<compile_context>
chip_gen: v7x
topology: tpu7x:2x2x1
jax: 0.10.0
libtpu: 0.0.40
codegen_flags: <defaults>
</compile_context>

<pallas_src>
import functools
import math

import jax
import jax.numpy as jnp
from jax.experimental import pallas as pl
from jax.experimental.pallas import tpu as pltpu


# ----------------------------- Pallas kernels ------------------------------

def _stage1_kernel(H1, W1,
                   xs_ref, w1_ref, b1_ref, w2a_ref, b2a_ref, w2b_ref, b2b_ref,
                   pool_ref, out2b_ref, s1p_ref, s2ap_ref):
    """stem1 -> pad -> (stem2a -> pad -> stem2b, maxpool). All intermediates live in VMEM."""
    n = H1 * W1

    def conv2x2(load, w_ref, b_ref):
        # 4 taps, each a (H1*W1, Cin) @ (Cin, Cout) MXU matmul, + folded-BN bias + ReLU.
        cin, cout = w_ref.shape[1], w_ref.shape[2]
        acc = jnp.zeros((n, cout), jnp.float32)
        for t in range(4):
            dh, dw = t // 2, t % 2
            acc = acc + jnp.dot(load(dh, dw).reshape(n, cin), w_ref[t],
                                preferred_element_type=jnp.float32)
        return jnp.maximum(acc + b_ref[...], 0.0).reshape(H1, W1, cout)

    # stem1: 3x3 stride-2 pad-1 conv, pre-lowered to a 2x2 valid conv on the space-to-depth input.
    y1 = conv2x2(lambda dh, dw: xs_ref[0, dh:dh + H1, dw:dw + W1, :], w1_ref, b1_ref)

    # F.pad(x, [0,1,0,1]): zero bottom/right border, kept in VMEM scratch.
    s1p_ref[...] = jnp.zeros_like(s1p_ref)
    s1p_ref[0:H1, 0:W1, :] = y1

    # stem2a: 2x2 valid conv on the padded map, then pad again.
    y2a = conv2x2(lambda dh, dw: s1p_ref[dh:dh + H1, dw:dw + W1, :], w2a_ref, b2a_ref)
    s2ap_ref[...] = jnp.zeros_like(s2ap_ref)
    s2ap_ref[0:H1, 0:W1, :] = y2a

    # stem2b: 2x2 valid conv.
    y2b = conv2x2(lambda dh, dw: s2ap_ref[dh:dh + H1, dw:dw + W1, :], w2b_ref, b2b_ref)
    out2b_ref[0] = y2b.astype(out2b_ref.dtype)

    # MaxPool2d(kernel=2, stride=1, padding=0, ceil_mode=True) on the padded stem1 map.
    m = jnp.maximum(s1p_ref[0:H1, 0:W1, :], s1p_ref[0:H1, 1:W1 + 1, :])
    m = jnp.maximum(m, s1p_ref[1:H1 + 1, 0:W1, :])
    m = jnp.maximum(m, s1p_ref[1:H1 + 1, 1:W1 + 1, :])
    pool_ref[0] = m.astype(pool_ref.dtype)


def _stage2_kernel(H3, W3,
                   xp_ref, xb_ref, w3a_ref, w3b_ref, b3_ref, w4_ref, b4_ref, out_ref):
    """stem3 (stride-2 3x3 as a 2x2 conv on space-to-depth input, weight split over the two
    concat branches so the channel concat is never materialized) + stem4 (1x1), fused."""
    n = H3 * W3
    cin = w3a_ref.shape[1]
    cmid = w3a_ref.shape[2]
    acc = jnp.zeros((n, cmid), jnp.float32)
    for t in range(4):
        dh, dw = t // 2, t % 2
        pa = xp_ref[0, dh:dh + H3, dw:dw + W3, :].reshape(n, cin)
        pb = xb_ref[0, dh:dh + H3, dw:dw + W3, :].reshape(n, cin)
        acc = acc + jnp.dot(pa, w3a_ref[t], preferred_element_type=jnp.float32)
        acc = acc + jnp.dot(pb, w3b_ref[t], preferred_element_type=jnp.float32)
    y3 = jnp.maximum(acc + b3_ref[...], 0.0)
    y4 = jnp.dot(y3, w4_ref[...], preferred_element_type=jnp.float32) + b4_ref[...]
    y4 = jnp.maximum(y4, 0.0)
    out_ref[0] = y4.reshape(H3, W3, w4_ref.shape[1]).astype(out_ref.dtype)


# ----------------------------- wrapper glue (XLA, tiny tensors only) ------------------------------

def _space_to_depth_pad(x):
    """[B, H, W, C] (H, W even) -> [B, H//2 + 1, W//2 + 1, 4C], zero-padded top/left.
    Channel order of the 4-block: (row parity, col parity, original channel)."""
    B, H, W, C = x.shape
    assert H % 2 == 0 and W % 2 == 0
    y = x.reshape(B, H // 2, 2, W // 2, 2, C)
    y = jnp.transpose(y, (0, 1, 3, 2, 4, 5)).reshape(B, H // 2, W // 2, 4 * C)
    return jnp.pad(y, ((0, 0), (1, 0), (1, 0), (0, 0)))


def hgstem_forward_pallas(x_nchw, P):
    B, c1, H, W = x_nchw.shape
    # s2d lowering of the two stride-2 convs needs even spatial sizes at both stages.
    assert H % 4 == 0 and W % 4 == 0, "this Pallas HGStem requires H, W divisible by 4"
    cm = P["stem1_b"].shape[0]
    cm2 = P["stem2a_b"].shape[0]
    c2 = P["stem4_b"].shape[0]
    H1, W1 = H // 2, W // 2          # stem1 / stem2 / pool spatial size
    H3, W3 = H1 // 2, W1 // 2        # stem3 / stem4 spatial size

    x_nhwc = jnp.transpose(x_nchw, (0, 2, 3, 1))
    xs = _space_to_depth_pad(x_nhwc)                       # (B, H1+1, W1+1, 4*c1)

    pool_o, y2b_o = pl.pallas_call(
        functools.partial(_stage1_kernel, H1, W1),
        out_shape=(jax.ShapeDtypeStruct((B, H1, W1, cm), jnp.float32),
                   jax.ShapeDtypeStruct((B, H1, W1, cm), jnp.float32)),
        grid=(B,),
        in_specs=[
            pl.BlockSpec((1, H1 + 1, W1 + 1, 4 * c1), lambda b: (b, 0, 0, 0)),
            pl.BlockSpec((4, 4 * c1, cm), lambda b: (0, 0, 0)),
            pl.BlockSpec((1, cm), lambda b: (0, 0)),
            pl.BlockSpec((4, cm, cm2), lambda b: (0, 0, 0)),
            pl.BlockSpec((1, cm2), lambda b: (0, 0)),
            pl.BlockSpec((4, cm2, cm), lambda b: (0, 0, 0)),
            pl.BlockSpec((1, cm), lambda b: (0, 0)),
        ],
        out_specs=(pl.BlockSpec((1, H1, W1, cm), lambda b: (b, 0, 0, 0)),
                   pl.BlockSpec((1, H1, W1, cm), lambda b: (b, 0, 0, 0))),
        scratch_shapes=[pltpu.VMEM((H1 + 1, W1 + 1, cm), jnp.float32),
                        pltpu.VMEM((H1 + 1, W1 + 1, cm2), jnp.float32)],
        compiler_params=pltpu.CompilerParams(dimension_semantics=("parallel",)),
    )(xs, P["stem1_wt"], P["stem1_b"].reshape(1, cm),
      P["stem2a_wt"], P["stem2a_b"].reshape(1, cm2),
      P["stem2b_wt"], P["stem2b_b"].reshape(1, cm))

    xp = _space_to_depth_pad(pool_o)                       # (B, H3+1, W3+1, 4*cm)
    xb = _space_to_depth_pad(y2b_o)

    out = pl.pallas_call(
        functools.partial(_stage2_kernel, H3, W3),
        out_shape=jax.ShapeDtypeStruct((B, H3, W3, c2), jnp.float32),
        grid=(B,),
        in_specs=[
            pl.BlockSpec((1, H3 + 1, W3 + 1, 4 * cm), lambda b: (b, 0, 0, 0)),
            pl.BlockSpec((1, H3 + 1, W3 + 1, 4 * cm), lambda b: (b, 0, 0, 0)),
            pl.BlockSpec((4, 4 * cm, cm), lambda b: (0, 0, 0)),
            pl.BlockSpec((4, 4 * cm, cm), lambda b: (0, 0, 0)),
            pl.BlockSpec((1, cm), lambda b: (0, 0)),
            pl.BlockSpec((cm, c2), lambda b: (0, 0)),
            pl.BlockSpec((1, c2), lambda b: (0, 0)),
        ],
        out_specs=pl.BlockSpec((1, H3, W3, c2), lambda b: (b, 0, 0, 0)),
        compiler_params=pltpu.CompilerParams(dimension_semantics=("parallel",)),
    )(xp, xb, P["stem3a_wt"], P["stem3b_wt"], P["stem3_b"].reshape(1, cm),
      P["stem4_wt"], P["stem4_b"].reshape(1, c2))

    return jnp.transpose(out, (0, 3, 1, 2))                # back to NCHW


# ----------------------------- deterministic params (Conv + folded BN) ------------------------------

def _fold_bn(key, cin, cout, k):
    """Conv2d(cin, cout, k, bias=False) + BatchNorm2d(eval, eps=1e-3) folded to (weight OIHW, bias)."""
    k1, k2, k3, k4, k5 = jax.random.split(key, 5)
    fan_in = cin * k * k
    w = jax.random.normal(k1, (cout, cin, k, k), jnp.float32) / math.sqrt(fan_in)
    gamma = 1.0 + 0.1 * jax.random.normal(k2, (cout,), jnp.float32)
    beta = 0.1 * jax.random.normal(k3, (cout,), jnp.float32)
    mean = 0.1 * jax.random.normal(k4, (cout,), jnp.float32)
    var = 1.0 + 0.1 * jnp.abs(jax.random.normal(k5, (cout,), jnp.float32))
    scale = gamma / jnp.sqrt(var + 1e-3)
    return w * scale[:, None, None, None], beta - mean * scale


def _k2_matmul_weight(w4d):
    """(Cout, Cin, 2, 2) OIHW -> (4, Cin, Cout), tap index = dh*2 + dw."""
    cout, cin = w4d.shape[:2]
    return jnp.transpose(w4d, (2, 3, 1, 0)).reshape(4, cin, cout)


def _s2_3x3_as_s2d_2x2_weight(w4d):
    """(Cout, Cin, 3, 3) stride-2 pad-1 conv weight -> (4, 4*Cin, Cout) weight of the equivalent
    2x2 valid conv on the space-to-depth, top/left zero-padded input."""
    cout, cin = w4d.shape[:2]
    wt = jnp.zeros((2, 2, 4, cin, cout), w4d.dtype)
    for dh in range(3):
        a, qr = (0, 1) if dh == 0 else (1, dh - 1)
        for dw in range(3):
            b, qc = (0, 1) if dw == 0 else (1, dw - 1)
            wt = wt.at[a, b, qr * 2 + qc].set(w4d[:, :, dh, dw].T)
    return wt.reshape(4, 4 * cin, cout)


def make_params(key, c1, cm, c2):
    cm2 = cm // 2
    k1, k2a, k2b, k3, k4 = jax.random.split(key, 5)
    P = {}
    P["stem1_w4"], P["stem1_b"] = _fold_bn(k1, c1, cm, 3)
    P["stem2a_w4"], P["stem2a_b"] = _fold_bn(k2a, cm, cm2, 2)
    P["stem2b_w4"], P["stem2b_b"] = _fold_bn(k2b, cm2, cm, 2)
    P["stem3_w4"], P["stem3_b"] = _fold_bn(k3, 2 * cm, cm, 3)
    P["stem4_w4"], P["stem4_b"] = _fold_bn(k4, cm, c2, 1)
    # matmul-form weights for the Pallas kernels
    P["stem1_wt"] = _s2_3x3_as_s2d_2x2_weight(P["stem1_w4"])
    P["stem2a_wt"] = _k2_matmul_weight(P["stem2a_w4"])
    P["stem2b_wt"] = _k2_matmul_weight(P["stem2b_w4"])
    P["stem3a_wt"] = _s2_3x3_as_s2d_2x2_weight(P["stem3_w4"][:, :cm])   # pool-branch channels
    P["stem3b_wt"] = _s2_3x3_as_s2d_2x2_weight(P["stem3_w4"][:, cm:])   # stem2b-branch channels
    P["stem4_wt"] = P["stem4_w4"][:, :, 0, 0].T
    return P


# ----------------------------- pure-JAX reference (spec check) ------------------------------

def _ref_conv(x, w4, b, stride, pad):
    y = jax.lax.conv_general_dilated(
        x, w4, (stride, stride), [(pad, pad), (pad, pad)],
        dimension_numbers=("NCHW", "OIHW", "NCHW"))
    return jax.nn.relu(y + b[None, :, None, None])


def hgstem_ref(x, P):
    x = _ref_conv(x, P["stem1_w4"], P["stem1_b"], 2, 1)
    x = jnp.pad(x, ((0, 0), (0, 0), (0, 1), (0, 1)))                 # F.pad(x, [0,1,0,1])
    x2 = _ref_conv(x, P["stem2a_w4"], P["stem2a_b"], 1, 0)
    x2 = jnp.pad(x2, ((0, 0), (0, 0), (0, 1), (0, 1)))
    x2 = _ref_conv(x2, P["stem2b_w4"], P["stem2b_b"], 1, 0)
    x1 = jax.lax.reduce_window(x, -jnp.inf, jax.lax.max,
                               (1, 1, 2, 2), (1, 1, 1, 1), "VALID")  # MaxPool2d(2,1,0,ceil)
    x = jnp.concatenate([x1, x2], axis=1)
    x = _ref_conv(x, P["stem3_w4"], P["stem3_b"], 2, 1)
    x = _ref_conv(x, P["stem4_w4"], P["stem4_b"], 1, 0)
    return x


# ----------------------------- main ------------------------------

if __name__ == "__main__":
    # HGStem(c1=3, cm=32, c2=64) on a 32x32 input, batch 2.
    B, c1, H, W = 2, 3, 32, 32
    cm, c2 = 32, 64

    key = jax.random.PRNGKey(0)
    kx, kp = jax.random.split(key)
    x = jax.random.normal(kx, (B, c1, H, W), jnp.float32)
    P = make_params(kp, c1, cm, c2)

    out = jax.jit(lambda xx: hgstem_forward_pallas(xx, P))(x)
    out = jax.block_until_ready(out)

    ref = jax.block_until_ready(hgstem_ref(x, P))
    assert out.shape == (B, c2, H // 4, W // 4), out.shape
    max_err = float(jnp.max(jnp.abs(out - ref)))
    assert jnp.allclose(out, ref, atol=2e-3, rtol=2e-3), max_err

    print("KERNEL_OK")
</pallas_src>

<mosaic_0001>
module attributes {stable_mosaic.version = 11 : i64} {
  func.func @_stage1_kernel(%arg0: i32, %arg1: memref<1x17x17x12xf32, #tpu.memory_space<vmem>>, %arg2: memref<4x12x32xf32, #tpu.memory_space<vmem>>, %arg3: memref<1x32xf32, #tpu.memory_space<vmem>>, %arg4: memref<4x32x16xf32, #tpu.memory_space<vmem>>, %arg5: memref<1x16xf32, #tpu.memory_space<vmem>>, %arg6: memref<4x16x32xf32, #tpu.memory_space<vmem>>, %arg7: memref<1x32xf32, #tpu.memory_space<vmem>>, %arg8: memref<1x16x16x32xf32, #tpu.memory_space<vmem>>, %arg9: memref<1x16x16x32xf32, #tpu.memory_space<vmem>>, %arg10: memref<17x17x32xf32, #tpu.memory_space<vmem>>, %arg11: memref<17x17x16xf32, #tpu.memory_space<vmem>>) attributes {dimension_semantics = [#tpu.dimension_semantics<parallel>], iteration_bounds = array<i64: 2>, scalar_prefetch = 0 : i64, scratch_operands = 2 : i64, tpu.core_type = #tpu.core_type<tc>, window_params = [{transform_indices = @transform_0, window_bounds = array<i64: 1, 17, 17, 12>}, {pipeline_mode = #tpu.pipeline_mode<synchronous>, transform_indices = @transform_1, window_bounds = array<i64: 4, 12, 32>}, {pipeline_mode = #tpu.pipeline_mode<synchronous>, transform_indices = @transform_2, window_bounds = array<i64: 1, 32>}, {pipeline_mode = #tpu.pipeline_mode<synchronous>, transform_indices = @transform_3, window_bounds = array<i64: 4, 32, 16>}, {pipeline_mode = #tpu.pipeline_mode<synchronous>, transform_indices = @transform_4, window_bounds = array<i64: 1, 16>}, {pipeline_mode = #tpu.pipeline_mode<synchronous>, transform_indices = @transform_5, window_bounds = array<i64: 4, 16, 32>}, {pipeline_mode = #tpu.pipeline_mode<synchronous>, transform_indices = @transform_6, window_bounds = array<i64: 1, 32>}, {transform_indices = @transform_7, window_bounds = array<i64: 1, 16, 16, 32>}, {transform_indices = @transform_8, window_bounds = array<i64: 1, 16, 16, 32>}]} {
    %cst = arith.constant 0.000000e+00 : f32
    %0 = vector.broadcast %cst : f32 to vector<256x32xf32>
    %c0 = arith.constant 0 : index
    %c0_0 = arith.constant 0 : index
    %c0_1 = arith.constant 0 : index
    %c0_2 = arith.constant 0 : index
    %1 = vector.load %arg1[%c0, %c0_0, %c0_1, %c0_2] : memref<1x17x17x12xf32, #tpu.memory_space<vmem>>, vector<1x16x16x12xf32>
    %2 = vector.shape_cast %1 : vector<1x16x16x12xf32> to vector<16x16x12xf32>
    %3 = vector.shape_cast %2 : vector<16x16x12xf32> to vector<256x12xf32>
    %c0_3 = arith.constant 0 : index
    %c0_4 = arith.constant 0 : index
    %c0_5 = arith.constant 0 : index
    %4 = vector.load %arg2[%c0_3, %c0_4, %c0_5] : memref<4x12x32xf32, #tpu.memory_space<vmem>>, vector<1x12x32xf32>
    %5 = vector.shape_cast %4 : vector<1x12x32xf32> to vector<12x32xf32>
    %cst_6 = arith.constant dense<0.000000e+00> : vector<256x32xf32>
    %6 = tpu.matmul %3, %5, %cst_6 {dimension_numbers = #tpu.dot_dimension_numbers<[1], [0], [0], [1], [0, 0, 1, 1], [], []>} : vector<256x12xf32>, vector<12x32xf32>, vector<256x32xf32> -> vector<256x32xf32>
    %7 = arith.addf %0, %6 : vector<256x32xf32>
    %c0_7 = arith.constant 0 : index
    %c0_8 = arith.constant 0 : index
    %c1 = arith.constant 1 : index
    %c0_9 = arith.constant 0 : index
    %8 = vector.load %arg1[%c0_7, %c0_8, %c1, %c0_9] : memref<1x17x17x12xf32, #tpu.memory_space<vmem>>, vector<1x16x16x12xf32>
    %9 = vector.shape_cast %8 : vector<1x16x16x12xf32> to vector<16x16x12xf32>
    %10 = vector.shape_cast %9 : vector<16x16x12xf32> to vector<256x12xf32>
    %c1_10 = arith.constant 1 : index
    %c0_11 = arith.constant 0 : index
    %c0_12 = arith.constant 0 : index
    %11 = vector.load %arg2[%c1_10, %c0_11, %c0_12] : memref<4x12x32xf32, #tpu.memory_space<vmem>>, vector<1x12x32xf32>
    %12 = vector.shape_cast %11 : vector<1x12x32xf32> to vector<12x32xf32>
    %cst_13 = arith.constant dense<0.000000e+00> : vector<256x32xf32>
    %13 = tpu.matmul %10, %12, %cst_13 {dimension_numbers = #tpu.dot_dimension_numbers<[1], [0], [0], [1], [0, 0, 1, 1], [], []>} : vector<256x12xf32>, vector<12x32xf32>, vector<256x32xf32> -> vector<256x32xf32>
    %14 = arith.addf %7, %13 : vector<256x32xf32>
    %c0_14 = arith.constant 0 : index
    %c1_15 = arith.constant 1 : index
    %c0_16 = arith.constant 0 : index
    %c0_17 = arith.constant 0 : index
    %15 = vector.load %arg1[%c0_14, %c1_15, %c0_16, %c0_17] : memref<1x17x17x12xf32, #tpu.memory_space<vmem>>, vector<1x16x16x12xf32>
    %16 = vector.shape_cast %15 : vector<1x16x16x12xf32> to vector<16x16x12xf32>
    %17 = vector.shape_cast %16 : vector<16x16x12xf32> to vector<256x12xf32>
    %c2 = arith.constant 2 : index
    %c0_18 = arith.constant 0 : index
    %c0_19 = arith.constant 0 : index
    %18 = vector.load %arg2[%c2, %c0_18, %c0_19] : memref<4x12x32xf32, #tpu.memory_space<vmem>>, vector<1x12x32xf32>
    %19 = vector.shape_cast %18 : vector<1x12x32xf32> to vector<12x32xf32>
    %cst_20 = arith.constant dense<0.000000e+00> : vector<256x32xf32>
    %20 = tpu.matmul %17, %19, %cst_20 {dimension_numbers = #tpu.dot_dimension_numbers<[1], [0], [0], [1], [0, 0, 1, 1], [], []>} : vector<256x12xf32>, vector<12x32xf32>, vector<256x32xf32> -> vector<256x32xf32>
    %21 = arith.addf %14, %20 : vector<256x32xf32>
    %c0_21 = arith.constant 0 : index
    %c1_22 = arith.constant 1 : index
    %c1_23 = arith.constant 1 : index
    %c0_24 = arith.constant 0 : index
    %22 = vector.load %arg1[%c0_21, %c1_22, %c1_23, %c0_24] : memref<1x17x17x12xf32, #tpu.memory_space<vmem>>, vector<1x16x16x12xf32>
    %23 = vector.shape_cast %22 : vector<1x16x16x12xf32> to vector<16x16x12xf32>
    %24 = vector.shape_cast %23 : vector<16x16x12xf32> to vector<256x12xf32>
    %c3 = arith.constant 3 : index
    %c0_25 = arith.constant 0 : index
    %c0_26 = arith.constant 0 : index
    %25 = vector.load %arg2[%c3, %c0_25, %c0_26] : memref<4x12x32xf32, #tpu.memory_space<vmem>>, vector<1x12x32xf32>
    %26 = vector.shape_cast %25 : vector<1x12x32xf32> to vector<12x32xf32>
    %cst_27 = arith.constant dense<0.000000e+00> : vector<256x32xf32>
    %27 = tpu.matmul %24, %26, %cst_27 {dimension_numbers = #tpu.dot_dimension_numbers<[1], [0], [0], [1], [0, 0, 1, 1], [], []>} : vector<256x12xf32>, vector<12x32xf32>, vector<256x32xf32> -> vector<256x32xf32>
    %28 = arith.addf %21, %27 : vector<256x32xf32>
    %c0_28 = arith.constant 0 : index
    %c0_29 = arith.constant 0 : index
    %29 = vector.load %arg3[%c0_28, %c0_29] : memref<1x32xf32, #tpu.memory_space<vmem>>, vector<1x32xf32>
    %30 = vector.broadcast %29 : vector<1x32xf32> to vector<256x32xf32>
    %31 = arith.addf %28, %30 : vector<256x32xf32>
    %cst_30 = arith.constant 0.000000e+00 : f32
    %32 = vector.broadcast %cst_30 : f32 to vector<256x32xf32>
    %33 = arith.maximumf %31, %32 : vector<256x32xf32>
    %34 = vector.shape_cast %33 : vector<256x32xf32> to vector<16x16x32xf32>
    %cst_31 = arith.constant 0.000000e+00 : f32
    %35 = vector.broadcast %cst_31 : f32 to vector<17x17x32xf32>
    %c0_32 = arith.constant 0 : index
    %c0_33 = arith.constant 0 : index
    %c0_34 = arith.constant 0 : index
    %36 = vector.load %arg10[%c0_32, %c0_33, %c0_34] : memref<17x17x32xf32, #tpu.memory_space<vmem>>, vector<17x17x32xf32>
    tpu.vector_store %arg10[%c0_32, %c0_33, %c0_34], %35 {strides = array<i32>} : memref<17x17x32xf32, #tpu.memory_space<vmem>>, vector<17x17x32xf32>,
    %c0_35 = arith.constant 0 : index
    %c0_36 = arith.constant 0 : index
    %c0_37 = arith.constant 0 : index
    %37 = vector.load %arg10[%c0_35, %c0_36, %c0_37] : memref<17x17x32xf32, #tpu.memory_space<vmem>>, vector<16x16x32xf32>
    tpu.vector_store %arg10[%c0_35, %c0_36, %c0_37], %34 {strides = array<i32>} : memref<17x17x32xf32, #tpu.memory_space<vmem>>, vector<16x16x32xf32>,
    %cst_38 = arith.constant 0.000000e+00 : f32
    %38 = vector.broadcast %cst_38 : f32 to vector<256x16xf32>
    %c0_39 = arith.constant 0 : index
    %c0_40 = arith.constant 0 : index
    %c0_41 = arith.constant 0 : index
    %39 = vector.load %arg10[%c0_39, %c0_40, %c0_41] : memref<17x17x32xf32, #tpu.memory_space<vmem>>, vector<16x16x32xf32>
    %40 = vector.shape_cast %39 : vector<16x16x32xf32> to vector<256x32xf32>
    %c0_42 = arith.constant 0 : index
    %c0_43 = arith.constant 0 : index
    %c0_44 = arith.constant 0 : index
    %41 = vector.load %arg4[%c0_42, %c0_43, %c0_44] : memref<4x32x16xf32, #tpu.memory_space<vmem>>, vector<1x32x16xf32>
    %42 = vector.shape_cast %41 : vector<1x32x16xf32> to vector<32x16xf32>
    %cst_45 = arith.constant dense<0.000000e+00> : vector<256x16xf32>
    %43 = tpu.matmul %40, %42, %cst_45 {dimension_numbers = #tpu.dot_dimension_numbers<[1], [0], [0], [1], [0, 0, 1, 1], [], []>} : vector<256x32xf32>, vector<32x16xf32>, vector<256x16xf32> -> vector<256x16xf32>
    %44 = arith.addf %38, %43 : vector<256x16xf32>
    %c0_46 = arith.constant 0 : index
    %c1_47 = arith.constant 1 : index
    %c0_48 = arith.constant 0 : index
    %45 = vector.load %arg10[%c0_46, %c1_47, %c0_48] : memref<17x17x32xf32, #tpu.memory_space<vmem>>, vector<16x16x32xf32>
    %46 = vector.shape_cast %45 : vector<16x16x32xf32> to vector<256x32xf32>
    %c1_49 = arith.constant 1 : index
    %c0_50 = arith.constant 0 : index
    %c0_51 = arith.constant 0 : index
    %47 = vector.load %arg4[%c1_49, %c0_50, %c0_51] : memref<4x32x16xf32, #tpu.memory_space<vmem>>, vector<1x32x16xf32>
    %48 = vector.shape_cast %47 : vector<1x32x16xf32> to vector<32x16xf32>
    %cst_52 = arith.constant dense<0.000000e+00> : vector<256x16xf32>
    %49 = tpu.matmul %46, %48, %cst_52 {dimension_numbers = #tpu.dot_dimension_numbers<[1], [0], [0], [1], [0, 0, 1, 1], [], []>} : vector<256x32xf32>, vector<32x16xf32>, vector<256x16xf32> -> vector<256x16xf32>
    %50 = arith.addf %44, %49 : vector<256x16xf32>
    %c1_53 = arith.constant 1 : index
    %c0_54 = arith.constant 0 : index
    %c0_55 = arith.constant 0 : index
    %51 = vector.load %arg10[%c1_53, %c0_54, %c0_55] : memref<17x17x32xf32, #tpu.memory_space<vmem>>, vector<16x16x32xf32>
    %52 = vector.shape_cast %51 : vector<16x16x32xf32> to vector<256x32xf32>
    %c2_56 = arith.constant 2 : index
    %c0_57 = arith.constant 0 : index
    %c0_58 = arith.constant 0 : index
    %53 = vector.load %arg4[%c2_56, %c0_57, %c0_58] : memref<4x32x16xf32, #tpu.memory_space<vmem>>, vector<1x32x16xf32>
    %54 = vector.shape_cast %53 : vector<1x32x16xf32> to vector<32x16xf32>
    %cst_59 = arith.constant dense<0.000000e+00> : vector<256x16xf32>
    %55 = tpu.matmul %52, %54, %cst_59 {dimension_numbers = #tpu.dot_dimension_numbers<[1], [0], [0], [1], [0, 0, 1, 1], [], []>} : vector<256x32xf32>, vector<32x16xf32>, vector<256x16xf32> -> vector<256x16xf32>
    %56 = arith.addf %50, %55 : vector<256x16xf32>
    %c1_60 = arith.constant 1 : index
    %c1_61 = arith.constant 1 : index
    %c0_62 = arith.constant 0 : index
    %57 = vector.load %arg10[%c1_60, %c1_61, %c0_62] : memref<17x17x32xf32, #tpu.memory_space<vmem>>, vector<16x16x32xf32>
    %58 = vector.shape_cast %57 : vector<16x16x32xf32> to vector<256x32xf32>
    %c3_63 = arith.constant 3 : index
    %c0_64 = arith.constant 0 : index
    %c0_65 = arith.constant 0 : index
    %59 = vector.load %arg4[%c3_63, %c0_64, %c0_65] : memref<4x32x16xf32, #tpu.memory_space<vmem>>, vector<1x32x16xf32>
    %60 = vector.shape_cast %59 : vector<1x32x16xf32> to vector<32x16xf32>
    %cst_66 = arith.constant dense<0.000000e+00> : vector<256x16xf32>
    %61 = tpu.matmul %58, %60, %cst_66 {dimension_numbers = #tpu.dot_dimension_numbers<[1], [0], [0], [1], [0, 0, 1, 1], [], []>} : vector<256x32xf32>, vector<32x16xf32>, vector<256x16xf32> -> vector<256x16xf32>
    %62 = arith.addf %56, %61 : vector<256x16xf32>
    %c0_67 = arith.constant 0 : index
    %c0_68 = arith.constant 0 : index
    %63 = vector.load %arg5[%c0_67, %c0_68] : memref<1x16xf32, #tpu.memory_space<vmem>>, vector<1x16xf32>
    %64 = vector.broadcast %63 : vector<1x16xf32> to vector<256x16xf32>
    %65 = arith.addf %62, %64 : vector<256x16xf32>
    %cst_69 = arith.constant 0.000000e+00 : f32
    %66 = vector.broadcast %cst_69 : f32 to vector<256x16xf32>
    %67 = arith.maximumf %65, %66 : vector<256x16xf32>
    %68 = vector.shape_cast %67 : vector<256x16xf32> to vector<16x16x16xf32>
    %cst_70 = arith.constant 0.000000e+00 : f32
    %69 = vector.broadcast %cst_70 : f32 to vector<17x17x16xf32>
    %c0_71 = arith.constant 0 : index
    %c0_72 = arith.constant 0 : index
    %c0_73 = arith.constant 0 : index
    %70 = vector.load %arg11[%c0_71, %c0_72, %c0_73] : memref<17x17x16xf32, #tpu.memory_space<vmem>>, vector<17x17x16xf32>
    tpu.vector_store %arg11[%c0_71, %c0_72, %c0_73], %69 {strides = array<i32>} : memref<17x17x16xf32, #tpu.memory_space<vmem>>, vector<17x17x16xf32>,
    %c0_74 = arith.constant 0 : index
    %c0_75 = arith.constant 0 : index
    %c0_76 = arith.constant 0 : index
    %71 = vector.load %arg11[%c0_74, %c0_75, %c0_76] : memref<17x17x16xf32, #tpu.memory_space<vmem>>, vector<16x16x16xf32>
    tpu.vector_store %arg11[%c0_74, %c0_75, %c0_76], %68 {strides = array<i32>} : memref<17x17x16xf32, #tpu.memory_space<vmem>>, vector<16x16x16xf32>,
    %cst_77 = arith.constant 0.000000e+00 : f32
    %72 = vector.broadcast %cst_77 : f32 to vector<256x32xf32>
    %c0_78 = arith.constant 0 : index
    %c0_79 = arith.constant 0 : index
    %c0_80 = arith.constant 0 : index
    %73 = vector.load %arg11[%c0_78, %c0_79, %c0_80] : memref<17x17x16xf32, #tpu.memory_space<vmem>>, vector<16x16x16xf32>
    %74 = vector.shape_cast %73 : vector<16x16x16xf32> to vector<256x16xf32>
    %c0_81 = arith.constant 0 : index
    %c0_82 = arith.constant 0 : index
    %c0_83 = arith.constant 0 : index
    %75 = vector.load %arg6[%c0_81, %c0_82, %c0_83] : memref<4x16x32xf32, #tpu.memory_space<vmem>>, vector<1x16x32xf32>
    %76 = vector.shape_cast %75 : vector<1x16x32xf32> to vector<16x32xf32>
    %cst_84 = arith.constant dense<0.000000e+00> : vector<256x32xf32>
    %77 = tpu.matmul %74, %76, %cst_84 {dimension_numbers = #tpu.dot_dimension_numbers<[1], [0], [0], [1], [0, 0, 1, 1], [], []>} : vector<256x16xf32>, vector<16x32xf32>, vector<256x32xf32> -> vector<256x32xf32>
    %78 = arith.addf %72, %77 : vector<256x32xf32>
    %c0_85 = arith.constant 0 : index
    %c1_86 = arith.constant 1 : index
    %c0_87 = arith.constant 0 : index
    %79 = vector.load %arg11[%c0_85, %c1_86, %c0_87] : memref<17x17x16xf32, #tpu.memory_space<vmem>>, vector<16x16x16xf32>
    %80 = vector.shape_cast %79 : vector<16x16x16xf32> to vector<256x16xf32>
    %c1_88 = arith.constant 1 : index
    %c0_89 = arith.constant 0 : index
    %c0_90 = arith.constant 0 : index
    %81 = vector.load %arg6[%c1_88, %c0_89, %c0_90] : memref<4x16x32xf32, #tpu.memory_space<vmem>>, vector<1x16x32xf32>
    %82 = vector.shape_cast %81 : vector<1x16x32xf32> to vector<16x32xf32>
    %cst_91 = arith.constant dense<0.000000e+00> : vector<256x32xf32>
    %83 = tpu.matmul %80, %82, %cst_91 {dimension_numbers = #tpu.dot_dimension_numbers<[1], [0], [0], [1], [0, 0, 1, 1], [], []>} : vector<256x16xf32>, vector<16x32xf32>, vector<256x32xf32> -> vector<256x32xf32>
    %84 = arith.addf %78, %83 : vector<256x32xf32>
    %c1_92 = arith.constant 1 : index
    %c0_93 = arith.constant 0 : index
    %c0_94 = arith.constant 0 : index
    %85 = vector.load %arg11[%c1_92, %c0_93, %c0_94] : memref<17x17x16xf32, #tpu.memory_space<vmem>>, vector<16x16x16xf32>
    %86 = vector.shape_cast %85 : vector<16x16x16xf32> to vector<256x16xf32>
    %c2_95 = arith.constant 2 : index
    %c0_96 = arith.constant 0 : index
    %c0_97 = arith.constant 0 : index
    %87 = vector.load %arg6[%c2_95, %c0_96, %c0_97] : memref<4x16x32xf32, #tpu.memory_space<vmem>>, vector<1x16x32xf32>
    %88 = vector.shape_cast %87 : vector<1x16x32xf32> to vector<16x32xf32>
    %cst_98 = arith.constant dense<0.000000e+00> : vector<256x32xf32>
    %89 = tpu.matmul %86, %88, %cst_98 {dimension_numbers = #tpu.dot_dimension_numbers<[1], [0], [0], [1], [0, 0, 1, 1], [], []>} : vector<256x16xf32>, vector<16x32xf32>, vector<256x32xf32> -> vector<256x32xf32>
    %90 = arith.addf %84, %89 : vector<256x32xf32>
    %c1_99 = arith.constant 1 : index
    %c1_100 = arith.constant 1 : index
    %c0_101 = arith.constant 0 : index
    %91 = vector.load %arg11[%c1_99, %c1_100, %c0_101] : memref<17x17x16xf32, #tpu.memory_space<vmem>>, vector<16x16x16xf32>
    %92 = vector.shape_cast %91 : vector<16x16x16xf32> to vector<256x16xf32>
    %c3_102 = arith.constant 3 : index
    %c0_103 = arith.constant 0 : index
    %c0_104 = arith.constant 0 : index
    %93 = vector.load %arg6[%c3_102, %c0_103, %c0_104] : memref<4x16x32xf32, #tpu.memory_space<vmem>>, vector<1x16x32xf32>
    %94 = vector.shape_cast %93 : vector<1x16x32xf32> to vector<16x32xf32>
    %cst_105 = arith.constant dense<0.000000e+00> : vector<256x32xf32>
    %95 = tpu.matmul %92, %94, %cst_105 {dimension_numbers = #tpu.dot_dimension_numbers<[1], [0], [0], [1], [0, 0, 1, 1], [], []>} : vector<256x16xf32>, vector<16x32xf32>, vector<256x32xf32> -> vector<256x32xf32>
    %96 = arith.addf %90, %95 : vector<256x32xf32>
    %c0_106 = arith.constant 0 : index
    %c0_107 = arith.constant 0 : index
    %97 = vector.load %arg7[%c0_106, %c0_107] : memref<1x32xf32, #tpu.memory_space<vmem>>, vector<1x32xf32>
    %98 = vector.broadcast %97 : vector<1x32xf32> to vector<256x32xf32>
    %99 = arith.addf %96, %98 : vector<256x32xf32>
    %cst_108 = arith.constant 0.000000e+00 : f32
    %100 = vector.broadcast %cst_108 : f32 to vector<256x32xf32>
    %101 = arith.maximumf %99, %100 : vector<256x32xf32>
    %102 = vector.shape_cast %101 : vector<256x32xf32> to vector<16x16x32xf32>
    %c0_109 = arith.constant 0 : index
    %c0_110 = arith.constant 0 : index
    %c0_111 = arith.constant 0 : index
    %c0_112 = arith.constant 0 : index
    %103 = vector.load %arg9[%c0_109, %c0_110, %c0_111, %c0_112] : memref<1x16x16x32xf32, #tpu.memory_space<vmem>>, vector<1x16x16x32xf32>
    %104 = vector.shape_cast %103 : vector<1x16x16x32xf32> to vector<16x16x32xf32>
    %105 = vector.shape_cast %102 : vector<16x16x32xf32> to vector<1x16x16x32xf32>
    tpu.vector_store %arg9[%c0_109, %c0_110, %c0_111, %c0_112], %105 {strides = array<i32>} : memref<1x16x16x32xf32, #tpu.memory_space<vmem>>, vector<1x16x16x32xf32>,
    %c0_113 = arith.constant 0 : index
    %c0_114 = arith.constant 0 : index
    %c0_115 = arith.constant 0 : index
    %106 = vector.load %arg10[%c0_113, %c0_114, %c0_115] : memref<17x17x32xf32, #tpu.memory_space<vmem>>, vector<16x16x32xf32>
    %c0_116 = arith.constant 0 : index
    %c1_117 = arith.constant 1 : index
    %c0_118 = arith.constant 0 : index
    %107 = vector.load %arg10[%c0_116, %c1_117, %c0_118] : memref<17x17x32xf32, #tpu.memory_space<vmem>>, vector<16x16x32xf32>
    %108 = arith.maximumf %106, %107 : vector<16x16x32xf32>
    %c1_119 = arith.constant 1 : index
    %c0_120 = arith.constant 0 : index
    %c0_121 = arith.constant 0 : index
    %109 = vector.load %arg10[%c1_119, %c0_120, %c0_121] : memref<17x17x32xf32, #tpu.memory_space<vmem>>, vector<16x16x32xf32>
    %110 = arith.maximumf %108, %109 : vector<16x16x32xf32>
    %c1_122 = arith.constant 1 : index
    %c1_123 = arith.constant 1 : index
    %c0_124 = arith.constant 0 : index
    %111 = vector.load %arg10[%c1_122, %c1_123, %c0_124] : memref<17x17x32xf32, #tpu.memory_space<vmem>>, vector<16x16x32xf32>
    %112 = arith.maximumf %110, %111 : vector<16x16x32xf32>
    %c0_125 = arith.constant 0 : index
    %c0_126 = arith.constant 0 : index
    %c0_127 = arith.constant 0 : index
    %c0_128 = arith.constant 0 : index
    %113 = vector.load %arg8[%c0_125, %c0_126, %c0_127, %c0_128] : memref<1x16x16x32xf32, #tpu.memory_space<vmem>>, vector<1x16x16x32xf32>
    %114 = vector.shape_cast %113 : vector<1x16x16x32xf32> to vector<16x16x32xf32>
    %115 = vector.shape_cast %112 : vector<16x16x32xf32> to vector<1x16x16x32xf32>
    tpu.vector_store %arg8[%c0_125, %c0_126, %c0_127, %c0_128], %115 {strides = array<i32>} : memref<1x16x16x32xf32, #tpu.memory_space<vmem>>, vector<1x16x16x32xf32>,
    return
  }
  func.func @transform_0(%arg0: i32) -> (i32, i32, i32, i32) {
    %c0_i32 = arith.constant 0 : i32
    %c0_i32_0 = arith.constant 0 : i32
    %c0_i32_1 = arith.constant 0 : i32
    %c0_i32_2 = arith.constant 0 : i32
    return %arg0, %c0_i32, %c0_i32_0, %c0_i32_1 : i32, i32, i32, i32
  }
  func.func @transform_1(%arg0: i32) -> (i32, i32, i32) {
    %c0_i32 = arith.constant 0 : i32
    %c0_i32_0 = arith.constant 0 : i32
    %c0_i32_1 = arith.constant 0 : i32
    %c0_i32_2 = arith.constant 0 : i32
    return %c0_i32, %c0_i32_0, %c0_i32_1 : i32, i32, i32
  }
  func.func @transform_2(%arg0: i32) -> (i32, i32) {
    %c0_i32 = arith.constant 0 : i32
    %c0_i32_0 = arith.constant 0 : i32
    %c0_i32_1 = arith.constant 0 : i32
    return %c0_i32, %c0_i32_0 : i32, i32
  }
  func.func @transform_3(%arg0: i32) -> (i32, i32, i32) {
    %c0_i32 = arith.constant 0 : i32
    %c0_i32_0 = arith.constant 0 : i32
    %c0_i32_1 = arith.constant 0 : i32
    %c0_i32_2 = arith.constant 0 : i32
    return %c0_i32, %c0_i32_0, %c0_i32_1 : i32, i32, i32
  }
  func.func @transform_4(%arg0: i32) -> (i32, i32) {
    %c0_i32 = arith.constant 0 : i32
    %c0_i32_0 = arith.constant 0 : i32
    %c0_i32_1 = arith.constant 0 : i32
    return %c0_i32, %c0_i32_0 : i32, i32
  }
  func.func @transform_5(%arg0: i32) -> (i32, i32, i32) {
    %c0_i32 = arith.constant 0 : i32
    %c0_i32_0 = arith.constant 0 : i32
    %c0_i32_1 = arith.constant 0 : i32
    %c0_i32_2 = arith.constant 0 : i32
    return %c0_i32, %c0_i32_0, %c0_i32_1 : i32, i32, i32
  }
  func.func @transform_6(%arg0: i32) -> (i32, i32) {
    %c0_i32 = arith.constant 0 : i32
    %c0_i32_0 = arith.constant 0 : i32
    %c0_i32_1 = arith.constant 0 : i32
    return %c0_i32, %c0_i32_0 : i32, i32
  }
  func.func @transform_7(%arg0: i32) -> (i32, i32, i32, i32) {
    %c0_i32 = arith.constant 0 : i32
    %c0_i32_0 = arith.constant 0 : i32
    %c0_i32_1 = arith.constant 0 : i32
    %c0_i32_2 = arith.constant 0 : i32
    return %arg0, %c0_i32, %c0_i32_0, %c0_i32_1 : i32, i32, i32, i32
  }
  func.func @transform_8(%arg0: i32) -> (i32, i32, i32, i32) {
    %c0_i32 = arith.constant 0 : i32
    %c0_i32_0 = arith.constant 0 : i32
    %c0_i32_1 = arith.constant 0 : i32
    %c0_i32_2 = arith.constant 0 : i32
    return %arg0, %c0_i32, %c0_i32_0, %c0_i32_1 : i32, i32, i32, i32
  }
}

module attributes {stable_mosaic.version = 11 : i64} {
  func.func @_stage2_kernel(%arg0: i32, %arg1: memref<1x9x9x128xf32, #tpu.memory_space<vmem>>, %arg2: memref<1x9x9x128xf32, #tpu.memory_space<vmem>>, %arg3: memref<4x128x32xf32, #tpu.memory_space<vmem>>, %arg4: memref<4x128x32xf32, #tpu.memory_space<vmem>>, %arg5: memref<1x32xf32, #tpu.memory_space<vmem>>, %arg6: memref<32x64xf32, #tpu.memory_space<vmem>>, %arg7: memref<1x64xf32, #tpu.memory_space<vmem>>, %arg8: memref<1x8x8x64xf32, #tpu.memory_space<vmem>>) attributes {dimension_semantics = [#tpu.dimension_semantics<parallel>], iteration_bounds = array<i64: 2>, scalar_prefetch = 0 : i64, scratch_operands = 0 : i64, tpu.core_type = #tpu.core_type<tc>, window_params = [{transform_indices = @transform_0, window_bounds = array<i64: 1, 9, 9, 128>}, {transform_indices = @transform_1, window_bounds = array<i64: 1, 9, 9, 128>}, {pipeline_mode = #tpu.pipeline_mode<synchronous>, transform_indices = @transform_2, window_bounds = array<i64: 4, 128, 32>}, {pipeline_mode = #tpu.pipeline_mode<synchronous>, transform_indices = @transform_3, window_bounds = array<i64: 4, 128, 32>}, {pipeline_mode = #tpu.pipeline_mode<synchronous>, transform_indices = @transform_4, window_bounds = array<i64: 1, 32>}, {pipeline_mode = #tpu.pipeline_mode<synchronous>, transform_indices = @transform_5, window_bounds = array<i64: 32, 64>}, {pipeline_mode = #tpu.pipeline_mode<synchronous>, transform_indices = @transform_6, window_bounds = array<i64: 1, 64>}, {transform_indices = @transform_7, window_bounds = array<i64: 1, 8, 8, 64>}]} {
    %cst = arith.constant 0.000000e+00 : f32
    %0 = vector.broadcast %cst : f32 to vector<64x32xf32>
    %c0 = arith.constant 0 : index
    %c0_0 = arith.constant 0 : index
    %c0_1 = arith.constant 0 : index
    %c0_2 = arith.constant 0 : index
    %1 = vector.load %arg1[%c0, %c0_0, %c0_1, %c0_2] : memref<1x9x9x128xf32, #tpu.memory_space<vmem>>, vector<1x8x8x128xf32>
    %2 = vector.shape_cast %1 : vector<1x8x8x128xf32> to vector<8x8x128xf32>
    %3 = vector.shape_cast %2 : vector<8x8x128xf32> to vector<64x128xf32>
    %c0_3 = arith.constant 0 : index
    %c0_4 = arith.constant 0 : index
    %c0_5 = arith.constant 0 : index
    %c0_6 = arith.constant 0 : index
    %4 = vector.load %arg2[%c0_3, %c0_4, %c0_5, %c0_6] : memref<1x9x9x128xf32, #tpu.memory_space<vmem>>, vector<1x8x8x128xf32>
    %5 = vector.shape_cast %4 : vector<1x8x8x128xf32> to vector<8x8x128xf32>
    %6 = vector.shape_cast %5 : vector<8x8x128xf32> to vector<64x128xf32>
    %c0_7 = arith.constant 0 : index
    %c0_8 = arith.constant 0 : index
    %c0_9 = arith.constant 0 : index
    %7 = vector.load %arg3[%c0_7, %c0_8, %c0_9] : memref<4x128x32xf32, #tpu.memory_space<vmem>>, vector<1x128x32xf32>
    %8 = vector.shape_cast %7 : vector<1x128x32xf32> to vector<128x32xf32>
    %cst_10 = arith.constant dense<0.000000e+00> : vector<64x32xf32>
    %9 = tpu.matmul %3, %8, %cst_10 {dimension_numbers = #tpu.dot_dimension_numbers<[1], [0], [0], [1], [0, 0, 1, 1], [], []>} : vector<64x128xf32>, vector<128x32xf32>, vector<64x32xf32> -> vector<64x32xf32>
    %10 = arith.addf %0, %9 : vector<64x32xf32>
    %c0_11 = arith.constant 0 : index
    %c0_12 = arith.constant 0 : index
    %c0_13 = arith.constant 0 : index
    %11 = vector.load %arg4[%c0_11, %c0_12, %c0_13] : memref<4x128x32xf32, #tpu.memory_space<vmem>>, vector<1x128x32xf32>
    %12 = vector.shape_cast %11 : vector<1x128x32xf32> to vector<128x32xf32>
    %cst_14 = arith.constant dense<0.000000e+00> : vector<64x32xf32>
    %13 = tpu.matmul %6, %12, %cst_14 {dimension_numbers = #tpu.dot_dimension_numbers<[1], [0], [0], [1], [0, 0, 1, 1], [], []>} : vector<64x128xf32>, vector<128x32xf32>, vector<64x32xf32> -> vector<64x32xf32>
    %14 = arith.addf %10, %13 : vector<64x32xf32>
    %c0_15 = arith.constant 0 : index
    %c0_16 = arith.constant 0 : index
    %c1 = arith.constant 1 : index
    %c0_17 = arith.constant 0 : index
    %15 = vector.load %arg1[%c0_15, %c0_16, %c1, %c0_17] : memref<1x9x9x128xf32, #tpu.memory_space<vmem>>, vector<1x8x8x128xf32>
    %16 = vector.shape_cast %15 : vector<1x8x8x128xf32> to vector<8x8x128xf32>
    %17 = vector.shape_cast %16 : vector<8x8x128xf32> to vector<64x128xf32>
    %c0_18 = arith.constant 0 : index
    %c0_19 = arith.constant 0 : index
    %c1_20 = arith.constant 1 : index
    %c0_21 = arith.constant 0 : index
    %18 = vector.load %arg2[%c0_18, %c0_19, %c1_20, %c0_21] : memref<1x9x9x128xf32, #tpu.memory_space<vmem>>, vector<1x8x8x128xf32>
    %19 = vector.shape_cast %18 : vector<1x8x8x128xf32> to vector<8x8x128xf32>
    %20 = vector.shape_cast %19 : vector<8x8x128xf32> to vector<64x128xf32>
    %c1_22 = arith.constant 1 : index
    %c0_23 = arith.constant 0 : index
    %c0_24 = arith.constant 0 : index
    %21 = vector.load %arg3[%c1_22, %c0_23, %c0_24] : memref<4x128x32xf32, #tpu.memory_space<vmem>>, vector<1x128x32xf32>
    %22 = vector.shape_cast %21 : vector<1x128x32xf32> to vector<128x32xf32>
    %cst_25 = arith.constant dense<0.000000e+00> : vector<64x32xf32>
    %23 = tpu.matmul %17, %22, %cst_25 {dimension_numbers = #tpu.dot_dimension_numbers<[1], [0], [0], [1], [0, 0, 1, 1], [], []>} : vector<64x128xf32>, vector<128x32xf32>, vector<64x32xf32> -> vector<64x32xf32>
    %24 = arith.addf %14, %23 : vector<64x32xf32>
    %c1_26 = arith.constant 1 : index
    %c0_27 = arith.constant 0 : index
    %c0_28 = arith.constant 0 : index
    %25 = vector.load %arg4[%c1_26, %c0_27, %c0_28] : memref<4x128x32xf32, #tpu.memory_space<vmem>>, vector<1x128x32xf32>
    %26 = vector.shape_cast %25 : vector<1x128x32xf32> to vector<128x32xf32>
    %cst_29 = arith.constant dense<0.000000e+00> : vector<64x32xf32>
    %27 = tpu.matmul %20, %26, %cst_29 {dimension_numbers = #tpu.dot_dimension_numbers<[1], [0], [0], [1], [0, 0, 1, 1], [], []>} : vector<64x128xf32>, vector<128x32xf32>, vector<64x32xf32> -> vector<64x32xf32>
    %28 = arith.addf %24, %27 : vector<64x32xf32>
    %c0_30 = arith.constant 0 : index
    %c1_31 = arith.constant 1 : index
    %c0_32 = arith.constant 0 : index
    %c0_33 = arith.constant 0 : index
    %29 = vector.load %arg1[%c0_30, %c1_31, %c0_32, %c0_33] : memref<1x9x9x128xf32, #tpu.memory_space<vmem>>, vector<1x8x8x128xf32>
    %30 = vector.shape_cast %29 : vector<1x8x8x128xf32> to vector<8x8x128xf32>
    %31 = vector.shape_cast %30 : vector<8x8x128xf32> to vector<64x128xf32>
    %c0_34 = arith.constant 0 : index
    %c1_35 = arith.constant 1 : index
    %c0_36 = arith.constant 0 : index
    %c0_37 = arith.constant 0 : index
    %32 = vector.load %arg2[%c0_34, %c1_35, %c0_36, %c0_37] : memref<1x9x9x128xf32, #tpu.memory_space<vmem>>, vector<1x8x8x128xf32>
    %33 = vector.shape_cast %32 : vector<1x8x8x128xf32> to vector<8x8x128xf32>
    %34 = vector.shape_cast %33 : vector<8x8x128xf32> to vector<64x128xf32>
    %c2 = arith.constant 2 : index
    %c0_38 = arith.constant 0 : index
    %c0_39 = arith.constant 0 : index
    %35 = vector.load %arg3[%c2, %c0_38, %c0_39] : memref<4x128x32xf32, #tpu.memory_space<vmem>>, vector<1x128x32xf32>
    %36 = vector.shape_cast %35 : vector<1x128x32xf32> to vector<128x32xf32>
    %cst_40 = arith.constant dense<0.000000e+00> : vector<64x32xf32>
    %37 = tpu.matmul %31, %36, %cst_40 {dimension_numbers = #tpu.dot_dimension_numbers<[1], [0], [0], [1], [0, 0, 1, 1], [], []>} : vector<64x128xf32>, vector<128x32xf32>, vector<64x32xf32> -> vector<64x32xf32>
    %38 = arith.addf %28, %37 : vector<64x32xf32>
    %c2_41 = arith.constant 2 : index
    %c0_42 = arith.constant 0 : index
    %c0_43 = arith.constant 0 : index
    %39 = vector.load %arg4[%c2_41, %c0_42, %c0_43] : memref<4x128x32xf32, #tpu.memory_space<vmem>>, vector<1x128x32xf32>
    %40 = vector.shape_cast %39 : vector<1x128x32xf32> to vector<128x32xf32>
    %cst_44 = arith.constant dense<0.000000e+00> : vector<64x32xf32>
    %41 = tpu.matmul %34, %40, %cst_44 {dimension_numbers = #tpu.dot_dimension_numbers<[1], [0], [0], [1], [0, 0, 1, 1], [], []>} : vector<64x128xf32>, vector<128x32xf32>, vector<64x32xf32> -> vector<64x32xf32>
    %42 = arith.addf %38, %41 : vector<64x32xf32>
    %c0_45 = arith.constant 0 : index
    %c1_46 = arith.constant 1 : index
    %c1_47 = arith.constant 1 : index
    %c0_48 = arith.constant 0 : index
    %43 = vector.load %arg1[%c0_45, %c1_46, %c1_47, %c0_48] : memref<1x9x9x128xf32, #tpu.memory_space<vmem>>, vector<1x8x8x128xf32>
    %44 = vector.shape_cast %43 : vector<1x8x8x128xf32> to vector<8x8x128xf32>
    %45 = vector.shape_cast %44 : vector<8x8x128xf32> to vector<64x128xf32>
    %c0_49 = arith.constant 0 : index
    %c1_50 = arith.constant 1 : index
    %c1_51 = arith.constant 1 : index
    %c0_52 = arith.constant 0 : index
    %46 = vector.load %arg2[%c0_49, %c1_50, %c1_51, %c0_52] : memref<1x9x9x128xf32, #tpu.memory_space<vmem>>, vector<1x8x8x128xf32>
    %47 = vector.shape_cast %46 : vector<1x8x8x128xf32> to vector<8x8x128xf32>
    %48 = vector.shape_cast %47 : vector<8x8x128xf32> to vector<64x128xf32>
    %c3 = arith.constant 3 : index
    %c0_53 = arith.constant 0 : index
    %c0_54 = arith.constant 0 : index
    %49 = vector.load %arg3[%c3, %c0_53, %c0_54] : memref<4x128x32xf32, #tpu.memory_space<vmem>>, vector<1x128x32xf32>
    %50 = vector.shape_cast %49 : vector<1x128x32xf32> to vector<128x32xf32>
    %cst_55 = arith.constant dense<0.000000e+00> : vector<64x32xf32>
    %51 = tpu.matmul %45, %50, %cst_55 {dimension_numbers = #tpu.dot_dimension_numbers<[1], [0], [0], [1], [0, 0, 1, 1], [], []>} : vector<64x128xf32>, vector<128x32xf32>, vector<64x32xf32> -> vector<64x32xf32>
    %52 = arith.addf %42, %51 : vector<64x32xf32>
    %c3_56 = arith.constant 3 : index
    %c0_57 = arith.constant 0 : index
    %c0_58 = arith.constant 0 : index
    %53 = vector.load %arg4[%c3_56, %c0_57, %c0_58] : memref<4x128x32xf32, #tpu.memory_space<vmem>>, vector<1x128x32xf32>
    %54 = vector.shape_cast %53 : vector<1x128x32xf32> to vector<128x32xf32>
    %cst_59 = arith.constant dense<0.000000e+00> : vector<64x32xf32>
    %55 = tpu.matmul %48, %54, %cst_59 {dimension_numbers = #tpu.dot_dimension_numbers<[1], [0], [0], [1], [0, 0, 1, 1], [], []>} : vector<64x128xf32>, vector<128x32xf32>, vector<64x32xf32> -> vector<64x32xf32>
    %56 = arith.addf %52, %55 : vector<64x32xf32>
    %c0_60 = arith.constant 0 : index
    %c0_61 = arith.constant 0 : index
    %57 = vector.load %arg5[%c0_60, %c0_61] : memref<1x32xf32, #tpu.memory_space<vmem>>, vector<1x32xf32>
    %58 = vector.broadcast %57 : vector<1x32xf32> to vector<64x32xf32>
    %59 = arith.addf %56, %58 : vector<64x32xf32>
    %cst_62 = arith.constant 0.000000e+00 : f32
    %60 = vector.broadcast %cst_62 : f32 to vector<64x32xf32>
    %61 = arith.maximumf %59, %60 : vector<64x32xf32>
    %c0_63 = arith.constant 0 : index
    %c0_64 = arith.constant 0 : index
    %62 = vector.load %arg6[%c0_63, %c0_64] : memref<32x64xf32, #tpu.memory_space<vmem>>, vector<32x64xf32>
    %cst_65 = arith.constant dense<0.000000e+00> : vector<64x64xf32>
    %63 = tpu.matmul %61, %62, %cst_65 {dimension_numbers = #tpu.dot_dimension_numbers<[1], [0], [0], [1], [0, 0, 1, 1], [], []>} : vector<64x32xf32>, vector<32x64xf32>, vector<64x64xf32> -> vector<64x64xf32>
    %c0_66 = arith.constant 0 : index
    %c0_67 = arith.constant 0 : index
    %64 = vector.load %arg7[%c0_66, %c0_67] : memref<1x64xf32, #tpu.memory_space<vmem>>, vector<1x64xf32>
    %65 = vector.broadcast %64 : vector<1x64xf32> to vector<64x64xf32>
    %66 = arith.addf %63, %65 : vector<64x64xf32>
    %cst_68 = arith.constant 0.000000e+00 : f32
    %67 = vector.broadcast %cst_68 : f32 to vector<64x64xf32>
    %68 = arith.maximumf %66, %67 : vector<64x64xf32>
    %69 = vector.shape_cast %68 : vector<64x64xf32> to vector<8x8x64xf32>
    %c0_69 = arith.constant 0 : index
    %c0_70 = arith.constant 0 : index
    %c0_71 = arith.constant 0 : index
    %c0_72 = arith.constant 0 : index
    %70 = vector.load %arg8[%c0_69, %c0_70, %c0_71, %c0_72] : memref<1x8x8x64xf32, #tpu.memory_space<vmem>>, vector<1x8x8x64xf32>
    %71 = vector.shape_cast %70 : vector<1x8x8x64xf32> to vector<8x8x64xf32>
    %72 = vector.shape_cast %69 : vector<8x8x64xf32> to vector<1x8x8x64xf32>
    tpu.vector_store %arg8[%c0_69, %c0_70, %c0_71, %c0_72], %72 {strides = array<i32>} : memref<1x8x8x64xf32, #tpu.memory_space<vmem>>, vector<1x8x8x64xf32>,
    return
  }
  func.func @transform_0(%arg0: i32) -> (i32, i32, i32, i32) {
    %c0_i32 = arith.constant 0 : i32
    %c0_i32_0 = arith.constant 0 : i32
    %c0_i32_1 = arith.constant 0 : i32
    %c0_i32_2 = arith.constant 0 : i32
    return %arg0, %c0_i32, %c0_i32_0, %c0_i32_1 : i32, i32, i32, i32
  }
  func.func @transform_1(%arg0: i32) -> (i32, i32, i32, i32) {
    %c0_i32 = arith.constant 0 : i32
    %c0_i32_0 = arith.constant 0 : i32
    %c0_i32_1 = arith.constant 0 : i32
    %c0_i32_2 = arith.constant 0 : i32
    return %arg0, %c0_i32, %c0_i32_0, %c0_i32_1 : i32, i32, i32, i32
  }
  func.func @transform_2(%arg0: i32) -> (i32, i32, i32) {
    %c0_i32 = arith.constant 0 : i32
    %c0_i32_0 = arith.constant 0 : i32
    %c0_i32_1 = arith.constant 0 : i32
    %c0_i32_2 = arith.constant 0 : i32
    return %c0_i32, %c0_i32_0, %c0_i32_1 : i32, i32, i32
  }
  func.func @transform_3(%arg0: i32) -> (i32, i32, i32) {
    %c0_i32 = arith.constant 0 : i32
    %c0_i32_0 = arith.constant 0 : i32
    %c0_i32_1 = arith.constant 0 : i32
    %c0_i32_2 = arith.constant 0 : i32
    return %c0_i32, %c0_i32_0, %c0_i32_1 : i32, i32, i32
  }
  func.func @transform_4(%arg0: i32) -> (i32, i32) {
    %c0_i32 = arith.constant 0 : i32
    %c0_i32_0 = arith.constant 0 : i32
    %c0_i32_1 = arith.constant 0 : i32
    return %c0_i32, %c0_i32_0 : i32, i32
  }
  func.func @transform_5(%arg0: i32) -> (i32, i32) {
    %c0_i32 = arith.constant 0 : i32
    %c0_i32_0 = arith.constant 0 : i32
    %c0_i32_1 = arith.constant 0 : i32
    return %c0_i32, %c0_i32_0 : i32, i32
  }
  func.func @transform_6(%arg0: i32) -> (i32, i32) {
    %c0_i32 = arith.constant 0 : i32
    %c0_i32_0 = arith.constant 0 : i32
    %c0_i32_1 = arith.constant 0 : i32
    return %c0_i32, %c0_i32_0 : i32, i32
  }
  func.func @transform_7(%arg0: i32) -> (i32, i32, i32, i32) {
    %c0_i32 = arith.constant 0 : i32
    %c0_i32_0 = arith.constant 0 : i32
    %c0_i32_1 = arith.constant 0 : i32
    %c0_i32_2 = arith.constant 0 : i32
    return %arg0, %c0_i32, %c0_i32_0, %c0_i32_1 : i32, i32, i32, i32
  }
}

</mosaic_0001>

<llo_original>
// kernel: _lambda_.3
$region0: #{_lambda_.3}
  #allocation0 [shape = 'u32[]', space=smem, size = 0x4, offset = 0x4, fixed_abs, tag = 'smem constant byte address 0x4 - core index']
  #allocation1 [shape = 'u32[144,128]{1,0:T(1,128)}', space=vmem, size = 0x12000, scoped, tag = 'internal scratch']
  %s0 = inlined_call_operand.vmem [shape: f32[2,9,9,128], index: 0, kind: input, shape index: {}]
  %s1 = inlined_call_operand.vmem [shape: f32[2,9,9,128], index: 1, kind: input, shape index: {}]
  %s2 = inlined_call_operand.vmem [shape: f32[4,128,32], index: 2, kind: input, shape index: {}]
  %s3 = inlined_call_operand.vmem [shape: f32[4,128,32], index: 3, kind: input, shape index: {}]
  %s4 = inlined_call_operand.vmem [shape: f32[1,32], index: 4, kind: input, shape index: {}]
  %s5 = inlined_call_operand.vmem [shape: f32[32,64], index: 5, kind: input, shape index: {}]
  %s6 = inlined_call_operand.vmem [shape: f32[1,64], index: 6, kind: input, shape index: {}]
  %s7 = inlined_call_operand.hbm [shape: f32[2,8,8,64], index: 7, kind: output, shape index: {}]
  %s8 = sld [smem:[#allocation0]]
  $region61: #{_lambda_.3} parent=0
    _
  %s10 = ssub.s32 1, %s8
  %s11 = scalar_select 0, %s10, %s8
  $region1: #{_lambda_.3} parent=0
    #allocation2 [shape = 'u8[65536]{0}', space=vmem, size = 0x10000, scoped, tag = 'output window, operand 0']
    #allocation3 [shape = 's32[2]{0}', space=sflag, size = 0x8, scoped, tag = 'scoped memory for _lambda_.3']
    %12 = vsyncpa [#allocation3], 0
    %s13 = scalar_lea.sflag [#allocation3], 1
    %14 = vsyncpa %s13, 0
    loop: start=0, step=1, limit=4
    $region2: #{_lambda_.3} parent=1 // loop_pre_header
      _
    $region3: #{_lambda_.3} parent=1 // loop_header
      %s16 = sphi 0, %s20
      %p17 = scmp.ge.s32.totalorder %s16, 4
      %s26 = sphi 0, %s28
      %s29 = sphi 0, %s26
      %s30 = sphi 0, %s29
      %s46 = sphi 0, %s30
      %s52 = sphi 0, %s54
      %s55 = sphi 0, %s52
      %s56 = sphi 0, %s55
      %s72 = sphi 0, %s56
      %s76 = sphi 0, %s76
      %s78 = sphi 0, %s76
      %s79 = sphi 0, %s78
      %s93 = sphi 0, %s79
      %s97 = sphi 0, %s97
      %s99 = sphi 0, %s97
      %s100 = sphi 0, %s99
      %s114 = sphi 0, %s100
      %s118 = sphi 0, %s118
      %s120 = sphi 0, %s118
      %s121 = sphi 0, %s120
      %s135 = sphi 0, %s121
      %s139 = sphi 0, %s139
      %s141 = sphi 0, %s139
      %s142 = sphi 0, %s141
      %s156 = sphi 0, %s142
      %s160 = sphi 0, %s160
      %s162 = sphi 0, %s160
      %s163 = sphi 0, %s162
      %s177 = sphi 0, %s163
      %s183 = sphi 0, %s185
      %s186 = sphi 0, %s183
      %s187 = sphi 0, %s186
      %s203 = sphi 0, %s187
    $region4: #{_lambda_.3} parent=1 // loop_header_branch
      %19 = sbr.rel (%p17) target = $region8
    $region5: #{_lambda_.3} parent=1 // loop_body
      %s21 = ssub.s32 %s16, 1
      %s22 = ssub.s32 %s16, 2
      %s23 = sadd.s32 %s16, 1
      %s24 = ssub.s32 %s16, %s23
      %p25 = scmp.eq.s32.totalorder %s24, 0
      %s27 = sadd.s32 %s26, 1
      %s28 = scalar_select %p25, %s26, %s27
      %p31 = pneg %p25
      %p32 = scmp.eq.s32.totalorder %s16, 1
      %p33 = por %p31, %p32
      %p34 = scmp.ne.s32.totalorder %s26, %s29
      %p35 = scmp.eq.s32.totalorder %s16, 0
      %p36 = por %p34, %p35
      %p37 = scmp.ne.s32.totalorder %s26, %s29
      %p38 = scmp.eq.s32.totalorder %s21, 1
      %p39 = por %p37, %p38
      %p40 = scmp.ne.s32.totalorder %s29, %s30
      %p41 = scmp.eq.s32.totalorder %s21, 0
      %p42 = por %p40, %p41
      %p43 = scmp.ne.s32.totalorder %s29, %s30
      %p44 = scmp.eq.s32.totalorder %s22, 1
      %p45 = por %p43, %p44
      %p47 = scmp.ne.s32.totalorder %s30, %s46
      %p48 = scmp.eq.s32.totalorder %s22, 0
      %p49 = por %p47, %p48
      %s50 = ssub.s32 %s16, %s23
      %p51 = scmp.eq.s32.totalorder %s50, 0
      %s53 = sadd.s32 %s52, 1
      %s54 = scalar_select %p51, %s52, %s53
      %p57 = pneg %p51
      %p58 = scmp.eq.s32.totalorder %s16, 1
      %p59 = por %p57, %p58
      %p60 = scmp.ne.s32.totalorder %s52, %s55
      %p61 = scmp.eq.s32.totalorder %s16, 0
      %p62 = por %p60, %p61
      %p63 = scmp.ne.s32.totalorder %s52, %s55
      %p64 = scmp.eq.s32.totalorder %s21, 1
      %p65 = por %p63, %p64
      %p66 = scmp.ne.s32.totalorder %s55, %s56
      %p67 = scmp.eq.s32.totalorder %s21, 0
      %p68 = por %p66, %p67
      %p69 = scmp.ne.s32.totalorder %s55, %s56
      %p70 = scmp.eq.s32.totalorder %s22, 1
      %p71 = por %p69, %p70
      %p73 = scmp.ne.s32.totalorder %s56, %s72
      %p74 = scmp.eq.s32.totalorder %s22, 0
      %p75 = por %p73, %p74
      %s77 = sadd.s32 %s76, 1
      %p80 = scmp.eq.s32.totalorder %s16, 1
      %p81 = scmp.ne.s32.totalorder %s76, %s78
      %p82 = scmp.eq.s32.totalorder %s16, 0
      %p83 = por %p81, %p82
      %p84 = scmp.ne.s32.totalorder %s76, %s78
      %p85 = scmp.eq.s32.totalorder %s21, 1
      %p86 = por %p84, %p85
      %p87 = scmp.ne.s32.totalorder %s78, %s79
      %p88 = scmp.eq.s32.totalorder %s21, 0
      %p89 = por %p87, %p88
      %p90 = scmp.ne.s32.totalorder %s78, %s79
      %p91 = scmp.eq.s32.totalorder %s22, 1
      %p92 = por %p90, %p91
      %p94 = scmp.ne.s32.totalorder %s79, %s93
      %p95 = scmp.eq.s32.totalorder %s22, 0
      %p96 = por %p94, %p95
      %s98 = sadd.s32 %s97, 1
      %p101 = scmp.eq.s32.totalorder %s16, 1
      %p102 = scmp.ne.s32.totalorder %s97, %s99
      %p103 = scmp.eq.s32.totalorder %s16, 0
      %p104 = por %p102, %p103
      %p105 = scmp.ne.s32.totalorder %s97, %s99
      %p106 = scmp.eq.s32.totalorder %s21, 1
      %p107 = por %p105, %p106
      %p108 = scmp.ne.s32.totalorder %s99, %s100
      %p109 = scmp.eq.s32.totalorder %s21, 0
      %p110 = por %p108, %p109
      %p111 = scmp.ne.s32.totalorder %s99, %s100
      %p112 = scmp.eq.s32.totalorder %s22, 1
      %p113 = por %p111, %p112
      %p115 = scmp.ne.s32.totalorder %s100, %s114
      %p116 = scmp.eq.s32.totalorder %s22, 0
      %p117 = por %p115, %p116
      %s119 = sadd.s32 %s118, 1
      %p122 = scmp.eq.s32.totalorder %s16, 1
      %p123 = scmp.ne.s32.totalorder %s118, %s120
      %p124 = scmp.eq.s32.totalorder %s16, 0
      %p125 = por %p123, %p124
      %p126 = scmp.ne.s32.totalorder %s118, %s120
      %p127 = scmp.eq.s32.totalorder %s21, 1
      %p128 = por %p126, %p127
      %p129 = scmp.ne.s32.totalorder %s120, %s121
      %p130 = scmp.eq.s32.totalorder %s21, 0
      %p131 = por %p129, %p130
      %p132 = scmp.ne.s32.totalorder %s120, %s121
      %p133 = scmp.eq.s32.totalorder %s22, 1
      %p134 = por %p132, %p133
      %p136 = scmp.ne.s32.totalorder %s121, %s135
      %p137 = scmp.eq.s32.totalorder %s22, 0
      %p138 = por %p136, %p137
      %s140 = sadd.s32 %s139, 1
      %p143 = scmp.eq.s32.totalorder %s16, 1
      %p144 = scmp.ne.s32.totalorder %s139, %s141
      %p145 = scmp.eq.s32.totalorder %s16, 0
      %p146 = por %p144, %p145
      %p147 = scmp.ne.s32.totalorder %s139, %s141
      %p148 = scmp.eq.s32.totalorder %s21, 1
      %p149 = por %p147, %p148
      %p150 = scmp.ne.s32.totalorder %s141, %s142
      %p151 = scmp.eq.s32.totalorder %s21, 0
      %p152 = por %p150, %p151
      %p153 = scmp.ne.s32.totalorder %s141, %s142
      %p154 = scmp.eq.s32.totalorder %s22, 1
      %p155 = por %p153, %p154
      %p157 = scmp.ne.s32.totalorder %s142, %s156
      %p158 = scmp.eq.s32.totalorder %s22, 0
      %p159 = por %p157, %p158
      %s161 = sadd.s32 %s160, 1
      %p164 = scmp.eq.s32.totalorder %s16, 1
      %p165 = scmp.ne.s32.totalorder %s160, %s162
      %p166 = scmp.eq.s32.totalorder %s16, 0
      %p167 = por %p165, %p166
      %p168 = scmp.ne.s32.totalorder %s160, %s162
      %p169 = scmp.eq.s32.totalorder %s21, 1
      %p170 = por %p168, %p169
      %p171 = scmp.ne.s32.totalorder %s162, %s163
      %p172 = scmp.eq.s32.totalorder %s21, 0
      %p173 = por %p171, %p172
      %p174 = scmp.ne.s32.totalorder %s162, %s163
      %p175 = scmp.eq.s32.totalorder %s22, 1
      %p176 = por %p174, %p175
      %p178 = scmp.ne.s32.totalorder %s163, %s177
      %p179 = scmp.eq.s32.totalorder %s22, 0
      %p180 = por %p178, %p179
      %s181 = ssub.s32 %s16, %s23
      %p182 = scmp.eq.s32.totalorder %s181, 0
      %s184 = sadd.s32 %s183, 1
      %s185 = scalar_select %p182, %s183, %s184
      %p188 = pneg %p182
      %p189 = scmp.eq.s32.totalorder %s16, 1
      %p190 = por %p188, %p189
      %p191 = scmp.ne.s32.totalorder %s183, %s186
      %p192 = scmp.eq.s32.totalorder %s16, 0
      %p193 = por %p191, %p192
      %p194 = scmp.ne.s32.totalorder %s183, %s186
      %p195 = scmp.eq.s32.totalorder %s21, 1
      %p196 = por %p194, %p195
      %p197 = scmp.ne.s32.totalorder %s186, %s187
      %p198 = scmp.eq.s32.totalorder %s21, 0
      %p199 = por %p197, %p198
      %p200 = scmp.ne.s32.totalorder %s186, %s187
      %p201 = scmp.eq.s32.totalorder %s22, 1
      %p202 = por %p200, %p201
      %p204 = scmp.ne.s32.totalorder %s187, %s203
      %p205 = scmp.eq.s32.totalorder %s22, 0
      %p206 = por %p204, %p205
      %p207 = scmp.le.s32.totalorder 1, %s16
      %p208 = scmp.lt.s32.totalorder %s16, 3
      %p209 = pnand %p207, %p208
      %p210 = pneg %p209
      // Predicated region
      $region9: #{_lambda_.3} parent=5 // pred_check
        _
      $region10: #{_lambda_.3} parent=5 // pred_check_branch
        %212 = sbr.rel (%p209) target = $region12
      $region11: #{_lambda_.3} parent=5 // pred_region
        %s213 = ssub.s32 %s16, 1
        // Predicated region
        $region13: #{_lambda_.3} parent=11 // pred_check
          %p214 = pneg %p89
        $region14: #{_lambda_.3} parent=11 // pred_check_branch
          %216 = sbr.rel (%p214) target = $region16
        $region15: #{_lambda_.3} parent=11 // pred_region
          _
        $region16: #{_lambda_.3} parent=11 // pred_fallthru
          _
        // Predicated region
        $region17: #{_lambda_.3} parent=11 // pred_check
          %p217 = pneg %p110
        $region18: #{_lambda_.3} parent=11 // pred_check_branch
          %219 = sbr.rel (%p217) target = $region20
        $region19: #{_lambda_.3} parent=11 // pred_region
          _
        $region20: #{_lambda_.3} parent=11 // pred_fallthru
          _
        // Predicated region
        $region21: #{_lambda_.3} parent=11 // pred_check
          %p220 = pneg %p131
        $region22: #{_lambda_.3} parent=11 // pred_check_branch
          %222 = sbr.rel (%p220) target = $region24
        $region23: #{_lambda_.3} parent=11 // pred_region
          _
        $region24: #{_lambda_.3} parent=11 // pred_fallthru
          _
        // Predicated region
        $region25: #{_lambda_.3} parent=11 // pred_check
          %p223 = pneg %p152
        $region26: #{_lambda_.3} parent=11 // pred_check_branch
          %225 = sbr.rel (%p223) target = $region28
        $region27: #{_lambda_.3} parent=11 // pred_region
          _
        $region28: #{_lambda_.3} parent=11 // pred_fallthru
          _
        // Predicated region
        $region29: #{_lambda_.3} parent=11 // pred_check
          %p226 = pneg %p173
        $region30: #{_lambda_.3} parent=11 // pred_check_branch
          %228 = sbr.rel (%p226) target = $region32
        $region31: #{_lambda_.3} parent=11 // pred_region
          _
        $region32: #{_lambda_.3} parent=11 // pred_fallthru
          _
      $region12: #{_lambda_.3} parent=5 // pred_fallthru
        _
      %p229 = scmp.lt.s32.totalorder %s16, 2
      // Predicated region
      $region33: #{_lambda_.3} parent=5 // pred_check
        %p230 = pneg %p229
      $region34: #{_lambda_.3} parent=5 // pred_check_branch
        %232 = sbr.rel (%p230) target = $region36
      $region35: #{_lambda_.3} parent=5 // pred_region
        // Predicated region
        $region37: #{_lambda_.3} parent=35 // pred_check
          %p233 = pneg %p36
        $region38: #{_lambda_.3} parent=35 // pred_check_branch
          %235 = sbr.rel (%p233) target = $region40
        $region39: #{_lambda_.3} parent=35 // pred_region
          %p236 = scmp.lt.s32.totalorder %s16, 1
          %s237 = scalar_select %p236, %s16, 1
          %s238 = smul.addr %s237, 18
          %s239 = smul.addr %s238, 8
          %s240 = scalar_lea.vmem %s0, %s239
        $region40: #{_lambda_.3} parent=35 // pred_fallthru
          _
        // Predicated region
        $region41: #{_lambda_.3} parent=35 // pred_check
          %p241 = pneg %p62
        $region42: #{_lambda_.3} parent=35 // pred_check_branch
          %243 = sbr.rel (%p241) target = $region44
        $region43: #{_lambda_.3} parent=35 // pred_region
          %p244 = scmp.lt.s32.totalorder %s16, 1
          %s245 = scalar_select %p244, %s16, 1
          %s246 = smul.addr %s245, 18
          %s247 = smul.addr %s246, 8
          %s248 = scalar_lea.vmem %s1, %s247
        $region44: #{_lambda_.3} parent=35 // pred_fallthru
          _
      $region36: #{_lambda_.3} parent=5 // pred_fallthru
        _
      %p249 = scmp.le.s32.totalorder 1, %s16
      %p250 = scmp.lt.s32.totalorder %s16, 3
      %p251 = pnand %p249, %p250
      %p252 = pneg %p251
      // Predicated region
      $region45: #{_lambda_.3} parent=5 // pred_check
        _
      $region46: #{_lambda_.3} parent=5 // pred_check_branch
        %254 = sbr.rel (%p251) target = $region48
      $region47: #{_lambda_.3} parent=5 // pred_region
        %s255 = ssub.s32 %s16, 1
        %p256 = scmp.lt.s32.totalorder %s21, 1
        %s257 = scalar_select %p256, %s21, 1
        %s258 = smul.addr %s257, 18
        %s259 = smul.addr %s258, 8
        %s260 = scalar_lea.vmem %s0, %s259
        %p261 = pneg %p42
        %p262 = pneg %p39
        %p263 = scmp.lt.s32.totalorder %s21, 1
        %s264 = scalar_select %p263, %s21, 1
        %s265 = smul.addr %s264, 18
        %s266 = smul.addr %s265, 8
        %s267 = scalar_lea.vmem %s1, %s266
        %p268 = pneg %p68
        %p269 = pneg %p65
        %p270 = pneg %p89
        %p271 = pneg %p86
        %p272 = pneg %p110
        %p273 = pneg %p107
        %p274 = pneg %p131
        %p275 = pneg %p128
        %p276 = pneg %p152
        %p277 = pneg %p149
        %p278 = pneg %p173
        %p279 = pneg %p170
        %p280 = pneg %p199
        %p281 = pneg %p196
        %s282 = sand.u32 %s186, 1
        %s283 = scalar_lea.sflag [#allocation3], %s282
        %s284 = sand.u32 %s186, 1
        %s285 = smul.addr %s284, 64
        %s286 = scalar_lea.vmem [#allocation2], %s285
        %p287 = scmp.lt.s32.totalorder %s21, 1
        %s288 = scalar_select %p287, %s21, 1
        %s289 = smul.addr %s288, 18
        %s290 = smul.addr %s289, 8
        %s291 = scalar_lea.vmem %s0, %s290
        %p292 = scmp.lt.s32.totalorder %s21, 1
        %s293 = scalar_select %p292, %s21, 1
        %s294 = smul.addr %s293, 18
        %s295 = smul.addr %s294, 8
        %s296 = scalar_lea.vmem %s1, %s295
        %v297 = vld [vmem:[%s291] sm:$0xff]
        %v298 = vld [vmem:[%s291 + $0x10] sm:$0xff]
        %v299 = vld [vmem:[%s291 + $0x20] sm:$0xff]
        %v300 = vld [vmem:[%s291 + $0x30] sm:$0xff]
        %v301 = vld [vmem:[%s291 + $0x40] sm:$0xff]
        %v302 = vld [vmem:[%s291 + $0x50] sm:$0xff]
        %v303 = vld [vmem:[%s291 + $0x60] sm:$0xff]
        %v304 = vld [vmem:[%s291 + $0x70] sm:$0xff]
        %v305 = vld [vmem:[%s296] sm:$0xff]
        %v306 = vld [vmem:[%s296 + $0x10] sm:$0xff]
        %v307 = vld [vmem:[%s296 + $0x20] sm:$0xff]
        %v308 = vld [vmem:[%s296 + $0x30] sm:$0xff]
        %v309 = vld [vmem:[%s296 + $0x40] sm:$0xff]
        %v310 = vld [vmem:[%s296 + $0x50] sm:$0xff]
        %v311 = vld [vmem:[%s296 + $0x60] sm:$0xff]
        %v312 = vld [vmem:[%s296 + $0x70] sm:$0xff]
        %v313 = vld [vmem:[%s2] sm:$0xff]
        %v314 = vld [vmem:[%s2 + $0x8] sm:$0xff]
        %v315 = vld [vmem:[%s2 + $0x10] sm:$0xff]
        %v316 = vld [vmem:[%s2 + $0x18] sm:$0xff]
        %v317 = vld [vmem:[%s2 + $0x20] sm:$0xff]
        %v318 = vld [vmem:[%s2 + $0x28] sm:$0xff]
        %v319 = vld [vmem:[%s2 + $0x30] sm:$0xff]
        %v320 = vld [vmem:[%s2 + $0x38] sm:$0xff]
        %v321 = vld [vmem:[%s2 + $0x40] sm:$0xff]
        %v322 = vld [vmem:[%s2 + $0x48] sm:$0xff]
        %v323 = vld [vmem:[%s2 + $0x50] sm:$0xff]
        %v324 = vld [vmem:[%s2 + $0x58] sm:$0xff]
        %v325 = vld [vmem:[%s2 + $0x60] sm:$0xff]
        %v326 = vld [vmem:[%s2 + $0x68] sm:$0xff]
        %v327 = vld [vmem:[%s2 + $0x70] sm:$0xff]
        %v328 = vld [vmem:[%s2 + $0x78] sm:$0xff]
        %v329 = vld [vmem:[%s3] sm:$0xff]
        %v330 = vld [vmem:[%s3 + $0x8] sm:$0xff]
        %v331 = vld [vmem:[%s3 + $0x10] sm:$0xff]
        %v332 = vld [vmem:[%s3 + $0x18] sm:$0xff]
        %v333 = vld [vmem:[%s3 + $0x20] sm:$0xff]
        %v334 = vld [vmem:[%s3 + $0x28] sm:$0xff]
        %v335 = vld [vmem:[%s3 + $0x30] sm:$0xff]
        %v336 = vld [vmem:[%s3 + $0x38] sm:$0xff]
        %v337 = vld [vmem:[%s3 + $0x40] sm:$0xff]
        %v338 = vld [vmem:[%s3 + $0x48] sm:$0xff]
        %v339 = vld [vmem:[%s3 + $0x50] sm:$0xff]
        %v340 = vld [vmem:[%s3 + $0x58] sm:$0xff]
        %v341 = vld [vmem:[%s3 + $0x60] sm:$0xff]
        %v342 = vld [vmem:[%s3 + $0x68] sm:$0xff]
        %v343 = vld [vmem:[%s3 + $0x70] sm:$0xff]
        %v344 = vld [vmem:[%s3 + $0x78] sm:$0xff]
        %345 = vmatprep.subr.mxu0 0.0
        %346 = vmatpush1.msra.mxu0 %v329
        %347 = vmatprep.subr.mxu0 0.0
        %348 = vmatpush1.msra.mxu0 %v330
        %349 = vmatprep.subr.mxu0 0.0
        %350 = vmatpush1.msra.mxu0 %v331
        %351 = vmatprep.subr.mxu0 0.0
        %352 = vmatpush1.msra.mxu0 %v332
        %353 = vmatprep.subr.mxu0 0.0
        %354 = vmatpush1.msra.mxu0 %v333
        %355 = vmatprep.subr.mxu0 0.0
        %356 = vmatpush1.msra.mxu0 %v334
        %357 = vmatprep.subr.mxu0 0.0
        %358 = vmatpush1.msra.mxu0 %v335
        %359 = vmatprep.subr.mxu0 0.0
        %360 = vmatpush1.msra.mxu0 %v336
        %361 = vmatprep.subr.mxu0 0.0
        %362 = vmatpush1.msra.mxu0 %v337
        %363 = vmatprep.subr.mxu0 0.0
        %364 = vmatpush1.msra.mxu0 %v338
        %365 = vmatprep.subr.mxu0 0.0
        %366 = vmatpush1.msra.mxu0 %v339
        %367 = vmatprep.subr.mxu0 0.0
        %368 = vmatpush1.msra.mxu0 %v340
        %369 = vmatprep.subr.mxu0 0.0
        %370 = vmatpush1.msra.mxu0 %v341
        %371 = vmatprep.subr.mxu0 0.0
        %372 = vmatpush1.msra.mxu0 %v342
        %373 = vmatprep.subr.mxu0 0.0
        %374 = vmatpush1.msra.mxu0 %v343
        %375 = vmatprep.subr.mxu0 0.0
        %376 = vmatpush1.msra.mxu0 %v344
        %377 = vmatprep.subr.mxu0 0.0
        %378 = vmatpush1.msra.mxu0 0.0
        %379 = vmatprep.subr.mxu0 0.0
        %380 = vmatpush1.msra.mxu0 0.0
        %381 = vmatprep.subr.mxu0 0.0
        %382 = vmatpush1.msra.mxu0 0.0
        %383 = vmatprep.subr.mxu0 0.0
        %384 = vmatpush1.msra.mxu0 0.0
        %385 = vmatprep.subr.mxu0 0.0
        %386 = vmatpush1.msra.mxu0 0.0
        %387 = vmatprep.subr.mxu0 0.0
        %388 = vmatpush1.msra.mxu0 0.0
        %389 = vmatprep.subr.mxu0 0.0
        %390 = vmatpush1.msra.mxu0 0.0
        %391 = vmatprep.subr.mxu0 0.0
        %392 = vmatpush1.msra.mxu0 0.0
        %393 = vmatprep.subr.mxu0 0.0
        %394 = vmatpush1.msra.mxu0 0.0
        %395 = vmatprep.subr.mxu0 0.0
        %396 = vmatpush1.msra.mxu0 0.0
        %397 = vmatprep.subr.mxu0 0.0
        %398 = vmatpush1.msra.mxu0 0.0
        %399 = vmatprep.subr.mxu0 0.0
        %400 = vmatpush1.msra.mxu0 0.0
        %401 = vmatprep.subr.mxu0 0.0
        %402 = vmatpush1.msra.mxu0 0.0
        %403 = vmatprep.subr.mxu0 0.0
        %404 = vmatpush1.msra.mxu0 0.0
        %405 = vmatprep.subr.mxu0 0.0
        %406 = vmatpush1.msra.mxu0 0.0
        %407 = vmatprep.subr.mxu0 0.0
        %408 = vmatpush1.msra.mxu0 0.0
        %409 = vmatprep.mubr.f32.mxu0 0.0
        %410 = vmatmul.mubr.f32.gmra.mrb[0].mxu0 %v305
        %v411 = vpop.f32.mrb[0].mxu0
        %v412 = vadd.f32 0.0, %v411
        %v413 = vpop.f32.mrb[0].mxu0
        %414 = vmatprep.mubr.f32.mxu0 0.0
        %415 = vmatmul.mubr.f32.gmra.mrb[0].mxu0 %v306
        %v416 = vpop.f32.mrb[0].mxu0
        %v417 = vadd.f32 0.0, %v416
        %v418 = vpop.f32.mrb[0].mxu0
        %419 = vmatprep.mubr.f32.mxu0 0.0
        %420 = vmatmul.mubr.f32.gmra.mrb[0].mxu0 %v307
        %v421 = vpop.f32.mrb[0].mxu0
        %v422 = vadd.f32 0.0, %v421
        %v423 = vpop.f32.mrb[0].mxu0
        %424 = vmatprep.mubr.f32.mxu0 0.0
        %425 = vmatmul.mubr.f32.gmra.mrb[0].mxu0 %v308
        %v426 = vpop.f32.mrb[0].mxu0
        %v427 = vadd.f32 0.0, %v426
        %v428 = vpop.f32.mrb[0].mxu0
        %429 = vmatprep.mubr.f32.mxu0 0.0
        %430 = vmatmul.mubr.f32.gmra.mrb[0].mxu0 %v309
        %v431 = vpop.f32.mrb[0].mxu0
        %v432 = vadd.f32 0.0, %v431
        %v433 = vpop.f32.mrb[0].mxu0
        %434 = vmatprep.mubr.f32.mxu0 0.0
        %435 = vmatmul.mubr.f32.gmra.mrb[0].mxu0 %v310
        %v436 = vpop.f32.mrb[0].mxu0
        %v437 = vadd.f32 0.0, %v436
        %v438 = vpop.f32.mrb[0].mxu0
        %439 = vmatprep.mubr.f32.mxu0 0.0
        %440 = vmatmul.mubr.f32.gmra.mrb[0].mxu0 %v311
        %v441 = vpop.f32.mrb[0].mxu0
        %v442 = vadd.f32 0.0, %v441
        %v443 = vpop.f32.mrb[0].mxu0
        %444 = vmatprep.mubr.f32.mxu0 0.0
        %445 = vmatmul.mubr.f32.gmra.mrb[0].mxu0 %v312
        %v446 = vpop.f32.mrb[0].mxu0
        %v447 = vadd.f32 0.0, %v446
        %v448 = vpop.f32.mrb[0].mxu0
        %449 = vdwg.mxu0
        %450 = vmatprep.subr.mxu0 0.0
        %451 = vmatpush1.msra.mxu0 %v313
        %452 = vmatprep.subr.mxu0 0.0
        %453 = vmatpush1.msra.mxu0 %v314
        %454 = vmatprep.subr.mxu0 0.0
        %455 = vmatpush1.msra.mxu0 %v315
        %456 = vmatprep.subr.mxu0 0.0
        %457 = vmatpush1.msra.mxu0 %v316
        %458 = vmatprep.subr.mxu0 0.0
        %459 = vmatpush1.msra.mxu0 %v317
        %460 = vmatprep.subr.mxu0 0.0
        %461 = vmatpush1.msra.mxu0 %v318
        %462 = vmatprep.subr.mxu0 0.0
        %463 = vmatpush1.msra.mxu0 %v319
        %464 = vmatprep.subr.mxu0 0.0
        %465 = vmatpush1.msra.mxu0 %v320
        %466 = vmatprep.subr.mxu0 0.0
        %467 = vmatpush1.msra.mxu0 %v321
        %468 = vmatprep.subr.mxu0 0.0
        %469 = vmatpush1.msra.mxu0 %v322
        %470 = vmatprep.subr.mxu0 0.0
        %471 = vmatpush1.msra.mxu0 %v323
        %472 = vmatprep.subr.mxu0 0.0
        %473 = vmatpush1.msra.mxu0 %v324
        %474 = vmatprep.subr.mxu0 0.0
        %475 = vmatpush1.msra.mxu0 %v325
        %476 = vmatprep.subr.mxu0 0.0
        %477 = vmatpush1.msra.mxu0 %v326
        %478 = vmatprep.subr.mxu0 0.0
        %479 = vmatpush1.msra.mxu0 %v327
        %480 = vmatprep.subr.mxu0 0.0
        %481 = vmatpush1.msra.mxu0 %v328
        %482 = vmatprep.subr.mxu0 0.0
        %483 = vmatpush1.msra.mxu0 0.0
        %484 = vmatprep.subr.mxu0 0.0
        %485 = vmatpush1.msra.mxu0 0.0
        %486 = vmatprep.subr.mxu0 0.0
        %487 = vmatpush1.msra.mxu0 0.0
        %488 = vmatprep.subr.mxu0 0.0
        %489 = vmatpush1.msra.mxu0 0.0
        %490 = vmatprep.subr.mxu0 0.0
        %491 = vmatpush1.msra.mxu0 0.0
        %492 = vmatprep.subr.mxu0 0.0
        %493 = vmatpush1.msra.mxu0 0.0
        %494 = vmatprep.subr.mxu0 0.0
        %495 = vmatpush1.msra.mxu0 0.0
        %496 = vmatprep.subr.mxu0 0.0
        %497 = vmatpush1.msra.mxu0 0.0
        %498 = vmatprep.subr.mxu0 0.0
        %499 = vmatpush1.msra.mxu0 0.0
        %500 = vmatprep.subr.mxu0 0.0
        %501 = vmatpush1.msra.mxu0 0.0
        %502 = vmatprep.subr.mxu0 0.0
        %503 = vmatpush1.msra.mxu0 0.0
        %504 = vmatprep.subr.mxu0 0.0
        %505 = vmatpush1.msra.mxu0 0.0
        %506 = vmatprep.subr.mxu0 0.0
        %507 = vmatpush1.msra.mxu0 0.0
        %508 = vmatprep.subr.mxu0 0.0
        %509 = vmatpush1.msra.mxu0 0.0
        %510 = vmatprep.subr.mxu0 0.0
        %511 = vmatpush1.msra.mxu0 0.0
        %512 = vmatprep.subr.mxu0 0.0
        %513 = vmatpush1.msra.mxu0 0.0
        %514 = vmatprep.mubr.f32.mxu0 0.0
        %515 = vmatmul.mubr.f32.gmra.mrb[0].mxu0 %v297
        %v516 = vpop.f32.mrb[0].mxu0
        %v517 = vadd.f32 %v412, %v516
        %v518 = vpop.f32.mrb[0].mxu0
        %519 = vmatprep.mubr.f32.mxu0 0.0
        %520 = vmatmul.mubr.f32.gmra.mrb[0].mxu0 %v298
        %v521 = vpop.f32.mrb[0].mxu0
        %v522 = vadd.f32 %v417, %v521
        %v523 = vpop.f32.mrb[0].mxu0
        %524 = vmatprep.mubr.f32.mxu0 0.0
        %525 = vmatmul.mubr.f32.gmra.mrb[0].mxu0 %v299
        %v526 = vpop.f32.mrb[0].mxu0
        %v527 = vadd.f32 %v422, %v526
        %v528 = vpop.f32.mrb[0].mxu0
        %529 = vmatprep.mubr.f32.mxu0 0.0
        %530 = vmatmul.mubr.f32.gmra.mrb[0].mxu0 %v300
        %v531 = vpop.f32.mrb[0].mxu0
        %v532 = vadd.f32 %v427, %v531
        %v533 = vpop.f32.mrb[0].mxu0
        %534 = vmatprep.mubr.f32.mxu0 0.0
        %535 = vmatmul.mubr.f32.gmra.mrb[0].mxu0 %v301
        %v536 = vpop.f32.mrb[0].mxu0
        %v537 = vadd.f32 %v432, %v536
        %v538 = vpop.f32.mrb[0].mxu0
        %539 = vmatprep.mubr.f32.mxu0 0.0
        %540 = vmatmul.mubr.f32.gmra.mrb[0].mxu0 %v302
        %v541 = vpop.f32.mrb[0].mxu0
        %v542 = vadd.f32 %v437, %v541
        %v543 = vpop.f32.mrb[0].mxu0
        %544 = vmatprep.mubr.f32.mxu0 0.0
        %545 = vmatmul.mubr.f32.gmra.mrb[0].mxu0 %v303
        %v546 = vpop.f32.mrb[0].mxu0
        %v547 = vadd.f32 %v442, %v546
        %v548 = vpop.f32.mrb[0].mxu0
        %549 = vmatprep.mubr.f32.mxu0 0.0
        %550 = vmatmul.mubr.f32.gmra.mrb[0].mxu0 %v304
        %v551 = vpop.f32.mrb[0].mxu0
        %v552 = vadd.f32 %v447, %v551
        %v553 = vpop.f32.mrb[0].mxu0
        %554 = vdwg.mxu0
        %v555 = vld [vmem:[%s291 + $0x1] sm:$0xff]
        %v556 = vld [vmem:[%s291 + $0x11] sm:$0xff]
        %v557 = vld [vmem:[%s291 + $0x21] sm:$0xff]
        %v558 = vld [vmem:[%s291 + $0x31] sm:$0xff]
        %v559 = vld [vmem:[%s291 + $0x41] sm:$0xff]
        %v560 = vld [vmem:[%s291 + $0x51] sm:$0xff]
        %v561 = vld [vmem:[%s291 + $0x61] sm:$0xff]
        %v562 = vld [vmem:[%s291 + $0x71] sm:$0xff]
        %v563 = vld [vmem:[%s296 + $0x1] sm:$0xff]
        %v564 = vld [vmem:[%s296 + $0x11] sm:$0xff]
        %v565 = vld [vmem:[%s296 + $0x21] sm:$0xff]
        %v566 = vld [vmem:[%s296 + $0x31] sm:$0xff]
        %v567 = vld [vmem:[%s296 + $0x41] sm:$0xff]
        %v568 = vld [vmem:[%s296 + $0x51] sm:$0xff]
        %v569 = vld [vmem:[%s296 + $0x61] sm:$0xff]
        %v570 = vld [vmem:[%s296 + $0x71] sm:$0xff]
        %s571 = scalar_lea.vmem %s2, 128
        %v572 = vld [vmem:[%s571] sm:$0xff]
        %v573 = vld [vmem:[%s571 + $0x8] sm:$0xff]
        %v574 = vld [vmem:[%s571 + $0x10] sm:$0xff]
        %v575 = vld [vmem:[%s571 + $0x18] sm:$0xff]
        %v576 = vld [vmem:[%s571 + $0x20] sm:$0xff]
        %v577 = vld [vmem:[%s571 + $0x28] sm:$0xff]
        %v578 = vld [vmem:[%s571 + $0x30] sm:$0xff]
        %v579 = vld [vmem:[%s571 + $0x38] sm:$0xff]
        %v580 = vld [vmem:[%s571 + $0x40] sm:$0xff]
        %v581 = vld [vmem:[%s571 + $0x48] sm:$0xff]
        %v582 = vld [vmem:[%s571 + $0x50] sm:$0xff]
        %v583 = vld [vmem:[%s571 + $0x58] sm:$0xff]
        %v584 = vld [vmem:[%s571 + $0x60] sm:$0xff]
        %v585 = vld [vmem:[%s571 + $0x68] sm:$0xff]
        %v586 = vld [vmem:[%s571 + $0x70] sm:$0xff]
        %v587 = vld [vmem:[%s571 + $0x78] sm:$0xff]
        %588 = vmatprep.subr.mxu0 0.0
        %589 = vmatpush1.msra.mxu0 %v572
        %590 = vmatprep.subr.mxu0 0.0
        %591 = vmatpush1.msra.mxu0 %v573
        %592 = vmatprep.subr.mxu0 0.0
        %593 = vmatpush1.msra.mxu0 %v574
        %594 = vmatprep.subr.mxu0 0.0
        %595 = vmatpush1.msra.mxu0 %v575
        %596 = vmatprep.subr.mxu0 0.0
        %597 = vmatpush1.msra.mxu0 %v576
        %598 = vmatprep.subr.mxu0 0.0
        %599 = vmatpush1.msra.mxu0 %v577
        %600 = vmatprep.subr.mxu0 0.0
        %601 = vmatpush1.msra.mxu0 %v578
        %602 = vmatprep.subr.mxu0 0.0
        %603 = vmatpush1.msra.mxu0 %v579
        %604 = vmatprep.subr.mxu0 0.0
        %605 = vmatpush1.msra.mxu0 %v580
        %606 = vmatprep.subr.mxu0 0.0
        %607 = vmatpush1.msra.mxu0 %v581
        %608 = vmatprep.subr.mxu0 0.0
        %609 = vmatpush1.msra.mxu0 %v582
        %610 = vmatprep.subr.mxu0 0.0
        %611 = vmatpush1.msra.mxu0 %v583
        %612 = vmatprep.subr.mxu0 0.0
        %613 = vmatpush1.msra.mxu0 %v584
        %614 = vmatprep.subr.mxu0 0.0
        %615 = vmatpush1.msra.mxu0 %v585
        %616 = vmatprep.subr.mxu0 0.0
        %617 = vmatpush1.msra.mxu0 %v586
        %618 = vmatprep.subr.mxu0 0.0
        %619 = vmatpush1.msra.mxu0 %v587
        %620 = vmatprep.subr.mxu0 0.0
        %621 = vmatpush1.msra.mxu0 0.0
        %622 = vmatprep.subr.mxu0 0.0
        %623 = vmatpush1.msra.mxu0 0.0
        %624 = vmatprep.subr.mxu0 0.0
        %625 = vmatpush1.msra.mxu0 0.0
        %626 = vmatprep.subr.mxu0 0.0
        %627 = vmatpush1.msra.mxu0 0.0
        %628 = vmatprep.subr.mxu0 0.0
        %629 = vmatpush1.msra.mxu0 0.0
        %630 = vmatprep.subr.mxu0 0.0
        %631 = vmatpush1.msra.mxu0 0.0
        %632 = vmatprep.subr.mxu0 0.0
        %633 = vmatpush1.msra.mxu0 0.0
        %634 = vmatprep.subr.mxu0 0.0
        %635 = vmatpush1.msra.mxu0 0.0
        %636 = vmatprep.subr.mxu0 0.0
        %637 = vmatpush1.msra.mxu0 0.0
        %638 = vmatprep.subr.mxu0 0.0
        %639 = vmatpush1.msra.mxu0 0.0
        %640 = vmatprep.subr.mxu0 0.0
        %641 = vmatpush1.msra.mxu0 0.0
        %642 = vmatprep.subr.mxu0 0.0
        %643 = vmatpush1.msra.mxu0 0.0
        %644 = vmatprep.subr.mxu0 0.0
        %645 = vmatpush1.msra.mxu0 0.0
        %646 = vmatprep.subr.mxu0 0.0
        %647 = vmatpush1.msra.mxu0 0.0
        %648 = vmatprep.subr.mxu0 0.0
        %649 = vmatpush1.msra.mxu0 0.0
        %650 = vmatprep.subr.mxu0 0.0
        %651 = vmatpush1.msra.mxu0 0.0
        %652 = vmatprep.mubr.f32.mxu0 0.0
        %653 = vmatmul.mubr.f32.gmra.mrb[0].mxu0 %v555
        %v654 = vpop.f32.mrb[0].mxu0
        %v655 = vadd.f32 0.0, %v654
        %v656 = vpop.f32.mrb[0].mxu0
        %657 = vmatprep.mubr.f32.mxu0 0.0
        %658 = vmatmul.mubr.f32.gmra.mrb[0].mxu0 %v556
        %v659 = vpop.f32.mrb[0].mxu0
        %v660 = vadd.f32 0.0, %v659
        %v661 = vpop.f32.mrb[0].mxu0
        %662 = vmatprep.mubr.f32.mxu0 0.0
        %663 = vmatmul.mubr.f32.gmra.mrb[0].mxu0 %v557
        %v664 = vpop.f32.mrb[0].mxu0
        %v665 = vadd.f32 0.0, %v664
        %v666 = vpop.f32.mrb[0].mxu0
        %667 = vmatprep.mubr.f32.mxu0 0.0
        %668 = vmatmul.mubr.f32.gmra.mrb[0].mxu0 %v558
        %v669 = vpop.f32.mrb[0].mxu0
        %v670 = vadd.f32 0.0, %v669
        %v671 = vpop.f32.mrb[0].mxu0
        %672 = vmatprep.mubr.f32.mxu0 0.0
        %673 = vmatmul.mubr.f32.gmra.mrb[0].mxu0 %v559
        %v674 = vpop.f32.mrb[0].mxu0
        %v675 = vadd.f32 0.0, %v674
        %v676 = vpop.f32.mrb[0].mxu0
        %677 = vmatprep.mubr.f32.mxu0 0.0
        %678 = vmatmul.mubr.f32.gmra.mrb[0].mxu0 %v560
        %v679 = vpop.f32.mrb[0].mxu0
        %v680 = vadd.f32 0.0, %v679
        %v681 = vpop.f32.mrb[0].mxu0
        %682 = vmatprep.mubr.f32.mxu0 0.0
        %683 = vmatmul.mubr.f32.gmra.mrb[0].mxu0 %v561
        %v684 = vpop.f32.mrb[0].mxu0
        %v685 = vadd.f32 0.0, %v684
        %v686 = vpop.f32.mrb[0].mxu0
        %687 = vmatprep.mubr.f32.mxu0 0.0
        %688 = vmatmul.mubr.f32.gmra.mrb[0].mxu0 %v562
        %v689 = vpop.f32.mrb[0].mxu0
        %v690 = vadd.f32 0.0, %v689
        %v691 = vpop.f32.mrb[0].mxu0
        %692 = vdwg.mxu0
        %v693 = vadd.f32 %v517, %v655
        %v694 = vadd.f32 %v522, %v660
        %v695 = vadd.f32 %v527, %v665
        %v696 = vadd.f32 %v532, %v670
        %v697 = vadd.f32 %v537, %v675
        %v698 = vadd.f32 %v542, %v680
        %v699 = vadd.f32 %v547, %v685
        %v700 = vadd.f32 %v552, %v690
        %s701 = scalar_lea.vmem %s3, 128
        %v702 = vld [vmem:[%s701] sm:$0xff]
        %v703 = vld [vmem:[%s701 + $0x8] sm:$0xff]
        %v704 = vld [vmem:[%s701 + $0x10] sm:$0xff]
        %v705 = vld [vmem:[%s701 + $0x18] sm:$0xff]
        %v706 = vld [vmem:[%s701 + $0x20] sm:$0xff]
        %v707 = vld [vmem:[%s701 + $0x28] sm:$0xff]
        %v708 = vld [vmem:[%s701 + $0x30] sm:$0xff]
        %v709 = vld [vmem:[%s701 + $0x38] sm:$0xff]
        %v710 = vld [vmem:[%s701 + $0x40] sm:$0xff]
        %v711 = vld [vmem:[%s701 + $0x48] sm:$0xff]
        %v712 = vld [vmem:[%s701 + $0x50] sm:$0xff]
        %v713 = vld [vmem:[%s701 + $0x58] sm:$0xff]
        %v714 = vld [vmem:[%s701 + $0x60] sm:$0xff]
        %v715 = vld [vmem:[%s701 + $0x68] sm:$0xff]
        %v716 = vld [vmem:[%s701 + $0x70] sm:$0xff]
        %v717 = vld [vmem:[%s701 + $0x78] sm:$0xff]
        %718 = vmatprep.subr.mxu0 0.0
        %719 = vmatpush1.msra.mxu0 %v702
        %720 = vmatprep.subr.mxu0 0.0
        %721 = vmatpush1.msra.mxu0 %v703
        %722 = vmatprep.subr.mxu0 0.0
        %723 = vmatpush1.msra.mxu0 %v704
        %724 = vmatprep.subr.mxu0 0.0
        %725 = vmatpush1.msra.mxu0 %v705
        %726 = vmatprep.subr.mxu0 0.0
        %727 = vmatpush1.msra.mxu0 %v706
        %728 = vmatprep.subr.mxu0 0.0
        %729 = vmatpush1.msra.mxu0 %v707
        %730 = vmatprep.subr.mxu0 0.0
        %731 = vmatpush1.msra.mxu0 %v708
        %732 = vmatprep.subr.mxu0 0.0
        %733 = vmatpush1.msra.mxu0 %v709
        %734 = vmatprep.subr.mxu0 0.0
        %735 = vmatpush1.msra.mxu0 %v710
        %736 = vmatprep.subr.mxu0 0.0
        %737 = vmatpush1.msra.mxu0 %v711
        %738 = vmatprep.subr.mxu0 0.0
        %739 = vmatpush1.msra.mxu0 %v712
        %740 = vmatprep.subr.mxu0 0.0
        %741 = vmatpush1.msra.mxu0 %v713
        %742 = vmatprep.subr.mxu0 0.0
        %743 = vmatpush1.msra.mxu0 %v714
        %744 = vmatprep.subr.mxu0 0.0
        %745 = vmatpush1.msra.mxu0 %v715
        %746 = vmatprep.subr.mxu0 0.0
        %747 = vmatpush1.msra.mxu0 %v716
        %748 = vmatprep.subr.mxu0 0.0
        %749 = vmatpush1.msra.mxu0 %v717
        %750 = vmatprep.subr.mxu0 0.0
        %751 = vmatpush1.msra.mxu0 0.0
        %752 = vmatprep.subr.mxu0 0.0
        %753 = vmatpush1.msra.mxu0 0.0
        %754 = vmatprep.subr.mxu0 0.0
        %755 = vmatpush1.msra.mxu0 0.0
        %756 = vmatprep.subr.mxu0 0.0
        %757 = vmatpush1.msra.mxu0 0.0
        %758 = vmatprep.subr.mxu0 0.0
        %759 = vmatpush1.msra.mxu0 0.0
        %760 = vmatprep.subr.mxu0 0.0
        %761 = vmatpush1.msra.mxu0 0.0
        %762 = vmatprep.subr.mxu0 0.0
        %763 = vmatpush1.msra.mxu0 0.0
        %764 = vmatprep.subr.mxu0 0.0
        %765 = vmatpush1.msra.mxu0 0.0
        %766 = vmatprep.subr.mxu0 0.0
        %767 = vmatpush1.msra.mxu0 0.0
        %768 = vmatprep.subr.mxu0 0.0
        %769 = vmatpush1.msra.mxu0 0.0
        %770 = vmatprep.subr.mxu0 0.0
        %771 = vmatpush1.msra.mxu0 0.0
        %772 = vmatprep.subr.mxu0 0.0
        %773 = vmatpush1.msra.mxu0 0.0
        %774 = vmatprep.subr.mxu0 0.0
        %775 = vmatpush1.msra.mxu0 0.0
        %776 = vmatprep.subr.mxu0 0.0
        %777 = vmatpush1.msra.mxu0 0.0
        %778 = vmatprep.subr.mxu0 0.0
        %779 = vmatpush1.msra.mxu0 0.0
        %780 = vmatprep.subr.mxu0 0.0
        %781 = vmatpush1.msra.mxu0 0.0
        %782 = vmatprep.mubr.f32.mxu0 0.0
        %783 = vmatmul.mubr.f32.gmra.mrb[0].mxu0 %v563
        %v784 = vpop.f32.mrb[0].mxu0
        %v785 = vadd.f32 0.0, %v784
        %v786 = vpop.f32.mrb[0].mxu0
        %787 = vmatprep.mubr.f32.mxu0 0.0
        %788 = vmatmul.mubr.f32.gmra.mrb[0].mxu0 %v564
        %v789 = vpop.f32.mrb[0].mxu0
        %v790 = vadd.f32 0.0, %v789
        %v791 = vpop.f32.mrb[0].mxu0
        %792 = vmatprep.mubr.f32.mxu0 0.0
        %793 = vmatmul.mubr.f32.gmra.mrb[0].mxu0 %v565
        %v794 = vpop.f32.mrb[0].mxu0
        %v795 = vadd.f32 0.0, %v794
        %v796 = vpop.f32.mrb[0].mxu0
        %797 = vmatprep.mubr.f32.mxu0 0.0
        %798 = vmatmul.mubr.f32.gmra.mrb[0].mxu0 %v566
        %v799 = vpop.f32.mrb[0].mxu0
        %v800 = vadd.f32 0.0, %v799
        %v801 = vpop.f32.mrb[0].mxu0
        %802 = vmatprep.mubr.f32.mxu0 0.0
        %803 = vmatmul.mubr.f32.gmra.mrb[0].mxu0 %v567
        %v804 = vpop.f32.mrb[0].mxu0
        %v805 = vadd.f32 0.0, %v804
        %v806 = vpop.f32.mrb[0].mxu0
        %807 = vmatprep.mubr.f32.mxu0 0.0
        %808 = vmatmul.mubr.f32.gmra.mrb[0].mxu0 %v568
        %v809 = vpop.f32.mrb[0].mxu0
        %v810 = vadd.f32 0.0, %v809
        %v811 = vpop.f32.mrb[0].mxu0
        %812 = vmatprep.mubr.f32.mxu0 0.0
        %813 = vmatmul.mubr.f32.gmra.mrb[0].mxu0 %v569
        %v814 = vpop.f32.mrb[0].mxu0
        %v815 = vadd.f32 0.0, %v814
        %v816 = vpop.f32.mrb[0].mxu0
        %817 = vmatprep.mubr.f32.mxu0 0.0
        %818 = vmatmul.mubr.f32.gmra.mrb[0].mxu0 %v570
        %v819 = vpop.f32.mrb[0].mxu0
        %v820 = vadd.f32 0.0, %v819
        %v821 = vpop.f32.mrb[0].mxu0
        %822 = vdwg.mxu0
        %v823 = vadd.f32 %v693, %v785
        %v824 = vadd.f32 %v694, %v790
        %v825 = vadd.f32 %v695, %v795
        %v826 = vadd.f32 %v696, %v800
        %v827 = vadd.f32 %v697, %v805
        %v828 = vadd.f32 %v698, %v810
        %v829 = vadd.f32 %v699, %v815
        %v830 = vadd.f32 %v700, %v820
        %s831 = scalar_lea.vmem %s291, 16
        %v832 = vld [vmem:[%s831] sm:$0xff]
        %v833 = vld [vmem:[%s831 + $0x10] sm:$0xff]
        %v834 = vld [vmem:[%s831 + $0x20] sm:$0xff]
        %v835 = vld [vmem:[%s831 + $0x30] sm:$0xff]
        %v836 = vld [vmem:[%s831 + $0x40] sm:$0xff]
        %v837 = vld [vmem:[%s831 + $0x50] sm:$0xff]
        %v838 = vld [vmem:[%s831 + $0x60] sm:$0xff]
        %v839 = vld [vmem:[%s831 + $0x70] sm:$0xff]
        %s840 = scalar_lea.vmem %s296, 16
        %v841 = vld [vmem:[%s840] sm:$0xff]
        %v842 = vld [vmem:[%s840 + $0x10] sm:$0xff]
        %v843 = vld [vmem:[%s840 + $0x20] sm:$0xff]
        %v844 = vld [vmem:[%s840 + $0x30] sm:$0xff]
        %v845 = vld [vmem:[%s840 + $0x40] sm:$0xff]
        %v846 = vld [vmem:[%s840 + $0x50] sm:$0xff]
        %v847 = vld [vmem:[%s840 + $0x60] sm:$0xff]
        %v848 = vld [vmem:[%s840 + $0x70] sm:$0xff]
        %s849 = scalar_lea.vmem %s2, 256
        %v850 = vld [vmem:[%s849] sm:$0xff]
        %v851 = vld [vmem:[%s849 + $0x8] sm:$0xff]
        %v852 = vld [vmem:[%s849 + $0x10] sm:$0xff]
        %v853 = vld [vmem:[%s849 + $0x18] sm:$0xff]
        %v854 = vld [vmem:[%s849 + $0x20] sm:$0xff]
        %v855 = vld [vmem:[%s849 + $0x28] sm:$0xff]
        %v856 = vld [vmem:[%s849 + $0x30] sm:$0xff]
        %v857 = vld [vmem:[%s849 + $0x38] sm:$0xff]
        %v858 = vld [vmem:[%s849 + $0x40] sm:$0xff]
        %v859 = vld [vmem:[%s849 + $0x48] sm:$0xff]
        %v860 = vld [vmem:[%s849 + $0x50] sm:$0xff]
        %v861 = vld [vmem:[%s849 + $0x58] sm:$0xff]
        %v862 = vld [vmem:[%s849 + $0x60] sm:$0xff]
        %v863 = vld [vmem:[%s849 + $0x68] sm:$0xff]
        %v864 = vld [vmem:[%s849 + $0x70] sm:$0xff]
        %v865 = vld [vmem:[%s849 + $0x78] sm:$0xff]
        %866 = vmatprep.subr.mxu0 0.0
        %867 = vmatpush1.msra.mxu0 %v850
        %868 = vmatprep.subr.mxu0 0.0
        %869 = vmatpush1.msra.mxu0 %v851
        %870 = vmatprep.subr.mxu0 0.0
        %871 = vmatpush1.msra.mxu0 %v852
        %872 = vmatprep.subr.mxu0 0.0
        %873 = vmatpush1.msra.mxu0 %v853
        %874 = vmatprep.subr.mxu0 0.0
        %875 = vmatpush1.msra.mxu0 %v854
        %876 = vmatprep.subr.mxu0 0.0
        %877 = vmatpush1.msra.mxu0 %v855
        %878 = vmatprep.subr.mxu0 0.0
        %879 = vmatpush1.msra.mxu0 %v856
        %880 = vmatprep.subr.mxu0 0.0
        %881 = vmatpush1.msra.mxu0 %v857
        %882 = vmatprep.subr.mxu0 0.0
        %883 = vmatpush1.msra.mxu0 %v858
        %884 = vmatprep.subr.mxu0 0.0
        %885 = vmatpush1.msra.mxu0 %v859
        %886 = vmatprep.subr.mxu0 0.0
        %887 = vmatpush1.msra.mxu0 %v860
        %888 = vmatprep.subr.mxu0 0.0
        %889 = vmatpush1.msra.mxu0 %v861
        %890 = vmatprep.subr.mxu0 0.0
        %891 = vmatpush1.msra.mxu0 %v862
        %892 = vmatprep.subr.mxu0 0.0
        %893 = vmatpush1.msra.mxu0 %v863
        %894 = vmatprep.subr.mxu0 0.0
        %895 = vmatpush1.msra.mxu0 %v864
        %896 = vmatprep.subr.mxu0 0.0
        %897 = vmatpush1.msra.mxu0 %v865
        %898 = vmatprep.subr.mxu0 0.0
        %899 = vmatpush1.msra.mxu0 0.0
        %900 = vmatprep.subr.mxu0 0.0
        %901 = vmatpush1.msra.mxu0 0.0
        %902 = vmatprep.subr.mxu0 0.0
        %903 = vmatpush1.msra.mxu0 0.0
        %904 = vmatprep.subr.mxu0 0.0
        %905 = vmatpush1.msra.mxu0 0.0
        %906 = vmatprep.subr.mxu0 0.0
        %907 = vmatpush1.msra.mxu0 0.0
        %908 = vmatprep.subr.mxu0 0.0
        %909 = vmatpush1.msra.mxu0 0.0
        %910 = vmatprep.subr.mxu0 0.0
        %911 = vmatpush1.msra.mxu0 0.0
        %912 = vmatprep.subr.mxu0 0.0
        %913 = vmatpush1.msra.mxu0 0.0
        %914 = vmatprep.subr.mxu0 0.0
        %915 = vmatpush1.msra.mxu0 0.0
        %916 = vmatprep.subr.mxu0 0.0
        %917 = vmatpush1.msra.mxu0 0.0
        %918 = vmatprep.subr.mxu0 0.0
        %919 = vmatpush1.msra.mxu0 0.0
        %920 = vmatprep.subr.mxu0 0.0
        %921 = vmatpush1.msra.mxu0 0.0
        %922 = vmatprep.subr.mxu0 0.0
        %923 = vmatpush1.msra.mxu0 0.0
        %924 = vmatprep.subr.mxu0 0.0
        %925 = vmatpush1.msra.mxu0 0.0
        %926 = vmatprep.subr.mxu0 0.0
        %927 = vmatpush1.msra.mxu0 0.0
        %928 = vmatprep.subr.mxu0 0.0
        %929 = vmatpush1.msra.mxu0 0.0
        %930 = vmatprep.mubr.f32.mxu0 0.0
        %931 = vmatmul.mubr.f32.gmra.mrb[0].mxu0 %v832
        %v932 = vpop.f32.mrb[0].mxu0
        %v933 = vadd.f32 0.0, %v932
        %v934 = vpop.f32.mrb[0].mxu0
        %935 = vmatprep.mubr.f32.mxu0 0.0
        %936 = vmatmul.mubr.f32.gmra.mrb[0].mxu0 %v833
        %v937 = vpop.f32.mrb[0].mxu0
        %v938 = vadd.f32 0.0, %v937
        %v939 = vpop.f32.mrb[0].mxu0
        %940 = vmatprep.mubr.f32.mxu0 0.0
        %941 = vmatmul.mubr.f32.gmra.mrb[0].mxu0 %v834
        %v942 = vpop.f32.mrb[0].mxu0
        %v943 = vadd.f32 0.0, %v942
        %v944 = vpop.f32.mrb[0].mxu0
        %945 = vmatprep.mubr.f32.mxu0 0.0
        %946 = vmatmul.mubr.f32.gmra.mrb[0].mxu0 %v835
        %v947 = vpop.f32.mrb[0].mxu0
        %v948 = vadd.f32 0.0, %v947
        %v949 = vpop.f32.mrb[0].mxu0
        %950 = vmatprep.mubr.f32.mxu0 0.0
        %951 = vmatmul.mubr.f32.gmra.mrb[0].mxu0 %v836
        %v952 = vpop.f32.mrb[0].mxu0
        %v953 = vadd.f32 0.0, %v952
        %v954 = vpop.f32.mrb[0].mxu0
        %955 = vmatprep.mubr.f32.mxu0 0.0
        %956 = vmatmul.mubr.f32.gmra.mrb[0].mxu0 %v837
        %v957 = vpop.f32.mrb[0].mxu0
        %v958 = vadd.f32 0.0, %v957
        %v959 = vpop.f32.mrb[0].mxu0
        %960 = vmatprep.mubr.f32.mxu0 0.0
        %961 = vmatmul.mubr.f32.gmra.mrb[0].mxu0 %v838
        %v962 = vpop.f32.mrb[0].mxu0
        %v963 = vadd.f32 0.0, %v962
        %v964 = vpop.f32.mrb[0].mxu0
        %965 = vmatprep.mubr.f32.mxu0 0.0
        %966 = vmatmul.mubr.f32.gmra.mrb[0].mxu0 %v839
        %v967 = vpop.f32.mrb[0].mxu0
        %v968 = vadd.f32 0.0, %v967
        %v969 = vpop.f32.mrb[0].mxu0
        %970 = vdwg.mxu0
        %v971 = vadd.f32 %v823, %v933
        %v972 = vadd.f32 %v824, %v938
        %v973 = vadd.f32 %v825, %v943
        %v974 = vadd.f32 %v826, %v948
        %v975 = vadd.f32 %v827, %v953
        %v976 = vadd.f32 %v828, %v958
        %v977 = vadd.f32 %v829, %v963
        %v978 = vadd.f32 %v830, %v968
        %s979 = scalar_lea.vmem %s3, 256
        %v980 = vld [vmem:[%s979] sm:$0xff]
        %v981 = vld [vmem:[%s979 + $0x8] sm:$0xff]
        %v982 = vld [vmem:[%s979 + $0x10] sm:$0xff]
        %v983 = vld [vmem:[%s979 + $0x18] sm:$0xff]
        %v984 = vld [vmem:[%s979 + $0x20] sm:$0xff]
        %v985 = vld [vmem:[%s979 + $0x28] sm:$0xff]
        %v986 = vld [vmem:[%s979 + $0x30] sm:$0xff]
        %v987 = vld [vmem:[%s979 + $0x38] sm:$0xff]
        %v988 = vld [vmem:[%s979 + $0x40] sm:$0xff]
        %v989 = vld [vmem:[%s979 + $0x48] sm:$0xff]
        %v990 = vld [vmem:[%s979 + $0x50] sm:$0xff]
        %v991 = vld [vmem:[%s979 + $0x58] sm:$0xff]
        %v992 = vld [vmem:[%s979 + $0x60] sm:$0xff]
        %v993 = vld [vmem:[%s979 + $0x68] sm:$0xff]
        %v994 = vld [vmem:[%s979 + $0x70] sm:$0xff]
        %v995 = vld [vmem:[%s979 + $0x78] sm:$0xff]
        %996 = vmatprep.subr.mxu0 0.0
        %997 = vmatpush1.msra.mxu0 %v980
        %998 = vmatprep.subr.mxu0 0.0
        %999 = vmatpush1.msra.mxu0 %v981
        %1000 = vmatprep.subr.mxu0 0.0
        %1001 = vmatpush1.msra.mxu0 %v982
        %1002 = vmatprep.subr.mxu0 0.0
        %1003 = vmatpush1.msra.mxu0 %v983
        %1004 = vmatprep.subr.mxu0 0.0
        %1005 = vmatpush1.msra.mxu0 %v984
        %1006 = vmatprep.subr.mxu0 0.0
        %1007 = vmatpush1.msra.mxu0 %v985
        %1008 = vmatprep.subr.mxu0 0.0
        %1009 = vmatpush1.msra.mxu0 %v986
        %1010 = vmatprep.subr.mxu0 0.0
        %1011 = vmatpush1.msra.mxu0 %v987
        %1012 = vmatprep.subr.mxu0 0.0
        %1013 = vmatpush1.msra.mxu0 %v988
        %1014 = vmatprep.subr.mxu0 0.0
        %1015 = vmatpush1.msra.mxu0 %v989
        %1016 = vmatprep.subr.mxu0 0.0
        %1017 = vmatpush1.msra.mxu0 %v990
        %1018 = vmatprep.subr.mxu0 0.0
        %1019 = vmatpush1.msra.mxu0 %v991
        %1020 = vmatprep.subr.mxu0 0.0
        %1021 = vmatpush1.msra.mxu0 %v992
        %1022 = vmatprep.subr.mxu0 0.0
        %1023 = vmatpush1.msra.mxu0 %v993
        %1024 = vmatprep.subr.mxu0 0.0
        %1025 = vmatpush1.msra.mxu0 %v994
        %1026 = vmatprep.subr.mxu0 0.0
        %1027 = vmatpush1.msra.mxu0 %v995
        %1028 = vmatprep.subr.mxu0 0.0
        %1029 = vmatpush1.msra.mxu0 0.0
        %1030 = vmatprep.subr.mxu0 0.0
        %1031 = vmatpush1.msra.mxu0 0.0
        %1032 = vmatprep.subr.mxu0 0.0
        %1033 = vmatpush1.msra.mxu0 0.0
        %1034 = vmatprep.subr.mxu0 0.0
        %1035 = vmatpush1.msra.mxu0 0.0
        %1036 = vmatprep.subr.mxu0 0.0
        %1037 = vmatpush1.msra.mxu0 0.0
        %1038 = vmatprep.subr.mxu0 0.0
        %1039 = vmatpush1.msra.mxu0 0.0
        %1040 = vmatprep.subr.mxu0 0.0
        %1041 = vmatpush1.msra.mxu0 0.0
        %1042 = vmatprep.subr.mxu0 0.0
        %1043 = vmatpush1.msra.mxu0 0.0
        %1044 = vmatprep.subr.mxu0 0.0
        %1045 = vmatpush1.msra.mxu0 0.0
        %1046 = vmatprep.subr.mxu0 0.0
        %1047 = vmatpush1.msra.mxu0 0.0
        %1048 = vmatprep.subr.mxu0 0.0
        %1049 = vmatpush1.msra.mxu0 0.0
        %1050 = vmatprep.subr.mxu0 0.0
        %1051 = vmatpush1.msra.mxu0 0.0
        %1052 = vmatprep.subr.mxu0 0.0
        %1053 = vmatpush1.msra.mxu0 0.0
        %1054 = vmatprep.subr.mxu0 0.0
        %1055 = vmatpush1.msra.mxu0 0.0
        %1056 = vmatprep.subr.mxu0 0.0
        %1057 = vmatpush1.msra.mxu0 0.0
        %1058 = vmatprep.subr.mxu0 0.0
        %1059 = vmatpush1.msra.mxu0 0.0
        %1060 = vmatprep.mubr.f32.mxu0 0.0
        %1061 = vmatmul.mubr.f32.gmra.mrb[0].mxu0 %v841
        %v1062 = vpop.f32.mrb[0].mxu0
        %v1063 = vadd.f32 0.0, %v1062
        %v1064 = vpop.f32.mrb[0].mxu0
        %1065 = vmatprep.mubr.f32.mxu0 0.0
        %1066 = vmatmul.mubr.f32.gmra.mrb[0].mxu0 %v842
        %v1067 = vpop.f32.mrb[0].mxu0
        %v1068 = vadd.f32 0.0, %v1067
        %v1069 = vpop.f32.mrb[0].mxu0
        %1070 = vmatprep.mubr.f32.mxu0 0.0
        %1071 = vmatmul.mubr.f32.gmra.mrb[0].mxu0 %v843
        %v1072 = vpop.f32.mrb[0].mxu0
        %v1073 = vadd.f32 0.0, %v1072
        %v1074 = vpop.f32.mrb[0].mxu0
        %1075 = vmatprep.mubr.f32.mxu0 0.0
        %1076 = vmatmul.mubr.f32.gmra.mrb[0].mxu0 %v844
        %v1077 = vpop.f32.mrb[0].mxu0
        %v1078 = vadd.f32 0.0, %v1077
        %v1079 = vpop.f32.mrb[0].mxu0
        %1080 = vmatprep.mubr.f32.mxu0 0.0
        %1081 = vmatmul.mubr.f32.gmra.mrb[0].mxu0 %v845
        %v1082 = vpop.f32.mrb[0].mxu0
        %v1083 = vadd.f32 0.0, %v1082
        %v1084 = vpop.f32.mrb[0].mxu0
        %1085 = vmatprep.mubr.f32.mxu0 0.0
        %1086 = vmatmul.mubr.f32.gmra.mrb[0].mxu0 %v846
        %v1087 = vpop.f32.mrb[0].mxu0
        %v1088 = vadd.f32 0.0, %v1087
        %v1089 = vpop.f32.mrb[0].mxu0
        %1090 = vmatprep.mubr.f32.mxu0 0.0
        %1091 = vmatmul.mubr.f32.gmra.mrb[0].mxu0 %v847
        %v1092 = vpop.f32.mrb[0].mxu0
        %v1093 = vadd.f32 0.0, %v1092
        %v1094 = vpop.f32.mrb[0].mxu0
        %1095 = vmatprep.mubr.f32.mxu0 0.0
        %1096 = vmatmul.mubr.f32.gmra.mrb[0].mxu0 %v848
        %v1097 = vpop.f32.mrb[0].mxu0
        %v1098 = vadd.f32 0.0, %v1097
        %v1099 = vpop.f32.mrb[0].mxu0
        %1100 = vdwg.mxu0
        %v1101 = vadd.f32 %v971, %v1063
        %v1102 = vadd.f32 %v972, %v1068
        %v1103 = vadd.f32 %v973, %v1073
        %v1104 = vadd.f32 %v974, %v1078
        %v1105 = vadd.f32 %v975, %v1083
        %v1106 = vadd.f32 %v976, %v1088
        %v1107 = vadd.f32 %v977, %v1093
        %v1108 = vadd.f32 %v978, %v1098
        %v1109 = vld [vmem:[%s831 + $0x1] sm:$0xff]
        %v1110 = vld [vmem:[%s831 + $0x11] sm:$0xff]
        %v1111 = vld [vmem:[%s831 + $0x21] sm:$0xff]
        %v1112 = vld [vmem:[%s831 + $0x31] sm:$0xff]
        %v1113 = vld [vmem:[%s831 + $0x41] sm:$0xff]
        %v1114 = vld [vmem:[%s831 + $0x51] sm:$0xff]
        %v1115 = vld [vmem:[%s831 + $0x61] sm:$0xff]
        %v1116 = vld [vmem:[%s831 + $0x71] sm:$0xff]
        %v1117 = vld [vmem:[%s840 + $0x1] sm:$0xff]
        %v1118 = vld [vmem:[%s840 + $0x11] sm:$0xff]
        %v1119 = vld [vmem:[%s840 + $0x21] sm:$0xff]
        %v1120 = vld [vmem:[%s840 + $0x31] sm:$0xff]
        %v1121 = vld [vmem:[%s840 + $0x41] sm:$0xff]
        %v1122 = vld [vmem:[%s840 + $0x51] sm:$0xff]
        %v1123 = vld [vmem:[%s840 + $0x61] sm:$0xff]
        %v1124 = vld [vmem:[%s840 + $0x71] sm:$0xff]
        %s1125 = scalar_lea.vmem %s2, 384
        %v1126 = vld [vmem:[%s1125] sm:$0xff]
        %v1127 = vld [vmem:[%s1125 + $0x8] sm:$0xff]
        %v1128 = vld [vmem:[%s1125 + $0x10] sm:$0xff]
        %v1129 = vld [vmem:[%s1125 + $0x18] sm:$0xff]
        %v1130 = vld [vmem:[%s1125 + $0x20] sm:$0xff]
        %v1131 = vld [vmem:[%s1125 + $0x28] sm:$0xff]
        %v1132 = vld [vmem:[%s1125 + $0x30] sm:$0xff]
        %v1133 = vld [vmem:[%s1125 + $0x38] sm:$0xff]
        %v1134 = vld [vmem:[%s1125 + $0x40] sm:$0xff]
        %v1135 = vld [vmem:[%s1125 + $0x48] sm:$0xff]
        %v1136 = vld [vmem:[%s1125 + $0x50] sm:$0xff]
        %v1137 = vld [vmem:[%s1125 + $0x58] sm:$0xff]
        %v1138 = vld [vmem:[%s1125 + $0x60] sm:$0xff]
        %v1139 = vld [vmem:[%s1125 + $0x68] sm:$0xff]
        %v1140 = vld [vmem:[%s1125 + $0x70] sm:$0xff]
        %v1141 = vld [vmem:[%s1125 + $0x78] sm:$0xff]
        %1142 = vmatprep.subr.mxu0 0.0
        %1143 = vmatpush1.msra.mxu0 %v1126
        %1144 = vmatprep.subr.mxu0 0.0
        %1145 = vmatpush1.msra.mxu0 %v1127
        %1146 = vmatprep.subr.mxu0 0.0
        %1147 = vmatpush1.msra.mxu0 %v1128
        %1148 = vmatprep.subr.mxu0 0.0
        %1149 = vmatpush1.msra.mxu0 %v1129
        %1150 = vmatprep.subr.mxu0 0.0
        %1151 = vmatpush1.msra.mxu0 %v1130
        %1152 = vmatprep.subr.mxu0 0.0
        %1153 = vmatpush1.msra.mxu0 %v1131
        %1154 = vmatprep.subr.mxu0 0.0
        %1155 = vmatpush1.msra.mxu0 %v1132
        %1156 = vmatprep.subr.mxu0 0.0
        %1157 = vmatpush1.msra.mxu0 %v1133
        %1158 = vmatprep.subr.mxu0 0.0
        %1159 = vmatpush1.msra.mxu0 %v1134
        %1160 = vmatprep.subr.mxu0 0.0
        %1161 = vmatpush1.msra.mxu0 %v1135
        %1162 = vmatprep.subr.mxu0 0.0
        %1163 = vmatpush1.msra.mxu0 %v1136
        %1164 = vmatprep.subr.mxu0 0.0
        %1165 = vmatpush1.msra.mxu0 %v1137
        %1166 = vmatprep.subr.mxu0 0.0
        %1167 = vmatpush1.msra.mxu0 %v1138
        %1168 = vmatprep.subr.mxu0 0.0
        %1169 = vmatpush1.msra.mxu0 %v1139
        %1170 = vmatprep.subr.mxu0 0.0
        %1171 = vmatpush1.msra.mxu0 %v1140
        %1172 = vmatprep.subr.mxu0 0.0
        %1173 = vmatpush1.msra.mxu0 %v1141
        %1174 = vmatprep.subr.mxu0 0.0
        %1175 = vmatpush1.msra.mxu0 0.0
        %1176 = vmatprep.subr.mxu0 0.0
        %1177 = vmatpush1.msra.mxu0 0.0
        %1178 = vmatprep.subr.mxu0 0.0
        %1179 = vmatpush1.msra.mxu0 0.0
        %1180 = vmatprep.subr.mxu0 0.0
        %1181 = vmatpush1.msra.mxu0 0.0
        %1182 = vmatprep.subr.mxu0 0.0
        %1183 = vmatpush1.msra.mxu0 0.0
        %1184 = vmatprep.subr.mxu0 0.0
        %1185 = vmatpush1.msra.mxu0 0.0
        %1186 = vmatprep.subr.mxu0 0.0
        %1187 = vmatpush1.msra.mxu0 0.0
        %1188 = vmatprep.subr.mxu0 0.0
        %1189 = vmatpush1.msra.mxu0 0.0
        %1190 = vmatprep.subr.mxu0 0.0
        %1191 = vmatpush1.msra.mxu0 0.0
        %1192 = vmatprep.subr.mxu0 0.0
        %1193 = vmatpush1.msra.mxu0 0.0
        %1194 = vmatprep.subr.mxu0 0.0
        %1195 = vmatpush1.msra.mxu0 0.0
        %1196 = vmatprep.subr.mxu0 0.0
        %1197 = vmatpush1.msra.mxu0 0.0
        %1198 = vmatprep.subr.mxu0 0.0
        %1199 = vmatpush1.msra.mxu0 0.0
        %1200 = vmatprep.subr.mxu0 0.0
        %1201 = vmatpush1.msra.mxu0 0.0
        %1202 = vmatprep.subr.mxu0 0.0
        %1203 = vmatpush1.msra.mxu0 0.0
        %1204 = vmatprep.subr.mxu0 0.0
        %1205 = vmatpush1.msra.mxu0 0.0
        %1206 = vmatprep.mubr.f32.mxu0 0.0
        %1207 = vmatmul.mubr.f32.gmra.mrb[0].mxu0 %v1109
        %v1208 = vpop.f32.mrb[0].mxu0
        %v1209 = vadd.f32 0.0, %v1208
        %v1210 = vpop.f32.mrb[0].mxu0
        %1211 = vmatprep.mubr.f32.mxu0 0.0
        %1212 = vmatmul.mubr.f32.gmra.mrb[0].mxu0 %v1110
        %v1213 = vpop.f32.mrb[0].mxu0
        %v1214 = vadd.f32 0.0, %v1213
        %v1215 = vpop.f32.mrb[0].mxu0
        %1216 = vmatprep.mubr.f32.mxu0 0.0
        %1217 = vmatmul.mubr.f32.gmra.mrb[0].mxu0 %v1111
        %v1218 = vpop.f32.mrb[0].mxu0
        %v1219 = vadd.f32 0.0, %v1218
        %v1220 = vpop.f32.mrb[0].mxu0
        %1221 = vmatprep.mubr.f32.mxu0 0.0
        %1222 = vmatmul.mubr.f32.gmra.mrb[0].mxu0 %v1112
        %v1223 = vpop.f32.mrb[0].mxu0
        %v1224 = vadd.f32 0.0, %v1223
        %v1225 = vpop.f32.mrb[0].mxu0
        %1226 = vmatprep.mubr.f32.mxu0 0.0
        %1227 = vmatmul.mubr.f32.gmra.mrb[0].mxu0 %v1113
        %v1228 = vpop.f32.mrb[0].mxu0
        %v1229 = vadd.f32 0.0, %v1228
        %v1230 = vpop.f32.mrb[0].mxu0
        %1231 = vmatprep.mubr.f32.mxu0 0.0
        %1232 = vmatmul.mubr.f32.gmra.mrb[0].mxu0 %v1114
        %v1233 = vpop.f32.mrb[0].mxu0
        %v1234 = vadd.f32 0.0, %v1233
        %v1235 = vpop.f32.mrb[0].mxu0
        %1236 = vmatprep.mubr.f32.mxu0 0.0
        %1237 = vmatmul.mubr.f32.gmra.mrb[0].mxu0 %v1115
        %v1238 = vpop.f32.mrb[0].mxu0
        %v1239 = vadd.f32 0.0, %v1238
        %v1240 = vpop.f32.mrb[0].mxu0
        %1241 = vmatprep.mubr.f32.mxu0 0.0
        %1242 = vmatmul.mubr.f32.gmra.mrb[0].mxu0 %v1116
        %v1243 = vpop.f32.mrb[0].mxu0
        %v1244 = vadd.f32 0.0, %v1243
        %v1245 = vpop.f32.mrb[0].mxu0
        %1246 = vdwg.mxu0
        %v1247 = vadd.f32 %v1101, %v1209
        %v1248 = vadd.f32 %v1102, %v1214
        %v1249 = vadd.f32 %v1103, %v1219
        %v1250 = vadd.f32 %v1104, %v1224
        %v1251 = vadd.f32 %v1105, %v1229
        %v1252 = vadd.f32 %v1106, %v1234
        %v1253 = vadd.f32 %v1107, %v1239
        %v1254 = vadd.f32 %v1108, %v1244
        %s1255 = scalar_lea.vmem %s3, 384
        %v1256 = vld [vmem:[%s1255] sm:$0xff]
        %v1257 = vld [vmem:[%s1255 + $0x8] sm:$0xff]
        %v1258 = vld [vmem:[%s1255 + $0x10] sm:$0xff]
        %v1259 = vld [vmem:[%s1255 + $0x18] sm:$0xff]
        %v1260 = vld [vmem:[%s1255 + $0x20] sm:$0xff]
        %v1261 = vld [vmem:[%s1255 + $0x28] sm:$0xff]
        %v1262 = vld [vmem:[%s1255 + $0x30] sm:$0xff]
        %v1263 = vld [vmem:[%s1255 + $0x38] sm:$0xff]
        %v1264 = vld [vmem:[%s1255 + $0x40] sm:$0xff]
        %v1265 = vld [vmem:[%s1255 + $0x48] sm:$0xff]
        %v1266 = vld [vmem:[%s1255 + $0x50] sm:$0xff]
        %v1267 = vld [vmem:[%s1255 + $0x58] sm:$0xff]
        %v1268 = vld [vmem:[%s1255 + $0x60] sm:$0xff]
        %v1269 = vld [vmem:[%s1255 + $0x68] sm:$0xff]
        %v1270 = vld [vmem:[%s1255 + $0x70] sm:$0xff]
        %v1271 = vld [vmem:[%s1255 + $0x78] sm:$0xff]
        %1272 = vmatprep.subr.mxu0 0.0
        %1273 = vmatpush1.msra.mxu0 %v1256
        %1274 = vmatprep.subr.mxu0 0.0
        %1275 = vmatpush1.msra.mxu0 %v1257
        %1276 = vmatprep.subr.mxu0 0.0
        %1277 = vmatpush1.msra.mxu0 %v1258
        %1278 = vmatprep.subr.mxu0 0.0
        %1279 = vmatpush1.msra.mxu0 %v1259
        %1280 = vmatprep.subr.mxu0 0.0
        %1281 = vmatpush1.msra.mxu0 %v1260
        %1282 = vmatprep.subr.mxu0 0.0
        %1283 = vmatpush1.msra.mxu0 %v1261
        %1284 = vmatprep.subr.mxu0 0.0
        %1285 = vmatpush1.msra.mxu0 %v1262
        %1286 = vmatprep.subr.mxu0 0.0
        %1287 = vmatpush1.msra.mxu0 %v1263
        %1288 = vmatprep.subr.mxu0 0.0
        %1289 = vmatpush1.msra.mxu0 %v1264
        %1290 = vmatprep.subr.mxu0 0.0
        %1291 = vmatpush1.msra.mxu0 %v1265
        %1292 = vmatprep.subr.mxu0 0.0
        %1293 = vmatpush1.msra.mxu0 %v1266
        %1294 = vmatprep.subr.mxu0 0.0
        %1295 = vmatpush1.msra.mxu0 %v1267
        %1296 = vmatprep.subr.mxu0 0.0
        %1297 = vmatpush1.msra.mxu0 %v1268
        %1298 = vmatprep.subr.mxu0 0.0
        %1299 = vmatpush1.msra.mxu0 %v1269
        %1300 = vmatprep.subr.mxu0 0.0
        %1301 = vmatpush1.msra.mxu0 %v1270
        %1302 = vmatprep.subr.mxu0 0.0
        %1303 = vmatpush1.msra.mxu0 %v1271
        %1304 = vmatprep.subr.mxu0 0.0
        %1305 = vmatpush1.msra.mxu0 0.0
        %1306 = vmatprep.subr.mxu0 0.0
        %1307 = vmatpush1.msra.mxu0 0.0
        %1308 = vmatprep.subr.mxu0 0.0
        %1309 = vmatpush1.msra.mxu0 0.0
        %1310 = vmatprep.subr.mxu0 0.0
        %1311 = vmatpush1.msra.mxu0 0.0
        %1312 = vmatprep.subr.mxu0 0.0
        %1313 = vmatpush1.msra.mxu0 0.0
        %1314 = vmatprep.subr.mxu0 0.0
        %1315 = vmatpush1.msra.mxu0 0.0
        %1316 = vmatprep.subr.mxu0 0.0
        %1317 = vmatpush1.msra.mxu0 0.0
        %1318 = vmatprep.subr.mxu0 0.0
        %1319 = vmatpush1.msra.mxu0 0.0
        %1320 = vmatprep.subr.mxu0 0.0
        %1321 = vmatpush1.msra.mxu0 0.0
        %1322 = vmatprep.subr.mxu0 0.0
        %1323 = vmatpush1.msra.mxu0 0.0
        %1324 = vmatprep.subr.mxu0 0.0
        %1325 = vmatpush1.msra.mxu0 0.0
        %1326 = vmatprep.subr.mxu0 0.0
        %1327 = vmatpush1.msra.mxu0 0.0
        %1328 = vmatprep.subr.mxu0 0.0
        %1329 = vmatpush1.msra.mxu0 0.0
        %1330 = vmatprep.subr.mxu0 0.0
        %1331 = vmatpush1.msra.mxu0 0.0
        %1332 = vmatprep.subr.mxu0 0.0
        %1333 = vmatpush1.msra.mxu0 0.0
        %1334 = vmatprep.subr.mxu0 0.0
        %1335 = vmatpush1.msra.mxu0 0.0
        %1336 = vmatprep.mubr.f32.mxu0 0.0
        %1337 = vmatmul.mubr.f32.gmra.mrb[0].mxu0 %v1117
        %v1338 = vpop.f32.mrb[0].mxu0
        %v1339 = vadd.f32 0.0, %v1338
        %v1340 = vpop.f32.mrb[0].mxu0
        %1341 = vmatprep.mubr.f32.mxu0 0.0
        %1342 = vmatmul.mubr.f32.gmra.mrb[0].mxu0 %v1118
        %v1343 = vpop.f32.mrb[0].mxu0
        %v1344 = vadd.f32 0.0, %v1343
        %v1345 = vpop.f32.mrb[0].mxu0
        %1346 = vmatprep.mubr.f32.mxu0 0.0
        %1347 = vmatmul.mubr.f32.gmra.mrb[0].mxu0 %v1119
        %v1348 = vpop.f32.mrb[0].mxu0
        %v1349 = vadd.f32 0.0, %v1348
        %v1350 = vpop.f32.mrb[0].mxu0
        %1351 = vmatprep.mubr.f32.mxu0 0.0
        %1352 = vmatmul.mubr.f32.gmra.mrb[0].mxu0 %v1120
        %v1353 = vpop.f32.mrb[0].mxu0
        %v1354 = vadd.f32 0.0, %v1353
        %v1355 = vpop.f32.mrb[0].mxu0
        %1356 = vmatprep.mubr.f32.mxu0 0.0
        %1357 = vmatmul.mubr.f32.gmra.mrb[0].mxu0 %v1121
        %v1358 = vpop.f32.mrb[0].mxu0
        %v1359 = vadd.f32 0.0, %v1358
        %v1360 = vpop.f32.mrb[0].mxu0
        %1361 = vmatprep.mubr.f32.mxu0 0.0
        %1362 = vmatmul.mubr.f32.gmra.mrb[0].mxu0 %v1122
        %v1363 = vpop.f32.mrb[0].mxu0
        %v1364 = vadd.f32 0.0, %v1363
        %v1365 = vpop.f32.mrb[0].mxu0
        %1366 = vmatprep.mubr.f32.mxu0 0.0
        %1367 = vmatmul.mubr.f32.gmra.mrb[0].mxu0 %v1123
        %v1368 = vpop.f32.mrb[0].mxu0
        %v1369 = vadd.f32 0.0, %v1368
        %v1370 = vpop.f32.mrb[0].mxu0
        %1371 = vmatprep.mubr.f32.mxu0 0.0
        %1372 = vmatmul.mubr.f32.gmra.mrb[0].mxu0 %v1124
        %v1373 = vpop.f32.mrb[0].mxu0
        %v1374 = vadd.f32 0.0, %v1373
        %v1375 = vpop.f32.mrb[0].mxu0
        %1376 = vdwg.mxu0
        %v1377 = vadd.f32 %v1247, %v1339
        %v1378 = vadd.f32 %v1248, %v1344
        %v1379 = vadd.f32 %v1249, %v1349
        %v1380 = vadd.f32 %v1250, %v1354
        %v1381 = vadd.f32 %v1251, %v1359
        %v1382 = vadd.f32 %v1252, %v1364
        %v1383 = vadd.f32 %v1253, %v1369
        %v1384 = vadd.f32 %v1254, %v1374
        %v1385 = vld [vmem:[%s4] sm:$0x1]
        %v1387 = vlaneseq
        %v1388 = vshrl.u32 %v1387, 7
        %v1389 = vsub.s32 0, %v1388
        %v1390 = vrot.slane %v1385, %v1389
        %v1392 = vadd.f32 %v1377, %v1390
        %v1393 = vadd.f32 %v1378, %v1390
        %v1394 = vadd.f32 %v1379, %v1390
        %v1395 = vadd.f32 %v1380, %v1390
        %v1396 = vadd.f32 %v1381, %v1390
        %v1397 = vadd.f32 %v1382, %v1390
        %v1398 = vadd.f32 %v1383, %v1390
        %v1399 = vadd.f32 %v1384, %v1390
        %v1400 = vmax.f32 %v1392, 0.0
        %v1401 = vmax.f32 %v1393, 0.0
        %v1402 = vmax.f32 %v1394, 0.0
        %v1403 = vmax.f32 %v1395, 0.0
        %v1404 = vmax.f32 %v1396, 0.0
        %v1405 = vmax.f32 %v1397, 0.0
        %v1406 = vmax.f32 %v1398, 0.0
        %v1407 = vmax.f32 %v1399, 0.0
        %v1408 = vld [vmem:[%s5] sm:$0xff]
        %v1409 = vld [vmem:[%s5 + $0x8] sm:$0xff]
        %v1410 = vld [vmem:[%s5 + $0x10] sm:$0xff]
        %v1411 = vld [vmem:[%s5 + $0x18] sm:$0xff]
        %v1412 = vld [vmem:[%s6] sm:$0x1]
        %v1414 = vlaneseq
        %v1415 = vshrl.u32 %v1414, 7
        %v1416 = vsub.s32 0, %v1415
        %v1417 = vrot.slane %v1412, %v1416
        %vm1419 = vcmask 261120
        %v1421 = vsel %vm1419, %v1400, 0
        %v1424 = vsel %vm1419, %v1401, 0
        %v1427 = vsel %vm1419, %v1402, 0
        %v1430 = vsel %vm1419, %v1403, 0
        %v1433 = vsel %vm1419, %v1404, 0
        %v1436 = vsel %vm1419, %v1405, 0
        %v1439 = vsel %vm1419, %v1406, 0
        %v1442 = vsel %vm1419, %v1407, 0
        %1444 = vmatprep.subr.mxu0 0.0
        %1445 = vmatpush1.msra.mxu0 %v1408
        %1446 = vmatprep.subr.mxu0 0.0
        %1447 = vmatpush1.msra.mxu0 %v1409
        %1448 = vmatprep.subr.mxu0 0.0
        %1449 = vmatpush1.msra.mxu0 %v1410
        %1450 = vmatprep.subr.mxu0 0.0
        %1451 = vmatpush1.msra.mxu0 %v1411
        %1452 = vmatprep.subr.mxu0 0.0
        %1453 = vmatpush1.msra.mxu0 0.0
        %1454 = vmatprep.subr.mxu0 0.0
        %1455 = vmatpush1.msra.mxu0 0.0
        %1456 = vmatprep.subr.mxu0 0.0
        %1457 = vmatpush1.msra.mxu0 0.0
        %1458 = vmatprep.subr.mxu0 0.0
        %1459 = vmatpush1.msra.mxu0 0.0
        %1460 = vmatprep.subr.mxu0 0.0
        %1461 = vmatpush1.msra.mxu0 0.0
        %1462 = vmatprep.subr.mxu0 0.0
        %1463 = vmatpush1.msra.mxu0 0.0
        %1464 = vmatprep.subr.mxu0 0.0
        %1465 = vmatpush1.msra.mxu0 0.0
        %1466 = vmatprep.subr.mxu0 0.0
        %1467 = vmatpush1.msra.mxu0 0.0
        %1468 = vmatprep.subr.mxu0 0.0
        %1469 = vmatpush1.msra.mxu0 0.0
        %1470 = vmatprep.subr.mxu0 0.0
        %1471 = vmatpush1.msra.mxu0 0.0
        %1472 = vmatprep.subr.mxu0 0.0
        %1473 = vmatpush1.msra.mxu0 0.0
        %1474 = vmatprep.subr.mxu0 0.0
        %1475 = vmatpush1.msra.mxu0 0.0
        %1476 = vmatprep.subr.mxu0 0.0
        %1477 = vmatpush1.msra.mxu0 0.0
        %1478 = vmatprep.subr.mxu0 0.0
        %1479 = vmatpush1.msra.mxu0 0.0
        %1480 = vmatprep.subr.mxu0 0.0
        %1481 = vmatpush1.msra.mxu0 0.0
        %1482 = vmatprep.subr.mxu0 0.0
        %1483 = vmatpush1.msra.mxu0 0.0
        %1484 = vmatprep.subr.mxu0 0.0
        %1485 = vmatpush1.msra.mxu0 0.0
        %1486 = vmatprep.subr.mxu0 0.0
        %1487 = vmatpush1.msra.mxu0 0.0
        %1488 = vmatprep.subr.mxu0 0.0
        %1489 = vmatpush1.msra.mxu0 0.0
        %1490 = vmatprep.subr.mxu0 0.0
        %1491 = vmatpush1.msra.mxu0 0.0
        %1492 = vmatprep.subr.mxu0 0.0
        %1493 = vmatpush1.msra.mxu0 0.0
        %1494 = vmatprep.subr.mxu0 0.0
        %1495 = vmatpush1.msra.mxu0 0.0
        %1496 = vmatprep.subr.mxu0 0.0
        %1497 = vmatpush1.msra.mxu0 0.0
        %1498 = vmatprep.subr.mxu0 0.0
        %1499 = vmatpush1.msra.mxu0 0.0
        %1500 = vmatprep.subr.mxu0 0.0
        %1501 = vmatpush1.msra.mxu0 0.0
        %1502 = vmatprep.subr.mxu0 0.0
        %1503 = vmatpush1.msra.mxu0 0.0
        %1504 = vmatprep.subr.mxu0 0.0
        %1505 = vmatpush1.msra.mxu0 0.0
        %1506 = vmatprep.subr.mxu0 0.0
        %1507 = vmatpush1.msra.mxu0 0.0
        %1508 = vmatprep.mubr.f32.mxu0 0.0
        %1509 = vmatmul.mubr.f32.gmra.mrb[0].mxu0 %v1421
        %v1510 = vpop.f32.mrb[0].mxu0
        %v1511 = vadd.f32 %v1417, %v1510
        %v1512 = vpop.f32.mrb[0].mxu0
        %1513 = vmatprep.mubr.f32.mxu0 0.0
        %1514 = vmatmul.mubr.f32.gmra.mrb[0].mxu0 %v1424
        %v1515 = vpop.f32.mrb[0].mxu0
        %v1516 = vadd.f32 %v1417, %v1515
        %v1517 = vpop.f32.mrb[0].mxu0
        %1518 = vmatprep.mubr.f32.mxu0 0.0
        %1519 = vmatmul.mubr.f32.gmra.mrb[0].mxu0 %v1427
        %v1520 = vpop.f32.mrb[0].mxu0
        %v1521 = vadd.f32 %v1417, %v1520
        %v1522 = vpop.f32.mrb[0].mxu0
        %1523 = vmatprep.mubr.f32.mxu0 0.0
        %1524 = vmatmul.mubr.f32.gmra.mrb[0].mxu0 %v1430
        %v1525 = vpop.f32.mrb[0].mxu0
        %v1526 = vadd.f32 %v1417, %v1525
        %v1527 = vpop.f32.mrb[0].mxu0
        %1528 = vmatprep.mubr.f32.mxu0 0.0
        %1529 = vmatmul.mubr.f32.gmra.mrb[0].mxu0 %v1433
        %v1530 = vpop.f32.mrb[0].mxu0
        %v1531 = vadd.f32 %v1417, %v1530
        %v1532 = vpop.f32.mrb[0].mxu0
        %1533 = vmatprep.mubr.f32.mxu0 0.0
        %1534 = vmatmul.mubr.f32.gmra.mrb[0].mxu0 %v1436
        %v1535 = vpop.f32.mrb[0].mxu0
        %v1536 = vadd.f32 %v1417, %v1535
        %v1537 = vpop.f32.mrb[0].mxu0
        %1538 = vmatprep.mubr.f32.mxu0 0.0
        %1539 = vmatmul.mubr.f32.gmra.mrb[0].mxu0 %v1439
        %v1540 = vpop.f32.mrb[0].mxu0
        %v1541 = vadd.f32 %v1417, %v1540
        %v1542 = vpop.f32.mrb[0].mxu0
        %1543 = vmatprep.mubr.f32.mxu0 0.0
        %1544 = vmatmul.mubr.f32.gmra.mrb[0].mxu0 %v1442
        %v1545 = vpop.f32.mrb[0].mxu0
        %v1546 = vadd.f32 %v1417, %v1545
        %v1547 = vpop.f32.mrb[0].mxu0
        %1548 = vdwg.mxu0
        %v1549 = vmax.f32 %v1511, 0.0
        %v1550 = vmax.f32 %v1516, 0.0
        %v1551 = vmax.f32 %v1521, 0.0
        %v1552 = vmax.f32 %v1526, 0.0
        %v1553 = vmax.f32 %v1531, 0.0
        %v1554 = vmax.f32 %v1536, 0.0
        %v1555 = vmax.f32 %v1541, 0.0
        %v1556 = vmax.f32 %v1546, 0.0
        %vm1557 = vcmask 523264
        %1558 = vst.msk [vmem:[%s286] sm:$0xff] %vm1557, %v1549
        %1559 = vst.msk [vmem:[%s286 + $0x8] sm:$0xff] %vm1557, %v1550
        %1560 = vst.msk [vmem:[%s286 + $0x10] sm:$0xff] %vm1557, %v1551
        %1561 = vst.msk [vmem:[%s286 + $0x18] sm:$0xff] %vm1557, %v1552
        %1562 = vst.msk [vmem:[%s286 + $0x20] sm:$0xff] %vm1557, %v1553
        %1563 = vst.msk [vmem:[%s286 + $0x28] sm:$0xff] %vm1557, %v1554
        %1564 = vst.msk [vmem:[%s286 + $0x30] sm:$0xff] %vm1557, %v1555
        %1565 = vst.msk [vmem:[%s286 + $0x38] sm:$0xff] %vm1557, %v1556
        %s1566 = sand.u32 %s186, 1
        %s1567 = scalar_lea.sflag [#allocation3], %s1566
        %s1568 = sand.u32 %s186, 1
        %s1569 = smul.addr %s1568, 64
        %s1570 = scalar_lea.vmem [#allocation2], %s1569
        // Predicated region
        $region49: #{_lambda_.3} parent=47 // pred_check
          %p1571 = pneg %p196
        $region50: #{_lambda_.3} parent=47 // pred_check_branch
          %1573 = sbr.rel (%p1571) target = $region52
        $region51: #{_lambda_.3} parent=47 // pred_region
          %s1575 = ssub.s32 1024, 1024
          %1576 = vsyncadd %s1567, %s1575
          %s1577 = smul.addr %s21, 8
          %s1578 = smul.addr %s1577, 128
          %s1579 = scalar_lea.hbm %s7, %s1578
          %s1580 = sshll.u32 %s1570, 4
          %s1581 = int_to_ptr.vmem [resolvable:$true] %s1580
          %1586 = dma.vmem_to_hbm [thread:$0]  %s1581, 1024, %s1579, %s1567, 128, 128, 8
        $region52: #{_lambda_.3} parent=47 // pred_fallthru
          _
      $region48: #{_lambda_.3} parent=5 // pred_fallthru
        _
      %p1587 = scmp.le.s32.totalorder 2, %s16
      // Predicated region
      $region53: #{_lambda_.3} parent=5 // pred_check
        %p1588 = pneg %p1587
      $region54: #{_lambda_.3} parent=5 // pred_check_branch
        %1590 = sbr.rel (%p1588) target = $region56
      $region55: #{_lambda_.3} parent=5 // pred_region
        %s1591 = ssub.s32 %s16, 2
        // Predicated region
        $region57: #{_lambda_.3} parent=55 // pred_check
          %p1592 = pneg %p202
        $region58: #{_lambda_.3} parent=55 // pred_check_branch
          %1594 = sbr.rel (%p1592) target = $region60
        $region59: #{_lambda_.3} parent=55 // pred_region
          %s1595 = sand.u32 %s187, 1
          %s1596 = scalar_lea.sflag [#allocation3], %s1595
          %s1597 = sand.u32 %s187, 1
          %s1598 = smul.addr %s1597, 64
          %s1599 = scalar_lea.vmem [#allocation2], %s1598
          %1600 = dma.done %s1596, 1024
        $region60: #{_lambda_.3} parent=55 // pred_fallthru
          _
      $region56: #{_lambda_.3} parent=5 // pred_fallthru
        _
    $region6: #{_lambda_.3} parent=1 // loop_footer
      %s20 = sadd.s32 1, %s16
    $region7: #{_lambda_.3} parent=1 // loop_footer_branch
      %15 = sbr.rel target = $region3
    $region8: #{_lambda_.3} parent=1 // loop_exit
      _
    %1601 = vsyncpa [#allocation3], 1
    %s1602 = scalar_lea.sflag [#allocation3], 1
    %1603 = vsyncpa %s1602, 1

// kernel: _lambda_.2
$region0: #{_lambda_.2}
  #allocation0 [shape = 'u32[]', space=smem, size = 0x4, offset = 0x4, fixed_abs, tag = 'smem constant byte address 0x4 - core index']
  #allocation1 [shape = 'u32[144,128]{1,0:T(1,128)}', space=vmem, size = 0x12000, scoped, tag = 'internal scratch']
  #allocation2 [shape = 'f32[17,17,32]{2,1,0:T(8,128)}', space=vmem, size = 0x33000, scoped, tag = 'scratch operand']
  #allocation3 [shape = 'f32[17,17,16]{2,1,0:T(8,128)}', space=vmem, size = 0x33000, scoped, tag = 'scratch operand']
  %s0 = inlined_call_operand.vmem [shape: f32[2,17,17,12], index: 0, kind: input, shape index: {}]
  %s1 = inlined_call_operand.vmem [shape: f32[4,12,32], index: 1, kind: input, shape index: {}]
  %s2 = inlined_call_operand.vmem [shape: f32[1,32], index: 2, kind: input, shape index: {}]
  %s3 = inlined_call_operand.vmem [shape: f32[4,32,16], index: 3, kind: input, shape index: {}]
  %s4 = inlined_call_operand.vmem [shape: f32[1,16], index: 4, kind: input, shape index: {}]
  %s5 = inlined_call_operand.vmem [shape: f32[4,16,32], index: 5, kind: input, shape index: {}]
  %s6 = inlined_call_operand.vmem [shape: f32[1,32], index: 6, kind: input, shape index: {}]
  %s7 = inlined_call_operand.vmem [shape: f32[2,16,16,32], index: 7, kind: output, shape index: {0}]
  %s8 = inlined_call_operand.vmem [shape: f32[2,16,16,32], index: 8, kind: output, shape index: {1}]
  %9 = xla_tuple %s7, %s8
  %s10 = sld [smem:[#allocation0]]
  $region69: #{_lambda_.2} parent=0
    _
  %s12 = ssub.s32 1, %s10
  %s13 = scalar_select 0, %s12, %s10
  loop: start=0, step=1, limit=4
  $region2: #{_lambda_.2} parent=0 // loop_pre_header
    _
  $region3: #{_lambda_.2} parent=0 // loop_header
    %s15 = sphi 0, %s19
    %p16 = scmp.ge.s32.totalorder %s15, 4
    %s25 = sphi 0, %s27
    %s28 = sphi 0, %s25
    %s29 = sphi 0, %s28
    %s45 = sphi 0, %s29
    %s49 = sphi 0, %s49
    %s51 = sphi 0, %s49
    %s52 = sphi 0, %s51
    %s66 = sphi 0, %s52
    %s70 = sphi 0, %s70
    %s72 = sphi 0, %s70
    %s73 = sphi 0, %s72
    %s87 = sphi 0, %s73
    %s91 = sphi 0, %s91
    %s93 = sphi 0, %s91
    %s94 = sphi 0, %s93
    %s108 = sphi 0, %s94
    %s112 = sphi 0, %s112
    %s114 = sphi 0, %s112
    %s115 = sphi 0, %s114
    %s129 = sphi 0, %s115
    %s133 = sphi 0, %s133
    %s135 = sphi 0, %s133
    %s136 = sphi 0, %s135
    %s150 = sphi 0, %s136
    %s154 = sphi 0, %s154
    %s156 = sphi 0, %s154
    %s157 = sphi 0, %s156
    %s171 = sphi 0, %s157
    %s177 = sphi 0, %s179
    %s180 = sphi 0, %s177
    %s181 = sphi 0, %s180
    %s197 = sphi 0, %s181
    %s203 = sphi 0, %s205
    %s206 = sphi 0, %s203
    %s207 = sphi 0, %s206
    %s223 = sphi 0, %s207
  $region4: #{_lambda_.2} parent=0 // loop_header_branch
    %18 = sbr.rel (%p16) target = $region8
  $region5: #{_lambda_.2} parent=0 // loop_body
    %s20 = ssub.s32 %s15, 1
    %s21 = ssub.s32 %s15, 2
    %s22 = sadd.s32 %s15, 1
    %s23 = ssub.s32 %s15, %s22
    %p24 = scmp.eq.s32.totalorder %s23, 0
    %s26 = sadd.s32 %s25, 1
    %s27 = scalar_select %p24, %s25, %s26
    %p30 = pneg %p24
    %p31 = scmp.eq.s32.totalorder %s15, 1
    %p32 = por %p30, %p31
    %p33 = scmp.ne.s32.totalorder %s25, %s28
    %p34 = scmp.eq.s32.totalorder %s15, 0
    %p35 = por %p33, %p34
    %p36 = scmp.ne.s32.totalorder %s25, %s28
    %p37 = scmp.eq.s32.totalorder %s20, 1
    %p38 = por %p36, %p37
    %p39 = scmp.ne.s32.totalorder %s28, %s29
    %p40 = scmp.eq.s32.totalorder %s20, 0
    %p41 = por %p39, %p40
    %p42 = scmp.ne.s32.totalorder %s28, %s29
    %p43 = scmp.eq.s32.totalorder %s21, 1
    %p44 = por %p42, %p43
    %p46 = scmp.ne.s32.totalorder %s29, %s45
    %p47 = scmp.eq.s32.totalorder %s21, 0
    %p48 = por %p46, %p47
    %s50 = sadd.s32 %s49, 1
    %p53 = scmp.eq.s32.totalorder %s15, 1
    %p54 = scmp.ne.s32.totalorder %s49, %s51
    %p55 = scmp.eq.s32.totalorder %s15, 0
    %p56 = por %p54, %p55
    %p57 = scmp.ne.s32.totalorder %s49, %s51
    %p58 = scmp.eq.s32.totalorder %s20, 1
    %p59 = por %p57, %p58
    %p60 = scmp.ne.s32.totalorder %s51, %s52
    %p61 = scmp.eq.s32.totalorder %s20, 0
    %p62 = por %p60, %p61
    %p63 = scmp.ne.s32.totalorder %s51, %s52
    %p64 = scmp.eq.s32.totalorder %s21, 1
    %p65 = por %p63, %p64
    %p67 = scmp.ne.s32.totalorder %s52, %s66
    %p68 = scmp.eq.s32.totalorder %s21, 0
    %p69 = por %p67, %p68
    %s71 = sadd.s32 %s70, 1
    %p74 = scmp.eq.s32.totalorder %s15, 1
    %p75 = scmp.ne.s32.totalorder %s70, %s72
    %p76 = scmp.eq.s32.totalorder %s15, 0
    %p77 = por %p75, %p76
    %p78 = scmp.ne.s32.totalorder %s70, %s72
    %p79 = scmp.eq.s32.totalorder %s20, 1
    %p80 = por %p78, %p79
    %p81 = scmp.ne.s32.totalorder %s72, %s73
    %p82 = scmp.eq.s32.totalorder %s20, 0
    %p83 = por %p81, %p82
    %p84 = scmp.ne.s32.totalorder %s72, %s73
    %p85 = scmp.eq.s32.totalorder %s21, 1
    %p86 = por %p84, %p85
    %p88 = scmp.ne.s32.totalorder %s73, %s87
    %p89 = scmp.eq.s32.totalorder %s21, 0
    %p90 = por %p88, %p89
    %s92 = sadd.s32 %s91, 1
    %p95 = scmp.eq.s32.totalorder %s15, 1
    %p96 = scmp.ne.s32.totalorder %s91, %s93
    %p97 = scmp.eq.s32.totalorder %s15, 0
    %p98 = por %p96, %p97
    %p99 = scmp.ne.s32.totalorder %s91, %s93
    %p100 = scmp.eq.s32.totalorder %s20, 1
    %p101 = por %p99, %p100
    %p102 = scmp.ne.s32.totalorder %s93, %s94
    %p103 = scmp.eq.s32.totalorder %s20, 0
    %p104 = por %p102, %p103
    %p105 = scmp.ne.s32.totalorder %s93, %s94
    %p106 = scmp.eq.s32.totalorder %s21, 1
    %p107 = por %p105, %p106
    %p109 = scmp.ne.s32.totalorder %s94, %s108
    %p110 = scmp.eq.s32.totalorder %s21, 0
    %p111 = por %p109, %p110
    %s113 = sadd.s32 %s112, 1
    %p116 = scmp.eq.s32.totalorder %s15, 1
    %p117 = scmp.ne.s32.totalorder %s112, %s114
    %p118 = scmp.eq.s32.totalorder %s15, 0
    %p119 = por %p117, %p118
    %p120 = scmp.ne.s32.totalorder %s112, %s114
    %p121 = scmp.eq.s32.totalorder %s20, 1
    %p122 = por %p120, %p121
    %p123 = scmp.ne.s32.totalorder %s114, %s115
    %p124 = scmp.eq.s32.totalorder %s20, 0
    %p125 = por %p123, %p124
    %p126 = scmp.ne.s32.totalorder %s114, %s115
    %p127 = scmp.eq.s32.totalorder %s21, 1
    %p128 = por %p126, %p127
    %p130 = scmp.ne.s32.totalorder %s115, %s129
    %p131 = scmp.eq.s32.totalorder %s21, 0
    %p132 = por %p130, %p131
    %s134 = sadd.s32 %s133, 1
    %p137 = scmp.eq.s32.totalorder %s15, 1
    %p138 = scmp.ne.s32.totalorder %s133, %s135
    %p139 = scmp.eq.s32.totalorder %s15, 0
    %p140 = por %p138, %p139
    %p141 = scmp.ne.s32.totalorder %s133, %s135
    %p142 = scmp.eq.s32.totalorder %s20, 1
    %p143 = por %p141, %p142
    %p144 = scmp.ne.s32.totalorder %s135, %s136
    %p145 = scmp.eq.s32.totalorder %s20, 0
    %p146 = por %p144, %p145
    %p147 = scmp.ne.s32.totalorder %s135, %s136
    %p148 = scmp.eq.s32.totalorder %s21, 1
    %p149 = por %p147, %p148
    %p151 = scmp.ne.s32.totalorder %s136, %s150
    %p152 = scmp.eq.s32.totalorder %s21, 0
    %p153 = por %p151, %p152
    %s155 = sadd.s32 %s154, 1
    %p158 = scmp.eq.s32.totalorder %s15, 1
    %p159 = scmp.ne.s32.totalorder %s154, %s156
    %p160 = scmp.eq.s32.totalorder %s15, 0
    %p161 = por %p159, %p160
    %p162 = scmp.ne.s32.totalorder %s154, %s156
    %p163 = scmp.eq.s32.totalorder %s20, 1
    %p164 = por %p162, %p163
    %p165 = scmp.ne.s32.totalorder %s156, %s157
    %p166 = scmp.eq.s32.totalorder %s20, 0
    %p167 = por %p165, %p166
    %p168 = scmp.ne.s32.totalorder %s156, %s157
    %p169 = scmp.eq.s32.totalorder %s21, 1
    %p170 = por %p168, %p169
    %p172 = scmp.ne.s32.totalorder %s157, %s171
    %p173 = scmp.eq.s32.totalorder %s21, 0
    %p174 = por %p172, %p173
    %s175 = ssub.s32 %s15, %s22
    %p176 = scmp.eq.s32.totalorder %s175, 0
    %s178 = sadd.s32 %s177, 1
    %s179 = scalar_select %p176, %s177, %s178
    %p182 = pneg %p176
    %p183 = scmp.eq.s32.totalorder %s15, 1
    %p184 = por %p182, %p183
    %p185 = scmp.ne.s32.totalorder %s177, %s180
    %p186 = scmp.eq.s32.totalorder %s15, 0
    %p187 = por %p185, %p186
    %p188 = scmp.ne.s32.totalorder %s177, %s180
    %p189 = scmp.eq.s32.totalorder %s20, 1
    %p190 = por %p188, %p189
    %p191 = scmp.ne.s32.totalorder %s180, %s181
    %p192 = scmp.eq.s32.totalorder %s20, 0
    %p193 = por %p191, %p192
    %p194 = scmp.ne.s32.totalorder %s180, %s181
    %p195 = scmp.eq.s32.totalorder %s21, 1
    %p196 = por %p194, %p195
    %p198 = scmp.ne.s32.totalorder %s181, %s197
    %p199 = scmp.eq.s32.totalorder %s21, 0
    %p200 = por %p198, %p199
    %s201 = ssub.s32 %s15, %s22
    %p202 = scmp.eq.s32.totalorder %s201, 0
    %s204 = sadd.s32 %s203, 1
    %s205 = scalar_select %p202, %s203, %s204
    %p208 = pneg %p202
    %p209 = scmp.eq.s32.totalorder %s15, 1
    %p210 = por %p208, %p209
    %p211 = scmp.ne.s32.totalorder %s203, %s206
    %p212 = scmp.eq.s32.totalorder %s15, 0
    %p213 = por %p211, %p212
    %p214 = scmp.ne.s32.totalorder %s203, %s206
    %p215 = scmp.eq.s32.totalorder %s20, 1
    %p216 = por %p214, %p215
    %p217 = scmp.ne.s32.totalorder %s206, %s207
    %p218 = scmp.eq.s32.totalorder %s20, 0
    %p219 = por %p217, %p218
    %p220 = scmp.ne.s32.totalorder %s206, %s207
    %p221 = scmp.eq.s32.totalorder %s21, 1
    %p222 = por %p220, %p221
    %p224 = scmp.ne.s32.totalorder %s207, %s223
    %p225 = scmp.eq.s32.totalorder %s21, 0
    %p226 = por %p224, %p225
    %p227 = scmp.le.s32.totalorder 1, %s15
    %p228 = scmp.lt.s32.totalorder %s15, 3
    %p229 = pnand %p227, %p228
    %p230 = pneg %p229
    // Predicated region
    $region9: #{_lambda_.2} parent=5 // pred_check
      _
    $region10: #{_lambda_.2} parent=5 // pred_check_branch
      %232 = sbr.rel (%p229) target = $region12
    $region11: #{_lambda_.2} parent=5 // pred_region
      %s233 = ssub.s32 %s15, 1
      // Predicated region
      $region13: #{_lambda_.2} parent=11 // pred_check
        %p234 = pneg %p62
      $region14: #{_lambda_.2} parent=11 // pred_check_branch
        %236 = sbr.rel (%p234) target = $region16
      $region15: #{_lambda_.2} parent=11 // pred_region
        _
      $region16: #{_lambda_.2} parent=11 // pred_fallthru
        _
      // Predicated region
      $region17: #{_lambda_.2} parent=11 // pred_check
        %p237 = pneg %p83
      $region18: #{_lambda_.2} parent=11 // pred_check_branch
        %239 = sbr.rel (%p237) target = $region20
      $region19: #{_lambda_.2} parent=11 // pred_region
        _
      $region20: #{_lambda_.2} parent=11 // pred_fallthru
        _
      // Predicated region
      $region21: #{_lambda_.2} parent=11 // pred_check
        %p240 = pneg %p104
      $region22: #{_lambda_.2} parent=11 // pred_check_branch
        %242 = sbr.rel (%p240) target = $region24
      $region23: #{_lambda_.2} parent=11 // pred_region
        _
      $region24: #{_lambda_.2} parent=11 // pred_fallthru
        _
      // Predicated region
      $region25: #{_lambda_.2} parent=11 // pred_check
        %p243 = pneg %p125
      $region26: #{_lambda_.2} parent=11 // pred_check_branch
        %245 = sbr.rel (%p243) target = $region28
      $region27: #{_lambda_.2} parent=11 // pred_region
        _
      $region28: #{_lambda_.2} parent=11 // pred_fallthru
        _
      // Predicated region
      $region29: #{_lambda_.2} parent=11 // pred_check
        %p246 = pneg %p146
      $region30: #{_lambda_.2} parent=11 // pred_check_branch
        %248 = sbr.rel (%p246) target = $region32
      $region31: #{_lambda_.2} parent=11 // pred_region
        _
      $region32: #{_lambda_.2} parent=11 // pred_fallthru
        _
      // Predicated region
      $region33: #{_lambda_.2} parent=11 // pred_check
        %p249 = pneg %p167
      $region34: #{_lambda_.2} parent=11 // pred_check_branch
        %251 = sbr.rel (%p249) target = $region36
      $region35: #{_lambda_.2} parent=11 // pred_region
        _
      $region36: #{_lambda_.2} parent=11 // pred_fallthru
        _
    $region12: #{_lambda_.2} parent=5 // pred_fallthru
      _
    %p252 = scmp.lt.s32.totalorder %s15, 2
    // Predicated region
    $region37: #{_lambda_.2} parent=5 // pred_check
      %p253 = pneg %p252
    $region38: #{_lambda_.2} parent=5 // pred_check_branch
      %255 = sbr.rel (%p253) target = $region40
    $region39: #{_lambda_.2} parent=5 // pred_region
      // Predicated region
      $region41: #{_lambda_.2} parent=39 // pred_check
        %p256 = pneg %p35
      $region42: #{_lambda_.2} parent=39 // pred_check_branch
        %258 = sbr.rel (%p256) target = $region44
      $region43: #{_lambda_.2} parent=39 // pred_region
        %p259 = scmp.lt.s32.totalorder %s15, 1
        %s260 = scalar_select %p259, %s15, 1
        %s261 = smul.addr %s260, 51
        %s262 = smul.addr %s261, 8
        %s263 = scalar_lea.vmem %s0, %s262
      $region44: #{_lambda_.2} parent=39 // pred_fallthru
        _
    $region40: #{_lambda_.2} parent=5 // pred_fallthru
      _
    %p264 = scmp.le.s32.totalorder 1, %s15
    %p265 = scmp.lt.s32.totalorder %s15, 3
    %p266 = pnand %p264, %p265
    %p267 = pneg %p266
    // Predicated region
    $region45: #{_lambda_.2} parent=5 // pred_check
      _
    $region46: #{_lambda_.2} parent=5 // pred_check_branch
      %269 = sbr.rel (%p266) target = $region48
    $region47: #{_lambda_.2} parent=5 // pred_region
      %s270 = ssub.s32 %s15, 1
      %p271 = scmp.lt.s32.totalorder %s20, 1
      %s272 = scalar_select %p271, %s20, 1
      %s273 = smul.addr %s272, 51
      %s274 = smul.addr %s273, 8
      %s275 = scalar_lea.vmem %s0, %s274
      %p276 = pneg %p41
      %p277 = pneg %p38
      %p278 = pneg %p62
      %p279 = pneg %p59
      %p280 = pneg %p83
      %p281 = pneg %p80
      %p282 = pneg %p104
      %p283 = pneg %p101
      %p284 = pneg %p125
      %p285 = pneg %p122
      %p286 = pneg %p146
      %p287 = pneg %p143
      %p288 = pneg %p167
      %p289 = pneg %p164
      %p290 = pneg %p193
      %p291 = pneg %p190
      %p292 = scmp.lt.s32.totalorder %s20, 1
      %s293 = scalar_select %p292, %s20, 1
      %s294 = smul.addr %s293, 32
      %s295 = smul.addr %s294, 8
      %s296 = scalar_lea.vmem %s7, %s295
      %p297 = pneg %p219
      %p298 = pneg %p216
      %p299 = scmp.lt.s32.totalorder %s20, 1
      %s300 = scalar_select %p299, %s20, 1
      %s301 = smul.addr %s300, 32
      %s302 = smul.addr %s301, 8
      %s303 = scalar_lea.vmem %s8, %s302
      %p304 = scmp.lt.s32.totalorder %s20, 1
      %s305 = scalar_select %p304, %s20, 1
      %s306 = smul.addr %s305, 51
      %s307 = smul.addr %s306, 8
      %s308 = scalar_lea.vmem %s0, %s307
      %p309 = scmp.lt.s32.totalorder %s20, 1
      %s310 = scalar_select %p309, %s20, 1
      %s311 = smul.addr %s310, 32
      %s312 = smul.addr %s311, 8
      %s313 = scalar_lea.vmem %s7, %s312
      %p314 = scmp.lt.s32.totalorder %s20, 1
      %s315 = scalar_select %p314, %s20, 1
      %s316 = smul.addr %s315, 32
      %s317 = smul.addr %s316, 8
      %s318 = scalar_lea.vmem %s8, %s317
      %v319 = vld [vmem:[%s308] sm:$0xff]
      %v320 = vld [vmem:[%s308 + $0x8] sm:$0xff]
      %v321 = vld [vmem:[%s308 + $0x18] sm:$0xff]
      %v322 = vld [vmem:[%s308 + $0x20] sm:$0xff]
      %v323 = vld [vmem:[%s308 + $0x30] sm:$0xff]
      %v324 = vld [vmem:[%s308 + $0x38] sm:$0xff]
      %v325 = vld [vmem:[%s308 + $0x48] sm:$0xff]
      %v326 = vld [vmem:[%s308 + $0x50] sm:$0xff]
      %v327 = vld [vmem:[%s308 + $0x60] sm:$0xff]
      %v328 = vld [vmem:[%s308 + $0x68] sm:$0xff]
      %v329 = vld [vmem:[%s308 + $0x78] sm:$0xff]
      %v330 = vld [vmem:[%s308 + $0x80] sm:$0xff]
      %v331 = vld [vmem:[%s308 + $0x90] sm:$0xff]
      %v332 = vld [vmem:[%s308 + $0x98] sm:$0xff]
      %v333 = vld [vmem:[%s308 + $0xa8] sm:$0xff]
      %v334 = vld [vmem:[%s308 + $0xb0] sm:$0xff]
      %v335 = vld [vmem:[%s308 + $0xc0] sm:$0xff]
      %v336 = vld [vmem:[%s308 + $0xc8] sm:$0xff]
      %v337 = vld [vmem:[%s308 + $0xd8] sm:$0xff]
      %v338 = vld [vmem:[%s308 + $0xe0] sm:$0xff]
      %v339 = vld [vmem:[%s308 + $0xf0] sm:$0xff]
      %v340 = vld [vmem:[%s308 + $0xf8] sm:$0xff]
      %v341 = vld [vmem:[%s308 + $0x108] sm:$0xff]
      %v342 = vld [vmem:[%s308 + $0x110] sm:$0xff]
      %v343 = vld [vmem:[%s308 + $0x120] sm:$0xff]
      %v344 = vld [vmem:[%s308 + $0x128] sm:$0xff]
      %v345 = vld [vmem:[%s308 + $0x138] sm:$0xff]
      %v346 = vld [vmem:[%s308 + $0x140] sm:$0xff]
      %v347 = vld [vmem:[%s308 + $0x150] sm:$0xff]
      %v348 = vld [vmem:[%s308 + $0x158] sm:$0xff]
      %v349 = vld [vmem:[%s308 + $0x168] sm:$0xff]
      %v350 = vld [vmem:[%s308 + $0x170] sm:$0xff]
      %v351 = vld [vmem:[%s1] sm:$0xff]
      %v352 = vld [vmem:[%s1 + $0x8] sm:$0xf]
      %v353 = vld [vmem:[%s308 + $0x1] sm:$0xff]
      %v354 = vld [vmem:[%s308 + $0x9] sm:$0xff]
      %v355 = vld [vmem:[%s308 + $0x19] sm:$0xff]
      %v356 = vld [vmem:[%s308 + $0x21] sm:$0xff]
      %v357 = vld [vmem:[%s308 + $0x31] sm:$0xff]
      %v358 = vld [vmem:[%s308 + $0x39] sm:$0xff]
      %v359 = vld [vmem:[%s308 + $0x49] sm:$0xff]
      %v360 = vld [vmem:[%s308 + $0x51] sm:$0xff]
      %v361 = vld [vmem:[%s308 + $0x61] sm:$0xff]
      %v362 = vld [vmem:[%s308 + $0x69] sm:$0xff]
      %v363 = vld [vmem:[%s308 + $0x79] sm:$0xff]
      %v364 = vld [vmem:[%s308 + $0x81] sm:$0xff]
      %v365 = vld [vmem:[%s308 + $0x91] sm:$0xff]
      %v366 = vld [vmem:[%s308 + $0x99] sm:$0xff]
      %v367 = vld [vmem:[%s308 + $0xa9] sm:$0xff]
      %v368 = vld [vmem:[%s308 + $0xb1] sm:$0xff]
      %v369 = vld [vmem:[%s308 + $0xc1] sm:$0xff]
      %v370 = vld [vmem:[%s308 + $0xc9] sm:$0xff]
      %v371 = vld [vmem:[%s308 + $0xd9] sm:$0xff]
      %v372 = vld [vmem:[%s308 + $0xe1] sm:$0xff]
      %v373 = vld [vmem:[%s308 + $0xf1] sm:$0xff]
      %v374 = vld [vmem:[%s308 + $0xf9] sm:$0xff]
      %v375 = vld [vmem:[%s308 + $0x109] sm:$0xff]
      %v376 = vld [vmem:[%s308 + $0x111] sm:$0xff]
      %v377 = vld [vmem:[%s308 + $0x121] sm:$0xff]
      %v378 = vld [vmem:[%s308 + $0x129] sm:$0xff]
      %v379 = vld [vmem:[%s308 + $0x139] sm:$0xff]
      %v380 = vld [vmem:[%s308 + $0x141] sm:$0xff]
      %v381 = vld [vmem:[%s308 + $0x151] sm:$0xff]
      %v382 = vld [vmem:[%s308 + $0x159] sm:$0xff]
      %v383 = vld [vmem:[%s308 + $0x169] sm:$0xff]
      %v384 = vld [vmem:[%s308 + $0x171] sm:$0xff]
      %s385 = scalar_lea.vmem %s1, 16
      %v386 = vld [vmem:[%s385] sm:$0xff]
      %v387 = vld [vmem:[%s385 + $0x8] sm:$0xf]
      %vm388 = vcmask 97280
      %v390 = vsel %vm388, %v353, 0
      %v393 = vsel %vm388, %v354, 0
      %v396 = vsel %vm388, %v355, 0
      %v399 = vsel %vm388, %v356, 0
      %v402 = vsel %vm388, %v357, 0
      %v405 = vsel %vm388, %v358, 0
      %v408 = vsel %vm388, %v359, 0
      %v411 = vsel %vm388, %v360, 0
      %v414 = vsel %vm388, %v361, 0
      %v417 = vsel %vm388, %v362, 0
      %v420 = vsel %vm388, %v363, 0
      %v423 = vsel %vm388, %v364, 0
      %v426 = vsel %vm388, %v365, 0
      %v429 = vsel %vm388, %v366, 0
      %v432 = vsel %vm388, %v367, 0
      %v435 = vsel %vm388, %v368, 0
      %v438 = vsel %vm388, %v369, 0
      %v441 = vsel %vm388, %v370, 0
      %v444 = vsel %vm388, %v371, 0
      %v447 = vsel %vm388, %v372, 0
      %v450 = vsel %vm388, %v373, 0
      %v453 = vsel %vm388, %v374, 0
      %v456 = vsel %vm388, %v375, 0
      %v459 = vsel %vm388, %v376, 0
      %v462 = vsel %vm388, %v377, 0
      %v465 = vsel %vm388, %v378, 0
      %v468 = vsel %vm388, %v379, 0
      %v471 = vsel %vm388, %v380, 0
      %v474 = vsel %vm388, %v381, 0
      %v477 = vsel %vm388, %v382, 0
      %v480 = vsel %vm388, %v383, 0
      %v483 = vsel %vm388, %v384, 0
      %vm485 = vcmask 1043456
      %v487 = vsel %vm485, %v387, 0
      %489 = vmatprep.subr.mxu0 0.0
      %490 = vmatpush1.msra.mxu0 %v386
      %491 = vmatprep.subr.mxu0 0.0
      %492 = vmatpush1.msra.mxu0 %v487
      %493 = vmatprep.subr.mxu0 0.0
      %494 = vmatpush1.msra.mxu0 0.0
      %495 = vmatprep.subr.mxu0 0.0
      %496 = vmatpush1.msra.mxu0 0.0
      %497 = vmatprep.subr.mxu0 0.0
      %498 = vmatpush1.msra.mxu0 0.0
      %499 = vmatprep.subr.mxu0 0.0
      %500 = vmatpush1.msra.mxu0 0.0
      %501 = vmatprep.subr.mxu0 0.0
      %502 = vmatpush1.msra.mxu0 0.0
      %503 = vmatprep.subr.mxu0 0.0
      %504 = vmatpush1.msra.mxu0 0.0
      %505 = vmatprep.subr.mxu0 0.0
      %506 = vmatpush1.msra.mxu0 0.0
      %507 = vmatprep.subr.mxu0 0.0
      %508 = vmatpush1.msra.mxu0 0.0
      %509 = vmatprep.subr.mxu0 0.0
      %510 = vmatpush1.msra.mxu0 0.0
      %511 = vmatprep.subr.mxu0 0.0
      %512 = vmatpush1.msra.mxu0 0.0
      %513 = vmatprep.subr.mxu0 0.0
      %514 = vmatpush1.msra.mxu0 0.0
      %515 = vmatprep.subr.mxu0 0.0
      %516 = vmatpush1.msra.mxu0 0.0
      %517 = vmatprep.subr.mxu0 0.0
      %518 = vmatpush1.msra.mxu0 0.0
      %519 = vmatprep.subr.mxu0 0.0
      %520 = vmatpush1.msra.mxu0 0.0
      %521 = vmatprep.subr.mxu0 0.0
      %522 = vmatpush1.msra.mxu0 0.0
      %523 = vmatprep.subr.mxu0 0.0
      %524 = vmatpush1.msra.mxu0 0.0
      %525 = vmatprep.subr.mxu0 0.0
      %526 = vmatpush1.msra.mxu0 0.0
      %527 = vmatprep.subr.mxu0 0.0
      %528 = vmatpush1.msra.mxu0 0.0
      %529 = vmatprep.subr.mxu0 0.0
      %530 = vmatpush1.msra.mxu0 0.0
      %531 = vmatprep.subr.mxu0 0.0
      %532 = vmatpush1.msra.mxu0 0.0
      %533 = vmatprep.subr.mxu0 0.0
      %534 = vmatpush1.msra.mxu0 0.0
      %535 = vmatprep.subr.mxu0 0.0
      %536 = vmatpush1.msra.mxu0 0.0
      %537 = vmatprep.subr.mxu0 0.0
      %538 = vmatpush1.msra.mxu0 0.0
      %539 = vmatprep.subr.mxu0 0.0
      %540 = vmatpush1.msra.mxu0 0.0
      %541 = vmatprep.subr.mxu0 0.0
      %542 = vmatpush1.msra.mxu0 0.0
      %543 = vmatprep.subr.mxu0 0.0
      %544 = vmatpush1.msra.mxu0 0.0
      %545 = vmatprep.subr.mxu0 0.0
      %546 = vmatpush1.msra.mxu0 0.0
      %547 = vmatprep.subr.mxu0 0.0
      %548 = vmatpush1.msra.mxu0 0.0
      %549 = vmatprep.subr.mxu0 0.0
      %550 = vmatpush1.msra.mxu0 0.0
      %551 = vmatprep.subr.mxu0 0.0
      %552 = vmatpush1.msra.mxu0 0.0
      %553 = vmatprep.mubr.f32.mxu0 0.0
      %554 = vmatmul.mubr.f32.gmra.mrb[0].mxu0 %v390
      %v555 = vpop.f32.mrb[0].mxu0
      %v556 = vadd.f32 0.0, %v555
      %v557 = vpop.f32.mrb[0].mxu0
      %558 = vmatprep.mubr.f32.mxu0 0.0
      %559 = vmatmul.mubr.f32.gmra.mrb[0].mxu0 %v393
      %v560 = vpop.f32.mrb[0].mxu0
      %v561 = vadd.f32 0.0, %v560
      %v562 = vpop.f32.mrb[0].mxu0
      %563 = vmatprep.mubr.f32.mxu0 0.0
      %564 = vmatmul.mubr.f32.gmra.mrb[0].mxu0 %v396
      %v565 = vpop.f32.mrb[0].mxu0
      %v566 = vadd.f32 0.0, %v565
      %v567 = vpop.f32.mrb[0].mxu0
      %568 = vmatprep.mubr.f32.mxu0 0.0
      %569 = vmatmul.mubr.f32.gmra.mrb[0].mxu0 %v399
      %v570 = vpop.f32.mrb[0].mxu0
      %v571 = vadd.f32 0.0, %v570
      %v572 = vpop.f32.mrb[0].mxu0
      %573 = vmatprep.mubr.f32.mxu0 0.0
      %574 = vmatmul.mubr.f32.gmra.mrb[0].mxu0 %v402
      %v575 = vpop.f32.mrb[0].mxu0
      %v576 = vadd.f32 0.0, %v575
      %v577 = vpop.f32.mrb[0].mxu0
      %578 = vmatprep.mubr.f32.mxu0 0.0
      %579 = vmatmul.mubr.f32.gmra.mrb[0].mxu0 %v405
      %v580 = vpop.f32.mrb[0].mxu0
      %v581 = vadd.f32 0.0, %v580
      %v582 = vpop.f32.mrb[0].mxu0
      %583 = vmatprep.mubr.f32.mxu0 0.0
      %584 = vmatmul.mubr.f32.gmra.mrb[0].mxu0 %v408
      %v585 = vpop.f32.mrb[0].mxu0
      %v586 = vadd.f32 0.0, %v585
      %v587 = vpop.f32.mrb[0].mxu0
      %588 = vmatprep.mubr.f32.mxu0 0.0
      %589 = vmatmul.mubr.f32.gmra.mrb[0].mxu0 %v411
      %v590 = vpop.f32.mrb[0].mxu0
      %v591 = vadd.f32 0.0, %v590
      %v592 = vpop.f32.mrb[0].mxu0
      %593 = vmatprep.mubr.f32.mxu0 0.0
      %594 = vmatmul.mubr.f32.gmra.mrb[0].mxu0 %v414
      %v595 = vpop.f32.mrb[0].mxu0
      %v596 = vadd.f32 0.0, %v595
      %v597 = vpop.f32.mrb[0].mxu0
      %598 = vmatprep.mubr.f32.mxu0 0.0
      %599 = vmatmul.mubr.f32.gmra.mrb[0].mxu0 %v417
      %v600 = vpop.f32.mrb[0].mxu0
      %v601 = vadd.f32 0.0, %v600
      %v602 = vpop.f32.mrb[0].mxu0
      %603 = vmatprep.mubr.f32.mxu0 0.0
      %604 = vmatmul.mubr.f32.gmra.mrb[0].mxu0 %v420
      %v605 = vpop.f32.mrb[0].mxu0
      %v606 = vadd.f32 0.0, %v605
      %v607 = vpop.f32.mrb[0].mxu0
      %608 = vmatprep.mubr.f32.mxu0 0.0
      %609 = vmatmul.mubr.f32.gmra.mrb[0].mxu0 %v423
      %v610 = vpop.f32.mrb[0].mxu0
      %v611 = vadd.f32 0.0, %v610
      %v612 = vpop.f32.mrb[0].mxu0
      %613 = vmatprep.mubr.f32.mxu0 0.0
      %614 = vmatmul.mubr.f32.gmra.mrb[0].mxu0 %v426
      %v615 = vpop.f32.mrb[0].mxu0
      %v616 = vadd.f32 0.0, %v615
      %v617 = vpop.f32.mrb[0].mxu0
      %618 = vmatprep.mubr.f32.mxu0 0.0
      %619 = vmatmul.mubr.f32.gmra.mrb[0].mxu0 %v429
      %v620 = vpop.f32.mrb[0].mxu0
      %v621 = vadd.f32 0.0, %v620
      %v622 = vpop.f32.mrb[0].mxu0
      %623 = vmatprep.mubr.f32.mxu0 0.0
      %624 = vmatmul.mubr.f32.gmra.mrb[0].mxu0 %v432
      %v625 = vpop.f32.mrb[0].mxu0
      %v626 = vadd.f32 0.0, %v625
      %v627 = vpop.f32.mrb[0].mxu0
      %628 = vmatprep.mubr.f32.mxu0 0.0
      %629 = vmatmul.mubr.f32.gmra.mrb[0].mxu0 %v435
      %v630 = vpop.f32.mrb[0].mxu0
      %v631 = vadd.f32 0.0, %v630
      %v632 = vpop.f32.mrb[0].mxu0
      %633 = vmatprep.mubr.f32.mxu0 0.0
      %634 = vmatmul.mubr.f32.gmra.mrb[0].mxu0 %v438
      %v635 = vpop.f32.mrb[0].mxu0
      %v636 = vadd.f32 0.0, %v635
      %v637 = vpop.f32.mrb[0].mxu0
      %638 = vmatprep.mubr.f32.mxu0 0.0
      %639 = vmatmul.mubr.f32.gmra.mrb[0].mxu0 %v441
      %v640 = vpop.f32.mrb[0].mxu0
      %v641 = vadd.f32 0.0, %v640
      %v642 = vpop.f32.mrb[0].mxu0
      %643 = vmatprep.mubr.f32.mxu0 0.0
      %644 = vmatmul.mubr.f32.gmra.mrb[0].mxu0 %v444
      %v645 = vpop.f32.mrb[0].mxu0
      %v646 = vadd.f32 0.0, %v645
      %v647 = vpop.f32.mrb[0].mxu0
      %648 = vmatprep.mubr.f32.mxu0 0.0
      %649 = vmatmul.mubr.f32.gmra.mrb[0].mxu0 %v447
      %v650 = vpop.f32.mrb[0].mxu0
      %v651 = vadd.f32 0.0, %v650
      %v652 = vpop.f32.mrb[0].mxu0
      %653 = vmatprep.mubr.f32.mxu0 0.0
      %654 = vmatmul.mubr.f32.gmra.mrb[0].mxu0 %v450
      %v655 = vpop.f32.mrb[0].mxu0
      %v656 = vadd.f32 0.0, %v655
      %v657 = vpop.f32.mrb[0].mxu0
      %658 = vmatprep.mubr.f32.mxu0 0.0
      %659 = vmatmul.mubr.f32.gmra.mrb[0].mxu0 %v453
      %v660 = vpop.f32.mrb[0].mxu0
      %v661 = vadd.f32 0.0, %v660
      %v662 = vpop.f32.mrb[0].mxu0
      %663 = vmatprep.mubr.f32.mxu0 0.0
      %664 = vmatmul.mubr.f32.gmra.mrb[0].mxu0 %v456
      %v665 = vpop.f32.mrb[0].mxu0
      %v666 = vadd.f32 0.0, %v665
      %v667 = vpop.f32.mrb[0].mxu0
      %668 = vmatprep.mubr.f32.mxu0 0.0
      %669 = vmatmul.mubr.f32.gmra.mrb[0].mxu0 %v459
      %v670 = vpop.f32.mrb[0].mxu0
      %v671 = vadd.f32 0.0, %v670
      %v672 = vpop.f32.mrb[0].mxu0
      %673 = vmatprep.mubr.f32.mxu0 0.0
      %674 = vmatmul.mubr.f32.gmra.mrb[0].mxu0 %v462
      %v675 = vpop.f32.mrb[0].mxu0
      %v676 = vadd.f32 0.0, %v675
      %v677 = vpop.f32.mrb[0].mxu0
      %678 = vmatprep.mubr.f32.mxu0 0.0
      %679 = vmatmul.mubr.f32.gmra.mrb[0].mxu0 %v465
      %v680 = vpop.f32.mrb[0].mxu0
      %v681 = vadd.f32 0.0, %v680
      %v682 = vpop.f32.mrb[0].mxu0
      %683 = vmatprep.mubr.f32.mxu0 0.0
      %684 = vmatmul.mubr.f32.gmra.mrb[0].mxu0 %v468
      %v685 = vpop.f32.mrb[0].mxu0
      %v686 = vadd.f32 0.0, %v685
      %v687 = vpop.f32.mrb[0].mxu0
      %688 = vmatprep.mubr.f32.mxu0 0.0
      %689 = vmatmul.mubr.f32.gmra.mrb[0].mxu0 %v471
      %v690 = vpop.f32.mrb[0].mxu0
      %v691 = vadd.f32 0.0, %v690
      %v692 = vpop.f32.mrb[0].mxu0
      %693 = vmatprep.mubr.f32.mxu0 0.0
      %694 = vmatmul.mubr.f32.gmra.mrb[0].mxu0 %v474
      %v695 = vpop.f32.mrb[0].mxu0
      %v696 = vadd.f32 0.0, %v695
      %v697 = vpop.f32.mrb[0].mxu0
      %698 = vmatprep.mubr.f32.mxu0 0.0
      %699 = vmatmul.mubr.f32.gmra.mrb[0].mxu0 %v477
      %v700 = vpop.f32.mrb[0].mxu0
      %v701 = vadd.f32 0.0, %v700
      %v702 = vpop.f32.mrb[0].mxu0
      %703 = vmatprep.mubr.f32.mxu0 0.0
      %704 = vmatmul.mubr.f32.gmra.mrb[0].mxu0 %v480
      %v705 = vpop.f32.mrb[0].mxu0
      %v706 = vadd.f32 0.0, %v705
      %v707 = vpop.f32.mrb[0].mxu0
      %708 = vmatprep.mubr.f32.mxu0 0.0
      %709 = vmatmul.mubr.f32.gmra.mrb[0].mxu0 %v483
      %v710 = vpop.f32.mrb[0].mxu0
      %v711 = vadd.f32 0.0, %v710
      %v712 = vpop.f32.mrb[0].mxu0
      %713 = vdwg.mxu0
      %v715 = vsel %vm388, %v319, 0
      %v718 = vsel %vm388, %v320, 0
      %v721 = vsel %vm388, %v321, 0
      %v724 = vsel %vm388, %v322, 0
      %v727 = vsel %vm388, %v323, 0
      %v730 = vsel %vm388, %v324, 0
      %v733 = vsel %vm388, %v325, 0
      %v736 = vsel %vm388, %v326, 0
      %v739 = vsel %vm388, %v327, 0
      %v742 = vsel %vm388, %v328, 0
      %v745 = vsel %vm388, %v329, 0
      %v748 = vsel %vm388, %v330, 0
      %v751 = vsel %vm388, %v331, 0
      %v754 = vsel %vm388, %v332, 0
      %v757 = vsel %vm388, %v333, 0
      %v760 = vsel %vm388, %v334, 0
      %v763 = vsel %vm388, %v335, 0
      %v766 = vsel %vm388, %v336, 0
      %v769 = vsel %vm388, %v337, 0
      %v772 = vsel %vm388, %v338, 0
      %v775 = vsel %vm388, %v339, 0
      %v778 = vsel %vm388, %v340, 0
      %v781 = vsel %vm388, %v341, 0
      %v784 = vsel %vm388, %v342, 0
      %v787 = vsel %vm388, %v343, 0
      %v790 = vsel %vm388, %v344, 0
      %v793 = vsel %vm388, %v345, 0
      %v796 = vsel %vm388, %v346, 0
      %v799 = vsel %vm388, %v347, 0
      %v802 = vsel %vm388, %v348, 0
      %v805 = vsel %vm388, %v349, 0
      %v808 = vsel %vm388, %v350, 0
      %v811 = vsel %vm485, %v352, 0
      %813 = vmatprep.subr.mxu0 0.0
      %814 = vmatpush1.msra.mxu0 %v351
      %815 = vmatprep.subr.mxu0 0.0
      %816 = vmatpush1.msra.mxu0 %v811
      %817 = vmatprep.subr.mxu0 0.0
      %818 = vmatpush1.msra.mxu0 0.0
      %819 = vmatprep.subr.mxu0 0.0
      %820 = vmatpush1.msra.mxu0 0.0
      %821 = vmatprep.subr.mxu0 0.0
      %822 = vmatpush1.msra.mxu0 0.0
      %823 = vmatprep.subr.mxu0 0.0
      %824 = vmatpush1.msra.mxu0 0.0
      %825 = vmatprep.subr.mxu0 0.0
      %826 = vmatpush1.msra.mxu0 0.0
      %827 = vmatprep.subr.mxu0 0.0
      %828 = vmatpush1.msra.mxu0 0.0
      %829 = vmatprep.subr.mxu0 0.0
      %830 = vmatpush1.msra.mxu0 0.0
      %831 = vmatprep.subr.mxu0 0.0
      %832 = vmatpush1.msra.mxu0 0.0
      %833 = vmatprep.subr.mxu0 0.0
      %834 = vmatpush1.msra.mxu0 0.0
      %835 = vmatprep.subr.mxu0 0.0
      %836 = vmatpush1.msra.mxu0 0.0
      %837 = vmatprep.subr.mxu0 0.0
      %838 = vmatpush1.msra.mxu0 0.0
      %839 = vmatprep.subr.mxu0 0.0
      %840 = vmatpush1.msra.mxu0 0.0
      %841 = vmatprep.subr.mxu0 0.0
      %842 = vmatpush1.msra.mxu0 0.0
      %843 = vmatprep.subr.mxu0 0.0
      %844 = vmatpush1.msra.mxu0 0.0
      %845 = vmatprep.subr.mxu0 0.0
      %846 = vmatpush1.msra.mxu0 0.0
      %847 = vmatprep.subr.mxu0 0.0
      %848 = vmatpush1.msra.mxu0 0.0
      %849 = vmatprep.subr.mxu0 0.0
      %850 = vmatpush1.msra.mxu0 0.0
      %851 = vmatprep.subr.mxu0 0.0
      %852 = vmatpush1.msra.mxu0 0.0
      %853 = vmatprep.subr.mxu0 0.0
      %854 = vmatpush1.msra.mxu0 0.0
      %855 = vmatprep.subr.mxu0 0.0
      %856 = vmatpush1.msra.mxu0 0.0
      %857 = vmatprep.subr.mxu0 0.0
      %858 = vmatpush1.msra.mxu0 0.0
      %859 = vmatprep.subr.mxu0 0.0
      %860 = vmatpush1.msra.mxu0 0.0
      %861 = vmatprep.subr.mxu0 0.0
      %862 = vmatpush1.msra.mxu0 0.0
      %863 = vmatprep.subr.mxu0 0.0
      %864 = vmatpush1.msra.mxu0 0.0
      %865 = vmatprep.subr.mxu0 0.0
      %866 = vmatpush1.msra.mxu0 0.0
      %867 = vmatprep.subr.mxu0 0.0
      %868 = vmatpush1.msra.mxu0 0.0
      %869 = vmatprep.subr.mxu0 0.0
      %870 = vmatpush1.msra.mxu0 0.0
      %871 = vmatprep.subr.mxu0 0.0
      %872 = vmatpush1.msra.mxu0 0.0
      %873 = vmatprep.subr.mxu0 0.0
      %874 = vmatpush1.msra.mxu0 0.0
      %875 = vmatprep.subr.mxu0 0.0
      %876 = vmatpush1.msra.mxu0 0.0
      %877 = vmatprep.mubr.f32.mxu0 0.0
      %878 = vmatmul.mubr.f32.gmra.mrb[0].mxu0 %v715
      %v879 = vpop.f32.mrb[0].mxu0
      %v880 = vadd.f32 %v556, %v879
      %v881 = vpop.f32.mrb[0].mxu0
      %882 = vmatprep.mubr.f32.mxu0 0.0
      %883 = vmatmul.mubr.f32.gmra.mrb[0].mxu0 %v718
      %v884 = vpop.f32.mrb[0].mxu0
      %v885 = vadd.f32 %v561, %v884
      %v886 = vpop.f32.mrb[0].mxu0
      %887 = vmatprep.mubr.f32.mxu0 0.0
      %888 = vmatmul.mubr.f32.gmra.mrb[0].mxu0 %v721
      %v889 = vpop.f32.mrb[0].mxu0
      %v890 = vadd.f32 %v566, %v889
      %v891 = vpop.f32.mrb[0].mxu0
      %892 = vmatprep.mubr.f32.mxu0 0.0
      %893 = vmatmul.mubr.f32.gmra.mrb[0].mxu0 %v724
      %v894 = vpop.f32.mrb[0].mxu0
      %v895 = vadd.f32 %v571, %v894
      %v896 = vpop.f32.mrb[0].mxu0
      %897 = vmatprep.mubr.f32.mxu0 0.0
      %898 = vmatmul.mubr.f32.gmra.mrb[0].mxu0 %v727
      %v899 = vpop.f32.mrb[0].mxu0
      %v900 = vadd.f32 %v576, %v899
      %v901 = vpop.f32.mrb[0].mxu0
      %902 = vmatprep.mubr.f32.mxu0 0.0
      %903 = vmatmul.mubr.f32.gmra.mrb[0].mxu0 %v730
      %v904 = vpop.f32.mrb[0].mxu0
      %v905 = vadd.f32 %v581, %v904
      %v906 = vpop.f32.mrb[0].mxu0
      %907 = vmatprep.mubr.f32.mxu0 0.0
      %908 = vmatmul.mubr.f32.gmra.mrb[0].mxu0 %v733
      %v909 = vpop.f32.mrb[0].mxu0
      %v910 = vadd.f32 %v586, %v909
      %v911 = vpop.f32.mrb[0].mxu0
      %912 = vmatprep.mubr.f32.mxu0 0.0
      %913 = vmatmul.mubr.f32.gmra.mrb[0].mxu0 %v736
      %v914 = vpop.f32.mrb[0].mxu0
      %v915 = vadd.f32 %v591, %v914
      %v916 = vpop.f32.mrb[0].mxu0
      %917 = vmatprep.mubr.f32.mxu0 0.0
      %918 = vmatmul.mubr.f32.gmra.mrb[0].mxu0 %v739
      %v919 = vpop.f32.mrb[0].mxu0
      %v920 = vadd.f32 %v596, %v919
      %v921 = vpop.f32.mrb[0].mxu0
      %922 = vmatprep.mubr.f32.mxu0 0.0
      %923 = vmatmul.mubr.f32.gmra.mrb[0].mxu0 %v742
      %v924 = vpop.f32.mrb[0].mxu0
      %v925 = vadd.f32 %v601, %v924
      %v926 = vpop.f32.mrb[0].mxu0
      %927 = vmatprep.mubr.f32.mxu0 0.0
      %928 = vmatmul.mubr.f32.gmra.mrb[0].mxu0 %v745
      %v929 = vpop.f32.mrb[0].mxu0
      %v930 = vadd.f32 %v606, %v929
      %v931 = vpop.f32.mrb[0].mxu0
      %932 = vmatprep.mubr.f32.mxu0 0.0
      %933 = vmatmul.mubr.f32.gmra.mrb[0].mxu0 %v748
      %v934 = vpop.f32.mrb[0].mxu0
      %v935 = vadd.f32 %v611, %v934
      %v936 = vpop.f32.mrb[0].mxu0
      %937 = vmatprep.mubr.f32.mxu0 0.0
      %938 = vmatmul.mubr.f32.gmra.mrb[0].mxu0 %v751
      %v939 = vpop.f32.mrb[0].mxu0
      %v940 = vadd.f32 %v616, %v939
      %v941 = vpop.f32.mrb[0].mxu0
      %942 = vmatprep.mubr.f32.mxu0 0.0
      %943 = vmatmul.mubr.f32.gmra.mrb[0].mxu0 %v754
      %v944 = vpop.f32.mrb[0].mxu0
      %v945 = vadd.f32 %v621, %v944
      %v946 = vpop.f32.mrb[0].mxu0
      %947 = vmatprep.mubr.f32.mxu0 0.0
      %948 = vmatmul.mubr.f32.gmra.mrb[0].mxu0 %v757
      %v949 = vpop.f32.mrb[0].mxu0
      %v950 = vadd.f32 %v626, %v949
      %v951 = vpop.f32.mrb[0].mxu0
      %952 = vmatprep.mubr.f32.mxu0 0.0
      %953 = vmatmul.mubr.f32.gmra.mrb[0].mxu0 %v760
      %v954 = vpop.f32.mrb[0].mxu0
      %v955 = vadd.f32 %v631, %v954
      %v956 = vpop.f32.mrb[0].mxu0
      %957 = vmatprep.mubr.f32.mxu0 0.0
      %958 = vmatmul.mubr.f32.gmra.mrb[0].mxu0 %v763
      %v959 = vpop.f32.mrb[0].mxu0
      %v960 = vadd.f32 %v636, %v959
      %v961 = vpop.f32.mrb[0].mxu0
      %962 = vmatprep.mubr.f32.mxu0 0.0
      %963 = vmatmul.mubr.f32.gmra.mrb[0].mxu0 %v766
      %v964 = vpop.f32.mrb[0].mxu0
      %v965 = vadd.f32 %v641, %v964
      %v966 = vpop.f32.mrb[0].mxu0
      %967 = vmatprep.mubr.f32.mxu0 0.0
      %968 = vmatmul.mubr.f32.gmra.mrb[0].mxu0 %v769
      %v969 = vpop.f32.mrb[0].mxu0
      %v970 = vadd.f32 %v646, %v969
      %v971 = vpop.f32.mrb[0].mxu0
      %972 = vmatprep.mubr.f32.mxu0 0.0
      %973 = vmatmul.mubr.f32.gmra.mrb[0].mxu0 %v772
      %v974 = vpop.f32.mrb[0].mxu0
      %v975 = vadd.f32 %v651, %v974
      %v976 = vpop.f32.mrb[0].mxu0
      %977 = vmatprep.mubr.f32.mxu0 0.0
      %978 = vmatmul.mubr.f32.gmra.mrb[0].mxu0 %v775
      %v979 = vpop.f32.mrb[0].mxu0
      %v980 = vadd.f32 %v656, %v979
      %v981 = vpop.f32.mrb[0].mxu0
      %982 = vmatprep.mubr.f32.mxu0 0.0
      %983 = vmatmul.mubr.f32.gmra.mrb[0].mxu0 %v778
      %v984 = vpop.f32.mrb[0].mxu0
      %v985 = vadd.f32 %v661, %v984
      %v986 = vpop.f32.mrb[0].mxu0
      %987 = vmatprep.mubr.f32.mxu0 0.0
      %988 = vmatmul.mubr.f32.gmra.mrb[0].mxu0 %v781
      %v989 = vpop.f32.mrb[0].mxu0
      %v990 = vadd.f32 %v666, %v989
      %v991 = vpop.f32.mrb[0].mxu0
      %992 = vmatprep.mubr.f32.mxu0 0.0
      %993 = vmatmul.mubr.f32.gmra.mrb[0].mxu0 %v784
      %v994 = vpop.f32.mrb[0].mxu0
      %v995 = vadd.f32 %v671, %v994
      %v996 = vpop.f32.mrb[0].mxu0
      %997 = vmatprep.mubr.f32.mxu0 0.0
      %998 = vmatmul.mubr.f32.gmra.mrb[0].mxu0 %v787
      %v999 = vpop.f32.mrb[0].mxu0
      %v1000 = vadd.f32 %v676, %v999
      %v1001 = vpop.f32.mrb[0].mxu0
      %1002 = vmatprep.mubr.f32.mxu0 0.0
      %1003 = vmatmul.mubr.f32.gmra.mrb[0].mxu0 %v790
      %v1004 = vpop.f32.mrb[0].mxu0
      %v1005 = vadd.f32 %v681, %v1004
      %v1006 = vpop.f32.mrb[0].mxu0
      %1007 = vmatprep.mubr.f32.mxu0 0.0
      %1008 = vmatmul.mubr.f32.gmra.mrb[0].mxu0 %v793
      %v1009 = vpop.f32.mrb[0].mxu0
      %v1010 = vadd.f32 %v686, %v1009
      %v1011 = vpop.f32.mrb[0].mxu0
      %1012 = vmatprep.mubr.f32.mxu0 0.0
      %1013 = vmatmul.mubr.f32.gmra.mrb[0].mxu0 %v796
      %v1014 = vpop.f32.mrb[0].mxu0
      %v1015 = vadd.f32 %v691, %v1014
      %v1016 = vpop.f32.mrb[0].mxu0
      %1017 = vmatprep.mubr.f32.mxu0 0.0
      %1018 = vmatmul.mubr.f32.gmra.mrb[0].mxu0 %v799
      %v1019 = vpop.f32.mrb[0].mxu0
      %v1020 = vadd.f32 %v696, %v1019
      %v1021 = vpop.f32.mrb[0].mxu0
      %1022 = vmatprep.mubr.f32.mxu0 0.0
      %1023 = vmatmul.mubr.f32.gmra.mrb[0].mxu0 %v802
      %v1024 = vpop.f32.mrb[0].mxu0
      %v1025 = vadd.f32 %v701, %v1024
      %v1026 = vpop.f32.mrb[0].mxu0
      %1027 = vmatprep.mubr.f32.mxu0 0.0
      %1028 = vmatmul.mubr.f32.gmra.mrb[0].mxu0 %v805
      %v1029 = vpop.f32.mrb[0].mxu0
      %v1030 = vadd.f32 %v706, %v1029
      %v1031 = vpop.f32.mrb[0].mxu0
      %1032 = vmatprep.mubr.f32.mxu0 0.0
      %1033 = vmatmul.mubr.f32.gmra.mrb[0].mxu0 %v808
      %v1034 = vpop.f32.mrb[0].mxu0
      %v1035 = vadd.f32 %v711, %v1034
      %v1036 = vpop.f32.mrb[0].mxu0
      %1037 = vdwg.mxu0
      %s1038 = scalar_lea.vmem %s308, 24
      %v1039 = vld [vmem:[%s1038] sm:$0xff]
      %v1040 = vld [vmem:[%s1038 + $0x8] sm:$0xff]
      %v1041 = vld [vmem:[%s1038 + $0x18] sm:$0xff]
      %v1042 = vld [vmem:[%s1038 + $0x20] sm:$0xff]
      %v1043 = vld [vmem:[%s1038 + $0x30] sm:$0xff]
      %v1044 = vld [vmem:[%s1038 + $0x38] sm:$0xff]
      %v1045 = vld [vmem:[%s1038 + $0x48] sm:$0xff]
      %v1046 = vld [vmem:[%s1038 + $0x50] sm:$0xff]
      %v1047 = vld [vmem:[%s1038 + $0x60] sm:$0xff]
      %v1048 = vld [vmem:[%s1038 + $0x68] sm:$0xff]
      %v1049 = vld [vmem:[%s1038 + $0x78] sm:$0xff]
      %v1050 = vld [vmem:[%s1038 + $0x80] sm:$0xff]
      %v1051 = vld [vmem:[%s1038 + $0x90] sm:$0xff]
      %v1052 = vld [vmem:[%s1038 + $0x98] sm:$0xff]
      %v1053 = vld [vmem:[%s1038 + $0xa8] sm:$0xff]
      %v1054 = vld [vmem:[%s1038 + $0xb0] sm:$0xff]
      %v1055 = vld [vmem:[%s1038 + $0xc0] sm:$0xff]
      %v1056 = vld [vmem:[%s1038 + $0xc8] sm:$0xff]
      %v1057 = vld [vmem:[%s1038 + $0xd8] sm:$0xff]
      %v1058 = vld [vmem:[%s1038 + $0xe0] sm:$0xff]
      %v1059 = vld [vmem:[%s1038 + $0xf0] sm:$0xff]
      %v1060 = vld [vmem:[%s1038 + $0xf8] sm:$0xff]
      %v1061 = vld [vmem:[%s1038 + $0x108] sm:$0xff]
      %v1062 = vld [vmem:[%s1038 + $0x110] sm:$0xff]
      %v1063 = vld [vmem:[%s1038 + $0x120] sm:$0xff]
      %v1064 = vld [vmem:[%s1038 + $0x128] sm:$0xff]
      %v1065 = vld [vmem:[%s1038 + $0x138] sm:$0xff]
      %v1066 = vld [vmem:[%s1038 + $0x140] sm:$0xff]
      %v1067 = vld [vmem:[%s1038 + $0x150] sm:$0xff]
      %v1068 = vld [vmem:[%s1038 + $0x158] sm:$0xff]
      %v1069 = vld [vmem:[%s1038 + $0x168] sm:$0xff]
      %v1070 = vld [vmem:[%s1038 + $0x170] sm:$0xff]
      %s1071 = scalar_lea.vmem %s1, 32
      %v1072 = vld [vmem:[%s1071] sm:$0xff]
      %v1073 = vld [vmem:[%s1071 + $0x8] sm:$0xf]
      %v1075 = vsel %vm388, %v1039, 0
      %v1078 = vsel %vm388, %v1040, 0
      %v1081 = vsel %vm388, %v1041, 0
      %v1084 = vsel %vm388, %v1042, 0
      %v1087 = vsel %vm388, %v1043, 0
      %v1090 = vsel %vm388, %v1044, 0
      %v1093 = vsel %vm388, %v1045, 0
      %v1096 = vsel %vm388, %v1046, 0
      %v1099 = vsel %vm388, %v1047, 0
      %v1102 = vsel %vm388, %v1048, 0
      %v1105 = vsel %vm388, %v1049, 0
      %v1108 = vsel %vm388, %v1050, 0
      %v1111 = vsel %vm388, %v1051, 0
      %v1114 = vsel %vm388, %v1052, 0
      %v1117 = vsel %vm388, %v1053, 0
      %v1120 = vsel %vm388, %v1054, 0
      %v1123 = vsel %vm388, %v1055, 0
      %v1126 = vsel %vm388, %v1056, 0
      %v1129 = vsel %vm388, %v1057, 0
      %v1132 = vsel %vm388, %v1058, 0
      %v1135 = vsel %vm388, %v1059, 0
      %v1138 = vsel %vm388, %v1060, 0
      %v1141 = vsel %vm388, %v1061, 0
      %v1144 = vsel %vm388, %v1062, 0
      %v1147 = vsel %vm388, %v1063, 0
      %v1150 = vsel %vm388, %v1064, 0
      %v1153 = vsel %vm388, %v1065, 0
      %v1156 = vsel %vm388, %v1066, 0
      %v1159 = vsel %vm388, %v1067, 0
      %v1162 = vsel %vm388, %v1068, 0
      %v1165 = vsel %vm388, %v1069, 0
      %v1168 = vsel %vm388, %v1070, 0
      %v1171 = vsel %vm485, %v1073, 0
      %1173 = vmatprep.subr.mxu0 0.0
      %1174 = vmatpush1.msra.mxu0 %v1072
      %1175 = vmatprep.subr.mxu0 0.0
      %1176 = vmatpush1.msra.mxu0 %v1171
      %1177 = vmatprep.subr.mxu0 0.0
      %1178 = vmatpush1.msra.mxu0 0.0
      %1179 = vmatprep.subr.mxu0 0.0
      %1180 = vmatpush1.msra.mxu0 0.0
      %1181 = vmatprep.subr.mxu0 0.0
      %1182 = vmatpush1.msra.mxu0 0.0
      %1183 = vmatprep.subr.mxu0 0.0
      %1184 = vmatpush1.msra.mxu0 0.0
      %1185 = vmatprep.subr.mxu0 0.0
      %1186 = vmatpush1.msra.mxu0 0.0
      %1187 = vmatprep.subr.mxu0 0.0
      %1188 = vmatpush1.msra.mxu0 0.0
      %1189 = vmatprep.subr.mxu0 0.0
      %1190 = vmatpush1.msra.mxu0 0.0
      %1191 = vmatprep.subr.mxu0 0.0
      %1192 = vmatpush1.msra.mxu0 0.0
      %1193 = vmatprep.subr.mxu0 0.0
      %1194 = vmatpush1.msra.mxu0 0.0
      %1195 = vmatprep.subr.mxu0 0.0
      %1196 = vmatpush1.msra.mxu0 0.0
      %1197 = vmatprep.subr.mxu0 0.0
      %1198 = vmatpush1.msra.mxu0 0.0
      %1199 = vmatprep.subr.mxu0 0.0
      %1200 = vmatpush1.msra.mxu0 0.0
      %1201 = vmatprep.subr.mxu0 0.0
      %1202 = vmatpush1.msra.mxu0 0.0
      %1203 = vmatprep.subr.mxu0 0.0
      %1204 = vmatpush1.msra.mxu0 0.0
      %1205 = vmatprep.subr.mxu0 0.0
      %1206 = vmatpush1.msra.mxu0 0.0
      %1207 = vmatprep.subr.mxu0 0.0
      %1208 = vmatpush1.msra.mxu0 0.0
      %1209 = vmatprep.subr.mxu0 0.0
      %1210 = vmatpush1.msra.mxu0 0.0
      %1211 = vmatprep.subr.mxu0 0.0
      %1212 = vmatpush1.msra.mxu0 0.0
      %1213 = vmatprep.subr.mxu0 0.0
      %1214 = vmatpush1.msra.mxu0 0.0
      %1215 = vmatprep.subr.mxu0 0.0
      %1216 = vmatpush1.msra.mxu0 0.0
      %1217 = vmatprep.subr.mxu0 0.0
      %1218 = vmatpush1.msra.mxu0 0.0
      %1219 = vmatprep.subr.mxu0 0.0
      %1220 = vmatpush1.msra.mxu0 0.0
      %1221 = vmatprep.subr.mxu0 0.0
      %1222 = vmatpush1.msra.mxu0 0.0
      %1223 = vmatprep.subr.mxu0 0.0
      %1224 = vmatpush1.msra.mxu0 0.0
      %1225 = vmatprep.subr.mxu0 0.0
      %1226 = vmatpush1.msra.mxu0 0.0
      %1227 = vmatprep.subr.mxu0 0.0
      %1228 = vmatpush1.msra.mxu0 0.0
      %1229 = vmatprep.subr.mxu0 0.0
      %1230 = vmatpush1.msra.mxu0 0.0
      %1231 = vmatprep.subr.mxu0 0.0
      %1232 = vmatpush1.msra.mxu0 0.0
      %1233 = vmatprep.subr.mxu0 0.0
      %1234 = vmatpush1.msra.mxu0 0.0
      %1235 = vmatprep.subr.mxu0 0.0
      %1236 = vmatpush1.msra.mxu0 0.0
      %1237 = vmatprep.mubr.f32.mxu0 0.0
      %1238 = vmatmul.mubr.f32.gmra.mrb[0].mxu0 %v1075
      %v1239 = vpop.f32.mrb[0].mxu0
      %v1240 = vadd.f32 0.0, %v1239
      %v1241 = vpop.f32.mrb[0].mxu0
      %1242 = vmatprep.mubr.f32.mxu0 0.0
      %1243 = vmatmul.mubr.f32.gmra.mrb[0].mxu0 %v1078
      %v1244 = vpop.f32.mrb[0].mxu0
      %v1245 = vadd.f32 0.0, %v1244
      %v1246 = vpop.f32.mrb[0].mxu0
      %1247 = vmatprep.mubr.f32.mxu0 0.0
      %1248 = vmatmul.mubr.f32.gmra.mrb[0].mxu0 %v1081
      %v1249 = vpop.f32.mrb[0].mxu0
      %v1250 = vadd.f32 0.0, %v1249
      %v1251 = vpop.f32.mrb[0].mxu0
      %1252 = vmatprep.mubr.f32.mxu0 0.0
      %1253 = vmatmul.mubr.f32.gmra.mrb[0].mxu0 %v1084
      %v1254 = vpop.f32.mrb[0].mxu0
      %v1255 = vadd.f32 0.0, %v1254
      %v1256 = vpop.f32.mrb[0].mxu0
      %1257 = vmatprep.mubr.f32.mxu0 0.0
      %1258 = vmatmul.mubr.f32.gmra.mrb[0].mxu0 %v1087
      %v1259 = vpop.f32.mrb[0].mxu0
      %v1260 = vadd.f32 0.0, %v1259
      %v1261 = vpop.f32.mrb[0].mxu0
      %1262 = vmatprep.mubr.f32.mxu0 0.0
      %1263 = vmatmul.mubr.f32.gmra.mrb[0].mxu0 %v1090
      %v1264 = vpop.f32.mrb[0].mxu0
      %v1265 = vadd.f32 0.0, %v1264
      %v1266 = vpop.f32.mrb[0].mxu0
      %1267 = vmatprep.mubr.f32.mxu0 0.0
      %1268 = vmatmul.mubr.f32.gmra.mrb[0].mxu0 %v1093
      %v1269 = vpop.f32.mrb[0].mxu0
      %v1270 = vadd.f32 0.0, %v1269
      %v1271 = vpop.f32.mrb[0].mxu0
      %1272 = vmatprep.mubr.f32.mxu0 0.0
      %1273 = vmatmul.mubr.f32.gmra.mrb[0].mxu0 %v1096
      %v1274 = vpop.f32.mrb[0].mxu0
      %v1275 = vadd.f32 0.0, %v1274
      %v1276 = vpop.f32.mrb[0].mxu0
      %1277 = vmatprep.mubr.f32.mxu0 0.0
      %1278 = vmatmul.mubr.f32.gmra.mrb[0].mxu0 %v1099
      %v1279 = vpop.f32.mrb[0].mxu0
      %v1280 = vadd.f32 0.0, %v1279
      %v1281 = vpop.f32.mrb[0].mxu0
      %1282 = vmatprep.mubr.f32.mxu0 0.0
      %1283 = vmatmul.mubr.f32.gmra.mrb[0].mxu0 %v1102
      %v1284 = vpop.f32.mrb[0].mxu0
      %v1285 = vadd.f32 0.0, %v1284
      %v1286 = vpop.f32.mrb[0].mxu0
      %1287 = vmatprep.mubr.f32.mxu0 0.0
      %1288 = vmatmul.mubr.f32.gmra.mrb[0].mxu0 %v1105
      %v1289 = vpop.f32.mrb[0].mxu0
      %v1290 = vadd.f32 0.0, %v1289
      %v1291 = vpop.f32.mrb[0].mxu0
      %1292 = vmatprep.mubr.f32.mxu0 0.0
      %1293 = vmatmul.mubr.f32.gmra.mrb[0].mxu0 %v1108
      %v1294 = vpop.f32.mrb[0].mxu0
      %v1295 = vadd.f32 0.0, %v1294
      %v1296 = vpop.f32.mrb[0].mxu0
      %1297 = vmatprep.mubr.f32.mxu0 0.0
      %1298 = vmatmul.mubr.f32.gmra.mrb[0].mxu0 %v1111
      %v1299 = vpop.f32.mrb[0].mxu0
      %v1300 = vadd.f32 0.0, %v1299
      %v1301 = vpop.f32.mrb[0].mxu0
      %1302 = vmatprep.mubr.f32.mxu0 0.0
      %1303 = vmatmul.mubr.f32.gmra.mrb[0].mxu0 %v1114
      %v1304 = vpop.f32.mrb[0].mxu0
      %v1305 = vadd.f32 0.0, %v1304
      %v1306 = vpop.f32.mrb[0].mxu0
      %1307 = vmatprep.mubr.f32.mxu0 0.0
      %1308 = vmatmul.mubr.f32.gmra.mrb[0].mxu0 %v1117
      %v1309 = vpop.f32.mrb[0].mxu0
      %v1310 = vadd.f32 0.0, %v1309
      %v1311 = vpop.f32.mrb[0].mxu0
      %1312 = vmatprep.mubr.f32.mxu0 0.0
      %1313 = vmatmul.mubr.f32.gmra.mrb[0].mxu0 %v1120
      %v1314 = vpop.f32.mrb[0].mxu0
      %v1315 = vadd.f32 0.0, %v1314
      %v1316 = vpop.f32.mrb[0].mxu0
      %1317 = vmatprep.mubr.f32.mxu0 0.0
      %1318 = vmatmul.mubr.f32.gmra.mrb[0].mxu0 %v1123
      %v1319 = vpop.f32.mrb[0].mxu0
      %v1320 = vadd.f32 0.0, %v1319
      %v1321 = vpop.f32.mrb[0].mxu0
      %1322 = vmatprep.mubr.f32.mxu0 0.0
      %1323 = vmatmul.mubr.f32.gmra.mrb[0].mxu0 %v1126
      %v1324 = vpop.f32.mrb[0].mxu0
      %v1325 = vadd.f32 0.0, %v1324
      %v1326 = vpop.f32.mrb[0].mxu0
      %1327 = vmatprep.mubr.f32.mxu0 0.0
      %1328 = vmatmul.mubr.f32.gmra.mrb[0].mxu0 %v1129
      %v1329 = vpop.f32.mrb[0].mxu0
      %v1330 = vadd.f32 0.0, %v1329
      %v1331 = vpop.f32.mrb[0].mxu0
      %1332 = vmatprep.mubr.f32.mxu0 0.0
      %1333 = vmatmul.mubr.f32.gmra.mrb[0].mxu0 %v1132
      %v1334 = vpop.f32.mrb[0].mxu0
      %v1335 = vadd.f32 0.0, %v1334
      %v1336 = vpop.f32.mrb[0].mxu0
      %1337 = vmatprep.mubr.f32.mxu0 0.0
      %1338 = vmatmul.mubr.f32.gmra.mrb[0].mxu0 %v1135
      %v1339 = vpop.f32.mrb[0].mxu0
      %v1340 = vadd.f32 0.0, %v1339
      %v1341 = vpop.f32.mrb[0].mxu0
      %1342 = vmatprep.mubr.f32.mxu0 0.0
      %1343 = vmatmul.mubr.f32.gmra.mrb[0].mxu0 %v1138
      %v1344 = vpop.f32.mrb[0].mxu0
      %v1345 = vadd.f32 0.0, %v1344
      %v1346 = vpop.f32.mrb[0].mxu0
      %1347 = vmatprep.mubr.f32.mxu0 0.0
      %1348 = vmatmul.mubr.f32.gmra.mrb[0].mxu0 %v1141
      %v1349 = vpop.f32.mrb[0].mxu0
      %v1350 = vadd.f32 0.0, %v1349
      %v1351 = vpop.f32.mrb[0].mxu0
      %1352 = vmatprep.mubr.f32.mxu0 0.0
      %1353 = vmatmul.mubr.f32.gmra.mrb[0].mxu0 %v1144
      %v1354 = vpop.f32.mrb[0].mxu0
      %v1355 = vadd.f32 0.0, %v1354
      %v1356 = vpop.f32.mrb[0].mxu0
      %1357 = vmatprep.mubr.f32.mxu0 0.0
      %1358 = vmatmul.mubr.f32.gmra.mrb[0].mxu0 %v1147
      %v1359 = vpop.f32.mrb[0].mxu0
      %v1360 = vadd.f32 0.0, %v1359
      %v1361 = vpop.f32.mrb[0].mxu0
      %1362 = vmatprep.mubr.f32.mxu0 0.0
      %1363 = vmatmul.mubr.f32.gmra.mrb[0].mxu0 %v1150
      %v1364 = vpop.f32.mrb[0].mxu0
      %v1365 = vadd.f32 0.0, %v1364
      %v1366 = vpop.f32.mrb[0].mxu0
      %1367 = vmatprep.mubr.f32.mxu0 0.0
      %1368 = vmatmul.mubr.f32.gmra.mrb[0].mxu0 %v1153
      %v1369 = vpop.f32.mrb[0].mxu0
      %v1370 = vadd.f32 0.0, %v1369
      %v1371 = vpop.f32.mrb[0].mxu0
      %1372 = vmatprep.mubr.f32.mxu0 0.0
      %1373 = vmatmul.mubr.f32.gmra.mrb[0].mxu0 %v1156
      %v1374 = vpop.f32.mrb[0].mxu0
      %v1375 = vadd.f32 0.0, %v1374
      %v1376 = vpop.f32.mrb[0].mxu0
      %1377 = vmatprep.mubr.f32.mxu0 0.0
      %1378 = vmatmul.mubr.f32.gmra.mrb[0].mxu0 %v1159
      %v1379 = vpop.f32.mrb[0].mxu0
      %v1380 = vadd.f32 0.0, %v1379
      %v1381 = vpop.f32.mrb[0].mxu0
      %1382 = vmatprep.mubr.f32.mxu0 0.0
      %1383 = vmatmul.mubr.f32.gmra.mrb[0].mxu0 %v1162
      %v1384 = vpop.f32.mrb[0].mxu0
      %v1385 = vadd.f32 0.0, %v1384
      %v1386 = vpop.f32.mrb[0].mxu0
      %1387 = vmatprep.mubr.f32.mxu0 0.0
      %1388 = vmatmul.mubr.f32.gmra.mrb[0].mxu0 %v1165
      %v1389 = vpop.f32.mrb[0].mxu0
      %v1390 = vadd.f32 0.0, %v1389
      %v1391 = vpop.f32.mrb[0].mxu0
      %1392 = vmatprep.mubr.f32.mxu0 0.0
      %1393 = vmatmul.mubr.f32.gmra.mrb[0].mxu0 %v1168
      %v1394 = vpop.f32.mrb[0].mxu0
      %v1395 = vadd.f32 0.0, %v1394
      %v1396 = vpop.f32.mrb[0].mxu0
      %1397 = vdwg.mxu0
      %v1398 = vadd.f32 %v880, %v1240
      %v1399 = vadd.f32 %v885, %v1245
      %v1400 = vadd.f32 %v890, %v1250
      %v1401 = vadd.f32 %v895, %v1255
      %v1402 = vadd.f32 %v900, %v1260
      %v1403 = vadd.f32 %v905, %v1265
      %v1404 = vadd.f32 %v910, %v1270
      %v1405 = vadd.f32 %v915, %v1275
      %v1406 = vadd.f32 %v920, %v1280
      %v1407 = vadd.f32 %v925, %v1285
      %v1408 = vadd.f32 %v930, %v1290
      %v1409 = vadd.f32 %v935, %v1295
      %v1410 = vadd.f32 %v940, %v1300
      %v1411 = vadd.f32 %v945, %v1305
      %v1412 = vadd.f32 %v950, %v1310
      %v1413 = vadd.f32 %v955, %v1315
      %v1414 = vadd.f32 %v960, %v1320
      %v1415 = vadd.f32 %v965, %v1325
      %v1416 = vadd.f32 %v970, %v1330
      %v1417 = vadd.f32 %v975, %v1335
      %v1418 = vadd.f32 %v980, %v1340
      %v1419 = vadd.f32 %v985, %v1345
      %v1420 = vadd.f32 %v990, %v1350
      %v1421 = vadd.f32 %v995, %v1355
      %v1422 = vadd.f32 %v1000, %v1360
      %v1423 = vadd.f32 %v1005, %v1365
      %v1424 = vadd.f32 %v1010, %v1370
      %v1425 = vadd.f32 %v1015, %v1375
      %v1426 = vadd.f32 %v1020, %v1380
      %v1427 = vadd.f32 %v1025, %v1385
      %v1428 = vadd.f32 %v1030, %v1390
      %v1429 = vadd.f32 %v1035, %v1395
      %v1430 = vld [vmem:[%s1038 + $0x1] sm:$0xff]
      %v1431 = vld [vmem:[%s1038 + $0x9] sm:$0xff]
      %v1432 = vld [vmem:[%s1038 + $0x19] sm:$0xff]
      %v1433 = vld [vmem:[%s1038 + $0x21] sm:$0xff]
      %v1434 = vld [vmem:[%s1038 + $0x31] sm:$0xff]
      %v1435 = vld [vmem:[%s1038 + $0x39] sm:$0xff]
      %v1436 = vld [vmem:[%s1038 + $0x49] sm:$0xff]
      %v1437 = vld [vmem:[%s1038 + $0x51] sm:$0xff]
      %v1438 = vld [vmem:[%s1038 + $0x61] sm:$0xff]
      %v1439 = vld [vmem:[%s1038 + $0x69] sm:$0xff]
      %v1440 = vld [vmem:[%s1038 + $0x79] sm:$0xff]
      %v1441 = vld [vmem:[%s1038 + $0x81] sm:$0xff]
      %v1442 = vld [vmem:[%s1038 + $0x91] sm:$0xff]
      %v1443 = vld [vmem:[%s1038 + $0x99] sm:$0xff]
      %v1444 = vld [vmem:[%s1038 + $0xa9] sm:$0xff]
      %v1445 = vld [vmem:[%s1038 + $0xb1] sm:$0xff]
      %v1446 = vld [vmem:[%s1038 + $0xc1] sm:$0xff]
      %v1447 = vld [vmem:[%s1038 + $0xc9] sm:$0xff]
      %v1448 = vld [vmem:[%s1038 + $0xd9] sm:$0xff]
      %v1449 = vld [vmem:[%s1038 + $0xe1] sm:$0xff]
      %v1450 = vld [vmem:[%s1038 + $0xf1] sm:$0xff]
      %v1451 = vld [vmem:[%s1038 + $0xf9] sm:$0xff]
      %v1452 = vld [vmem:[%s1038 + $0x109] sm:$0xff]
      %v1453 = vld [vmem:[%s1038 + $0x111] sm:$0xff]
      %v1454 = vld [vmem:[%s1038 + $0x121] sm:$0xff]
      %v1455 = vld [vmem:[%s1038 + $0x129] sm:$0xff]
      %v1456 = vld [vmem:[%s1038 + $0x139] sm:$0xff]
      %v1457 = vld [vmem:[%s1038 + $0x141] sm:$0xff]
      %v1458 = vld [vmem:[%s1038 + $0x151] sm:$0xff]
      %v1459 = vld [vmem:[%s1038 + $0x159] sm:$0xff]
      %v1460 = vld [vmem:[%s1038 + $0x169] sm:$0xff]
      %v1461 = vld [vmem:[%s1038 + $0x171] sm:$0xff]
      %s1462 = scalar_lea.vmem %s1, 48
      %v1463 = vld [vmem:[%s1462] sm:$0xff]
      %v1464 = vld [vmem:[%s1462 + $0x8] sm:$0xf]
      %v1466 = vsel %vm388, %v1430, 0
      %v1469 = vsel %vm388, %v1431, 0
      %v1472 = vsel %vm388, %v1432, 0
      %v1475 = vsel %vm388, %v1433, 0
      %v1478 = vsel %vm388, %v1434, 0
      %v1481 = vsel %vm388, %v1435, 0
      %v1484 = vsel %vm388, %v1436, 0
      %v1487 = vsel %vm388, %v1437, 0
      %v1490 = vsel %vm388, %v1438, 0
      %v1493 = vsel %vm388, %v1439, 0
      %v1496 = vsel %vm388, %v1440, 0
      %v1499 = vsel %vm388, %v1441, 0
      %v1502 = vsel %vm388, %v1442, 0
      %v1505 = vsel %vm388, %v1443, 0
      %v1508 = vsel %vm388, %v1444, 0
      %v1511 = vsel %vm388, %v1445, 0
      %v1514 = vsel %vm388, %v1446, 0
      %v1517 = vsel %vm388, %v1447, 0
      %v1520 = vsel %vm388, %v1448, 0
      %v1523 = vsel %vm388, %v1449, 0
      %v1526 = vsel %vm388, %v1450, 0
      %v1529 = vsel %vm388, %v1451, 0
      %v1532 = vsel %vm388, %v1452, 0
      %v1535 = vsel %vm388, %v1453, 0
      %v1538 = vsel %vm388, %v1454, 0
      %v1541 = vsel %vm388, %v1455, 0
      %v1544 = vsel %vm388, %v1456, 0
      %v1547 = vsel %vm388, %v1457, 0
      %v1550 = vsel %vm388, %v1458, 0
      %v1553 = vsel %vm388, %v1459, 0
      %v1556 = vsel %vm388, %v1460, 0
      %v1559 = vsel %vm388, %v1461, 0
      %v1562 = vsel %vm485, %v1464, 0
      %1564 = vmatprep.subr.mxu0 0.0
      %1565 = vmatpush1.msra.mxu0 %v1463
      %1566 = vmatprep.subr.mxu0 0.0
      %1567 = vmatpush1.msra.mxu0 %v1562
      %1568 = vmatprep.subr.mxu0 0.0
      %1569 = vmatpush1.msra.mxu0 0.0
      %1570 = vmatprep.subr.mxu0 0.0
      %1571 = vmatpush1.msra.mxu0 0.0
      %1572 = vmatprep.subr.mxu0 0.0
      %1573 = vmatpush1.msra.mxu0 0.0
      %1574 = vmatprep.subr.mxu0 0.0
      %1575 = vmatpush1.msra.mxu0 0.0
      %1576 = vmatprep.subr.mxu0 0.0
      %1577 = vmatpush1.msra.mxu0 0.0
      %1578 = vmatprep.subr.mxu0 0.0
      %1579 = vmatpush1.msra.mxu0 0.0
      %1580 = vmatprep.subr.mxu0 0.0
      %1581 = vmatpush1.msra.mxu0 0.0
      %1582 = vmatprep.subr.mxu0 0.0
      %1583 = vmatpush1.msra.mxu0 0.0
      %1584 = vmatprep.subr.mxu0 0.0
      %1585 = vmatpush1.msra.mxu0 0.0
      %1586 = vmatprep.subr.mxu0 0.0
      %1587 = vmatpush1.msra.mxu0 0.0
      %1588 = vmatprep.subr.mxu0 0.0
      %1589 = vmatpush1.msra.mxu0 0.0
      %1590 = vmatprep.subr.mxu0 0.0
      %1591 = vmatpush1.msra.mxu0 0.0
      %1592 = vmatprep.subr.mxu0 0.0
      %1593 = vmatpush1.msra.mxu0 0.0
      %1594 = vmatprep.subr.mxu0 0.0
      %1595 = vmatpush1.msra.mxu0 0.0
      %1596 = vmatprep.subr.mxu0 0.0
      %1597 = vmatpush1.msra.mxu0 0.0
      %1598 = vmatprep.subr.mxu0 0.0
      %1599 = vmatpush1.msra.mxu0 0.0
      %1600 = vmatprep.subr.mxu0 0.0
      %1601 = vmatpush1.msra.mxu0 0.0
      %1602 = vmatprep.subr.mxu0 0.0
      %1603 = vmatpush1.msra.mxu0 0.0
      %1604 = vmatprep.subr.mxu0 0.0
      %1605 = vmatpush1.msra.mxu0 0.0
      %1606 = vmatprep.subr.mxu0 0.0
      %1607 = vmatpush1.msra.mxu0 0.0
      %1608 = vmatprep.subr.mxu0 0.0
      %1609 = vmatpush1.msra.mxu0 0.0
      %1610 = vmatprep.subr.mxu0 0.0
      %1611 = vmatpush1.msra.mxu0 0.0
      %1612 = vmatprep.subr.mxu0 0.0
      %1613 = vmatpush1.msra.mxu0 0.0
      %1614 = vmatprep.subr.mxu0 0.0
      %1615 = vmatpush1.msra.mxu0 0.0
      %1616 = vmatprep.subr.mxu0 0.0
      %1617 = vmatpush1.msra.mxu0 0.0
      %1618 = vmatprep.subr.mxu0 0.0
      %1619 = vmatpush1.msra.mxu0 0.0
      %1620 = vmatprep.subr.mxu0 0.0
      %1621 = vmatpush1.msra.mxu0 0.0
      %1622 = vmatprep.subr.mxu0 0.0
      %1623 = vmatpush1.msra.mxu0 0.0
      %1624 = vmatprep.subr.mxu0 0.0
      %1625 = vmatpush1.msra.mxu0 0.0
      %1626 = vmatprep.subr.mxu0 0.0
      %1627 = vmatpush1.msra.mxu0 0.0
      %1628 = vmatprep.mubr.f32.mxu0 0.0
      %1629 = vmatmul.mubr.f32.gmra.mrb[0].mxu0 %v1466
      %v1630 = vpop.f32.mrb[0].mxu0
      %v1631 = vadd.f32 0.0, %v1630
      %v1632 = vpop.f32.mrb[0].mxu0
      %1633 = vmatprep.mubr.f32.mxu0 0.0
      %1634 = vmatmul.mubr.f32.gmra.mrb[0].mxu0 %v1469
      %v1635 = vpop.f32.mrb[0].mxu0
      %v1636 = vadd.f32 0.0, %v1635
      %v1637 = vpop.f32.mrb[0].mxu0
      %1638 = vmatprep.mubr.f32.mxu0 0.0
      %1639 = vmatmul.mubr.f32.gmra.mrb[0].mxu0 %v1472
      %v1640 = vpop.f32.mrb[0].mxu0
      %v1641 = vadd.f32 0.0, %v1640
      %v1642 = vpop.f32.mrb[0].mxu0
      %1643 = vmatprep.mubr.f32.mxu0 0.0
      %1644 = vmatmul.mubr.f32.gmra.mrb[0].mxu0 %v1475
      %v1645 = vpop.f32.mrb[0].mxu0
      %v1646 = vadd.f32 0.0, %v1645
      %v1647 = vpop.f32.mrb[0].mxu0
      %1648 = vmatprep.mubr.f32.mxu0 0.0
      %1649 = vmatmul.mubr.f32.gmra.mrb[0].mxu0 %v1478
      %v1650 = vpop.f32.mrb[0].mxu0
      %v1651 = vadd.f32 0.0, %v1650
      %v1652 = vpop.f32.mrb[0].mxu0
      %1653 = vmatprep.mubr.f32.mxu0 0.0
      %1654 = vmatmul.mubr.f32.gmra.mrb[0].mxu0 %v1481
      %v1655 = vpop.f32.mrb[0].mxu0
      %v1656 = vadd.f32 0.0, %v1655
      %v1657 = vpop.f32.mrb[0].mxu0
      %1658 = vmatprep.mubr.f32.mxu0 0.0
      %1659 = vmatmul.mubr.f32.gmra.mrb[0].mxu0 %v1484
      %v1660 = vpop.f32.mrb[0].mxu0
      %v1661 = vadd.f32 0.0, %v1660
      %v1662 = vpop.f32.mrb[0].mxu0
      %1663 = vmatprep.mubr.f32.mxu0 0.0
      %1664 = vmatmul.mubr.f32.gmra.mrb[0].mxu0 %v1487
      %v1665 = vpop.f32.mrb[0].mxu0
      %v1666 = vadd.f32 0.0, %v1665
      %v1667 = vpop.f32.mrb[0].mxu0
      %1668 = vmatprep.mubr.f32.mxu0 0.0
      %1669 = vmatmul.mubr.f32.gmra.mrb[0].mxu0 %v1490
      %v1670 = vpop.f32.mrb[0].mxu0
      %v1671 = vadd.f32 0.0, %v1670
      %v1672 = vpop.f32.mrb[0].mxu0
      %1673 = vmatprep.mubr.f32.mxu0 0.0
      %1674 = vmatmul.mubr.f32.gmra.mrb[0].mxu0 %v1493
      %v1675 = vpop.f32.mrb[0].mxu0
      %v1676 = vadd.f32 0.0, %v1675
      %v1677 = vpop.f32.mrb[0].mxu0
      %1678 = vmatprep.mubr.f32.mxu0 0.0
      %1679 = vmatmul.mubr.f32.gmra.mrb[0].mxu0 %v1496
      %v1680 = vpop.f32.mrb[0].mxu0
      %v1681 = vadd.f32 0.0, %v1680
      %v1682 = vpop.f32.mrb[0].mxu0
      %1683 = vmatprep.mubr.f32.mxu0 0.0
      %1684 = vmatmul.mubr.f32.gmra.mrb[0].mxu0 %v1499
      %v1685 = vpop.f32.mrb[0].mxu0
      %v1686 = vadd.f32 0.0, %v1685
      %v1687 = vpop.f32.mrb[0].mxu0
      %1688 = vmatprep.mubr.f32.mxu0 0.0
      %1689 = vmatmul.mubr.f32.gmra.mrb[0].mxu0 %v1502
      %v1690 = vpop.f32.mrb[0].mxu0
      %v1691 = vadd.f32 0.0, %v1690
      %v1692 = vpop.f32.mrb[0].mxu0
      %1693 = vmatprep.mubr.f32.mxu0 0.0
      %1694 = vmatmul.mubr.f32.gmra.mrb[0].mxu0 %v1505
      %v1695 = vpop.f32.mrb[0].mxu0
      %v1696 = vadd.f32 0.0, %v1695
      %v1697 = vpop.f32.mrb[0].mxu0
      %1698 = vmatprep.mubr.f32.mxu0 0.0
      %1699 = vmatmul.mubr.f32.gmra.mrb[0].mxu0 %v1508
      %v1700 = vpop.f32.mrb[0].mxu0
      %v1701 = vadd.f32 0.0, %v1700
      %v1702 = vpop.f32.mrb[0].mxu0
      %1703 = vmatprep.mubr.f32.mxu0 0.0
      %1704 = vmatmul.mubr.f32.gmra.mrb[0].mxu0 %v1511
      %v1705 = vpop.f32.mrb[0].mxu0
      %v1706 = vadd.f32 0.0, %v1705
      %v1707 = vpop.f32.mrb[0].mxu0
      %1708 = vmatprep.mubr.f32.mxu0 0.0
      %1709 = vmatmul.mubr.f32.gmra.mrb[0].mxu0 %v1514
      %v1710 = vpop.f32.mrb[0].mxu0
      %v1711 = vadd.f32 0.0, %v1710
      %v1712 = vpop.f32.mrb[0].mxu0
      %1713 = vmatprep.mubr.f32.mxu0 0.0
      %1714 = vmatmul.mubr.f32.gmra.mrb[0].mxu0 %v1517
      %v1715 = vpop.f32.mrb[0].mxu0
      %v1716 = vadd.f32 0.0, %v1715
      %v1717 = vpop.f32.mrb[0].mxu0
      %1718 = vmatprep.mubr.f32.mxu0 0.0
      %1719 = vmatmul.mubr.f32.gmra.mrb[0].mxu0 %v1520
      %v1720 = vpop.f32.mrb[0].mxu0
      %v1721 = vadd.f32 0.0, %v1720
      %v1722 = vpop.f32.mrb[0].mxu0
      %1723 = vmatprep.mubr.f32.mxu0 0.0
      %1724 = vmatmul.mubr.f32.gmra.mrb[0].mxu0 %v1523
      %v1725 = vpop.f32.mrb[0].mxu0
      %v1726 = vadd.f32 0.0, %v1725
      %v1727 = vpop.f32.mrb[0].mxu0
      %1728 = vmatprep.mubr.f32.mxu0 0.0
      %1729 = vmatmul.mubr.f32.gmra.mrb[0].mxu0 %v1526
      %v1730 = vpop.f32.mrb[0].mxu0
      %v1731 = vadd.f32 0.0, %v1730
      %v1732 = vpop.f32.mrb[0].mxu0
      %1733 = vmatprep.mubr.f32.mxu0 0.0
      %1734 = vmatmul.mubr.f32.gmra.mrb[0].mxu0 %v1529
      %v1735 = vpop.f32.mrb[0].mxu0
      %v1736 = vadd.f32 0.0, %v1735
      %v1737 = vpop.f32.mrb[0].mxu0
      %1738 = vmatprep.mubr.f32.mxu0 0.0
      %1739 = vmatmul.mubr.f32.gmra.mrb[0].mxu0 %v1532
      %v1740 = vpop.f32.mrb[0].mxu0
      %v1741 = vadd.f32 0.0, %v1740
      %v1742 = vpop.f32.mrb[0].mxu0
      %1743 = vmatprep.mubr.f32.mxu0 0.0
      %1744 = vmatmul.mubr.f32.gmra.mrb[0].mxu0 %v1535
      %v1745 = vpop.f32.mrb[0].mxu0
      %v1746 = vadd.f32 0.0, %v1745
      %v1747 = vpop.f32.mrb[0].mxu0
      %1748 = vmatprep.mubr.f32.mxu0 0.0
      %1749 = vmatmul.mubr.f32.gmra.mrb[0].mxu0 %v1538
      %v1750 = vpop.f32.mrb[0].mxu0
      %v1751 = vadd.f32 0.0, %v1750
      %v1752 = vpop.f32.mrb[0].mxu0
      %1753 = vmatprep.mubr.f32.mxu0 0.0
      %1754 = vmatmul.mubr.f32.gmra.mrb[0].mxu0 %v1541
      %v1755 = vpop.f32.mrb[0].mxu0
      %v1756 = vadd.f32 0.0, %v1755
      %v1757 = vpop.f32.mrb[0].mxu0
      %1758 = vmatprep.mubr.f32.mxu0 0.0
      %1759 = vmatmul.mubr.f32.gmra.mrb[0].mxu0 %v1544
      %v1760 = vpop.f32.mrb[0].mxu0
      %v1761 = vadd.f32 0.0, %v1760
      %v1762 = vpop.f32.mrb[0].mxu0
      %1763 = vmatprep.mubr.f32.mxu0 0.0
      %1764 = vmatmul.mubr.f32.gmra.mrb[0].mxu0 %v1547
      %v1765 = vpop.f32.mrb[0].mxu0
      %v1766 = vadd.f32 0.0, %v1765
      %v1767 = vpop.f32.mrb[0].mxu0
      %1768 = vmatprep.mubr.f32.mxu0 0.0
      %1769 = vmatmul.mubr.f32.gmra.mrb[0].mxu0 %v1550
      %v1770 = vpop.f32.mrb[0].mxu0
      %v1771 = vadd.f32 0.0, %v1770
      %v1772 = vpop.f32.mrb[0].mxu0
      %1773 = vmatprep.mubr.f32.mxu0 0.0
      %1774 = vmatmul.mubr.f32.gmra.mrb[0].mxu0 %v1553
      %v1775 = vpop.f32.mrb[0].mxu0
      %v1776 = vadd.f32 0.0, %v1775
      %v1777 = vpop.f32.mrb[0].mxu0
      %1778 = vmatprep.mubr.f32.mxu0 0.0
      %1779 = vmatmul.mubr.f32.gmra.mrb[0].mxu0 %v1556
      %v1780 = vpop.f32.mrb[0].mxu0
      %v1781 = vadd.f32 0.0, %v1780
      %v1782 = vpop.f32.mrb[0].mxu0
      %1783 = vmatprep.mubr.f32.mxu0 0.0
      %1784 = vmatmul.mubr.f32.gmra.mrb[0].mxu0 %v1559
      %v1785 = vpop.f32.mrb[0].mxu0
      %v1786 = vadd.f32 0.0, %v1785
      %v1787 = vpop.f32.mrb[0].mxu0
      %1788 = vdwg.mxu0
      %v1789 = vadd.f32 %v1398, %v1631
      %v1790 = vadd.f32 %v1399, %v1636
      %v1791 = vadd.f32 %v1400, %v1641
      %v1792 = vadd.f32 %v1401, %v1646
      %v1793 = vadd.f32 %v1402, %v1651
      %v1794 = vadd.f32 %v1403, %v1656
      %v1795 = vadd.f32 %v1404, %v1661
      %v1796 = vadd.f32 %v1405, %v1666
      %v1797 = vadd.f32 %v1406, %v1671
      %v1798 = vadd.f32 %v1407, %v1676
      %v1799 = vadd.f32 %v1408, %v1681
      %v1800 = vadd.f32 %v1409, %v1686
      %v1801 = vadd.f32 %v1410, %v1691
      %v1802 = vadd.f32 %v1411, %v1696
      %v1803 = vadd.f32 %v1412, %v1701
      %v1804 = vadd.f32 %v1413, %v1706
      %v1805 = vadd.f32 %v1414, %v1711
      %v1806 = vadd.f32 %v1415, %v1716
      %v1807 = vadd.f32 %v1416, %v1721
      %v1808 = vadd.f32 %v1417, %v1726
      %v1809 = vadd.f32 %v1418, %v1731
      %v1810 = vadd.f32 %v1419, %v1736
      %v1811 = vadd.f32 %v1420, %v1741
      %v1812 = vadd.f32 %v1421, %v1746
      %v1813 = vadd.f32 %v1422, %v1751
      %v1814 = vadd.f32 %v1423, %v1756
      %v1815 = vadd.f32 %v1424, %v1761
      %v1816 = vadd.f32 %v1425, %v1766
      %v1817 = vadd.f32 %v1426, %v1771
      %v1818 = vadd.f32 %v1427, %v1776
      %v1819 = vadd.f32 %v1428, %v1781
      %v1820 = vadd.f32 %v1429, %v1786
      %v1821 = vld [vmem:[%s2] sm:$0x1]
      %v1823 = vlaneseq
      %v1824 = vshrl.u32 %v1823, 7
      %v1825 = vsub.s32 0, %v1824
      %v1826 = vrot.slane %v1821, %v1825
      %v1828 = vadd.f32 %v1789, %v1826
      %v1829 = vadd.f32 %v1790, %v1826
      %v1830 = vadd.f32 %v1791, %v1826
      %v1831 = vadd.f32 %v1792, %v1826
      %v1832 = vadd.f32 %v1793, %v1826
      %v1833 = vadd.f32 %v1794, %v1826
      %v1834 = vadd.f32 %v1795, %v1826
      %v1835 = vadd.f32 %v1796, %v1826
      %v1836 = vadd.f32 %v1797, %v1826
      %v1837 = vadd.f32 %v1798, %v1826
      %v1838 = vadd.f32 %v1799, %v1826
      %v1839 = vadd.f32 %v1800, %v1826
      %v1840 = vadd.f32 %v1801, %v1826
      %v1841 = vadd.f32 %v1802, %v1826
      %v1842 = vadd.f32 %v1803, %v1826
      %v1843 = vadd.f32 %v1804, %v1826
      %v1844 = vadd.f32 %v1805, %v1826
      %v1845 = vadd.f32 %v1806, %v1826
      %v1846 = vadd.f32 %v1807, %v1826
      %v1847 = vadd.f32 %v1808, %v1826
      %v1848 = vadd.f32 %v1809, %v1826
      %v1849 = vadd.f32 %v1810, %v1826
      %v1850 = vadd.f32 %v1811, %v1826
      %v1851 = vadd.f32 %v1812, %v1826
      %v1852 = vadd.f32 %v1813, %v1826
      %v1853 = vadd.f32 %v1814, %v1826
      %v1854 = vadd.f32 %v1815, %v1826
      %v1855 = vadd.f32 %v1816, %v1826
      %v1856 = vadd.f32 %v1817, %v1826
      %v1857 = vadd.f32 %v1818, %v1826
      %v1858 = vadd.f32 %v1819, %v1826
      %v1859 = vadd.f32 %v1820, %v1826
      %v1860 = vmax.f32 %v1828, 0.0
      %v1861 = vmax.f32 %v1829, 0.0
      %v1862 = vmax.f32 %v1830, 0.0
      %v1863 = vmax.f32 %v1831, 0.0
      %v1864 = vmax.f32 %v1832, 0.0
      %v1865 = vmax.f32 %v1833, 0.0
      %v1866 = vmax.f32 %v1834, 0.0
      %v1867 = vmax.f32 %v1835, 0.0
      %v1868 = vmax.f32 %v1836, 0.0
      %v1869 = vmax.f32 %v1837, 0.0
      %v1870 = vmax.f32 %v1838, 0.0
      %v1871 = vmax.f32 %v1839, 0.0
      %v1872 = vmax.f32 %v1840, 0.0
      %v1873 = vmax.f32 %v1841, 0.0
      %v1874 = vmax.f32 %v1842, 0.0
      %v1875 = vmax.f32 %v1843, 0.0
      %v1876 = vmax.f32 %v1844, 0.0
      %v1877 = vmax.f32 %v1845, 0.0
      %v1878 = vmax.f32 %v1846, 0.0
      %v1879 = vmax.f32 %v1847, 0.0
      %v1880 = vmax.f32 %v1848, 0.0
      %v1881 = vmax.f32 %v1849, 0.0
      %v1882 = vmax.f32 %v1850, 0.0
      %v1883 = vmax.f32 %v1851, 0.0
      %v1884 = vmax.f32 %v1852, 0.0
      %v1885 = vmax.f32 %v1853, 0.0
      %v1886 = vmax.f32 %v1854, 0.0
      %v1887 = vmax.f32 %v1855, 0.0
      %v1888 = vmax.f32 %v1856, 0.0
      %v1889 = vmax.f32 %v1857, 0.0
      %v1890 = vmax.f32 %v1858, 0.0
      %v1891 = vmax.f32 %v1859, 0.0
      %vm1892 = vcmask 261120
      %1893 = vst.msk [vmem:[#allocation2] sm:$0xff] %vm1892, 0.0
      %1894 = vst.msk [vmem:[#allocation2 + $0x8] sm:$0xff] %vm1892, 0.0
      %vm1895 = vcmask 253952
      %1896 = vst.msk [vmem:[#allocation2 + $0x10] sm:$0x1] %vm1895, 0.0
      %1897 = vst.msk [vmem:[#allocation2 + $0x18] sm:$0xff] %vm1892, 0.0
      %1898 = vst.msk [vmem:[#allocation2 + $0x20] sm:$0xff] %vm1892, 0.0
      %1899 = vst.msk [vmem:[#allocation2 + $0x28] sm:$0x1] %vm1895, 0.0
      %1900 = vst.msk [vmem:[#allocation2 + $0x30] sm:$0xff] %vm1892, 0.0
      %1901 = vst.msk [vmem:[#allocation2 + $0x38] sm:$0xff] %vm1892, 0.0
      %1902 = vst.msk [vmem:[#allocation2 + $0x40] sm:$0x1] %vm1895, 0.0
      %1903 = vst.msk [vmem:[#allocation2 + $0x48] sm:$0xff] %vm1892, 0.0
      %1904 = vst.msk [vmem:[#allocation2 + $0x50] sm:$0xff] %vm1892, 0.0
      %1905 = vst.msk [vmem:[#allocation2 + $0x58] sm:$0x1] %vm1895, 0.0
      %1906 = vst.msk [vmem:[#allocation2 + $0x60] sm:$0xff] %vm1892, 0.0
      %1907 = vst.msk [vmem:[#allocation2 + $0x68] sm:$0xff] %vm1892, 0.0
      %1908 = vst.msk [vmem:[#allocation2 + $0x70] sm:$0x1] %vm1895, 0.0
      %1909 = vst.msk [vmem:[#allocation2 + $0x78] sm:$0xff] %vm1892, 0.0
      %1910 = vst.msk [vmem:[#allocation2 + $0x80] sm:$0xff] %vm1892, 0.0
      %1911 = vst.msk [vmem:[#allocation2 + $0x88] sm:$0x1] %vm1895, 0.0
      %1912 = vst.msk [vmem:[#allocation2 + $0x90] sm:$0xff] %vm1892, 0.0
      %1913 = vst.msk [vmem:[#allocation2 + $0x98] sm:$0xff] %vm1892, 0.0
      %1914 = vst.msk [vmem:[#allocation2 + $0xa0] sm:$0x1] %vm1895, 0.0
      %1915 = vst.msk [vmem:[#allocation2 + $0xa8] sm:$0xff] %vm1892, 0.0
      %1916 = vst.msk [vmem:[#allocation2 + $0xb0] sm:$0xff] %vm1892, 0.0
      %1917 = vst.msk [vmem:[#allocation2 + $0xb8] sm:$0x1] %vm1895, 0.0
      %1918 = vst.msk [vmem:[#allocation2 + $0xc0] sm:$0xff] %vm1892, 0.0
      %1919 = vst.msk [vmem:[#allocation2 + $0xc8] sm:$0xff] %vm1892, 0.0
      %1920 = vst.msk [vmem:[#allocation2 + $0xd0] sm:$0x1] %vm1895, 0.0
      %1921 = vst.msk [vmem:[#allocation2 + $0xd8] sm:$0xff] %vm1892, 0.0
      %1922 = vst.msk [vmem:[#allocation2 + $0xe0] sm:$0xff] %vm1892, 0.0
      %1923 = vst.msk [vmem:[#allocation2 + $0xe8] sm:$0x1] %vm1895, 0.0
      %1924 = vst.msk [vmem:[#allocation2 + $0xf0] sm:$0xff] %vm1892, 0.0
      %1925 = vst.msk [vmem:[#allocation2 + $0xf8] sm:$0xff] %vm1892, 0.0
      %1926 = vst.msk [vmem:[#allocation2 + $0x100] sm:$0x1] %vm1895, 0.0
      %1927 = vst.msk [vmem:[#allocation2 + $0x108] sm:$0xff] %vm1892, 0.0
      %1928 = vst.msk [vmem:[#allocation2 + $0x110] sm:$0xff] %vm1892, 0.0
      %1929 = vst.msk [vmem:[#allocation2 + $0x118] sm:$0x1] %vm1895, 0.0
      %1930 = vst.msk [vmem:[#allocation2 + $0x120] sm:$0xff] %vm1892, 0.0
      %1931 = vst.msk [vmem:[#allocation2 + $0x128] sm:$0xff] %vm1892, 0.0
      %1932 = vst.msk [vmem:[#allocation2 + $0x130] sm:$0x1] %vm1895, 0.0
      %1933 = vst.msk [vmem:[#allocation2 + $0x138] sm:$0xff] %vm1892, 0.0
      %1934 = vst.msk [vmem:[#allocation2 + $0x140] sm:$0xff] %vm1892, 0.0
      %1935 = vst.msk [vmem:[#allocation2 + $0x148] sm:$0x1] %vm1895, 0.0
      %1936 = vst.msk [vmem:[#allocation2 + $0x150] sm:$0xff] %vm1892, 0.0
      %1937 = vst.msk [vmem:[#allocation2 + $0x158] sm:$0xff] %vm1892, 0.0
      %1938 = vst.msk [vmem:[#allocation2 + $0x160] sm:$0x1] %vm1895, 0.0
      %1939 = vst.msk [vmem:[#allocation2 + $0x168] sm:$0xff] %vm1892, 0.0
      %1940 = vst.msk [vmem:[#allocation2 + $0x170] sm:$0xff] %vm1892, 0.0
      %1941 = vst.msk [vmem:[#allocation2 + $0x178] sm:$0x1] %vm1895, 0.0
      %1942 = vst.msk [vmem:[#allocation2 + $0x180] sm:$0xff] %vm1892, 0.0
      %1943 = vst.msk [vmem:[#allocation2 + $0x188] sm:$0xff] %vm1892, 0.0
      %1944 = vst.msk [vmem:[#allocation2 + $0x190] sm:$0x1] %vm1895, 0.0
      %1945 = vst.msk [vmem:[#allocation2] sm:$0xff] %vm1892, %v1860
      %1946 = vst.msk [vmem:[#allocation2 + $0x8] sm:$0xff] %vm1892, %v1861
      %1947 = vst.msk [vmem:[#allocation2 + $0x18] sm:$0xff] %vm1892, %v1862
      %1948 = vst.msk [vmem:[#allocation2 + $0x20] sm:$0xff] %vm1892, %v1863
      %1949 = vst.msk [vmem:[#allocation2 + $0x30] sm:$0xff] %vm1892, %v1864
      %1950 = vst.msk [vmem:[#allocation2 + $0x38] sm:$0xff] %vm1892, %v1865
      %1951 = vst.msk [vmem:[#allocation2 + $0x48] sm:$0xff] %vm1892, %v1866
      %1952 = vst.msk [vmem:[#allocation2 + $0x50] sm:$0xff] %vm1892, %v1867
      %1953 = vst.msk [vmem:[#allocation2 + $0x60] sm:$0xff] %vm1892, %v1868
      %1954 = vst.msk [vmem:[#allocation2 + $0x68] sm:$0xff] %vm1892, %v1869
      %1955 = vst.msk [vmem:[#allocation2 + $0x78] sm:$0xff] %vm1892, %v1870
      %1956 = vst.msk [vmem:[#allocation2 + $0x80] sm:$0xff] %vm1892, %v1871
      %1957 = vst.msk [vmem:[#allocation2 + $0x90] sm:$0xff] %vm1892, %v1872
      %1958 = vst.msk [vmem:[#allocation2 + $0x98] sm:$0xff] %vm1892, %v1873
      %1959 = vst.msk [vmem:[#allocation2 + $0xa8] sm:$0xff] %vm1892, %v1874
      %1960 = vst.msk [vmem:[#allocation2 + $0xb0] sm:$0xff] %vm1892, %v1875
      %1961 = vst.msk [vmem:[#allocation2 + $0xc0] sm:$0xff] %vm1892, %v1876
      %1962 = vst.msk [vmem:[#allocation2 + $0xc8] sm:$0xff] %vm1892, %v1877
      %1963 = vst.msk [vmem:[#allocation2 + $0xd8] sm:$0xff] %vm1892, %v1878
      %1964 = vst.msk [vmem:[#allocation2 + $0xe0] sm:$0xff] %vm1892, %v1879
      %1965 = vst.msk [vmem:[#allocation2 + $0xf0] sm:$0xff] %vm1892, %v1880
      %1966 = vst.msk [vmem:[#allocation2 + $0xf8] sm:$0xff] %vm1892, %v1881
      %1967 = vst.msk [vmem:[#allocation2 + $0x108] sm:$0xff] %vm1892, %v1882
      %1968 = vst.msk [vmem:[#allocation2 + $0x110] sm:$0xff] %vm1892, %v1883
      %1969 = vst.msk [vmem:[#allocation2 + $0x120] sm:$0xff] %vm1892, %v1884
      %1970 = vst.msk [vmem:[#allocation2 + $0x128] sm:$0xff] %vm1892, %v1885
      %1971 = vst.msk [vmem:[#allocation2 + $0x138] sm:$0xff] %vm1892, %v1886
      %1972 = vst.msk [vmem:[#allocation2 + $0x140] sm:$0xff] %vm1892, %v1887
      %1973 = vst.msk [vmem:[#allocation2 + $0x150] sm:$0xff] %vm1892, %v1888
      %1974 = vst.msk [vmem:[#allocation2 + $0x158] sm:$0xff] %vm1892, %v1889
      %1975 = vst.msk [vmem:[#allocation2 + $0x168] sm:$0xff] %vm1892, %v1890
      %1976 = vst.msk [vmem:[#allocation2 + $0x170] sm:$0xff] %vm1892, %v1891
      %v1977 = vld [vmem:[#allocation2] sm:$0xff]
      %v1978 = vld [vmem:[#allocation2 + $0x8] sm:$0xff]
      %v1979 = vld [vmem:[#allocation2 + $0x18] sm:$0xff]
      %v1980 = vld [vmem:[#allocation2 + $0x20] sm:$0xff]
      %v1981 = vld [vmem:[#allocation2 + $0x30] sm:$0xff]
      %v1982 = vld [vmem:[#allocation2 + $0x38] sm:$0xff]
      %v1983 = vld [vmem:[#allocation2 + $0x48] sm:$0xff]
      %v1984 = vld [vmem:[#allocation2 + $0x50] sm:$0xff]
      %v1985 = vld [vmem:[#allocation2 + $0x60] sm:$0xff]
      %v1986 = vld [vmem:[#allocation2 + $0x68] sm:$0xff]
      %v1987 = vld [vmem:[#allocation2 + $0x78] sm:$0xff]
      %v1988 = vld [vmem:[#allocation2 + $0x80] sm:$0xff]
      %v1989 = vld [vmem:[#allocation2 + $0x90] sm:$0xff]
      %v1990 = vld [vmem:[#allocation2 + $0x98] sm:$0xff]
      %v1991 = vld [vmem:[#allocation2 + $0xa8] sm:$0xff]
      %v1992 = vld [vmem:[#allocation2 + $0xb0] sm:$0xff]
      %v1993 = vld [vmem:[#allocation2 + $0xc0] sm:$0xff]
      %v1994 = vld [vmem:[#allocation2 + $0xc8] sm:$0xff]
      %v1995 = vld [vmem:[#allocation2 + $0xd8] sm:$0xff]
      %v1996 = vld [vmem:[#allocation2 + $0xe0] sm:$0xff]
      %v1997 = vld [vmem:[#allocation2 + $0xf0] sm:$0xff]
      %v1998 = vld [vmem:[#allocation2 + $0xf8] sm:$0xff]
      %v1999 = vld [vmem:[#allocation2 + $0x108] sm:$0xff]
      %v2000 = vld [vmem:[#allocation2 + $0x110] sm:$0xff]
      %v2001 = vld [vmem:[#allocation2 + $0x120] sm:$0xff]
      %v2002 = vld [vmem:[#allocation2 + $0x128] sm:$0xff]
      %v2003 = vld [vmem:[#allocation2 + $0x138] sm:$0xff]
      %v2004 = vld [vmem:[#allocation2 + $0x140] sm:$0xff]
      %v2005 = vld [vmem:[#allocation2 + $0x150] sm:$0xff]
      %v2006 = vld [vmem:[#allocation2 + $0x158] sm:$0xff]
      %v2007 = vld [vmem:[#allocation2 + $0x168] sm:$0xff]
      %v2008 = vld [vmem:[#allocation2 + $0x170] sm:$0xff]
      %v2009 = vld [vmem:[%s3] sm:$0xff]
      %v2010 = vld [vmem:[%s3 + $0x8] sm:$0xff]
      %v2011 = vld [vmem:[%s3 + $0x10] sm:$0xff]
      %v2012 = vld [vmem:[%s3 + $0x18] sm:$0xff]
      %v2013 = vld [vmem:[#allocation2 + $0x1] sm:$0xff]
      %v2014 = vld [vmem:[#allocation2 + $0x9] sm:$0xff]
      %v2015 = vld [vmem:[#allocation2 + $0x19] sm:$0xff]
      %v2016 = vld [vmem:[#allocation2 + $0x21] sm:$0xff]
      %v2017 = vld [vmem:[#allocation2 + $0x31] sm:$0xff]
      %v2018 = vld [vmem:[#allocation2 + $0x39] sm:$0xff]
      %v2019 = vld [vmem:[#allocation2 + $0x49] sm:$0xff]
      %v2020 = vld [vmem:[#allocation2 + $0x51] sm:$0xff]
      %v2021 = vld [vmem:[#allocation2 + $0x61] sm:$0xff]
      %v2022 = vld [vmem:[#allocation2 + $0x69] sm:$0xff]
      %v2023 = vld [vmem:[#allocation2 + $0x79] sm:$0xff]
      %v2024 = vld [vmem:[#allocation2 + $0x81] sm:$0xff]
      %v2025 = vld [vmem:[#allocation2 + $0x91] sm:$0xff]
      %v2026 = vld [vmem:[#allocation2 + $0x99] sm:$0xff]
      %v2027 = vld [vmem:[#allocation2 + $0xa9] sm:$0xff]
      %v2028 = vld [vmem:[#allocation2 + $0xb1] sm:$0xff]
      %v2029 = vld [vmem:[#allocation2 + $0xc1] sm:$0xff]
      %v2030 = vld [vmem:[#allocation2 + $0xc9] sm:$0xff]
      %v2031 = vld [vmem:[#allocation2 + $0xd9] sm:$0xff]
      %v2032 = vld [vmem:[#allocation2 + $0xe1] sm:$0xff]
      %v2033 = vld [vmem:[#allocation2 + $0xf1] sm:$0xff]
      %v2034 = vld [vmem:[#allocation2 + $0xf9] sm:$0xff]
      %v2035 = vld [vmem:[#allocation2 + $0x109] sm:$0xff]
      %v2036 = vld [vmem:[#allocation2 + $0x111] sm:$0xff]
      %v2037 = vld [vmem:[#allocation2 + $0x121] sm:$0xff]
      %v2038 = vld [vmem:[#allocation2 + $0x129] sm:$0xff]
      %v2039 = vld [vmem:[#allocation2 + $0x139] sm:$0xff]
      %v2040 = vld [vmem:[#allocation2 + $0x141] sm:$0xff]
      %v2041 = vld [vmem:[#allocation2 + $0x151] sm:$0xff]
      %v2042 = vld [vmem:[#allocation2 + $0x159] sm:$0xff]
      %v2043 = vld [vmem:[#allocation2 + $0x169] sm:$0xff]
      %v2044 = vld [vmem:[#allocation2 + $0x171] sm:$0xff]
      %s2045 = scalar_lea.vmem %s3, 32
      %v2046 = vld [vmem:[%s2045] sm:$0xff]
      %v2047 = vld [vmem:[%s2045 + $0x8] sm:$0xff]
      %v2048 = vld [vmem:[%s2045 + $0x10] sm:$0xff]
      %v2049 = vld [vmem:[%s2045 + $0x18] sm:$0xff]
      %v2051 = vsel %vm1892, %v2013, 0
      %v2054 = vsel %vm1892, %v2014, 0
      %v2057 = vsel %vm1892, %v2015, 0
      %v2060 = vsel %vm1892, %v2016, 0
      %v2063 = vsel %vm1892, %v2017, 0
      %v2066 = vsel %vm1892, %v2018, 0
      %v2069 = vsel %vm1892, %v2019, 0
      %v2072 = vsel %vm1892, %v2020, 0
      %v2075 = vsel %vm1892, %v2021, 0
      %v2078 = vsel %vm1892, %v2022, 0
      %v2081 = vsel %vm1892, %v2023, 0
      %v2084 = vsel %vm1892, %v2024, 0
      %v2087 = vsel %vm1892, %v2025, 0
      %v2090 = vsel %vm1892, %v2026, 0
      %v2093 = vsel %vm1892, %v2027, 0
      %v2096 = vsel %vm1892, %v2028, 0
      %v2099 = vsel %vm1892, %v2029, 0
      %v2102 = vsel %vm1892, %v2030, 0
      %v2105 = vsel %vm1892, %v2031, 0
      %v2108 = vsel %vm1892, %v2032, 0
      %v2111 = vsel %vm1892, %v2033, 0
      %v2114 = vsel %vm1892, %v2034, 0
      %v2117 = vsel %vm1892, %v2035, 0
      %v2120 = vsel %vm1892, %v2036, 0
      %v2123 = vsel %vm1892, %v2037, 0
      %v2126 = vsel %vm1892, %v2038, 0
      %v2129 = vsel %vm1892, %v2039, 0
      %v2132 = vsel %vm1892, %v2040, 0
      %v2135 = vsel %vm1892, %v2041, 0
      %v2138 = vsel %vm1892, %v2042, 0
      %v2141 = vsel %vm1892, %v2043, 0
      %v2144 = vsel %vm1892, %v2044, 0
      %2146 = vmatprep.subr.mxu0 0.0
      %2147 = vmatpush1.msra.mxu0 %v2046
      %2148 = vmatprep.subr.mxu0 0.0
      %2149 = vmatpush1.msra.mxu0 %v2047
      %2150 = vmatprep.subr.mxu0 0.0
      %2151 = vmatpush1.msra.mxu0 %v2048
      %2152 = vmatprep.subr.mxu0 0.0
      %2153 = vmatpush1.msra.mxu0 %v2049
      %2154 = vmatprep.subr.mxu0 0.0
      %2155 = vmatpush1.msra.mxu0 0.0
      %2156 = vmatprep.subr.mxu0 0.0
      %2157 = vmatpush1.msra.mxu0 0.0
      %2158 = vmatprep.subr.mxu0 0.0
      %2159 = vmatpush1.msra.mxu0 0.0
      %2160 = vmatprep.subr.mxu0 0.0
      %2161 = vmatpush1.msra.mxu0 0.0
      %2162 = vmatprep.subr.mxu0 0.0
      %2163 = vmatpush1.msra.mxu0 0.0
      %2164 = vmatprep.subr.mxu0 0.0
      %2165 = vmatpush1.msra.mxu0 0.0
      %2166 = vmatprep.subr.mxu0 0.0
      %2167 = vmatpush1.msra.mxu0 0.0
      %2168 = vmatprep.subr.mxu0 0.0
      %2169 = vmatpush1.msra.mxu0 0.0
      %2170 = vmatprep.subr.mxu0 0.0
      %2171 = vmatpush1.msra.mxu0 0.0
      %2172 = vmatprep.subr.mxu0 0.0
      %2173 = vmatpush1.msra.mxu0 0.0
      %2174 = vmatprep.subr.mxu0 0.0
      %2175 = vmatpush1.msra.mxu0 0.0
      %2176 = vmatprep.subr.mxu0 0.0
      %2177 = vmatpush1.msra.mxu0 0.0
      %2178 = vmatprep.subr.mxu0 0.0
      %2179 = vmatpush1.msra.mxu0 0.0
      %2180 = vmatprep.subr.mxu0 0.0
      %2181 = vmatpush1.msra.mxu0 0.0
      %2182 = vmatprep.subr.mxu0 0.0
      %2183 = vmatpush1.msra.mxu0 0.0
      %2184 = vmatprep.subr.mxu0 0.0
      %2185 = vmatpush1.msra.mxu0 0.0
      %2186 = vmatprep.subr.mxu0 0.0
      %2187 = vmatpush1.msra.mxu0 0.0
      %2188 = vmatprep.subr.mxu0 0.0
      %2189 = vmatpush1.msra.mxu0 0.0
      %2190 = vmatprep.subr.mxu0 0.0
      %2191 = vmatpush1.msra.mxu0 0.0
      %2192 = vmatprep.subr.mxu0 0.0
      %2193 = vmatpush1.msra.mxu0 0.0
      %2194 = vmatprep.subr.mxu0 0.0
      %2195 = vmatpush1.msra.mxu0 0.0
      %2196 = vmatprep.subr.mxu0 0.0
      %2197 = vmatpush1.msra.mxu0 0.0
      %2198 = vmatprep.subr.mxu0 0.0
      %2199 = vmatpush1.msra.mxu0 0.0
      %2200 = vmatprep.subr.mxu0 0.0
      %2201 = vmatpush1.msra.mxu0 0.0
      %2202 = vmatprep.subr.mxu0 0.0
      %2203 = vmatpush1.msra.mxu0 0.0
      %2204 = vmatprep.subr.mxu0 0.0
      %2205 = vmatpush1.msra.mxu0 0.0
      %2206 = vmatprep.subr.mxu0 0.0
      %2207 = vmatpush1.msra.mxu0 0.0
      %2208 = vmatprep.subr.mxu0 0.0
      %2209 = vmatpush1.msra.mxu0 0.0
      %2210 = vmatprep.mubr.f32.mxu0 0.0
      %2211 = vmatmul.mubr.f32.gmra.mrb[0].mxu0 %v2051
      %v2212 = vpop.f32.mrb[0].mxu0
      %v2213 = vadd.f32 0.0, %v2212
      %v2214 = vpop.f32.mrb[0].mxu0
      %2215 = vmatprep.mubr.f32.mxu0 0.0
      %2216 = vmatmul.mubr.f32.gmra.mrb[0].mxu0 %v2054
      %v2217 = vpop.f32.mrb[0].mxu0
      %v2218 = vadd.f32 0.0, %v2217
      %v2219 = vpop.f32.mrb[0].mxu0
      %2220 = vmatprep.mubr.f32.mxu0 0.0
      %2221 = vmatmul.mubr.f32.gmra.mrb[0].mxu0 %v2057
      %v2222 = vpop.f32.mrb[0].mxu0
      %v2223 = vadd.f32 0.0, %v2222
      %v2224 = vpop.f32.mrb[0].mxu0
      %2225 = vmatprep.mubr.f32.mxu0 0.0
      %2226 = vmatmul.mubr.f32.gmra.mrb[0].mxu0 %v2060
      %v2227 = vpop.f32.mrb[0].mxu0
      %v2228 = vadd.f32 0.0, %v2227
      %v2229 = vpop.f32.mrb[0].mxu0
      %2230 = vmatprep.mubr.f32.mxu0 0.0
      %2231 = vmatmul.mubr.f32.gmra.mrb[0].mxu0 %v2063
      %v2232 = vpop.f32.mrb[0].mxu0
      %v2233 = vadd.f32 0.0, %v2232
      %v2234 = vpop.f32.mrb[0].mxu0
      %2235 = vmatprep.mubr.f32.mxu0 0.0
      %2236 = vmatmul.mubr.f32.gmra.mrb[0].mxu0 %v2066
      %v2237 = vpop.f32.mrb[0].mxu0
      %v2238 = vadd.f32 0.0, %v2237
      %v2239 = vpop.f32.mrb[0].mxu0
      %2240 = vmatprep.mubr.f32.mxu0 0.0
      %2241 = vmatmul.mubr.f32.gmra.mrb[0].mxu0 %v2069
      %v2242 = vpop.f32.mrb[0].mxu0
      %v2243 = vadd.f32 0.0, %v2242
      %v2244 = vpop.f32.mrb[0].mxu0
      %2245 = vmatprep.mubr.f32.mxu0 0.0
      %2246 = vmatmul.mubr.f32.gmra.mrb[0].mxu0 %v2072
      %v2247 = vpop.f32.mrb[0].mxu0
      %v2248 = vadd.f32 0.0, %v2247
      %v2249 = vpop.f32.mrb[0].mxu0
      %2250 = vmatprep.mubr.f32.mxu0 0.0
      %2251 = vmatmul.mubr.f32.gmra.mrb[0].mxu0 %v2075
      %v2252 = vpop.f32.mrb[0].mxu0
      %v2253 = vadd.f32 0.0, %v2252
      %v2254 = vpop.f32.mrb[0].mxu0
      %2255 = vmatprep.mubr.f32.mxu0 0.0
      %2256 = vmatmul.mubr.f32.gmra.mrb[0].mxu0 %v2078
      %v2257 = vpop.f32.mrb[0].mxu0
      %v2258 = vadd.f32 0.0, %v2257
      %v2259 = vpop.f32.mrb[0].mxu0
      %2260 = vmatprep.mubr.f32.mxu0 0.0
      %2261 = vmatmul.mubr.f32.gmra.mrb[0].mxu0 %v2081
      %v2262 = vpop.f32.mrb[0].mxu0
      %v2263 = vadd.f32 0.0, %v2262
      %v2264 = vpop.f32.mrb[0].mxu0
      %2265 = vmatprep.mubr.f32.mxu0 0.0
      %2266 = vmatmul.mubr.f32.gmra.mrb[0].mxu0 %v2084
      %v2267 = vpop.f32.mrb[0].mxu0
      %v2268 = vadd.f32 0.0, %v2267
      %v2269 = vpop.f32.mrb[0].mxu0
      %2270 = vmatprep.mubr.f32.mxu0 0.0
      %2271 = vmatmul.mubr.f32.gmra.mrb[0].mxu0 %v2087
      %v2272 = vpop.f32.mrb[0].mxu0
      %v2273 = vadd.f32 0.0, %v2272
      %v2274 = vpop.f32.mrb[0].mxu0
      %2275 = vmatprep.mubr.f32.mxu0 0.0
      %2276 = vmatmul.mubr.f32.gmra.mrb[0].mxu0 %v2090
      %v2277 = vpop.f32.mrb[0].mxu0
      %v2278 = vadd.f32 0.0, %v2277
      %v2279 = vpop.f32.mrb[0].mxu0
      %2280 = vmatprep.mubr.f32.mxu0 0.0
      %2281 = vmatmul.mubr.f32.gmra.mrb[0].mxu0 %v2093
      %v2282 = vpop.f32.mrb[0].mxu0
      %v2283 = vadd.f32 0.0, %v2282
      %v2284 = vpop.f32.mrb[0].mxu0
      %2285 = vmatprep.mubr.f32.mxu0 0.0
      %2286 = vmatmul.mubr.f32.gmra.mrb[0].mxu0 %v2096
      %v2287 = vpop.f32.mrb[0].mxu0
      %v2288 = vadd.f32 0.0, %v2287
      %v2289 = vpop.f32.mrb[0].mxu0
      %2290 = vmatprep.mubr.f32.mxu0 0.0
      %2291 = vmatmul.mubr.f32.gmra.mrb[0].mxu0 %v2099
      %v2292 = vpop.f32.mrb[0].mxu0
      %v2293 = vadd.f32 0.0, %v2292
      %v2294 = vpop.f32.mrb[0].mxu0
      %2295 = vmatprep.mubr.f32.mxu0 0.0
      %2296 = vmatmul.mubr.f32.gmra.mrb[0].mxu0 %v2102
      %v2297 = vpop.f32.mrb[0].mxu0
      %v2298 = vadd.f32 0.0, %v2297
      %v2299 = vpop.f32.mrb[0].mxu0
      %2300 = vmatprep.mubr.f32.mxu0 0.0
      %2301 = vmatmul.mubr.f32.gmra.mrb[0].mxu0 %v2105
      %v2302 = vpop.f32.mrb[0].mxu0
      %v2303 = vadd.f32 0.0, %v2302
      %v2304 = vpop.f32.mrb[0].mxu0
      %2305 = vmatprep.mubr.f32.mxu0 0.0
      %2306 = vmatmul.mubr.f32.gmra.mrb[0].mxu0 %v2108
      %v2307 = vpop.f32.mrb[0].mxu0
      %v2308 = vadd.f32 0.0, %v2307
      %v2309 = vpop.f32.mrb[0].mxu0
      %2310 = vmatprep.mubr.f32.mxu0 0.0
      %2311 = vmatmul.mubr.f32.gmra.mrb[0].mxu0 %v2111
      %v2312 = vpop.f32.mrb[0].mxu0
      %v2313 = vadd.f32 0.0, %v2312
      %v2314 = vpop.f32.mrb[0].mxu0
      %2315 = vmatprep.mubr.f32.mxu0 0.0
      %2316 = vmatmul.mubr.f32.gmra.mrb[0].mxu0 %v2114
      %v2317 = vpop.f32.mrb[0].mxu0
      %v2318 = vadd.f32 0.0, %v2317
      %v2319 = vpop.f32.mrb[0].mxu0
      %2320 = vmatprep.mubr.f32.mxu0 0.0
      %2321 = vmatmul.mubr.f32.gmra.mrb[0].mxu0 %v2117
      %v2322 = vpop.f32.mrb[0].mxu0
      %v2323 = vadd.f32 0.0, %v2322
      %v2324 = vpop.f32.mrb[0].mxu0
      %2325 = vmatprep.mubr.f32.mxu0 0.0
      %2326 = vmatmul.mubr.f32.gmra.mrb[0].mxu0 %v2120
      %v2327 = vpop.f32.mrb[0].mxu0
      %v2328 = vadd.f32 0.0, %v2327
      %v2329 = vpop.f32.mrb[0].mxu0
      %2330 = vmatprep.mubr.f32.mxu0 0.0
      %2331 = vmatmul.mubr.f32.gmra.mrb[0].mxu0 %v2123
      %v2332 = vpop.f32.mrb[0].mxu0
      %v2333 = vadd.f32 0.0, %v2332
      %v2334 = vpop.f32.mrb[0].mxu0
      %2335 = vmatprep.mubr.f32.mxu0 0.0
      %2336 = vmatmul.mubr.f32.gmra.mrb[0].mxu0 %v2126
      %v2337 = vpop.f32.mrb[0].mxu0
      %v2338 = vadd.f32 0.0, %v2337
      %v2339 = vpop.f32.mrb[0].mxu0
      %2340 = vmatprep.mubr.f32.mxu0 0.0
      %2341 = vmatmul.mubr.f32.gmra.mrb[0].mxu0 %v2129
      %v2342 = vpop.f32.mrb[0].mxu0
      %v2343 = vadd.f32 0.0, %v2342
      %v2344 = vpop.f32.mrb[0].mxu0
      %2345 = vmatprep.mubr.f32.mxu0 0.0
      %2346 = vmatmul.mubr.f32.gmra.mrb[0].mxu0 %v2132
      %v2347 = vpop.f32.mrb[0].mxu0
      %v2348 = vadd.f32 0.0, %v2347
      %v2349 = vpop.f32.mrb[0].mxu0
      %2350 = vmatprep.mubr.f32.mxu0 0.0
      %2351 = vmatmul.mubr.f32.gmra.mrb[0].mxu0 %v2135
      %v2352 = vpop.f32.mrb[0].mxu0
      %v2353 = vadd.f32 0.0, %v2352
      %v2354 = vpop.f32.mrb[0].mxu0
      %2355 = vmatprep.mubr.f32.mxu0 0.0
      %2356 = vmatmul.mubr.f32.gmra.mrb[0].mxu0 %v2138
      %v2357 = vpop.f32.mrb[0].mxu0
      %v2358 = vadd.f32 0.0, %v2357
      %v2359 = vpop.f32.mrb[0].mxu0
      %2360 = vmatprep.mubr.f32.mxu0 0.0
      %2361 = vmatmul.mubr.f32.gmra.mrb[0].mxu0 %v2141
      %v2362 = vpop.f32.mrb[0].mxu0
      %v2363 = vadd.f32 0.0, %v2362
      %v2364 = vpop.f32.mrb[0].mxu0
      %2365 = vmatprep.mubr.f32.mxu0 0.0
      %2366 = vmatmul.mubr.f32.gmra.mrb[0].mxu0 %v2144
      %v2367 = vpop.f32.mrb[0].mxu0
      %v2368 = vadd.f32 0.0, %v2367
      %v2369 = vpop.f32.mrb[0].mxu0
      %2370 = vdwg.mxu0
      %v2372 = vsel %vm1892, %v1977, 0
      %v2375 = vsel %vm1892, %v1978, 0
      %v2378 = vsel %vm1892, %v1979, 0
      %v2381 = vsel %vm1892, %v1980, 0
      %v2384 = vsel %vm1892, %v1981, 0
      %v2387 = vsel %vm1892, %v1982, 0
      %v2390 = vsel %vm1892, %v1983, 0
      %v2393 = vsel %vm1892, %v1984, 0
      %v2396 = vsel %vm1892, %v1985, 0
      %v2399 = vsel %vm1892, %v1986, 0
      %v2402 = vsel %vm1892, %v1987, 0
      %v2405 = vsel %vm1892, %v1988, 0
      %v2408 = vsel %vm1892, %v1989, 0
      %v2411 = vsel %vm1892, %v1990, 0
      %v2414 = vsel %vm1892, %v1991, 0
      %v2417 = vsel %vm1892, %v1992, 0
      %v2420 = vsel %vm1892, %v1993, 0
      %v2423 = vsel %vm1892, %v1994, 0
      %v2426 = vsel %vm1892, %v1995, 0
      %v2429 = vsel %vm1892, %v1996, 0
      %v2432 = vsel %vm1892, %v1997, 0
      %v2435 = vsel %vm1892, %v1998, 0
      %v2438 = vsel %vm1892, %v1999, 0
      %v2441 = vsel %vm1892, %v2000, 0
      %v2444 = vsel %vm1892, %v2001, 0
      %v2447 = vsel %vm1892, %v2002, 0
      %v2450 = vsel %vm1892, %v2003, 0
      %v2453 = vsel %vm1892, %v2004, 0
      %v2456 = vsel %vm1892, %v2005, 0
      %v2459 = vsel %vm1892, %v2006, 0
      %v2462 = vsel %vm1892, %v2007, 0
      %v2465 = vsel %vm1892, %v2008, 0
      %2467 = vmatprep.subr.mxu0 0.0
      %2468 = vmatpush1.msra.mxu0 %v2009
      %2469 = vmatprep.subr.mxu0 0.0
      %2470 = vmatpush1.msra.mxu0 %v2010
      %2471 = vmatprep.subr.mxu0 0.0
      %2472 = vmatpush1.msra.mxu0 %v2011
      %2473 = vmatprep.subr.mxu0 0.0
      %2474 = vmatpush1.msra.mxu0 %v2012
      %2475 = vmatprep.subr.mxu0 0.0
      %2476 = vmatpush1.msra.mxu0 0.0
      %2477 = vmatprep.subr.mxu0 0.0
      %2478 = vmatpush1.msra.mxu0 0.0
      %2479 = vmatprep.subr.mxu0 0.0
      %2480 = vmatpush1.msra.mxu0 0.0
      %2481 = vmatprep.subr.mxu0 0.0
      %2482 = vmatpush1.msra.mxu0 0.0
      %2483 = vmatprep.subr.mxu0 0.0
      %2484 = vmatpush1.msra.mxu0 0.0
      %2485 = vmatprep.subr.mxu0 0.0
      %2486 = vmatpush1.msra.mxu0 0.0
      %2487 = vmatprep.subr.mxu0 0.0
      %2488 = vmatpush1.msra.mxu0 0.0
      %2489 = vmatprep.subr.mxu0 0.0
      %2490 = vmatpush1.msra.mxu0 0.0
      %2491 = vmatprep.subr.mxu0 0.0
      %2492 = vmatpush1.msra.mxu0 0.0
      %2493 = vmatprep.subr.mxu0 0.0
      %2494 = vmatpush1.msra.mxu0 0.0
      %2495 = vmatprep.subr.mxu0 0.0
      %2496 = vmatpush1.msra.mxu0 0.0
      %2497 = vmatprep.subr.mxu0 0.0
      %2498 = vmatpush1.msra.mxu0 0.0
      %2499 = vmatprep.subr.mxu0 0.0
      %2500 = vmatpush1.msra.mxu0 0.0
      %2501 = vmatprep.subr.mxu0 0.0
      %2502 = vmatpush1.msra.mxu0 0.0
      %2503 = vmatprep.subr.mxu0 0.0
      %2504 = vmatpush1.msra.mxu0 0.0
      %2505 = vmatprep.subr.mxu0 0.0
      %2506 = vmatpush1.msra.mxu0 0.0
      %2507 = vmatprep.subr.mxu0 0.0
      %2508 = vmatpush1.msra.mxu0 0.0
      %2509 = vmatprep.subr.mxu0 0.0
      %2510 = vmatpush1.msra.mxu0 0.0
      %2511 = vmatprep.subr.mxu0 0.0
      %2512 = vmatpush1.msra.mxu0 0.0
      %2513 = vmatprep.subr.mxu0 0.0
      %2514 = vmatpush1.msra.mxu0 0.0
      %2515 = vmatprep.subr.mxu0 0.0
      %2516 = vmatpush1.msra.mxu0 0.0
      %2517 = vmatprep.subr.mxu0 0.0
      %2518 = vmatpush1.msra.mxu0 0.0
      %2519 = vmatprep.subr.mxu0 0.0
      %2520 = vmatpush1.msra.mxu0 0.0
      %2521 = vmatprep.subr.mxu0 0.0
      %2522 = vmatpush1.msra.mxu0 0.0
      %2523 = vmatprep.subr.mxu0 0.0
      %2524 = vmatpush1.msra.mxu0 0.0
      %2525 = vmatprep.subr.mxu0 0.0
      %2526 = vmatpush1.msra.mxu0 0.0
      %2527 = vmatprep.subr.mxu0 0.0
      %2528 = vmatpush1.msra.mxu0 0.0
      %2529 = vmatprep.subr.mxu0 0.0
      %2530 = vmatpush1.msra.mxu0 0.0
      %2531 = vmatprep.mubr.f32.mxu0 0.0
      %2532 = vmatmul.mubr.f32.gmra.mrb[0].mxu0 %v2372
      %v2533 = vpop.f32.mrb[0].mxu0
      %v2534 = vadd.f32 %v2213, %v2533
      %v2535 = vpop.f32.mrb[0].mxu0
      %2536 = vmatprep.mubr.f32.mxu0 0.0
      %2537 = vmatmul.mubr.f32.gmra.mrb[0].mxu0 %v2375
      %v2538 = vpop.f32.mrb[0].mxu0
      %v2539 = vadd.f32 %v2218, %v2538
      %v2540 = vpop.f32.mrb[0].mxu0
      %2541 = vmatprep.mubr.f32.mxu0 0.0
      %2542 = vmatmul.mubr.f32.gmra.mrb[0].mxu0 %v2378
      %v2543 = vpop.f32.mrb[0].mxu0
      %v2544 = vadd.f32 %v2223, %v2543
      %v2545 = vpop.f32.mrb[0].mxu0
      %2546 = vmatprep.mubr.f32.mxu0 0.0
      %2547 = vmatmul.mubr.f32.gmra.mrb[0].mxu0 %v2381
      %v2548 = vpop.f32.mrb[0].mxu0
      %v2549 = vadd.f32 %v2228, %v2548
      %v2550 = vpop.f32.mrb[0].mxu0
      %2551 = vmatprep.mubr.f32.mxu0 0.0
      %2552 = vmatmul.mubr.f32.gmra.mrb[0].mxu0 %v2384
      %v2553 = vpop.f32.mrb[0].mxu0
      %v2554 = vadd.f32 %v2233, %v2553
      %v2555 = vpop.f32.mrb[0].mxu0
      %2556 = vmatprep.mubr.f32.mxu0 0.0
      %2557 = vmatmul.mubr.f32.gmra.mrb[0].mxu0 %v2387
      %v2558 = vpop.f32.mrb[0].mxu0
      %v2559 = vadd.f32 %v2238, %v2558
      %v2560 = vpop.f32.mrb[0].mxu0
      %2561 = vmatprep.mubr.f32.mxu0 0.0
      %2562 = vmatmul.mubr.f32.gmra.mrb[0].mxu0 %v2390
      %v2563 = vpop.f32.mrb[0].mxu0
      %v2564 = vadd.f32 %v2243, %v2563
      %v2565 = vpop.f32.mrb[0].mxu0
      %2566 = vmatprep.mubr.f32.mxu0 0.0
      %2567 = vmatmul.mubr.f32.gmra.mrb[0].mxu0 %v2393
      %v2568 = vpop.f32.mrb[0].mxu0
      %v2569 = vadd.f32 %v2248, %v2568
      %v2570 = vpop.f32.mrb[0].mxu0
      %2571 = vmatprep.mubr.f32.mxu0 0.0
      %2572 = vmatmul.mubr.f32.gmra.mrb[0].mxu0 %v2396
      %v2573 = vpop.f32.mrb[0].mxu0
      %v2574 = vadd.f32 %v2253, %v2573
      %v2575 = vpop.f32.mrb[0].mxu0
      %2576 = vmatprep.mubr.f32.mxu0 0.0
      %2577 = vmatmul.mubr.f32.gmra.mrb[0].mxu0 %v2399
      %v2578 = vpop.f32.mrb[0].mxu0
      %v2579 = vadd.f32 %v2258, %v2578
      %v2580 = vpop.f32.mrb[0].mxu0
      %2581 = vmatprep.mubr.f32.mxu0 0.0
      %2582 = vmatmul.mubr.f32.gmra.mrb[0].mxu0 %v2402
      %v2583 = vpop.f32.mrb[0].mxu0
      %v2584 = vadd.f32 %v2263, %v2583
      %v2585 = vpop.f32.mrb[0].mxu0
      %2586 = vmatprep.mubr.f32.mxu0 0.0
      %2587 = vmatmul.mubr.f32.gmra.mrb[0].mxu0 %v2405
      %v2588 = vpop.f32.mrb[0].mxu0
      %v2589 = vadd.f32 %v2268, %v2588
      %v2590 = vpop.f32.mrb[0].mxu0
      %2591 = vmatprep.mubr.f32.mxu0 0.0
      %2592 = vmatmul.mubr.f32.gmra.mrb[0].mxu0 %v2408
      %v2593 = vpop.f32.mrb[0].mxu0
      %v2594 = vadd.f32 %v2273, %v2593
      %v2595 = vpop.f32.mrb[0].mxu0
      %2596 = vmatprep.mubr.f32.mxu0 0.0
      %2597 = vmatmul.mubr.f32.gmra.mrb[0].mxu0 %v2411
      %v2598 = vpop.f32.mrb[0].mxu0
      %v2599 = vadd.f32 %v2278, %v2598
      %v2600 = vpop.f32.mrb[0].mxu0
      %2601 = vmatprep.mubr.f32.mxu0 0.0
      %2602 = vmatmul.mubr.f32.gmra.mrb[0].mxu0 %v2414
      %v2603 = vpop.f32.mrb[0].mxu0
      %v2604 = vadd.f32 %v2283, %v2603
      %v2605 = vpop.f32.mrb[0].mxu0
      %2606 = vmatprep.mubr.f32.mxu0 0.0
      %2607 = vmatmul.mubr.f32.gmra.mrb[0].mxu0 %v2417
      %v2608 = vpop.f32.mrb[0].mxu0
      %v2609 = vadd.f32 %v2288, %v2608
      %v2610 = vpop.f32.mrb[0].mxu0
      %2611 = vmatprep.mubr.f32.mxu0 0.0
      %2612 = vmatmul.mubr.f32.gmra.mrb[0].mxu0 %v2420
      %v2613 = vpop.f32.mrb[0].mxu0
      %v2614 = vadd.f32 %v2293, %v2613
      %v2615 = vpop.f32.mrb[0].mxu0
      %2616 = vmatprep.mubr.f32.mxu0 0.0
      %2617 = vmatmul.mubr.f32.gmra.mrb[0].mxu0 %v2423
      %v2618 = vpop.f32.mrb[0].mxu0
      %v2619 = vadd.f32 %v2298, %v2618
      %v2620 = vpop.f32.mrb[0].mxu0
      %2621 = vmatprep.mubr.f32.mxu0 0.0
      %2622 = vmatmul.mubr.f32.gmra.mrb[0].mxu0 %v2426
      %v2623 = vpop.f32.mrb[0].mxu0
      %v2624 = vadd.f32 %v2303, %v2623
      %v2625 = vpop.f32.mrb[0].mxu0
      %2626 = vmatprep.mubr.f32.mxu0 0.0
      %2627 = vmatmul.mubr.f32.gmra.mrb[0].mxu0 %v2429
      %v2628 = vpop.f32.mrb[0].mxu0
      %v2629 = vadd.f32 %v2308, %v2628
      %v2630 = vpop.f32.mrb[0].mxu0
      %2631 = vmatprep.mubr.f32.mxu0 0.0
      %2632 = vmatmul.mubr.f32.gmra.mrb[0].mxu0 %v2432
      %v2633 = vpop.f32.mrb[0].mxu0
      %v2634 = vadd.f32 %v2313, %v2633
      %v2635 = vpop.f32.mrb[0].mxu0
      %2636 = vmatprep.mubr.f32.mxu0 0.0
      %2637 = vmatmul.mubr.f32.gmra.mrb[0].mxu0 %v2435
      %v2638 = vpop.f32.mrb[0].mxu0
      %v2639 = vadd.f32 %v2318, %v2638
      %v2640 = vpop.f32.mrb[0].mxu0
      %2641 = vmatprep.mubr.f32.mxu0 0.0
      %2642 = vmatmul.mubr.f32.gmra.mrb[0].mxu0 %v2438
      %v2643 = vpop.f32.mrb[0].mxu0
      %v2644 = vadd.f32 %v2323, %v2643
      %v2645 = vpop.f32.mrb[0].mxu0
      %2646 = vmatprep.mubr.f32.mxu0 0.0
      %2647 = vmatmul.mubr.f32.gmra.mrb[0].mxu0 %v2441
      %v2648 = vpop.f32.mrb[0].mxu0
      %v2649 = vadd.f32 %v2328, %v2648
      %v2650 = vpop.f32.mrb[0].mxu0
      %2651 = vmatprep.mubr.f32.mxu0 0.0
      %2652 = vmatmul.mubr.f32.gmra.mrb[0].mxu0 %v2444
      %v2653 = vpop.f32.mrb[0].mxu0
      %v2654 = vadd.f32 %v2333, %v2653
      %v2655 = vpop.f32.mrb[0].mxu0
      %2656 = vmatprep.mubr.f32.mxu0 0.0
      %2657 = vmatmul.mubr.f32.gmra.mrb[0].mxu0 %v2447
      %v2658 = vpop.f32.mrb[0].mxu0
      %v2659 = vadd.f32 %v2338, %v2658
      %v2660 = vpop.f32.mrb[0].mxu0
      %2661 = vmatprep.mubr.f32.mxu0 0.0
      %2662 = vmatmul.mubr.f32.gmra.mrb[0].mxu0 %v2450
      %v2663 = vpop.f32.mrb[0].mxu0
      %v2664 = vadd.f32 %v2343, %v2663
      %v2665 = vpop.f32.mrb[0].mxu0
      %2666 = vmatprep.mubr.f32.mxu0 0.0
      %2667 = vmatmul.mubr.f32.gmra.mrb[0].mxu0 %v2453
      %v2668 = vpop.f32.mrb[0].mxu0
      %v2669 = vadd.f32 %v2348, %v2668
      %v2670 = vpop.f32.mrb[0].mxu0
      %2671 = vmatprep.mubr.f32.mxu0 0.0
      %2672 = vmatmul.mubr.f32.gmra.mrb[0].mxu0 %v2456
      %v2673 = vpop.f32.mrb[0].mxu0
      %v2674 = vadd.f32 %v2353, %v2673
      %v2675 = vpop.f32.mrb[0].mxu0
      %2676 = vmatprep.mubr.f32.mxu0 0.0
      %2677 = vmatmul.mubr.f32.gmra.mrb[0].mxu0 %v2459
      %v2678 = vpop.f32.mrb[0].mxu0
      %v2679 = vadd.f32 %v2358, %v2678
      %v2680 = vpop.f32.mrb[0].mxu0
      %2681 = vmatprep.mubr.f32.mxu0 0.0
      %2682 = vmatmul.mubr.f32.gmra.mrb[0].mxu0 %v2462
      %v2683 = vpop.f32.mrb[0].mxu0
      %v2684 = vadd.f32 %v2363, %v2683
      %v2685 = vpop.f32.mrb[0].mxu0
      %2686 = vmatprep.mubr.f32.mxu0 0.0
      %2687 = vmatmul.mubr.f32.gmra.mrb[0].mxu0 %v2465
      %v2688 = vpop.f32.mrb[0].mxu0
      %v2689 = vadd.f32 %v2368, %v2688
      %v2690 = vpop.f32.mrb[0].mxu0
      %2691 = vdwg.mxu0
      %s2692 = scalar_lea.vmem [#allocation2], 24
      %v2693 = vld [vmem:[%s2692] sm:$0xff]
      %v2694 = vld [vmem:[%s2692 + $0x8] sm:$0xff]
      %v2695 = vld [vmem:[%s2692 + $0x18] sm:$0xff]
      %v2696 = vld [vmem:[%s2692 + $0x20] sm:$0xff]
      %v2697 = vld [vmem:[%s2692 + $0x30] sm:$0xff]
      %v2698 = vld [vmem:[%s2692 + $0x38] sm:$0xff]
      %v2699 = vld [vmem:[%s2692 + $0x48] sm:$0xff]
      %v2700 = vld [vmem:[%s2692 + $0x50] sm:$0xff]
      %v2701 = vld [vmem:[%s2692 + $0x60] sm:$0xff]
      %v2702 = vld [vmem:[%s2692 + $0x68] sm:$0xff]
      %v2703 = vld [vmem:[%s2692 + $0x78] sm:$0xff]
      %v2704 = vld [vmem:[%s2692 + $0x80] sm:$0xff]
      %v2705 = vld [vmem:[%s2692 + $0x90] sm:$0xff]
      %v2706 = vld [vmem:[%s2692 + $0x98] sm:$0xff]
      %v2707 = vld [vmem:[%s2692 + $0xa8] sm:$0xff]
      %v2708 = vld [vmem:[%s2692 + $0xb0] sm:$0xff]
      %v2709 = vld [vmem:[%s2692 + $0xc0] sm:$0xff]
      %v2710 = vld [vmem:[%s2692 + $0xc8] sm:$0xff]
      %v2711 = vld [vmem:[%s2692 + $0xd8] sm:$0xff]
      %v2712 = vld [vmem:[%s2692 + $0xe0] sm:$0xff]
      %v2713 = vld [vmem:[%s2692 + $0xf0] sm:$0xff]
      %v2714 = vld [vmem:[%s2692 + $0xf8] sm:$0xff]
      %v2715 = vld [vmem:[%s2692 + $0x108] sm:$0xff]
      %v2716 = vld [vmem:[%s2692 + $0x110] sm:$0xff]
      %v2717 = vld [vmem:[%s2692 + $0x120] sm:$0xff]
      %v2718 = vld [vmem:[%s2692 + $0x128] sm:$0xff]
      %v2719 = vld [vmem:[%s2692 + $0x138] sm:$0xff]
      %v2720 = vld [vmem:[%s2692 + $0x140] sm:$0xff]
      %v2721 = vld [vmem:[%s2692 + $0x150] sm:$0xff]
      %v2722 = vld [vmem:[%s2692 + $0x158] sm:$0xff]
      %v2723 = vld [vmem:[%s2692 + $0x168] sm:$0xff]
      %v2724 = vld [vmem:[%s2692 + $0x170] sm:$0xff]
      %s2725 = scalar_lea.vmem %s3, 64
      %v2726 = vld [vmem:[%s2725] sm:$0xff]
      %v2727 = vld [vmem:[%s2725 + $0x8] sm:$0xff]
      %v2728 = vld [vmem:[%s2725 + $0x10] sm:$0xff]
      %v2729 = vld [vmem:[%s2725 + $0x18] sm:$0xff]
      %v2731 = vsel %vm1892, %v2693, 0
      %v2734 = vsel %vm1892, %v2694, 0
      %v2737 = vsel %vm1892, %v2695, 0
      %v2740 = vsel %vm1892, %v2696, 0
      %v2743 = vsel %vm1892, %v2697, 0
      %v2746 = vsel %vm1892, %v2698, 0
      %v2749 = vsel %vm1892, %v2699, 0
      %v2752 = vsel %vm1892, %v2700, 0
      %v2755 = vsel %vm1892, %v2701, 0
      %v2758 = vsel %vm1892, %v2702, 0
      %v2761 = vsel %vm1892, %v2703, 0
      %v2764 = vsel %vm1892, %v2704, 0
      %v2767 = vsel %vm1892, %v2705, 0
      %v2770 = vsel %vm1892, %v2706, 0
      %v2773 = vsel %vm1892, %v2707, 0
      %v2776 = vsel %vm1892, %v2708, 0
      %v2779 = vsel %vm1892, %v2709, 0
      %v2782 = vsel %vm1892, %v2710, 0
      %v2785 = vsel %vm1892, %v2711, 0
      %v2788 = vsel %vm1892, %v2712, 0
      %v2791 = vsel %vm1892, %v2713, 0
      %v2794 = vsel %vm1892, %v2714, 0
      %v2797 = vsel %vm1892, %v2715, 0
      %v2800 = vsel %vm1892, %v2716, 0
      %v2803 = vsel %vm1892, %v2717, 0
      %v2806 = vsel %vm1892, %v2718, 0
      %v2809 = vsel %vm1892, %v2719, 0
      %v2812 = vsel %vm1892, %v2720, 0
      %v2815 = vsel %vm1892, %v2721, 0
      %v2818 = vsel %vm1892, %v2722, 0
      %v2821 = vsel %vm1892, %v2723, 0
      %v2824 = vsel %vm1892, %v2724, 0
      %2826 = vmatprep.subr.mxu0 0.0
      %2827 = vmatpush1.msra.mxu0 %v2726
      %2828 = vmatprep.subr.mxu0 0.0
      %2829 = vmatpush1.msra.mxu0 %v2727
      %2830 = vmatprep.subr.mxu0 0.0
      %2831 = vmatpush1.msra.mxu0 %v2728
      %2832 = vmatprep.subr.mxu0 0.0
      %2833 = vmatpush1.msra.mxu0 %v2729
      %2834 = vmatprep.subr.mxu0 0.0
      %2835 = vmatpush1.msra.mxu0 0.0
      %2836 = vmatprep.subr.mxu0 0.0
      %2837 = vmatpush1.msra.mxu0 0.0
      %2838 = vmatprep.subr.mxu0 0.0
      %2839 = vmatpush1.msra.mxu0 0.0
      %2840 = vmatprep.subr.mxu0 0.0
      %2841 = vmatpush1.msra.mxu0 0.0
      %2842 = vmatprep.subr.mxu0 0.0
      %2843 = vmatpush1.msra.mxu0 0.0
      %2844 = vmatprep.subr.mxu0 0.0
      %2845 = vmatpush1.msra.mxu0 0.0
      %2846 = vmatprep.subr.mxu0 0.0
      %2847 = vmatpush1.msra.mxu0 0.0
      %2848 = vmatprep.subr.mxu0 0.0
      %2849 = vmatpush1.msra.mxu0 0.0
      %2850 = vmatprep.subr.mxu0 0.0
      %2851 = vmatpush1.msra.mxu0 0.0
      %2852 = vmatprep.subr.mxu0 0.0
      %2853 = vmatpush1.msra.mxu0 0.0
      %2854 = vmatprep.subr.mxu0 0.0
      %2855 = vmatpush1.msra.mxu0 0.0
      %2856 = vmatprep.subr.mxu0 0.0
      %2857 = vmatpush1.msra.mxu0 0.0
      %2858 = vmatprep.subr.mxu0 0.0
      %2859 = vmatpush1.msra.mxu0 0.0
      %2860 = vmatprep.subr.mxu0 0.0
      %2861 = vmatpush1.msra.mxu0 0.0
      %2862 = vmatprep.subr.mxu0 0.0
      %2863 = vmatpush1.msra.mxu0 0.0
      %2864 = vmatprep.subr.mxu0 0.0
      %2865 = vmatpush1.msra.mxu0 0.0
      %2866 = vmatprep.subr.mxu0 0.0
      %2867 = vmatpush1.msra.mxu0 0.0
      %2868 = vmatprep.subr.mxu0 0.0
      %2869 = vmatpush1.msra.mxu0 0.0
      %2870 = vmatprep.subr.mxu0 0.0
      %2871 = vmatpush1.msra.mxu0 0.0
      %2872 = vmatprep.subr.mxu0 0.0
      %2873 = vmatpush1.msra.mxu0 0.0
      %2874 = vmatprep.subr.mxu0 0.0
      %2875 = vmatpush1.msra.mxu0 0.0
      %2876 = vmatprep.subr.mxu0 0.0
      %2877 = vmatpush1.msra.mxu0 0.0
      %2878 = vmatprep.subr.mxu0 0.0
      %2879 = vmatpush1.msra.mxu0 0.0
      %2880 = vmatprep.subr.mxu0 0.0
      %2881 = vmatpush1.msra.mxu0 0.0
      %2882 = vmatprep.subr.mxu0 0.0
      %2883 = vmatpush1.msra.mxu0 0.0
      %2884 = vmatprep.subr.mxu0 0.0
      %2885 = vmatpush1.msra.mxu0 0.0
      %2886 = vmatprep.subr.mxu0 0.0
      %2887 = vmatpush1.msra.mxu0 0.0
      %2888 = vmatprep.subr.mxu0 0.0
      %2889 = vmatpush1.msra.mxu0 0.0
      %2890 = vmatprep.mubr.f32.mxu0 0.0
      %2891 = vmatmul.mubr.f32.gmra.mrb[0].mxu0 %v2731
      %v2892 = vpop.f32.mrb[0].mxu0
      %v2893 = vadd.f32 0.0, %v2892
      %v2894 = vpop.f32.mrb[0].mxu0
      %2895 = vmatprep.mubr.f32.mxu0 0.0
      %2896 = vmatmul.mubr.f32.gmra.mrb[0].mxu0 %v2734
      %v2897 = vpop.f32.mrb[0].mxu0
      %v2898 = vadd.f32 0.0, %v2897
      %v2899 = vpop.f32.mrb[0].mxu0
      %2900 = vmatprep.mubr.f32.mxu0 0.0
      %2901 = vmatmul.mubr.f32.gmra.mrb[0].mxu0 %v2737
      %v2902 = vpop.f32.mrb[0].mxu0
      %v2903 = vadd.f32 0.0, %v2902
      %v2904 = vpop.f32.mrb[0].mxu0
      %2905 = vmatprep.mubr.f32.mxu0 0.0
      %2906 = vmatmul.mubr.f32.gmra.mrb[0].mxu0 %v2740
      %v2907 = vpop.f32.mrb[0].mxu0
      %v2908 = vadd.f32 0.0, %v2907
      %v2909 = vpop.f32.mrb[0].mxu0
      %2910 = vmatprep.mubr.f32.mxu0 0.0
      %2911 = vmatmul.mubr.f32.gmra.mrb[0].mxu0 %v2743
      %v2912 = vpop.f32.mrb[0].mxu0
      %v2913 = vadd.f32 0.0, %v2912
      %v2914 = vpop.f32.mrb[0].mxu0
      %2915 = vmatprep.mubr.f32.mxu0 0.0
      %2916 = vmatmul.mubr.f32.gmra.mrb[0].mxu0 %v2746
      %v2917 = vpop.f32.mrb[0].mxu0
      %v2918 = vadd.f32 0.0, %v2917
      %v2919 = vpop.f32.mrb[0].mxu0
      %2920 = vmatprep.mubr.f32.mxu0 0.0
      %2921 = vmatmul.mubr.f32.gmra.mrb[0].mxu0 %v2749
      %v2922 = vpop.f32.mrb[0].mxu0
      %v2923 = vadd.f32 0.0, %v2922
      %v2924 = vpop.f32.mrb[0].mxu0
      %2925 = vmatprep.mubr.f32.mxu0 0.0
      %2926 = vmatmul.mubr.f32.gmra.mrb[0].mxu0 %v2752
      %v2927 = vpop.f32.mrb[0].mxu0
      %v2928 = vadd.f32 0.0, %v2927
      %v2929 = vpop.f32.mrb[0].mxu0
      %2930 = vmatprep.mubr.f32.mxu0 0.0
      %2931 = vmatmul.mubr.f32.gmra.mrb[0].mxu0 %v2755
      %v2932 = vpop.f32.mrb[0].mxu0
      %v2933 = vadd.f32 0.0, %v2932
      %v2934 = vpop.f32.mrb[0].mxu0
      %2935 = vmatprep.mubr.f32.mxu0 0.0
      %2936 = vmatmul.mubr.f32.gmra.mrb[0].mxu0 %v2758
      %v2937 = vpop.f32.mrb[0].mxu0
      %v2938 = vadd.f32 0.0, %v2937
      %v2939 = vpop.f32.mrb[0].mxu0
      %2940 = vmatprep.mubr.f32.mxu0 0.0
      %2941 = vmatmul.mubr.f32.gmra.mrb[0].mxu0 %v2761
      %v2942 = vpop.f32.mrb[0].mxu0
      %v2943 = vadd.f32 0.0, %v2942
      %v2944 = vpop.f32.mrb[0].mxu0
      %2945 = vmatprep.mubr.f32.mxu0 0.0
      %2946 = vmatmul.mubr.f32.gmra.mrb[0].mxu0 %v2764
      %v2947 = vpop.f32.mrb[0].mxu0
      %v2948 = vadd.f32 0.0, %v2947
      %v2949 = vpop.f32.mrb[0].mxu0
      %2950 = vmatprep.mubr.f32.mxu0 0.0
      %2951 = vmatmul.mubr.f32.gmra.mrb[0].mxu0 %v2767
      %v2952 = vpop.f32.mrb[0].mxu0
      %v2953 = vadd.f32 0.0, %v2952
      %v2954 = vpop.f32.mrb[0].mxu0
      %2955 = vmatprep.mubr.f32.mxu0 0.0
      %2956 = vmatmul.mubr.f32.gmra.mrb[0].mxu0 %v2770
      %v2957 = vpop.f32.mrb[0].mxu0
      %v2958 = vadd.f32 0.0, %v2957
      %v2959 = vpop.f32.mrb[0].mxu0
      %2960 = vmatprep.mubr.f32.mxu0 0.0
      %2961 = vmatmul.mubr.f32.gmra.mrb[0].mxu0 %v2773
      %v2962 = vpop.f32.mrb[0].mxu0
      %v2963 = vadd.f32 0.0, %v2962
      %v2964 = vpop.f32.mrb[0].mxu0
      %2965 = vmatprep.mubr.f32.mxu0 0.0
      %2966 = vmatmul.mubr.f32.gmra.mrb[0].mxu0 %v2776
      %v2967 = vpop.f32.mrb[0].mxu0
      %v2968 = vadd.f32 0.0, %v2967
      %v2969 = vpop.f32.mrb[0].mxu0
      %2970 = vmatprep.mubr.f32.mxu0 0.0
      %2971 = vmatmul.mubr.f32.gmra.mrb[0].mxu0 %v2779
      %v2972 = vpop.f32.mrb[0].mxu0
      %v2973 = vadd.f32 0.0, %v2972
      %v2974 = vpop.f32.mrb[0].mxu0
      %2975 = vmatprep.mubr.f32.mxu0 0.0
      %2976 = vmatmul.mubr.f32.gmra.mrb[0].mxu0 %v2782
      %v2977 = vpop.f32.mrb[0].mxu0
      %v2978 = vadd.f32 0.0, %v2977
      %v2979 = vpop.f32.mrb[0].mxu0
      %2980 = vmatprep.mubr.f32.mxu0 0.0
      %2981 = vmatmul.mubr.f32.gmra.mrb[0].mxu0 %v2785
      %v2982 = vpop.f32.mrb[0].mxu0
      %v2983 = vadd.f32 0.0, %v2982
      %v2984 = vpop.f32.mrb[0].mxu0
      %2985 = vmatprep.mubr.f32.mxu0 0.0
      %2986 = vmatmul.mubr.f32.gmra.mrb[0].mxu0 %v2788
      %v2987 = vpop.f32.mrb[0].mxu0
      %v2988 = vadd.f32 0.0, %v2987
      %v2989 = vpop.f32.mrb[0].mxu0
      %2990 = vmatprep.mubr.f32.mxu0 0.0
      %2991 = vmatmul.mubr.f32.gmra.mrb[0].mxu0 %v2791
      %v2992 = vpop.f32.mrb[0].mxu0
      %v2993 = vadd.f32 0.0, %v2992
      %v2994 = vpop.f32.mrb[0].mxu0
      %2995 = vmatprep.mubr.f32.mxu0 0.0
      %2996 = vmatmul.mubr.f32.gmra.mrb[0].mxu0 %v2794
      %v2997 = vpop.f32.mrb[0].mxu0
      %v2998 = vadd.f32 0.0, %v2997
      %v2999 = vpop.f32.mrb[0].mxu0
      %3000 = vmatprep.mubr.f32.mxu0 0.0
      %3001 = vmatmul.mubr.f32.gmra.mrb[0].mxu0 %v2797
      %v3002 = vpop.f32.mrb[0].mxu0
      %v3003 = vadd.f32 0.0, %v3002
      %v3004 = vpop.f32.mrb[0].mxu0
      %3005 = vmatprep.mubr.f32.mxu0 0.0
      %3006 = vmatmul.mubr.f32.gmra.mrb[0].mxu0 %v2800
      %v3007 = vpop.f32.mrb[0].mxu0
      %v3008 = vadd.f32 0.0, %v3007
      %v3009 = vpop.f32.mrb[0].mxu0
      %3010 = vmatprep.mubr.f32.mxu0 0.0
      %3011 = vmatmul.mubr.f32.gmra.mrb[0].mxu0 %v2803
      %v3012 = vpop.f32.mrb[0].mxu0
      %v3013 = vadd.f32 0.0, %v3012
      %v3014 = vpop.f32.mrb[0].mxu0
      %3015 = vmatprep.mubr.f32.mxu0 0.0
      %3016 = vmatmul.mubr.f32.gmra.mrb[0].mxu0 %v2806
      %v3017 = vpop.f32.mrb[0].mxu0
      %v3018 = vadd.f32 0.0, %v3017
      %v3019 = vpop.f32.mrb[0].mxu0
      %3020 = vmatprep.mubr.f32.mxu0 0.0
      %3021 = vmatmul.mubr.f32.gmra.mrb[0].mxu0 %v2809
      %v3022 = vpop.f32.mrb[0].mxu0
      %v3023 = vadd.f32 0.0, %v3022
      %v3024 = vpop.f32.mrb[0].mxu0
      %3025 = vmatprep.mubr.f32.mxu0 0.0
      %3026 = vmatmul.mubr.f32.gmra.mrb[0].mxu0 %v2812
      %v3027 = vpop.f32.mrb[0].mxu0
      %v3028 = vadd.f32 0.0, %v3027
      %v3029 = vpop.f32.mrb[0].mxu0
      %3030 = vmatprep.mubr.f32.mxu0 0.0
      %3031 = vmatmul.mubr.f32.gmra.mrb[0].mxu0 %v2815
      %v3032 = vpop.f32.mrb[0].mxu0
      %v3033 = vadd.f32 0.0, %v3032
      %v3034 = vpop.f32.mrb[0].mxu0
      %3035 = vmatprep.mubr.f32.mxu0 0.0
      %3036 = vmatmul.mubr.f32.gmra.mrb[0].mxu0 %v2818
      %v3037 = vpop.f32.mrb[0].mxu0
      %v3038 = vadd.f32 0.0, %v3037
      %v3039 = vpop.f32.mrb[0].mxu0
      %3040 = vmatprep.mubr.f32.mxu0 0.0
      %3041 = vmatmul.mubr.f32.gmra.mrb[0].mxu0 %v2821
      %v3042 = vpop.f32.mrb[0].mxu0
      %v3043 = vadd.f32 0.0, %v3042
      %v3044 = vpop.f32.mrb[0].mxu0
      %3045 = vmatprep.mubr.f32.mxu0 0.0
      %3046 = vmatmul.mubr.f32.gmra.mrb[0].mxu0 %v2824
      %v3047 = vpop.f32.mrb[0].mxu0
      %v3048 = vadd.f32 0.0, %v3047
      %v3049 = vpop.f32.mrb[0].mxu0
      %3050 = vdwg.mxu0
      %v3051 = vadd.f32 %v2534, %v2893
      %v3052 = vadd.f32 %v2539, %v2898
      %v3053 = vadd.f32 %v2544, %v2903
      %v3054 = vadd.f32 %v2549, %v2908
      %v3055 = vadd.f32 %v2554, %v2913
      %v3056 = vadd.f32 %v2559, %v2918
      %v3057 = vadd.f32 %v2564, %v2923
      %v3058 = vadd.f32 %v2569, %v2928
      %v3059 = vadd.f32 %v2574, %v2933
      %v3060 = vadd.f32 %v2579, %v2938
      %v3061 = vadd.f32 %v2584, %v2943
      %v3062 = vadd.f32 %v2589, %v2948
      %v3063 = vadd.f32 %v2594, %v2953
      %v3064 = vadd.f32 %v2599, %v2958
      %v3065 = vadd.f32 %v2604, %v2963
      %v3066 = vadd.f32 %v2609, %v2968
      %v3067 = vadd.f32 %v2614, %v2973
      %v3068 = vadd.f32 %v2619, %v2978
      %v3069 = vadd.f32 %v2624, %v2983
      %v3070 = vadd.f32 %v2629, %v2988
      %v3071 = vadd.f32 %v2634, %v2993
      %v3072 = vadd.f32 %v2639, %v2998
      %v3073 = vadd.f32 %v2644, %v3003
      %v3074 = vadd.f32 %v2649, %v3008
      %v3075 = vadd.f32 %v2654, %v3013
      %v3076 = vadd.f32 %v2659, %v3018
      %v3077 = vadd.f32 %v2664, %v3023
      %v3078 = vadd.f32 %v2669, %v3028
      %v3079 = vadd.f32 %v2674, %v3033
      %v3080 = vadd.f32 %v2679, %v3038
      %v3081 = vadd.f32 %v2684, %v3043
      %v3082 = vadd.f32 %v2689, %v3048
      %v3083 = vld [vmem:[%s2692 + $0x1] sm:$0xff]
      %v3084 = vld [vmem:[%s2692 + $0x9] sm:$0xff]
      %v3085 = vld [vmem:[%s2692 + $0x19] sm:$0xff]
      %v3086 = vld [vmem:[%s2692 + $0x21] sm:$0xff]
      %v3087 = vld [vmem:[%s2692 + $0x31] sm:$0xff]
      %v3088 = vld [vmem:[%s2692 + $0x39] sm:$0xff]
      %v3089 = vld [vmem:[%s2692 + $0x49] sm:$0xff]
      %v3090 = vld [vmem:[%s2692 + $0x51] sm:$0xff]
      %v3091 = vld [vmem:[%s2692 + $0x61] sm:$0xff]
      %v3092 = vld [vmem:[%s2692 + $0x69] sm:$0xff]
      %v3093 = vld [vmem:[%s2692 + $0x79] sm:$0xff]
      %v3094 = vld [vmem:[%s2692 + $0x81] sm:$0xff]
      %v3095 = vld [vmem:[%s2692 + $0x91] sm:$0xff]
      %v3096 = vld [vmem:[%s2692 + $0x99] sm:$0xff]
      %v3097 = vld [vmem:[%s2692 + $0xa9] sm:$0xff]
      %v3098 = vld [vmem:[%s2692 + $0xb1] sm:$0xff]
      %v3099 = vld [vmem:[%s2692 + $0xc1] sm:$0xff]
      %v3100 = vld [vmem:[%s2692 + $0xc9] sm:$0xff]
      %v3101 = vld [vmem:[%s2692 + $0xd9] sm:$0xff]
      %v3102 = vld [vmem:[%s2692 + $0xe1] sm:$0xff]
      %v3103 = vld [vmem:[%s2692 + $0xf1] sm:$0xff]
      %v3104 = vld [vmem:[%s2692 + $0xf9] sm:$0xff]
      %v3105 = vld [vmem:[%s2692 + $0x109] sm:$0xff]
      %v3106 = vld [vmem:[%s2692 + $0x111] sm:$0xff]
      %v3107 = vld [vmem:[%s2692 + $0x121] sm:$0xff]
      %v3108 = vld [vmem:[%s2692 + $0x129] sm:$0xff]
      %v3109 = vld [vmem:[%s2692 + $0x139] sm:$0xff]
      %v3110 = vld [vmem:[%s2692 + $0x141] sm:$0xff]
      %v3111 = vld [vmem:[%s2692 + $0x151] sm:$0xff]
      %v3112 = vld [vmem:[%s2692 + $0x159] sm:$0xff]
      %v3113 = vld [vmem:[%s2692 + $0x169] sm:$0xff]
      %v3114 = vld [vmem:[%s2692 + $0x171] sm:$0xff]
      %s3115 = scalar_lea.vmem %s3, 96
      %v3116 = vld [vmem:[%s3115] sm:$0xff]
      %v3117 = vld [vmem:[%s3115 + $0x8] sm:$0xff]
      %v3118 = vld [vmem:[%s3115 + $0x10] sm:$0xff]
      %v3119 = vld [vmem:[%s3115 + $0x18] sm:$0xff]
      %v3121 = vsel %vm1892, %v3083, 0
      %v3124 = vsel %vm1892, %v3084, 0
      %v3127 = vsel %vm1892, %v3085, 0
      %v3130 = vsel %vm1892, %v3086, 0
      %v3133 = vsel %vm1892, %v3087, 0
      %v3136 = vsel %vm1892, %v3088, 0
      %v3139 = vsel %vm1892, %v3089, 0
      %v3142 = vsel %vm1892, %v3090, 0
      %v3145 = vsel %vm1892, %v3091, 0
      %v3148 = vsel %vm1892, %v3092, 0
      %v3151 = vsel %vm1892, %v3093, 0
      %v3154 = vsel %vm1892, %v3094, 0
      %v3157 = vsel %vm1892, %v3095, 0
      %v3160 = vsel %vm1892, %v3096, 0
      %v3163 = vsel %vm1892, %v3097, 0
      %v3166 = vsel %vm1892, %v3098, 0
      %v3169 = vsel %vm1892, %v3099, 0
      %v3172 = vsel %vm1892, %v3100, 0
      %v3175 = vsel %vm1892, %v3101, 0
      %v3178 = vsel %vm1892, %v3102, 0
      %v3181 = vsel %vm1892, %v3103, 0
      %v3184 = vsel %vm1892, %v3104, 0
      %v3187 = vsel %vm1892, %v3105, 0
      %v3190 = vsel %vm1892, %v3106, 0
      %v3193 = vsel %vm1892, %v3107, 0
      %v3196 = vsel %vm1892, %v3108, 0
      %v3199 = vsel %vm1892, %v3109, 0
      %v3202 = vsel %vm1892, %v3110, 0
      %v3205 = vsel %vm1892, %v3111, 0
      %v3208 = vsel %vm1892, %v3112, 0
      %v3211 = vsel %vm1892, %v3113, 0
      %v3214 = vsel %vm1892, %v3114, 0
      %3216 = vmatprep.subr.mxu0 0.0
      %3217 = vmatpush1.msra.mxu0 %v3116
      %3218 = vmatprep.subr.mxu0 0.0
      %3219 = vmatpush1.msra.mxu0 %v3117
      %3220 = vmatprep.subr.mxu0 0.0
      %3221 = vmatpush1.msra.mxu0 %v3118
      %3222 = vmatprep.subr.mxu0 0.0
      %3223 = vmatpush1.msra.mxu0 %v3119
      %3224 = vmatprep.subr.mxu0 0.0
      %3225 = vmatpush1.msra.mxu0 0.0
      %3226 = vmatprep.subr.mxu0 0.0
      %3227 = vmatpush1.msra.mxu0 0.0
      %3228 = vmatprep.subr.mxu0 0.0
      %3229 = vmatpush1.msra.mxu0 0.0
      %3230 = vmatprep.subr.mxu0 0.0
      %3231 = vmatpush1.msra.mxu0 0.0
      %3232 = vmatprep.subr.mxu0 0.0
      %3233 = vmatpush1.msra.mxu0 0.0
      %3234 = vmatprep.subr.mxu0 0.0
      %3235 = vmatpush1.msra.mxu0 0.0
      %3236 = vmatprep.subr.mxu0 0.0
      %3237 = vmatpush1.msra.mxu0 0.0
      %3238 = vmatprep.subr.mxu0 0.0
      %3239 = vmatpush1.msra.mxu0 0.0
      %3240 = vmatprep.subr.mxu0 0.0
      %3241 = vmatpush1.msra.mxu0 0.0
      %3242 = vmatprep.subr.mxu0 0.0
      %3243 = vmatpush1.msra.mxu0 0.0
      %3244 = vmatprep.subr.mxu0 0.0
      %3245 = vmatpush1.msra.mxu0 0.0
      %3246 = vmatprep.subr.mxu0 0.0
      %3247 = vmatpush1.msra.mxu0 0.0
      %3248 = vmatprep.subr.mxu0 0.0
      %3249 = vmatpush1.msra.mxu0 0.0
      %3250 = vmatprep.subr.mxu0 0.0
      %3251 = vmatpush1.msra.mxu0 0.0
      %3252 = vmatprep.subr.mxu0 0.0
      %3253 = vmatpush1.msra.mxu0 0.0
      %3254 = vmatprep.subr.mxu0 0.0
      %3255 = vmatpush1.msra.mxu0 0.0
      %3256 = vmatprep.subr.mxu0 0.0
      %3257 = vmatpush1.msra.mxu0 0.0
      %3258 = vmatprep.subr.mxu0 0.0
      %3259 = vmatpush1.msra.mxu0 0.0
      %3260 = vmatprep.subr.mxu0 0.0
      %3261 = vmatpush1.msra.mxu0 0.0
      %3262 = vmatprep.subr.mxu0 0.0
      %3263 = vmatpush1.msra.mxu0 0.0
      %3264 = vmatprep.subr.mxu0 0.0
      %3265 = vmatpush1.msra.mxu0 0.0
      %3266 = vmatprep.subr.mxu0 0.0
      %3267 = vmatpush1.msra.mxu0 0.0
      %3268 = vmatprep.subr.mxu0 0.0
      %3269 = vmatpush1.msra.mxu0 0.0
      %3270 = vmatprep.subr.mxu0 0.0
      %3271 = vmatpush1.msra.mxu0 0.0
      %3272 = vmatprep.subr.mxu0 0.0
      %3273 = vmatpush1.msra.mxu0 0.0
      %3274 = vmatprep.subr.mxu0 0.0
      %3275 = vmatpush1.msra.mxu0 0.0
      %3276 = vmatprep.subr.mxu0 0.0
      %3277 = vmatpush1.msra.mxu0 0.0
      %3278 = vmatprep.subr.mxu0 0.0
      %3279 = vmatpush1.msra.mxu0 0.0
      %3280 = vmatprep.mubr.f32.mxu0 0.0
      %3281 = vmatmul.mubr.f32.gmra.mrb[0].mxu0 %v3121
      %v3282 = vpop.f32.mrb[0].mxu0
      %v3283 = vadd.f32 0.0, %v3282
      %v3284 = vpop.f32.mrb[0].mxu0
      %3285 = vmatprep.mubr.f32.mxu0 0.0
      %3286 = vmatmul.mubr.f32.gmra.mrb[0].mxu0 %v3124
      %v3287 = vpop.f32.mrb[0].mxu0
      %v3288 = vadd.f32 0.0, %v3287
      %v3289 = vpop.f32.mrb[0].mxu0
      %3290 = vmatprep.mubr.f32.mxu0 0.0
      %3291 = vmatmul.mubr.f32.gmra.mrb[0].mxu0 %v3127
      %v3292 = vpop.f32.mrb[0].mxu0
      %v3293 = vadd.f32 0.0, %v3292
      %v3294 = vpop.f32.mrb[0].mxu0
      %3295 = vmatprep.mubr.f32.mxu0 0.0
      %3296 = vmatmul.mubr.f32.gmra.mrb[0].mxu0 %v3130
      %v3297 = vpop.f32.mrb[0].mxu0
      %v3298 = vadd.f32 0.0, %v3297
      %v3299 = vpop.f32.mrb[0].mxu0
      %3300 = vmatprep.mubr.f32.mxu0 0.0
      %3301 = vmatmul.mubr.f32.gmra.mrb[0].mxu0 %v3133
      %v3302 = vpop.f32.mrb[0].mxu0
      %v3303 = vadd.f32 0.0, %v3302
      %v3304 = vpop.f32.mrb[0].mxu0
      %3305 = vmatprep.mubr.f32.mxu0 0.0
      %3306 = vmatmul.mubr.f32.gmra.mrb[0].mxu0 %v3136
      %v3307 = vpop.f32.mrb[0].mxu0
      %v3308 = vadd.f32 0.0, %v3307
      %v3309 = vpop.f32.mrb[0].mxu0
      %3310 = vmatprep.mubr.f32.mxu0 0.0
      %3311 = vmatmul.mubr.f32.gmra.mrb[0].mxu0 %v3139
      %v3312 = vpop.f32.mrb[0].mxu0
      %v3313 = vadd.f32 0.0, %v3312
      %v3314 = vpop.f32.mrb[0].mxu0
      %3315 = vmatprep.mubr.f32.mxu0 0.0
      %3316 = vmatmul.mubr.f32.gmra.mrb[0].mxu0 %v3142
      %v3317 = vpop.f32.mrb[0].mxu0
      %v3318 = vadd.f32 0.0, %v3317
      %v3319 = vpop.f32.mrb[0].mxu0
      %3320 = vmatprep.mubr.f32.mxu0 0.0
      %3321 = vmatmul.mubr.f32.gmra.mrb[0].mxu0 %v3145
      %v3322 = vpop.f32.mrb[0].mxu0
      %v3323 = vadd.f32 0.0, %v3322
      %v3324 = vpop.f32.mrb[0].mxu0
      %3325 = vmatprep.mubr.f32.mxu0 0.0
      %3326 = vmatmul.mubr.f32.gmra.mrb[0].mxu0 %v3148
      %v3327 = vpop.f32.mrb[0].mxu0
      %v3328 = vadd.f32 0.0, %v3327
      %v3329 = vpop.f32.mrb[0].mxu0
      %3330 = vmatprep.mubr.f32.mxu0 0.0
      %3331 = vmatmul.mubr.f32.gmra.mrb[0].mxu0 %v3151
      %v3332 = vpop.f32.mrb[0].mxu0
      %v3333 = vadd.f32 0.0, %v3332
      %v3334 = vpop.f32.mrb[0].mxu0
      %3335 = vmatprep.mubr.f32.mxu0 0.0
      %3336 = vmatmul.mubr.f32.gmra.mrb[0].mxu0 %v3154
      %v3337 = vpop.f32.mrb[0].mxu0
      %v3338 = vadd.f32 0.0, %v3337
      %v3339 = vpop.f32.mrb[0].mxu0
      %3340 = vmatprep.mubr.f32.mxu0 0.0
      %3341 = vmatmul.mubr.f32.gmra.mrb[0].mxu0 %v3157
      %v3342 = vpop.f32.mrb[0].mxu0
      %v3343 = vadd.f32 0.0, %v3342
      %v3344 = vpop.f32.mrb[0].mxu0
      %3345 = vmatprep.mubr.f32.mxu0 0.0
      %3346 = vmatmul.mubr.f32.gmra.mrb[0].mxu0 %v3160
      %v3347 = vpop.f32.mrb[0].mxu0
      %v3348 = vadd.f32 0.0, %v3347
      %v3349 = vpop.f32.mrb[0].mxu0
      %3350 = vmatprep.mubr.f32.mxu0 0.0
      %3351 = vmatmul.mubr.f32.gmra.mrb[0].mxu0 %v3163
      %v3352 = vpop.f32.mrb[0].mxu0
      %v3353 = vadd.f32 0.0, %v3352
      %v3354 = vpop.f32.mrb[0].mxu0
      %3355 = vmatprep.mubr.f32.mxu0 0.0
      %3356 = vmatmul.mubr.f32.gmra.mrb[0].mxu0 %v3166
      %v3357 = vpop.f32.mrb[0].mxu0
      %v3358 = vadd.f32 0.0, %v3357
      %v3359 = vpop.f32.mrb[0].mxu0
      %3360 = vmatprep.mubr.f32.mxu0 0.0
      %3361 = vmatmul.mubr.f32.gmra.mrb[0].mxu0 %v3169
      %v3362 = vpop.f32.mrb[0].mxu0
      %v3363 = vadd.f32 0.0, %v3362
      %v3364 = vpop.f32.mrb[0].mxu0
      %3365 = vmatprep.mubr.f32.mxu0 0.0
      %3366 = vmatmul.mubr.f32.gmra.mrb[0].mxu0 %v3172
      %v3367 = vpop.f32.mrb[0].mxu0
      %v3368 = vadd.f32 0.0, %v3367
      %v3369 = vpop.f32.mrb[0].mxu0
      %3370 = vmatprep.mubr.f32.mxu0 0.0
      %3371 = vmatmul.mubr.f32.gmra.mrb[0].mxu0 %v3175
      %v3372 = vpop.f32.mrb[0].mxu0
      %v3373 = vadd.f32 0.0, %v3372
      %v3374 = vpop.f32.mrb[0].mxu0
      %3375 = vmatprep.mubr.f32.mxu0 0.0
      %3376 = vmatmul.mubr.f32.gmra.mrb[0].mxu0 %v3178
      %v3377 = vpop.f32.mrb[0].mxu0
      %v3378 = vadd.f32 0.0, %v3377
      %v3379 = vpop.f32.mrb[0].mxu0
      %3380 = vmatprep.mubr.f32.mxu0 0.0
      %3381 = vmatmul.mubr.f32.gmra.mrb[0].mxu0 %v3181
      %v3382 = vpop.f32.mrb[0].mxu0
      %v3383 = vadd.f32 0.0, %v3382
      %v3384 = vpop.f32.mrb[0].mxu0
      %3385 = vmatprep.mubr.f32.mxu0 0.0
      %3386 = vmatmul.mubr.f32.gmra.mrb[0].mxu0 %v3184
      %v3387 = vpop.f32.mrb[0].mxu0
      %v3388 = vadd.f32 0.0, %v3387
      %v3389 = vpop.f32.mrb[0].mxu0
      %3390 = vmatprep.mubr.f32.mxu0 0.0
      %3391 = vmatmul.mubr.f32.gmra.mrb[0].mxu0 %v3187
      %v3392 = vpop.f32.mrb[0].mxu0
      %v3393 = vadd.f32 0.0, %v3392
      %v3394 = vpop.f32.mrb[0].mxu0
      %3395 = vmatprep.mubr.f32.mxu0 0.0
      %3396 = vmatmul.mubr.f32.gmra.mrb[0].mxu0 %v3190
      %v3397 = vpop.f32.mrb[0].mxu0
      %v3398 = vadd.f32 0.0, %v3397
      %v3399 = vpop.f32.mrb[0].mxu0
      %3400 = vmatprep.mubr.f32.mxu0 0.0
      %3401 = vmatmul.mubr.f32.gmra.mrb[0].mxu0 %v3193
      %v3402 = vpop.f32.mrb[0].mxu0
      %v3403 = vadd.f32 0.0, %v3402
      %v3404 = vpop.f32.mrb[0].mxu0
      %3405 = vmatprep.mubr.f32.mxu0 0.0
      %3406 = vmatmul.mubr.f32.gmra.mrb[0].mxu0 %v3196
      %v3407 = vpop.f32.mrb[0].mxu0
      %v3408 = vadd.f32 0.0, %v3407
      %v3409 = vpop.f32.mrb[0].mxu0
      %3410 = vmatprep.mubr.f32.mxu0 0.0
      %3411 = vmatmul.mubr.f32.gmra.mrb[0].mxu0 %v3199
      %v3412 = vpop.f32.mrb[0].mxu0
      %v3413 = vadd.f32 0.0, %v3412
      %v3414 = vpop.f32.mrb[0].mxu0
      %3415 = vmatprep.mubr.f32.mxu0 0.0
      %3416 = vmatmul.mubr.f32.gmra.mrb[0].mxu0 %v3202
      %v3417 = vpop.f32.mrb[0].mxu0
      %v3418 = vadd.f32 0.0, %v3417
      %v3419 = vpop.f32.mrb[0].mxu0
      %3420 = vmatprep.mubr.f32.mxu0 0.0
      %3421 = vmatmul.mubr.f32.gmra.mrb[0].mxu0 %v3205
      %v3422 = vpop.f32.mrb[0].mxu0
      %v3423 = vadd.f32 0.0, %v3422
      %v3424 = vpop.f32.mrb[0].mxu0
      %3425 = vmatprep.mubr.f32.mxu0 0.0
      %3426 = vmatmul.mubr.f32.gmra.mrb[0].mxu0 %v3208
      %v3427 = vpop.f32.mrb[0].mxu0
      %v3428 = vadd.f32 0.0, %v3427
      %v3429 = vpop.f32.mrb[0].mxu0
      %3430 = vmatprep.mubr.f32.mxu0 0.0
      %3431 = vmatmul.mubr.f32.gmra.mrb[0].mxu0 %v3211
      %v3432 = vpop.f32.mrb[0].mxu0
      %v3433 = vadd.f32 0.0, %v3432
      %v3434 = vpop.f32.mrb[0].mxu0
      %3435 = vmatprep.mubr.f32.mxu0 0.0
      %3436 = vmatmul.mubr.f32.gmra.mrb[0].mxu0 %v3214
      %v3437 = vpop.f32.mrb[0].mxu0
      %v3438 = vadd.f32 0.0, %v3437
      %v3439 = vpop.f32.mrb[0].mxu0
      %3440 = vdwg.mxu0
      %v3441 = vadd.f32 %v3051, %v3283
      %v3442 = vadd.f32 %v3052, %v3288
      %v3443 = vadd.f32 %v3053, %v3293
      %v3444 = vadd.f32 %v3054, %v3298
      %v3445 = vadd.f32 %v3055, %v3303
      %v3446 = vadd.f32 %v3056, %v3308
      %v3447 = vadd.f32 %v3057, %v3313
      %v3448 = vadd.f32 %v3058, %v3318
      %v3449 = vadd.f32 %v3059, %v3323
      %v3450 = vadd.f32 %v3060, %v3328
      %v3451 = vadd.f32 %v3061, %v3333
      %v3452 = vadd.f32 %v3062, %v3338
      %v3453 = vadd.f32 %v3063, %v3343
      %v3454 = vadd.f32 %v3064, %v3348
      %v3455 = vadd.f32 %v3065, %v3353
      %v3456 = vadd.f32 %v3066, %v3358
      %v3457 = vadd.f32 %v3067, %v3363
      %v3458 = vadd.f32 %v3068, %v3368
      %v3459 = vadd.f32 %v3069, %v3373
      %v3460 = vadd.f32 %v3070, %v3378
      %v3461 = vadd.f32 %v3071, %v3383
      %v3462 = vadd.f32 %v3072, %v3388
      %v3463 = vadd.f32 %v3073, %v3393
      %v3464 = vadd.f32 %v3074, %v3398
      %v3465 = vadd.f32 %v3075, %v3403
      %v3466 = vadd.f32 %v3076, %v3408
      %v3467 = vadd.f32 %v3077, %v3413
      %v3468 = vadd.f32 %v3078, %v3418
      %v3469 = vadd.f32 %v3079, %v3423
      %v3470 = vadd.f32 %v3080, %v3428
      %v3471 = vadd.f32 %v3081, %v3433
      %v3472 = vadd.f32 %v3082, %v3438
      %v3473 = vld [vmem:[%s4] sm:$0x1]
      %v3475 = vlaneseq
      %v3476 = vshrl.u32 %v3475, 7
      %v3477 = vsub.s32 0, %v3476
      %v3478 = vrot.slane %v3473, %v3477
      %v3480 = vadd.f32 %v3441, %v3478
      %v3481 = vadd.f32 %v3442, %v3478
      %v3482 = vadd.f32 %v3443, %v3478
      %v3483 = vadd.f32 %v3444, %v3478
      %v3484 = vadd.f32 %v3445, %v3478
      %v3485 = vadd.f32 %v3446, %v3478
      %v3486 = vadd.f32 %v3447, %v3478
      %v3487 = vadd.f32 %v3448, %v3478
      %v3488 = vadd.f32 %v3449, %v3478
      %v3489 = vadd.f32 %v3450, %v3478
      %v3490 = vadd.f32 %v3451, %v3478
      %v3491 = vadd.f32 %v3452, %v3478
      %v3492 = vadd.f32 %v3453, %v3478
      %v3493 = vadd.f32 %v3454, %v3478
      %v3494 = vadd.f32 %v3455, %v3478
      %v3495 = vadd.f32 %v3456, %v3478
      %v3496 = vadd.f32 %v3457, %v3478
      %v3497 = vadd.f32 %v3458, %v3478
      %v3498 = vadd.f32 %v3459, %v3478
      %v3499 = vadd.f32 %v3460, %v3478
      %v3500 = vadd.f32 %v3461, %v3478
      %v3501 = vadd.f32 %v3462, %v3478
      %v3502 = vadd.f32 %v3463, %v3478
      %v3503 = vadd.f32 %v3464, %v3478
      %v3504 = vadd.f32 %v3465, %v3478
      %v3505 = vadd.f32 %v3466, %v3478
      %v3506 = vadd.f32 %v3467, %v3478
      %v3507 = vadd.f32 %v3468, %v3478
      %v3508 = vadd.f32 %v3469, %v3478
      %v3509 = vadd.f32 %v3470, %v3478
      %v3510 = vadd.f32 %v3471, %v3478
      %v3511 = vadd.f32 %v3472, %v3478
      %v3512 = vmax.f32 %v3480, 0.0
      %v3513 = vmax.f32 %v3481, 0.0
      %v3514 = vmax.f32 %v3482, 0.0
      %v3515 = vmax.f32 %v3483, 0.0
      %v3516 = vmax.f32 %v3484, 0.0
      %v3517 = vmax.f32 %v3485, 0.0
      %v3518 = vmax.f32 %v3486, 0.0
      %v3519 = vmax.f32 %v3487, 0.0
      %v3520 = vmax.f32 %v3488, 0.0
      %v3521 = vmax.f32 %v3489, 0.0
      %v3522 = vmax.f32 %v3490, 0.0
      %v3523 = vmax.f32 %v3491, 0.0
      %v3524 = vmax.f32 %v3492, 0.0
      %v3525 = vmax.f32 %v3493, 0.0
      %v3526 = vmax.f32 %v3494, 0.0
      %v3527 = vmax.f32 %v3495, 0.0
      %v3528 = vmax.f32 %v3496, 0.0
      %v3529 = vmax.f32 %v3497, 0.0
      %v3530 = vmax.f32 %v3498, 0.0
      %v3531 = vmax.f32 %v3499, 0.0
      %v3532 = vmax.f32 %v3500, 0.0
      %v3533 = vmax.f32 %v3501, 0.0
      %v3534 = vmax.f32 %v3502, 0.0
      %v3535 = vmax.f32 %v3503, 0.0
      %v3536 = vmax.f32 %v3504, 0.0
      %v3537 = vmax.f32 %v3505, 0.0
      %v3538 = vmax.f32 %v3506, 0.0
      %v3539 = vmax.f32 %v3507, 0.0
      %v3540 = vmax.f32 %v3508, 0.0
      %v3541 = vmax.f32 %v3509, 0.0
      %v3542 = vmax.f32 %v3510, 0.0
      %v3543 = vmax.f32 %v3511, 0.0
      %vm3544 = vcmask 130048
      %3545 = vst.msk [vmem:[#allocation3] sm:$0xff] %vm3544, 0.0
      %3546 = vst.msk [vmem:[#allocation3 + $0x8] sm:$0xff] %vm3544, 0.0
      %vm3547 = vcmask 122880
      %3548 = vst.msk [vmem:[#allocation3 + $0x10] sm:$0x1] %vm3547, 0.0
      %3549 = vst.msk [vmem:[#allocation3 + $0x18] sm:$0xff] %vm3544, 0.0
      %3550 = vst.msk [vmem:[#allocation3 + $0x20] sm:$0xff] %vm3544, 0.0
      %3551 = vst.msk [vmem:[#allocation3 + $0x28] sm:$0x1] %vm3547, 0.0
      %3552 = vst.msk [vmem:[#allocation3 + $0x30] sm:$0xff] %vm3544, 0.0
      %3553 = vst.msk [vmem:[#allocation3 + $0x38] sm:$0xff] %vm3544, 0.0
      %3554 = vst.msk [vmem:[#allocation3 + $0x40] sm:$0x1] %vm3547, 0.0
      %3555 = vst.msk [vmem:[#allocation3 + $0x48] sm:$0xff] %vm3544, 0.0
      %3556 = vst.msk [vmem:[#allocation3 + $0x50] sm:$0xff] %vm3544, 0.0
      %3557 = vst.msk [vmem:[#allocation3 + $0x58] sm:$0x1] %vm3547, 0.0
      %3558 = vst.msk [vmem:[#allocation3 + $0x60] sm:$0xff] %vm3544, 0.0
      %3559 = vst.msk [vmem:[#allocation3 + $0x68] sm:$0xff] %vm3544, 0.0
      %3560 = vst.msk [vmem:[#allocation3 + $0x70] sm:$0x1] %vm3547, 0.0
      %3561 = vst.msk [vmem:[#allocation3 + $0x78] sm:$0xff] %vm3544, 0.0
      %3562 = vst.msk [vmem:[#allocation3 + $0x80] sm:$0xff] %vm3544, 0.0
      %3563 = vst.msk [vmem:[#allocation3 + $0x88] sm:$0x1] %vm3547, 0.0
      %3564 = vst.msk [vmem:[#allocation3 + $0x90] sm:$0xff] %vm3544, 0.0
      %3565 = vst.msk [vmem:[#allocation3 + $0x98] sm:$0xff] %vm3544, 0.0
      %3566 = vst.msk [vmem:[#allocation3 + $0xa0] sm:$0x1] %vm3547, 0.0
      %3567 = vst.msk [vmem:[#allocation3 + $0xa8] sm:$0xff] %vm3544, 0.0
      %3568 = vst.msk [vmem:[#allocation3 + $0xb0] sm:$0xff] %vm3544, 0.0
      %3569 = vst.msk [vmem:[#allocation3 + $0xb8] sm:$0x1] %vm3547, 0.0
      %3570 = vst.msk [vmem:[#allocation3 + $0xc0] sm:$0xff] %vm3544, 0.0
      %3571 = vst.msk [vmem:[#allocation3 + $0xc8] sm:$0xff] %vm3544, 0.0
      %3572 = vst.msk [vmem:[#allocation3 + $0xd0] sm:$0x1] %vm3547, 0.0
      %3573 = vst.msk [vmem:[#allocation3 + $0xd8] sm:$0xff] %vm3544, 0.0
      %3574 = vst.msk [vmem:[#allocation3 + $0xe0] sm:$0xff] %vm3544, 0.0
      %3575 = vst.msk [vmem:[#allocation3 + $0xe8] sm:$0x1] %vm3547, 0.0
      %3576 = vst.msk [vmem:[#allocation3 + $0xf0] sm:$0xff] %vm3544, 0.0
      %3577 = vst.msk [vmem:[#allocation3 + $0xf8] sm:$0xff] %vm3544, 0.0
      %3578 = vst.msk [vmem:[#allocation3 + $0x100] sm:$0x1] %vm3547, 0.0
      %3579 = vst.msk [vmem:[#allocation3 + $0x108] sm:$0xff] %vm3544, 0.0
      %3580 = vst.msk [vmem:[#allocation3 + $0x110] sm:$0xff] %vm3544, 0.0
      %3581 = vst.msk [vmem:[#allocation3 + $0x118] sm:$0x1] %vm3547, 0.0
      %3582 = vst.msk [vmem:[#allocation3 + $0x120] sm:$0xff] %vm3544, 0.0
      %3583 = vst.msk [vmem:[#allocation3 + $0x128] sm:$0xff] %vm3544, 0.0
      %3584 = vst.msk [vmem:[#allocation3 + $0x130] sm:$0x1] %vm3547, 0.0
      %3585 = vst.msk [vmem:[#allocation3 + $0x138] sm:$0xff] %vm3544, 0.0
      %3586 = vst.msk [vmem:[#allocation3 + $0x140] sm:$0xff] %vm3544, 0.0
      %3587 = vst.msk [vmem:[#allocation3 + $0x148] sm:$0x1] %vm3547, 0.0
      %3588 = vst.msk [vmem:[#allocation3 + $0x150] sm:$0xff] %vm3544, 0.0
      %3589 = vst.msk [vmem:[#allocation3 + $0x158] sm:$0xff] %vm3544, 0.0
      %3590 = vst.msk [vmem:[#allocation3 + $0x160] sm:$0x1] %vm3547, 0.0
      %3591 = vst.msk [vmem:[#allocation3 + $0x168] sm:$0xff] %vm3544, 0.0
      %3592 = vst.msk [vmem:[#allocation3 + $0x170] sm:$0xff] %vm3544, 0.0
      %3593 = vst.msk [vmem:[#allocation3 + $0x178] sm:$0x1] %vm3547, 0.0
      %3594 = vst.msk [vmem:[#allocation3 + $0x180] sm:$0xff] %vm3544, 0.0
      %3595 = vst.msk [vmem:[#allocation3 + $0x188] sm:$0xff] %vm3544, 0.0
      %3596 = vst.msk [vmem:[#allocation3 + $0x190] sm:$0x1] %vm3547, 0.0
      %3597 = vst.msk [vmem:[#allocation3] sm:$0xff] %vm3544, %v3512
      %3598 = vst.msk [vmem:[#allocation3 + $0x8] sm:$0xff] %vm3544, %v3513
      %3599 = vst.msk [vmem:[#allocation3 + $0x18] sm:$0xff] %vm3544, %v3514
      %3600 = vst.msk [vmem:[#allocation3 + $0x20] sm:$0xff] %vm3544, %v3515
      %3601 = vst.msk [vmem:[#allocation3 + $0x30] sm:$0xff] %vm3544, %v3516
      %3602 = vst.msk [vmem:[#allocation3 + $0x38] sm:$0xff] %vm3544, %v3517
      %3603 = vst.msk [vmem:[#allocation3 + $0x48] sm:$0xff] %vm3544, %v3518
      %3604 = vst.msk [vmem:[#allocation3 + $0x50] sm:$0xff] %vm3544, %v3519
      %3605 = vst.msk [vmem:[#allocation3 + $0x60] sm:$0xff] %vm3544, %v3520
      %3606 = vst.msk [vmem:[#allocation3 + $0x68] sm:$0xff] %vm3544, %v3521
      %3607 = vst.msk [vmem:[#allocation3 + $0x78] sm:$0xff] %vm3544, %v3522
      %3608 = vst.msk [vmem:[#allocation3 + $0x80] sm:$0xff] %vm3544, %v3523
      %3609 = vst.msk [vmem:[#allocation3 + $0x90] sm:$0xff] %vm3544, %v3524
      %3610 = vst.msk [vmem:[#allocation3 + $0x98] sm:$0xff] %vm3544, %v3525
      %3611 = vst.msk [vmem:[#allocation3 + $0xa8] sm:$0xff] %vm3544, %v3526
      %3612 = vst.msk [vmem:[#allocation3 + $0xb0] sm:$0xff] %vm3544, %v3527
      %3613 = vst.msk [vmem:[#allocation3 + $0xc0] sm:$0xff] %vm3544, %v3528
      %3614 = vst.msk [vmem:[#allocation3 + $0xc8] sm:$0xff] %vm3544, %v3529
      %3615 = vst.msk [vmem:[#allocation3 + $0xd8] sm:$0xff] %vm3544, %v3530
      %3616 = vst.msk [vmem:[#allocation3 + $0xe0] sm:$0xff] %vm3544, %v3531
      %3617 = vst.msk [vmem:[#allocation3 + $0xf0] sm:$0xff] %vm3544, %v3532
      %3618 = vst.msk [vmem:[#allocation3 + $0xf8] sm:$0xff] %vm3544, %v3533
      %3619 = vst.msk [vmem:[#allocation3 + $0x108] sm:$0xff] %vm3544, %v3534
      %3620 = vst.msk [vmem:[#allocation3 + $0x110] sm:$0xff] %vm3544, %v3535
      %3621 = vst.msk [vmem:[#allocation3 + $0x120] sm:$0xff] %vm3544, %v3536
      %3622 = vst.msk [vmem:[#allocation3 + $0x128] sm:$0xff] %vm3544, %v3537
      %3623 = vst.msk [vmem:[#allocation3 + $0x138] sm:$0xff] %vm3544, %v3538
      %3624 = vst.msk [vmem:[#allocation3 + $0x140] sm:$0xff] %vm3544, %v3539
      %3625 = vst.msk [vmem:[#allocation3 + $0x150] sm:$0xff] %vm3544, %v3540
      %3626 = vst.msk [vmem:[#allocation3 + $0x158] sm:$0xff] %vm3544, %v3541
      %3627 = vst.msk [vmem:[#allocation3 + $0x168] sm:$0xff] %vm3544, %v3542
      %3628 = vst.msk [vmem:[#allocation3 + $0x170] sm:$0xff] %vm3544, %v3543
      %v3629 = vld [vmem:[#allocation3] sm:$0xff]
      %v3630 = vld [vmem:[#allocation3 + $0x8] sm:$0xff]
      %v3631 = vld [vmem:[#allocation3 + $0x18] sm:$0xff]
      %v3632 = vld [vmem:[#allocation3 + $0x20] sm:$0xff]
      %v3633 = vld [vmem:[#allocation3 + $0x30] sm:$0xff]
      %v3634 = vld [vmem:[#allocation3 + $0x38] sm:$0xff]
      %v3635 = vld [vmem:[#allocation3 + $0x48] sm:$0xff]
      %v3636 = vld [vmem:[#allocation3 + $0x50] sm:$0xff]
      %v3637 = vld [vmem:[#allocation3 + $0x60] sm:$0xff]
      %v3638 = vld [vmem:[#allocation3 + $0x68] sm:$0xff]
      %v3639 = vld [vmem:[#allocation3 + $0x78] sm:$0xff]
      %v3640 = vld [vmem:[#allocation3 + $0x80] sm:$0xff]
      %v3641 = vld [vmem:[#allocation3 + $0x90] sm:$0xff]
      %v3642 = vld [vmem:[#allocation3 + $0x98] sm:$0xff]
      %v3643 = vld [vmem:[#allocation3 + $0xa8] sm:$0xff]
      %v3644 = vld [vmem:[#allocation3 + $0xb0] sm:$0xff]
      %v3645 = vld [vmem:[#allocation3 + $0xc0] sm:$0xff]
      %v3646 = vld [vmem:[#allocation3 + $0xc8] sm:$0xff]
      %v3647 = vld [vmem:[#allocation3 + $0xd8] sm:$0xff]
      %v3648 = vld [vmem:[#allocation3 + $0xe0] sm:$0xff]
      %v3649 = vld [vmem:[#allocation3 + $0xf0] sm:$0xff]
      %v3650 = vld [vmem:[#allocation3 + $0xf8] sm:$0xff]
      %v3651 = vld [vmem:[#allocation3 + $0x108] sm:$0xff]
      %v3652 = vld [vmem:[#allocation3 + $0x110] sm:$0xff]
      %v3653 = vld [vmem:[#allocation3 + $0x120] sm:$0xff]
      %v3654 = vld [vmem:[#allocation3 + $0x128] sm:$0xff]
      %v3655 = vld [vmem:[#allocation3 + $0x138] sm:$0xff]
      %v3656 = vld [vmem:[#allocation3 + $0x140] sm:$0xff]
      %v3657 = vld [vmem:[#allocation3 + $0x150] sm:$0xff]
      %v3658 = vld [vmem:[#allocation3 + $0x158] sm:$0xff]
      %v3659 = vld [vmem:[#allocation3 + $0x168] sm:$0xff]
      %v3660 = vld [vmem:[#allocation3 + $0x170] sm:$0xff]
      %v3661 = vld [vmem:[%s5] sm:$0xff]
      %v3662 = vld [vmem:[%s5 + $0x8] sm:$0xff]
      %v3663 = vld [vmem:[#allocation3 + $0x1] sm:$0xff]
      %v3664 = vld [vmem:[#allocation3 + $0x9] sm:$0xff]
      %v3665 = vld [vmem:[#allocation3 + $0x19] sm:$0xff]
      %v3666 = vld [vmem:[#allocation3 + $0x21] sm:$0xff]
      %v3667 = vld [vmem:[#allocation3 + $0x31] sm:$0xff]
      %v3668 = vld [vmem:[#allocation3 + $0x39] sm:$0xff]
      %v3669 = vld [vmem:[#allocation3 + $0x49] sm:$0xff]
      %v3670 = vld [vmem:[#allocation3 + $0x51] sm:$0xff]
      %v3671 = vld [vmem:[#allocation3 + $0x61] sm:$0xff]
      %v3672 = vld [vmem:[#allocation3 + $0x69] sm:$0xff]
      %v3673 = vld [vmem:[#allocation3 + $0x79] sm:$0xff]
      %v3674 = vld [vmem:[#allocation3 + $0x81] sm:$0xff]
      %v3675 = vld [vmem:[#allocation3 + $0x91] sm:$0xff]
      %v3676 = vld [vmem:[#allocation3 + $0x99] sm:$0xff]
      %v3677 = vld [vmem:[#allocation3 + $0xa9] sm:$0xff]
      %v3678 = vld [vmem:[#allocation3 + $0xb1] sm:$0xff]
      %v3679 = vld [vmem:[#allocation3 + $0xc1] sm:$0xff]
      %v3680 = vld [vmem:[#allocation3 + $0xc9] sm:$0xff]
      %v3681 = vld [vmem:[#allocation3 + $0xd9] sm:$0xff]
      %v3682 = vld [vmem:[#allocation3 + $0xe1] sm:$0xff]
      %v3683 = vld [vmem:[#allocation3 + $0xf1] sm:$0xff]
      %v3684 = vld [vmem:[#allocation3 + $0xf9] sm:$0xff]
      %v3685 = vld [vmem:[#allocation3 + $0x109] sm:$0xff]
      %v3686 = vld [vmem:[#allocation3 + $0x111] sm:$0xff]
      %v3687 = vld [vmem:[#allocation3 + $0x121] sm:$0xff]
      %v3688 = vld [vmem:[#allocation3 + $0x129] sm:$0xff]
      %v3689 = vld [vmem:[#allocation3 + $0x139] sm:$0xff]
      %v3690 = vld [vmem:[#allocation3 + $0x141] sm:$0xff]
      %v3691 = vld [vmem:[#allocation3 + $0x151] sm:$0xff]
      %v3692 = vld [vmem:[#allocation3 + $0x159] sm:$0xff]
      %v3693 = vld [vmem:[#allocation3 + $0x169] sm:$0xff]
      %v3694 = vld [vmem:[#allocation3 + $0x171] sm:$0xff]
      %s3695 = scalar_lea.vmem %s5, 16
      %v3696 = vld [vmem:[%s3695] sm:$0xff]
      %v3697 = vld [vmem:[%s3695 + $0x8] sm:$0xff]
      %v3699 = vsel %vm3544, %v3663, 0
      %v3702 = vsel %vm3544, %v3664, 0
      %v3705 = vsel %vm3544, %v3665, 0
      %v3708 = vsel %vm3544, %v3666, 0
      %v3711 = vsel %vm3544, %v3667, 0
      %v3714 = vsel %vm3544, %v3668, 0
      %v3717 = vsel %vm3544, %v3669, 0
      %v3720 = vsel %vm3544, %v3670, 0
      %v3723 = vsel %vm3544, %v3671, 0
      %v3726 = vsel %vm3544, %v3672, 0
      %v3729 = vsel %vm3544, %v3673, 0
      %v3732 = vsel %vm3544, %v3674, 0
      %v3735 = vsel %vm3544, %v3675, 0
      %v3738 = vsel %vm3544, %v3676, 0
      %v3741 = vsel %vm3544, %v3677, 0
      %v3744 = vsel %vm3544, %v3678, 0
      %v3747 = vsel %vm3544, %v3679, 0
      %v3750 = vsel %vm3544, %v3680, 0
      %v3753 = vsel %vm3544, %v3681, 0
      %v3756 = vsel %vm3544, %v3682, 0
      %v3759 = vsel %vm3544, %v3683, 0
      %v3762 = vsel %vm3544, %v3684, 0
      %v3765 = vsel %vm3544, %v3685, 0
      %v3768 = vsel %vm3544, %v3686, 0
      %v3771 = vsel %vm3544, %v3687, 0
      %v3774 = vsel %vm3544, %v3688, 0
      %v3777 = vsel %vm3544, %v3689, 0
      %v3780 = vsel %vm3544, %v3690, 0
      %v3783 = vsel %vm3544, %v3691, 0
      %v3786 = vsel %vm3544, %v3692, 0
      %v3789 = vsel %vm3544, %v3693, 0
      %v3792 = vsel %vm3544, %v3694, 0
      %3794 = vmatprep.subr.mxu0 0.0
      %3795 = vmatpush1.msra.mxu0 %v3696
      %3796 = vmatprep.subr.mxu0 0.0
      %3797 = vmatpush1.msra.mxu0 %v3697
      %3798 = vmatprep.subr.mxu0 0.0
      %3799 = vmatpush1.msra.mxu0 0.0
      %3800 = vmatprep.subr.mxu0 0.0
      %3801 = vmatpush1.msra.mxu0 0.0
      %3802 = vmatprep.subr.mxu0 0.0
      %3803 = vmatpush1.msra.mxu0 0.0
      %3804 = vmatprep.subr.mxu0 0.0
      %3805 = vmatpush1.msra.mxu0 0.0
      %3806 = vmatprep.subr.mxu0 0.0
      %3807 = vmatpush1.msra.mxu0 0.0
      %3808 = vmatprep.subr.mxu0 0.0
      %3809 = vmatpush1.msra.mxu0 0.0
      %3810 = vmatprep.subr.mxu0 0.0
      %3811 = vmatpush1.msra.mxu0 0.0
      %3812 = vmatprep.subr.mxu0 0.0
      %3813 = vmatpush1.msra.mxu0 0.0
      %3814 = vmatprep.subr.mxu0 0.0
      %3815 = vmatpush1.msra.mxu0 0.0
      %3816 = vmatprep.subr.mxu0 0.0
      %3817 = vmatpush1.msra.mxu0 0.0
      %3818 = vmatprep.subr.mxu0 0.0
      %3819 = vmatpush1.msra.mxu0 0.0
      %3820 = vmatprep.subr.mxu0 0.0
      %3821 = vmatpush1.msra.mxu0 0.0
      %3822 = vmatprep.subr.mxu0 0.0
      %3823 = vmatpush1.msra.mxu0 0.0
      %3824 = vmatprep.subr.mxu0 0.0
      %3825 = vmatpush1.msra.mxu0 0.0
      %3826 = vmatprep.subr.mxu0 0.0
      %3827 = vmatpush1.msra.mxu0 0.0
      %3828 = vmatprep.subr.mxu0 0.0
      %3829 = vmatpush1.msra.mxu0 0.0
      %3830 = vmatprep.subr.mxu0 0.0
      %3831 = vmatpush1.msra.mxu0 0.0
      %3832 = vmatprep.subr.mxu0 0.0
      %3833 = vmatpush1.msra.mxu0 0.0
      %3834 = vmatprep.subr.mxu0 0.0
      %3835 = vmatpush1.msra.mxu0 0.0
      %3836 = vmatprep.subr.mxu0 0.0
      %3837 = vmatpush1.msra.mxu0 0.0
      %3838 = vmatprep.subr.mxu0 0.0
      %3839 = vmatpush1.msra.mxu0 0.0
      %3840 = vmatprep.subr.mxu0 0.0
      %3841 = vmatpush1.msra.mxu0 0.0
      %3842 = vmatprep.subr.mxu0 0.0
      %3843 = vmatpush1.msra.mxu0 0.0
      %3844 = vmatprep.subr.mxu0 0.0
      %3845 = vmatpush1.msra.mxu0 0.0
      %3846 = vmatprep.subr.mxu0 0.0
      %3847 = vmatpush1.msra.mxu0 0.0
      %3848 = vmatprep.subr.mxu0 0.0
      %3849 = vmatpush1.msra.mxu0 0.0
      %3850 = vmatprep.subr.mxu0 0.0
      %3851 = vmatpush1.msra.mxu0 0.0
      %3852 = vmatprep.subr.mxu0 0.0
      %3853 = vmatpush1.msra.mxu0 0.0
      %3854 = vmatprep.subr.mxu0 0.0
      %3855 = vmatpush1.msra.mxu0 0.0
      %3856 = vmatprep.subr.mxu0 0.0
      %3857 = vmatpush1.msra.mxu0 0.0
      %3858 = vmatprep.mubr.f32.mxu0 0.0
      %3859 = vmatmul.mubr.f32.gmra.mrb[0].mxu0 %v3699
      %v3860 = vpop.f32.mrb[0].mxu0
      %v3861 = vadd.f32 0.0, %v3860
      %v3862 = vpop.f32.mrb[0].mxu0
      %3863 = vmatprep.mubr.f32.mxu0 0.0
      %3864 = vmatmul.mubr.f32.gmra.mrb[0].mxu0 %v3702
      %v3865 = vpop.f32.mrb[0].mxu0
      %v3866 = vadd.f32 0.0, %v3865
      %v3867 = vpop.f32.mrb[0].mxu0
      %3868 = vmatprep.mubr.f32.mxu0 0.0
      %3869 = vmatmul.mubr.f32.gmra.mrb[0].mxu0 %v3705
      %v3870 = vpop.f32.mrb[0].mxu0
      %v3871 = vadd.f32 0.0, %v3870
      %v3872 = vpop.f32.mrb[0].mxu0
      %3873 = vmatprep.mubr.f32.mxu0 0.0
      %3874 = vmatmul.mubr.f32.gmra.mrb[0].mxu0 %v3708
      %v3875 = vpop.f32.mrb[0].mxu0
      %v3876 = vadd.f32 0.0, %v3875
      %v3877 = vpop.f32.mrb[0].mxu0
      %3878 = vmatprep.mubr.f32.mxu0 0.0
      %3879 = vmatmul.mubr.f32.gmra.mrb[0].mxu0 %v3711
      %v3880 = vpop.f32.mrb[0].mxu0
      %v3881 = vadd.f32 0.0, %v3880
      %v3882 = vpop.f32.mrb[0].mxu0
      %3883 = vmatprep.mubr.f32.mxu0 0.0
      %3884 = vmatmul.mubr.f32.gmra.mrb[0].mxu0 %v3714
      %v3885 = vpop.f32.mrb[0].mxu0
      %v3886 = vadd.f32 0.0, %v3885
      %v3887 = vpop.f32.mrb[0].mxu0
      %3888 = vmatprep.mubr.f32.mxu0 0.0
      %3889 = vmatmul.mubr.f32.gmra.mrb[0].mxu0 %v3717
      %v3890 = vpop.f32.mrb[0].mxu0
      %v3891 = vadd.f32 0.0, %v3890
      %v3892 = vpop.f32.mrb[0].mxu0
      %3893 = vmatprep.mubr.f32.mxu0 0.0
      %3894 = vmatmul.mubr.f32.gmra.mrb[0].mxu0 %v3720
      %v3895 = vpop.f32.mrb[0].mxu0
      %v3896 = vadd.f32 0.0, %v3895
      %v3897 = vpop.f32.mrb[0].mxu0
      %3898 = vmatprep.mubr.f32.mxu0 0.0
      %3899 = vmatmul.mubr.f32.gmra.mrb[0].mxu0 %v3723
      %v3900 = vpop.f32.mrb[0].mxu0
      %v3901 = vadd.f32 0.0, %v3900
      %v3902 = vpop.f32.mrb[0].mxu0
      %3903 = vmatprep.mubr.f32.mxu0 0.0
      %3904 = vmatmul.mubr.f32.gmra.mrb[0].mxu0 %v3726
      %v3905 = vpop.f32.mrb[0].mxu0
      %v3906 = vadd.f32 0.0, %v3905
      %v3907 = vpop.f32.mrb[0].mxu0
      %3908 = vmatprep.mubr.f32.mxu0 0.0
      %3909 = vmatmul.mubr.f32.gmra.mrb[0].mxu0 %v3729
      %v3910 = vpop.f32.mrb[0].mxu0
      %v3911 = vadd.f32 0.0, %v3910
      %v3912 = vpop.f32.mrb[0].mxu0
      %3913 = vmatprep.mubr.f32.mxu0 0.0
      %3914 = vmatmul.mubr.f32.gmra.mrb[0].mxu0 %v3732
      %v3915 = vpop.f32.mrb[0].mxu0
      %v3916 = vadd.f32 0.0, %v3915
      %v3917 = vpop.f32.mrb[0].mxu0
      %3918 = vmatprep.mubr.f32.mxu0 0.0
      %3919 = vmatmul.mubr.f32.gmra.mrb[0].mxu0 %v3735
      %v3920 = vpop.f32.mrb[0].mxu0
      %v3921 = vadd.f32 0.0, %v3920
      %v3922 = vpop.f32.mrb[0].mxu0
      %3923 = vmatprep.mubr.f32.mxu0 0.0
      %3924 = vmatmul.mubr.f32.gmra.mrb[0].mxu0 %v3738
      %v3925 = vpop.f32.mrb[0].mxu0
      %v3926 = vadd.f32 0.0, %v3925
      %v3927 = vpop.f32.mrb[0].mxu0
      %3928 = vmatprep.mubr.f32.mxu0 0.0
      %3929 = vmatmul.mubr.f32.gmra.mrb[0].mxu0 %v3741
      %v3930 = vpop.f32.mrb[0].mxu0
      %v3931 = vadd.f32 0.0, %v3930
      %v3932 = vpop.f32.mrb[0].mxu0
      %3933 = vmatprep.mubr.f32.mxu0 0.0
      %3934 = vmatmul.mubr.f32.gmra.mrb[0].mxu0 %v3744
      %v3935 = vpop.f32.mrb[0].mxu0
      %v3936 = vadd.f32 0.0, %v3935
      %v3937 = vpop.f32.mrb[0].mxu0
      %3938 = vmatprep.mubr.f32.mxu0 0.0
      %3939 = vmatmul.mubr.f32.gmra.mrb[0].mxu0 %v3747
      %v3940 = vpop.f32.mrb[0].mxu0
      %v3941 = vadd.f32 0.0, %v3940
      %v3942 = vpop.f32.mrb[0].mxu0
      %3943 = vmatprep.mubr.f32.mxu0 0.0
      %3944 = vmatmul.mubr.f32.gmra.mrb[0].mxu0 %v3750
      %v3945 = vpop.f32.mrb[0].mxu0
      %v3946 = vadd.f32 0.0, %v3945
      %v3947 = vpop.f32.mrb[0].mxu0
      %3948 = vmatprep.mubr.f32.mxu0 0.0
      %3949 = vmatmul.mubr.f32.gmra.mrb[0].mxu0 %v3753
      %v3950 = vpop.f32.mrb[0].mxu0
      %v3951 = vadd.f32 0.0, %v3950
      %v3952 = vpop.f32.mrb[0].mxu0
      %3953 = vmatprep.mubr.f32.mxu0 0.0
      %3954 = vmatmul.mubr.f32.gmra.mrb[0].mxu0 %v3756
      %v3955 = vpop.f32.mrb[0].mxu0
      %v3956 = vadd.f32 0.0, %v3955
      %v3957 = vpop.f32.mrb[0].mxu0
      %3958 = vmatprep.mubr.f32.mxu0 0.0
      %3959 = vmatmul.mubr.f32.gmra.mrb[0].mxu0 %v3759
      %v3960 = vpop.f32.mrb[0].mxu0
      %v3961 = vadd.f32 0.0, %v3960
      %v3962 = vpop.f32.mrb[0].mxu0
      %3963 = vmatprep.mubr.f32.mxu0 0.0
      %3964 = vmatmul.mubr.f32.gmra.mrb[0].mxu0 %v3762
      %v3965 = vpop.f32.mrb[0].mxu0
      %v3966 = vadd.f32 0.0, %v3965
      %v3967 = vpop.f32.mrb[0].mxu0
      %3968 = vmatprep.mubr.f32.mxu0 0.0
      %3969 = vmatmul.mubr.f32.gmra.mrb[0].mxu0 %v3765
      %v3970 = vpop.f32.mrb[0].mxu0
      %v3971 = vadd.f32 0.0, %v3970
      %v3972 = vpop.f32.mrb[0].mxu0
      %3973 = vmatprep.mubr.f32.mxu0 0.0
      %3974 = vmatmul.mubr.f32.gmra.mrb[0].mxu0 %v3768
      %v3975 = vpop.f32.mrb[0].mxu0
      %v3976 = vadd.f32 0.0, %v3975
      %v3977 = vpop.f32.mrb[0].mxu0
      %3978 = vmatprep.mubr.f32.mxu0 0.0
      %3979 = vmatmul.mubr.f32.gmra.mrb[0].mxu0 %v3771
      %v3980 = vpop.f32.mrb[0].mxu0
      %v3981 = vadd.f32 0.0, %v3980
      %v3982 = vpop.f32.mrb[0].mxu0
      %3983 = vmatprep.mubr.f32.mxu0 0.0
      %3984 = vmatmul.mubr.f32.gmra.mrb[0].mxu0 %v3774
      %v3985 = vpop.f32.mrb[0].mxu0
      %v3986 = vadd.f32 0.0, %v3985
      %v3987 = vpop.f32.mrb[0].mxu0
      %3988 = vmatprep.mubr.f32.mxu0 0.0
      %3989 = vmatmul.mubr.f32.gmra.mrb[0].mxu0 %v3777
      %v3990 = vpop.f32.mrb[0].mxu0
      %v3991 = vadd.f32 0.0, %v3990
      %v3992 = vpop.f32.mrb[0].mxu0
      %3993 = vmatprep.mubr.f32.mxu0 0.0
      %3994 = vmatmul.mubr.f32.gmra.mrb[0].mxu0 %v3780
      %v3995 = vpop.f32.mrb[0].mxu0
      %v3996 = vadd.f32 0.0, %v3995
      %v3997 = vpop.f32.mrb[0].mxu0
      %3998 = vmatprep.mubr.f32.mxu0 0.0
      %3999 = vmatmul.mubr.f32.gmra.mrb[0].mxu0 %v3783
      %v4000 = vpop.f32.mrb[0].mxu0
      %v4001 = vadd.f32 0.0, %v4000
      %v4002 = vpop.f32.mrb[0].mxu0
      %4003 = vmatprep.mubr.f32.mxu0 0.0
      %4004 = vmatmul.mubr.f32.gmra.mrb[0].mxu0 %v3786
      %v4005 = vpop.f32.mrb[0].mxu0
      %v4006 = vadd.f32 0.0, %v4005
      %v4007 = vpop.f32.mrb[0].mxu0
      %4008 = vmatprep.mubr.f32.mxu0 0.0
      %4009 = vmatmul.mubr.f32.gmra.mrb[0].mxu0 %v3789
      %v4010 = vpop.f32.mrb[0].mxu0
      %v4011 = vadd.f32 0.0, %v4010
      %v4012 = vpop.f32.mrb[0].mxu0
      %4013 = vmatprep.mubr.f32.mxu0 0.0
      %4014 = vmatmul.mubr.f32.gmra.mrb[0].mxu0 %v3792
      %v4015 = vpop.f32.mrb[0].mxu0
      %v4016 = vadd.f32 0.0, %v4015
      %v4017 = vpop.f32.mrb[0].mxu0
      %4018 = vdwg.mxu0
      %v4020 = vsel %vm3544, %v3629, 0
      %v4023 = vsel %vm3544, %v3630, 0
      %v4026 = vsel %vm3544, %v3631, 0
      %v4029 = vsel %vm3544, %v3632, 0
      %v4032 = vsel %vm3544, %v3633, 0
      %v4035 = vsel %vm3544, %v3634, 0
      %v4038 = vsel %vm3544, %v3635, 0
      %v4041 = vsel %vm3544, %v3636, 0
      %v4044 = vsel %vm3544, %v3637, 0
      %v4047 = vsel %vm3544, %v3638, 0
      %v4050 = vsel %vm3544, %v3639, 0
      %v4053 = vsel %vm3544, %v3640, 0
      %v4056 = vsel %vm3544, %v3641, 0
      %v4059 = vsel %vm3544, %v3642, 0
      %v4062 = vsel %vm3544, %v3643, 0
      %v4065 = vsel %vm3544, %v3644, 0
      %v4068 = vsel %vm3544, %v3645, 0
      %v4071 = vsel %vm3544, %v3646, 0
      %v4074 = vsel %vm3544, %v3647, 0
      %v4077 = vsel %vm3544, %v3648, 0
      %v4080 = vsel %vm3544, %v3649, 0
      %v4083 = vsel %vm3544, %v3650, 0
      %v4086 = vsel %vm3544, %v3651, 0
      %v4089 = vsel %vm3544, %v3652, 0
      %v4092 = vsel %vm3544, %v3653, 0
      %v4095 = vsel %vm3544, %v3654, 0
      %v4098 = vsel %vm3544, %v3655, 0
      %v4101 = vsel %vm3544, %v3656, 0
      %v4104 = vsel %vm3544, %v3657, 0
      %v4107 = vsel %vm3544, %v3658, 0
      %v4110 = vsel %vm3544, %v3659, 0
      %v4113 = vsel %vm3544, %v3660, 0
      %4115 = vmatprep.subr.mxu0 0.0
      %4116 = vmatpush1.msra.mxu0 %v3661
      %4117 = vmatprep.subr.mxu0 0.0
      %4118 = vmatpush1.msra.mxu0 %v3662
      %4119 = vmatprep.subr.mxu0 0.0
      %4120 = vmatpush1.msra.mxu0 0.0
      %4121 = vmatprep.subr.mxu0 0.0
      %4122 = vmatpush1.msra.mxu0 0.0
      %4123 = vmatprep.subr.mxu0 0.0
      %4124 = vmatpush1.msra.mxu0 0.0
      %4125 = vmatprep.subr.mxu0 0.0
      %4126 = vmatpush1.msra.mxu0 0.0
      %4127 = vmatprep.subr.mxu0 0.0
      %4128 = vmatpush1.msra.mxu0 0.0
      %4129 = vmatprep.subr.mxu0 0.0
      %4130 = vmatpush1.msra.mxu0 0.0
      %4131 = vmatprep.subr.mxu0 0.0
      %4132 = vmatpush1.msra.mxu0 0.0
      %4133 = vmatprep.subr.mxu0 0.0
      %4134 = vmatpush1.msra.mxu0 0.0
      %4135 = vmatprep.subr.mxu0 0.0
      %4136 = vmatpush1.msra.mxu0 0.0
      %4137 = vmatprep.subr.mxu0 0.0
      %4138 = vmatpush1.msra.mxu0 0.0
      %4139 = vmatprep.subr.mxu0 0.0
      %4140 = vmatpush1.msra.mxu0 0.0
      %4141 = vmatprep.subr.mxu0 0.0
      %4142 = vmatpush1.msra.mxu0 0.0
      %4143 = vmatprep.subr.mxu0 0.0
      %4144 = vmatpush1.msra.mxu0 0.0
      %4145 = vmatprep.subr.mxu0 0.0
      %4146 = vmatpush1.msra.mxu0 0.0
      %4147 = vmatprep.subr.mxu0 0.0
      %4148 = vmatpush1.msra.mxu0 0.0
      %4149 = vmatprep.subr.mxu0 0.0
      %4150 = vmatpush1.msra.mxu0 0.0
      %4151 = vmatprep.subr.mxu0 0.0
      %4152 = vmatpush1.msra.mxu0 0.0
      %4153 = vmatprep.subr.mxu0 0.0
      %4154 = vmatpush1.msra.mxu0 0.0
      %4155 = vmatprep.subr.mxu0 0.0
      %4156 = vmatpush1.msra.mxu0 0.0
      %4157 = vmatprep.subr.mxu0 0.0
      %4158 = vmatpush1.msra.mxu0 0.0
      %4159 = vmatprep.subr.mxu0 0.0
      %4160 = vmatpush1.msra.mxu0 0.0
      %4161 = vmatprep.subr.mxu0 0.0
      %4162 = vmatpush1.msra.mxu0 0.0
      %4163 = vmatprep.subr.mxu0 0.0
      %4164 = vmatpush1.msra.mxu0 0.0
      %4165 = vmatprep.subr.mxu0 0.0
      %4166 = vmatpush1.msra.mxu0 0.0
      %4167 = vmatprep.subr.mxu0 0.0
      %4168 = vmatpush1.msra.mxu0 0.0
      %4169 = vmatprep.subr.mxu0 0.0
      %4170 = vmatpush1.msra.mxu0 0.0
      %4171 = vmatprep.subr.mxu0 0.0
      %4172 = vmatpush1.msra.mxu0 0.0
      %4173 = vmatprep.subr.mxu0 0.0
      %4174 = vmatpush1.msra.mxu0 0.0
      %4175 = vmatprep.subr.mxu0 0.0
      %4176 = vmatpush1.msra.mxu0 0.0
      %4177 = vmatprep.subr.mxu0 0.0
      %4178 = vmatpush1.msra.mxu0 0.0
      %4179 = vmatprep.mubr.f32.mxu0 0.0
      %4180 = vmatmul.mubr.f32.gmra.mrb[0].mxu0 %v4020
      %v4181 = vpop.f32.mrb[0].mxu0
      %v4182 = vadd.f32 %v3861, %v4181
      %v4183 = vpop.f32.mrb[0].mxu0
      %4184 = vmatprep.mubr.f32.mxu0 0.0
      %4185 = vmatmul.mubr.f32.gmra.mrb[0].mxu0 %v4023
      %v4186 = vpop.f32.mrb[0].mxu0
      %v4187 = vadd.f32 %v3866, %v4186
      %v4188 = vpop.f32.mrb[0].mxu0
      %4189 = vmatprep.mubr.f32.mxu0 0.0
      %4190 = vmatmul.mubr.f32.gmra.mrb[0].mxu0 %v4026
      %v4191 = vpop.f32.mrb[0].mxu0
      %v4192 = vadd.f32 %v3871, %v4191
      %v4193 = vpop.f32.mrb[0].mxu0
      %4194 = vmatprep.mubr.f32.mxu0 0.0
      %4195 = vmatmul.mubr.f32.gmra.mrb[0].mxu0 %v4029
      %v4196 = vpop.f32.mrb[0].mxu0
      %v4197 = vadd.f32 %v3876, %v4196
      %v4198 = vpop.f32.mrb[0].mxu0
      %4199 = vmatprep.mubr.f32.mxu0 0.0
      %4200 = vmatmul.mubr.f32.gmra.mrb[0].mxu0 %v4032
      %v4201 = vpop.f32.mrb[0].mxu0
      %v4202 = vadd.f32 %v3881, %v4201
      %v4203 = vpop.f32.mrb[0].mxu0
      %4204 = vmatprep.mubr.f32.mxu0 0.0
      %4205 = vmatmul.mubr.f32.gmra.mrb[0].mxu0 %v4035
      %v4206 = vpop.f32.mrb[0].mxu0
      %v4207 = vadd.f32 %v3886, %v4206
      %v4208 = vpop.f32.mrb[0].mxu0
      %4209 = vmatprep.mubr.f32.mxu0 0.0
      %4210 = vmatmul.mubr.f32.gmra.mrb[0].mxu0 %v4038
      %v4211 = vpop.f32.mrb[0].mxu0
      %v4212 = vadd.f32 %v3891, %v4211
      %v4213 = vpop.f32.mrb[0].mxu0
      %4214 = vmatprep.mubr.f32.mxu0 0.0
      %4215 = vmatmul.mubr.f32.gmra.mrb[0].mxu0 %v4041
      %v4216 = vpop.f32.mrb[0].mxu0
      %v4217 = vadd.f32 %v3896, %v4216
      %v4218 = vpop.f32.mrb[0].mxu0
      %4219 = vmatprep.mubr.f32.mxu0 0.0
      %4220 = vmatmul.mubr.f32.gmra.mrb[0].mxu0 %v4044
      %v4221 = vpop.f32.mrb[0].mxu0
      %v4222 = vadd.f32 %v3901, %v4221
      %v4223 = vpop.f32.mrb[0].mxu0
      %4224 = vmatprep.mubr.f32.mxu0 0.0
      %4225 = vmatmul.mubr.f32.gmra.mrb[0].mxu0 %v4047
      %v4226 = vpop.f32.mrb[0].mxu0
      %v4227 = vadd.f32 %v3906, %v4226
      %v4228 = vpop.f32.mrb[0].mxu0
      %4229 = vmatprep.mubr.f32.mxu0 0.0
      %4230 = vmatmul.mubr.f32.gmra.mrb[0].mxu0 %v4050
      %v4231 = vpop.f32.mrb[0].mxu0
      %v4232 = vadd.f32 %v3911, %v4231
      %v4233 = vpop.f32.mrb[0].mxu0
      %4234 = vmatprep.mubr.f32.mxu0 0.0
      %4235 = vmatmul.mubr.f32.gmra.mrb[0].mxu0 %v4053
      %v4236 = vpop.f32.mrb[0].mxu0
      %v4237 = vadd.f32 %v3916, %v4236
      %v4238 = vpop.f32.mrb[0].mxu0
      %4239 = vmatprep.mubr.f32.mxu0 0.0
      %4240 = vmatmul.mubr.f32.gmra.mrb[0].mxu0 %v4056
      %v4241 = vpop.f32.mrb[0].mxu0
      %v4242 = vadd.f32 %v3921, %v4241
      %v4243 = vpop.f32.mrb[0].mxu0
      %4244 = vmatprep.mubr.f32.mxu0 0.0
      %4245 = vmatmul.mubr.f32.gmra.mrb[0].mxu0 %v4059
      %v4246 = vpop.f32.mrb[0].mxu0
      %v4247 = vadd.f32 %v3926, %v4246
      %v4248 = vpop.f32.mrb[0].mxu0
      %4249 = vmatprep.mubr.f32.mxu0 0.0
      %4250 = vmatmul.mubr.f32.gmra.mrb[0].mxu0 %v4062
      %v4251 = vpop.f32.mrb[0].mxu0
      %v4252 = vadd.f32 %v3931, %v4251
      %v4253 = vpop.f32.mrb[0].mxu0
      %4254 = vmatprep.mubr.f32.mxu0 0.0
      %4255 = vmatmul.mubr.f32.gmra.mrb[0].mxu0 %v4065
      %v4256 = vpop.f32.mrb[0].mxu0
      %v4257 = vadd.f32 %v3936, %v4256
      %v4258 = vpop.f32.mrb[0].mxu0
      %4259 = vmatprep.mubr.f32.mxu0 0.0
      %4260 = vmatmul.mubr.f32.gmra.mrb[0].mxu0 %v4068
      %v4261 = vpop.f32.mrb[0].mxu0
      %v4262 = vadd.f32 %v3941, %v4261
      %v4263 = vpop.f32.mrb[0].mxu0
      %4264 = vmatprep.mubr.f32.mxu0 0.0
      %4265 = vmatmul.mubr.f32.gmra.mrb[0].mxu0 %v4071
      %v4266 = vpop.f32.mrb[0].mxu0
      %v4267 = vadd.f32 %v3946, %v4266
      %v4268 = vpop.f32.mrb[0].mxu0
      %4269 = vmatprep.mubr.f32.mxu0 0.0
      %4270 = vmatmul.mubr.f32.gmra.mrb[0].mxu0 %v4074
      %v4271 = vpop.f32.mrb[0].mxu0
      %v4272 = vadd.f32 %v3951, %v4271
      %v4273 = vpop.f32.mrb[0].mxu0
      %4274 = vmatprep.mubr.f32.mxu0 0.0
      %4275 = vmatmul.mubr.f32.gmra.mrb[0].mxu0 %v4077
      %v4276 = vpop.f32.mrb[0].mxu0
      %v4277 = vadd.f32 %v3956, %v4276
      %v4278 = vpop.f32.mrb[0].mxu0
      %4279 = vmatprep.mubr.f32.mxu0 0.0
      %4280 = vmatmul.mubr.f32.gmra.mrb[0].mxu0 %v4080
      %v4281 = vpop.f32.mrb[0].mxu0
      %v4282 = vadd.f32 %v3961, %v4281
      %v4283 = vpop.f32.mrb[0].mxu0
      %4284 = vmatprep.mubr.f32.mxu0 0.0
      %4285 = vmatmul.mubr.f32.gmra.mrb[0].mxu0 %v4083
      %v4286 = vpop.f32.mrb[0].mxu0
      %v4287 = vadd.f32 %v3966, %v4286
      %v4288 = vpop.f32.mrb[0].mxu0
      %4289 = vmatprep.mubr.f32.mxu0 0.0
      %4290 = vmatmul.mubr.f32.gmra.mrb[0].mxu0 %v4086
      %v4291 = vpop.f32.mrb[0].mxu0
      %v4292 = vadd.f32 %v3971, %v4291
      %v4293 = vpop.f32.mrb[0].mxu0
      %4294 = vmatprep.mubr.f32.mxu0 0.0
      %4295 = vmatmul.mubr.f32.gmra.mrb[0].mxu0 %v4089
      %v4296 = vpop.f32.mrb[0].mxu0
      %v4297 = vadd.f32 %v3976, %v4296
      %v4298 = vpop.f32.mrb[0].mxu0
      %4299 = vmatprep.mubr.f32.mxu0 0.0
      %4300 = vmatmul.mubr.f32.gmra.mrb[0].mxu0 %v4092
      %v4301 = vpop.f32.mrb[0].mxu0
      %v4302 = vadd.f32 %v3981, %v4301
      %v4303 = vpop.f32.mrb[0].mxu0
      %4304 = vmatprep.mubr.f32.mxu0 0.0
      %4305 = vmatmul.mubr.f32.gmra.mrb[0].mxu0 %v4095
      %v4306 = vpop.f32.mrb[0].mxu0
      %v4307 = vadd.f32 %v3986, %v4306
      %v4308 = vpop.f32.mrb[0].mxu0
      %4309 = vmatprep.mubr.f32.mxu0 0.0
      %4310 = vmatmul.mubr.f32.gmra.mrb[0].mxu0 %v4098
      %v4311 = vpop.f32.mrb[0].mxu0
      %v4312 = vadd.f32 %v3991, %v4311
      %v4313 = vpop.f32.mrb[0].mxu0
      %4314 = vmatprep.mubr.f32.mxu0 0.0
      %4315 = vmatmul.mubr.f32.gmra.mrb[0].mxu0 %v4101
      %v4316 = vpop.f32.mrb[0].mxu0
      %v4317 = vadd.f32 %v3996, %v4316
      %v4318 = vpop.f32.mrb[0].mxu0
      %4319 = vmatprep.mubr.f32.mxu0 0.0
      %4320 = vmatmul.mubr.f32.gmra.mrb[0].mxu0 %v4104
      %v4321 = vpop.f32.mrb[0].mxu0
      %v4322 = vadd.f32 %v4001, %v4321
      %v4323 = vpop.f32.mrb[0].mxu0
      %4324 = vmatprep.mubr.f32.mxu0 0.0
      %4325 = vmatmul.mubr.f32.gmra.mrb[0].mxu0 %v4107
      %v4326 = vpop.f32.mrb[0].mxu0
      %v4327 = vadd.f32 %v4006, %v4326
      %v4328 = vpop.f32.mrb[0].mxu0
      %4329 = vmatprep.mubr.f32.mxu0 0.0
      %4330 = vmatmul.mubr.f32.gmra.mrb[0].mxu0 %v4110
      %v4331 = vpop.f32.mrb[0].mxu0
      %v4332 = vadd.f32 %v4011, %v4331
      %v4333 = vpop.f32.mrb[0].mxu0
      %4334 = vmatprep.mubr.f32.mxu0 0.0
      %4335 = vmatmul.mubr.f32.gmra.mrb[0].mxu0 %v4113
      %v4336 = vpop.f32.mrb[0].mxu0
      %v4337 = vadd.f32 %v4016, %v4336
      %v4338 = vpop.f32.mrb[0].mxu0
      %4339 = vdwg.mxu0
      %s4340 = scalar_lea.vmem [#allocation3], 24
      %v4341 = vld [vmem:[%s4340] sm:$0xff]
      %v4342 = vld [vmem:[%s4340 + $0x8] sm:$0xff]
      %v4343 = vld [vmem:[%s4340 + $0x18] sm:$0xff]
      %v4344 = vld [vmem:[%s4340 + $0x20] sm:$0xff]
      %v4345 = vld [vmem:[%s4340 + $0x30] sm:$0xff]
      %v4346 = vld [vmem:[%s4340 + $0x38] sm:$0xff]
      %v4347 = vld [vmem:[%s4340 + $0x48] sm:$0xff]
      %v4348 = vld [vmem:[%s4340 + $0x50] sm:$0xff]
      %v4349 = vld [vmem:[%s4340 + $0x60] sm:$0xff]
      %v4350 = vld [vmem:[%s4340 + $0x68] sm:$0xff]
      %v4351 = vld [vmem:[%s4340 + $0x78] sm:$0xff]
      %v4352 = vld [vmem:[%s4340 + $0x80] sm:$0xff]
      %v4353 = vld [vmem:[%s4340 + $0x90] sm:$0xff]
      %v4354 = vld [vmem:[%s4340 + $0x98] sm:$0xff]
      %v4355 = vld [vmem:[%s4340 + $0xa8] sm:$0xff]
      %v4356 = vld [vmem:[%s4340 + $0xb0] sm:$0xff]
      %v4357 = vld [vmem:[%s4340 + $0xc0] sm:$0xff]
      %v4358 = vld [vmem:[%s4340 + $0xc8] sm:$0xff]
      %v4359 = vld [vmem:[%s4340 + $0xd8] sm:$0xff]
      %v4360 = vld [vmem:[%s4340 + $0xe0] sm:$0xff]
      %v4361 = vld [vmem:[%s4340 + $0xf0] sm:$0xff]
      %v4362 = vld [vmem:[%s4340 + $0xf8] sm:$0xff]
      %v4363 = vld [vmem:[%s4340 + $0x108] sm:$0xff]
      %v4364 = vld [vmem:[%s4340 + $0x110] sm:$0xff]
      %v4365 = vld [vmem:[%s4340 + $0x120] sm:$0xff]
      %v4366 = vld [vmem:[%s4340 + $0x128] sm:$0xff]
      %v4367 = vld [vmem:[%s4340 + $0x138] sm:$0xff]
      %v4368 = vld [vmem:[%s4340 + $0x140] sm:$0xff]
      %v4369 = vld [vmem:[%s4340 + $0x150] sm:$0xff]
      %v4370 = vld [vmem:[%s4340 + $0x158] sm:$0xff]
      %v4371 = vld [vmem:[%s4340 + $0x168] sm:$0xff]
      %v4372 = vld [vmem:[%s4340 + $0x170] sm:$0xff]
      %s4373 = scalar_lea.vmem %s5, 32
      %v4374 = vld [vmem:[%s4373] sm:$0xff]
      %v4375 = vld [vmem:[%s4373 + $0x8] sm:$0xff]
      %v4377 = vsel %vm3544, %v4341, 0
      %v4380 = vsel %vm3544, %v4342, 0
      %v4383 = vsel %vm3544, %v4343, 0
      %v4386 = vsel %vm3544, %v4344, 0
      %v4389 = vsel %vm3544, %v4345, 0
      %v4392 = vsel %vm3544, %v4346, 0
      %v4395 = vsel %vm3544, %v4347, 0
      %v4398 = vsel %vm3544, %v4348, 0
      %v4401 = vsel %vm3544, %v4349, 0
      %v4404 = vsel %vm3544, %v4350, 0
      %v4407 = vsel %vm3544, %v4351, 0
      %v4410 = vsel %vm3544, %v4352, 0
      %v4413 = vsel %vm3544, %v4353, 0
      %v4416 = vsel %vm3544, %v4354, 0
      %v4419 = vsel %vm3544, %v4355, 0
      %v4422 = vsel %vm3544, %v4356, 0
      %v4425 = vsel %vm3544, %v4357, 0
      %v4428 = vsel %vm3544, %v4358, 0
      %v4431 = vsel %vm3544, %v4359, 0
      %v4434 = vsel %vm3544, %v4360, 0
      %v4437 = vsel %vm3544, %v4361, 0
      %v4440 = vsel %vm3544, %v4362, 0
      %v4443 = vsel %vm3544, %v4363, 0
      %v4446 = vsel %vm3544, %v4364, 0
      %v4449 = vsel %vm3544, %v4365, 0
      %v4452 = vsel %vm3544, %v4366, 0
      %v4455 = vsel %vm3544, %v4367, 0
      %v4458 = vsel %vm3544, %v4368, 0
      %v4461 = vsel %vm3544, %v4369, 0
      %v4464 = vsel %vm3544, %v4370, 0
      %v4467 = vsel %vm3544, %v4371, 0
      %v4470 = vsel %vm3544, %v4372, 0
      %4472 = vmatprep.subr.mxu0 0.0
      %4473 = vmatpush1.msra.mxu0 %v4374
      %4474 = vmatprep.subr.mxu0 0.0
      %4475 = vmatpush1.msra.mxu0 %v4375
      %4476 = vmatprep.subr.mxu0 0.0
      %4477 = vmatpush1.msra.mxu0 0.0
      %4478 = vmatprep.subr.mxu0 0.0
      %4479 = vmatpush1.msra.mxu0 0.0
      %4480 = vmatprep.subr.mxu0 0.0
      %4481 = vmatpush1.msra.mxu0 0.0
      %4482 = vmatprep.subr.mxu0 0.0
      %4483 = vmatpush1.msra.mxu0 0.0
      %4484 = vmatprep.subr.mxu0 0.0
      %4485 = vmatpush1.msra.mxu0 0.0
      %4486 = vmatprep.subr.mxu0 0.0
      %4487 = vmatpush1.msra.mxu0 0.0
      %4488 = vmatprep.subr.mxu0 0.0
      %4489 = vmatpush1.msra.mxu0 0.0
      %4490 = vmatprep.subr.mxu0 0.0
      %4491 = vmatpush1.msra.mxu0 0.0
      %4492 = vmatprep.subr.mxu0 0.0
      %4493 = vmatpush1.msra.mxu0 0.0
      %4494 = vmatprep.subr.mxu0 0.0
      %4495 = vmatpush1.msra.mxu0 0.0
      %4496 = vmatprep.subr.mxu0 0.0
      %4497 = vmatpush1.msra.mxu0 0.0
      %4498 = vmatprep.subr.mxu0 0.0
      %4499 = vmatpush1.msra.mxu0 0.0
      %4500 = vmatprep.subr.mxu0 0.0
      %4501 = vmatpush1.msra.mxu0 0.0
      %4502 = vmatprep.subr.mxu0 0.0
      %4503 = vmatpush1.msra.mxu0 0.0
      %4504 = vmatprep.subr.mxu0 0.0
      %4505 = vmatpush1.msra.mxu0 0.0
      %4506 = vmatprep.subr.mxu0 0.0
      %4507 = vmatpush1.msra.mxu0 0.0
      %4508 = vmatprep.subr.mxu0 0.0
      %4509 = vmatpush1.msra.mxu0 0.0
      %4510 = vmatprep.subr.mxu0 0.0
      %4511 = vmatpush1.msra.mxu0 0.0
      %4512 = vmatprep.subr.mxu0 0.0
      %4513 = vmatpush1.msra.mxu0 0.0
      %4514 = vmatprep.subr.mxu0 0.0
      %4515 = vmatpush1.msra.mxu0 0.0
      %4516 = vmatprep.subr.mxu0 0.0
      %4517 = vmatpush1.msra.mxu0 0.0
      %4518 = vmatprep.subr.mxu0 0.0
      %4519 = vmatpush1.msra.mxu0 0.0
      %4520 = vmatprep.subr.mxu0 0.0
      %4521 = vmatpush1.msra.mxu0 0.0
      %4522 = vmatprep.subr.mxu0 0.0
      %4523 = vmatpush1.msra.mxu0 0.0
      %4524 = vmatprep.subr.mxu0 0.0
      %4525 = vmatpush1.msra.mxu0 0.0
      %4526 = vmatprep.subr.mxu0 0.0
      %4527 = vmatpush1.msra.mxu0 0.0
      %4528 = vmatprep.subr.mxu0 0.0
      %4529 = vmatpush1.msra.mxu0 0.0
      %4530 = vmatprep.subr.mxu0 0.0
      %4531 = vmatpush1.msra.mxu0 0.0
      %4532 = vmatprep.subr.mxu0 0.0
      %4533 = vmatpush1.msra.mxu0 0.0
      %4534 = vmatprep.subr.mxu0 0.0
      %4535 = vmatpush1.msra.mxu0 0.0
      %4536 = vmatprep.mubr.f32.mxu0 0.0
      %4537 = vmatmul.mubr.f32.gmra.mrb[0].mxu0 %v4377
      %v4538 = vpop.f32.mrb[0].mxu0
      %v4539 = vadd.f32 0.0, %v4538
      %v4540 = vpop.f32.mrb[0].mxu0
      %4541 = vmatprep.mubr.f32.mxu0 0.0
      %4542 = vmatmul.mubr.f32.gmra.mrb[0].mxu0 %v4380
      %v4543 = vpop.f32.mrb[0].mxu0
      %v4544 = vadd.f32 0.0, %v4543
      %v4545 = vpop.f32.mrb[0].mxu0
      %4546 = vmatprep.mubr.f32.mxu0 0.0
      %4547 = vmatmul.mubr.f32.gmra.mrb[0].mxu0 %v4383
      %v4548 = vpop.f32.mrb[0].mxu0
      %v4549 = vadd.f32 0.0, %v4548
      %v4550 = vpop.f32.mrb[0].mxu0
      %4551 = vmatprep.mubr.f32.mxu0 0.0
      %4552 = vmatmul.mubr.f32.gmra.mrb[0].mxu0 %v4386
      %v4553 = vpop.f32.mrb[0].mxu0
      %v4554 = vadd.f32 0.0, %v4553
      %v4555 = vpop.f32.mrb[0].mxu0
      %4556 = vmatprep.mubr.f32.mxu0 0.0
      %4557 = vmatmul.mubr.f32.gmra.mrb[0].mxu0 %v4389
      %v4558 = vpop.f32.mrb[0].mxu0
      %v4559 = vadd.f32 0.0, %v4558
      %v4560 = vpop.f32.mrb[0].mxu0
      %4561 = vmatprep.mubr.f32.mxu0 0.0
      %4562 = vmatmul.mubr.f32.gmra.mrb[0].mxu0 %v4392
      %v4563 = vpop.f32.mrb[0].mxu0
      %v4564 = vadd.f32 0.0, %v4563
      %v4565 = vpop.f32.mrb[0].mxu0
      %4566 = vmatprep.mubr.f32.mxu0 0.0
      %4567 = vmatmul.mubr.f32.gmra.mrb[0].mxu0 %v4395
      %v4568 = vpop.f32.mrb[0].mxu0
      %v4569 = vadd.f32 0.0, %v4568
      %v4570 = vpop.f32.mrb[0].mxu0
      %4571 = vmatprep.mubr.f32.mxu0 0.0
      %4572 = vmatmul.mubr.f32.gmra.mrb[0].mxu0 %v4398
      %v4573 = vpop.f32.mrb[0].mxu0
      %v4574 = vadd.f32 0.0, %v4573
      %v4575 = vpop.f32.mrb[0].mxu0
      %4576 = vmatprep.mubr.f32.mxu0 0.0
      %4577 = vmatmul.mubr.f32.gmra.mrb[0].mxu0 %v4401
      %v4578 = vpop.f32.mrb[0].mxu0
      %v4579 = vadd.f32 0.0, %v4578
      %v4580 = vpop.f32.mrb[0].mxu0
      %4581 = vmatprep.mubr.f32.mxu0 0.0
      %4582 = vmatmul.mubr.f32.gmra.mrb[0].mxu0 %v4404
      %v4583 = vpop.f32.mrb[0].mxu0
      %v4584 = vadd.f32 0.0, %v4583
      %v4585 = vpop.f32.mrb[0].mxu0
      %4586 = vmatprep.mubr.f32.mxu0 0.0
      %4587 = vmatmul.mubr.f32.gmra.mrb[0].mxu0 %v4407
      %v4588 = vpop.f32.mrb[0].mxu0
      %v4589 = vadd.f32 0.0, %v4588
      %v4590 = vpop.f32.mrb[0].mxu0
      %4591 = vmatprep.mubr.f32.mxu0 0.0
      %4592 = vmatmul.mubr.f32.gmra.mrb[0].mxu0 %v4410
      %v4593 = vpop.f32.mrb[0].mxu0
      %v4594 = vadd.f32 0.0, %v4593
      %v4595 = vpop.f32.mrb[0].mxu0
      %4596 = vmatprep.mubr.f32.mxu0 0.0
      %4597 = vmatmul.mubr.f32.gmra.mrb[0].mxu0 %v4413
      %v4598 = vpop.f32.mrb[0].mxu0
      %v4599 = vadd.f32 0.0, %v4598
      %v4600 = vpop.f32.mrb[0].mxu0
      %4601 = vmatprep.mubr.f32.mxu0 0.0
      %4602 = vmatmul.mubr.f32.gmra.mrb[0].mxu0 %v4416
      %v4603 = vpop.f32.mrb[0].mxu0
      %v4604 = vadd.f32 0.0, %v4603
      %v4605 = vpop.f32.mrb[0].mxu0
      %4606 = vmatprep.mubr.f32.mxu0 0.0
      %4607 = vmatmul.mubr.f32.gmra.mrb[0].mxu0 %v4419
      %v4608 = vpop.f32.mrb[0].mxu0
      %v4609 = vadd.f32 0.0, %v4608
      %v4610 = vpop.f32.mrb[0].mxu0
      %4611 = vmatprep.mubr.f32.mxu0 0.0
      %4612 = vmatmul.mubr.f32.gmra.mrb[0].mxu0 %v4422
      %v4613 = vpop.f32.mrb[0].mxu0
      %v4614 = vadd.f32 0.0, %v4613
      %v4615 = vpop.f32.mrb[0].mxu0
      %4616 = vmatprep.mubr.f32.mxu0 0.0
      %4617 = vmatmul.mubr.f32.gmra.mrb[0].mxu0 %v4425
      %v4618 = vpop.f32.mrb[0].mxu0
      %v4619 = vadd.f32 0.0, %v4618
      %v4620 = vpop.f32.mrb[0].mxu0
      %4621 = vmatprep.mubr.f32.mxu0 0.0
      %4622 = vmatmul.mubr.f32.gmra.mrb[0].mxu0 %v4428
      %v4623 = vpop.f32.mrb[0].mxu0
      %v4624 = vadd.f32 0.0, %v4623
      %v4625 = vpop.f32.mrb[0].mxu0
      %4626 = vmatprep.mubr.f32.mxu0 0.0
      %4627 = vmatmul.mubr.f32.gmra.mrb[0].mxu0 %v4431
      %v4628 = vpop.f32.mrb[0].mxu0
      %v4629 = vadd.f32 0.0, %v4628
      %v4630 = vpop.f32.mrb[0].mxu0
      %4631 = vmatprep.mubr.f32.mxu0 0.0
      %4632 = vmatmul.mubr.f32.gmra.mrb[0].mxu0 %v4434
      %v4633 = vpop.f32.mrb[0].mxu0
      %v4634 = vadd.f32 0.0, %v4633
      %v4635 = vpop.f32.mrb[0].mxu0
      %4636 = vmatprep.mubr.f32.mxu0 0.0
      %4637 = vmatmul.mubr.f32.gmra.mrb[0].mxu0 %v4437
      %v4638 = vpop.f32.mrb[0].mxu0
      %v4639 = vadd.f32 0.0, %v4638
      %v4640 = vpop.f32.mrb[0].mxu0
      %4641 = vmatprep.mubr.f32.mxu0 0.0
      %4642 = vmatmul.mubr.f32.gmra.mrb[0].mxu0 %v4440
      %v4643 = vpop.f32.mrb[0].mxu0
      %v4644 = vadd.f32 0.0, %v4643
      %v4645 = vpop.f32.mrb[0].mxu0
      %4646 = vmatprep.mubr.f32.mxu0 0.0
      %4647 = vmatmul.mubr.f32.gmra.mrb[0].mxu0 %v4443
      %v4648 = vpop.f32.mrb[0].mxu0
      %v4649 = vadd.f32 0.0, %v4648
      %v4650 = vpop.f32.mrb[0].mxu0
      %4651 = vmatprep.mubr.f32.mxu0 0.0
      %4652 = vmatmul.mubr.f32.gmra.mrb[0].mxu0 %v4446
      %v4653 = vpop.f32.mrb[0].mxu0
      %v4654 = vadd.f32 0.0, %v4653
      %v4655 = vpop.f32.mrb[0].mxu0
      %4656 = vmatprep.mubr.f32.mxu0 0.0
      %4657 = vmatmul.mubr.f32.gmra.mrb[0].mxu0 %v4449
      %v4658 = vpop.f32.mrb[0].mxu0
      %v4659 = vadd.f32 0.0, %v4658
      %v4660 = vpop.f32.mrb[0].mxu0
      %4661 = vmatprep.mubr.f32.mxu0 0.0
      %4662 = vmatmul.mubr.f32.gmra.mrb[0].mxu0 %v4452
      %v4663 = vpop.f32.mrb[0].mxu0
      %v4664 = vadd.f32 0.0, %v4663
      %v4665 = vpop.f32.mrb[0].mxu0
      %4666 = vmatprep.mubr.f32.mxu0 0.0
      %4667 = vmatmul.mubr.f32.gmra.mrb[0].mxu0 %v4455
      %v4668 = vpop.f32.mrb[0].mxu0
      %v4669 = vadd.f32 0.0, %v4668
      %v4670 = vpop.f32.mrb[0].mxu0
      %4671 = vmatprep.mubr.f32.mxu0 0.0
      %4672 = vmatmul.mubr.f32.gmra.mrb[0].mxu0 %v4458
      %v4673 = vpop.f32.mrb[0].mxu0
      %v4674 = vadd.f32 0.0, %v4673
      %v4675 = vpop.f32.mrb[0].mxu0
      %4676 = vmatprep.mubr.f32.mxu0 0.0
      %4677 = vmatmul.mubr.f32.gmra.mrb[0].mxu0 %v4461
      %v4678 = vpop.f32.mrb[0].mxu0
      %v4679 = vadd.f32 0.0, %v4678
      %v4680 = vpop.f32.mrb[0].mxu0
      %4681 = vmatprep.mubr.f32.mxu0 0.0
      %4682 = vmatmul.mubr.f32.gmra.mrb[0].mxu0 %v4464
      %v4683 = vpop.f32.mrb[0].mxu0
      %v4684 = vadd.f32 0.0, %v4683
      %v4685 = vpop.f32.mrb[0].mxu0
      %4686 = vmatprep.mubr.f32.mxu0 0.0
      %4687 = vmatmul.mubr.f32.gmra.mrb[0].mxu0 %v4467
      %v4688 = vpop.f32.mrb[0].mxu0
      %v4689 = vadd.f32 0.0, %v4688
      %v4690 = vpop.f32.mrb[0].mxu0
      %4691 = vmatprep.mubr.f32.mxu0 0.0
      %4692 = vmatmul.mubr.f32.gmra.mrb[0].mxu0 %v4470
      %v4693 = vpop.f32.mrb[0].mxu0
      %v4694 = vadd.f32 0.0, %v4693
      %v4695 = vpop.f32.mrb[0].mxu0
      %4696 = vdwg.mxu0
      %v4697 = vadd.f32 %v4182, %v4539
      %v4698 = vadd.f32 %v4187, %v4544
      %v4699 = vadd.f32 %v4192, %v4549
      %v4700 = vadd.f32 %v4197, %v4554
      %v4701 = vadd.f32 %v4202, %v4559
      %v4702 = vadd.f32 %v4207, %v4564
      %v4703 = vadd.f32 %v4212, %v4569
      %v4704 = vadd.f32 %v4217, %v4574
      %v4705 = vadd.f32 %v4222, %v4579
      %v4706 = vadd.f32 %v4227, %v4584
      %v4707 = vadd.f32 %v4232, %v4589
      %v4708 = vadd.f32 %v4237, %v4594
      %v4709 = vadd.f32 %v4242, %v4599
      %v4710 = vadd.f32 %v4247, %v4604
      %v4711 = vadd.f32 %v4252, %v4609
      %v4712 = vadd.f32 %v4257, %v4614
      %v4713 = vadd.f32 %v4262, %v4619
      %v4714 = vadd.f32 %v4267, %v4624
      %v4715 = vadd.f32 %v4272, %v4629
      %v4716 = vadd.f32 %v4277, %v4634
      %v4717 = vadd.f32 %v4282, %v4639
      %v4718 = vadd.f32 %v4287, %v4644
      %v4719 = vadd.f32 %v4292, %v4649
      %v4720 = vadd.f32 %v4297, %v4654
      %v4721 = vadd.f32 %v4302, %v4659
      %v4722 = vadd.f32 %v4307, %v4664
      %v4723 = vadd.f32 %v4312, %v4669
      %v4724 = vadd.f32 %v4317, %v4674
      %v4725 = vadd.f32 %v4322, %v4679
      %v4726 = vadd.f32 %v4327, %v4684
      %v4727 = vadd.f32 %v4332, %v4689
      %v4728 = vadd.f32 %v4337, %v4694
      %v4729 = vld [vmem:[%s4340 + $0x1] sm:$0xff]
      %v4730 = vld [vmem:[%s4340 + $0x9] sm:$0xff]
      %v4731 = vld [vmem:[%s4340 + $0x19] sm:$0xff]
      %v4732 = vld [vmem:[%s4340 + $0x21] sm:$0xff]
      %v4733 = vld [vmem:[%s4340 + $0x31] sm:$0xff]
      %v4734 = vld [vmem:[%s4340 + $0x39] sm:$0xff]
      %v4735 = vld [vmem:[%s4340 + $0x49] sm:$0xff]
      %v4736 = vld [vmem:[%s4340 + $0x51] sm:$0xff]
      %v4737 = vld [vmem:[%s4340 + $0x61] sm:$0xff]
      %v4738 = vld [vmem:[%s4340 + $0x69] sm:$0xff]
      %v4739 = vld [vmem:[%s4340 + $0x79] sm:$0xff]
      %v4740 = vld [vmem:[%s4340 + $0x81] sm:$0xff]
      %v4741 = vld [vmem:[%s4340 + $0x91] sm:$0xff]
      %v4742 = vld [vmem:[%s4340 + $0x99] sm:$0xff]
      %v4743 = vld [vmem:[%s4340 + $0xa9] sm:$0xff]
      %v4744 = vld [vmem:[%s4340 + $0xb1] sm:$0xff]
      %v4745 = vld [vmem:[%s4340 + $0xc1] sm:$0xff]
      %v4746 = vld [vmem:[%s4340 + $0xc9] sm:$0xff]
      %v4747 = vld [vmem:[%s4340 + $0xd9] sm:$0xff]
      %v4748 = vld [vmem:[%s4340 + $0xe1] sm:$0xff]
      %v4749 = vld [vmem:[%s4340 + $0xf1] sm:$0xff]
      %v4750 = vld [vmem:[%s4340 + $0xf9] sm:$0xff]
      %v4751 = vld [vmem:[%s4340 + $0x109] sm:$0xff]
      %v4752 = vld [vmem:[%s4340 + $0x111] sm:$0xff]
      %v4753 = vld [vmem:[%s4340 + $0x121] sm:$0xff]
      %v4754 = vld [vmem:[%s4340 + $0x129] sm:$0xff]
      %v4755 = vld [vmem:[%s4340 + $0x139] sm:$0xff]
      %v4756 = vld [vmem:[%s4340 + $0x141] sm:$0xff]
      %v4757 = vld [vmem:[%s4340 + $0x151] sm:$0xff]
      %v4758 = vld [vmem:[%s4340 + $0x159] sm:$0xff]
      %v4759 = vld [vmem:[%s4340 + $0x169] sm:$0xff]
      %v4760 = vld [vmem:[%s4340 + $0x171] sm:$0xff]
      %s4761 = scalar_lea.vmem %s5, 48
      %v4762 = vld [vmem:[%s4761] sm:$0xff]
      %v4763 = vld [vmem:[%s4761 + $0x8] sm:$0xff]
      %v4765 = vsel %vm3544, %v4729, 0
      %v4768 = vsel %vm3544, %v4730, 0
      %v4771 = vsel %vm3544, %v4731, 0
      %v4774 = vsel %vm3544, %v4732, 0
      %v4777 = vsel %vm3544, %v4733, 0
      %v4780 = vsel %vm3544, %v4734, 0
      %v4783 = vsel %vm3544, %v4735, 0
      %v4786 = vsel %vm3544, %v4736, 0
      %v4789 = vsel %vm3544, %v4737, 0
      %v4792 = vsel %vm3544, %v4738, 0
      %v4795 = vsel %vm3544, %v4739, 0
      %v4798 = vsel %vm3544, %v4740, 0
      %v4801 = vsel %vm3544, %v4741, 0
      %v4804 = vsel %vm3544, %v4742, 0
      %v4807 = vsel %vm3544, %v4743, 0
      %v4810 = vsel %vm3544, %v4744, 0
      %v4813 = vsel %vm3544, %v4745, 0
      %v4816 = vsel %vm3544, %v4746, 0
      %v4819 = vsel %vm3544, %v4747, 0
      %v4822 = vsel %vm3544, %v4748, 0
      %v4825 = vsel %vm3544, %v4749, 0
      %v4828 = vsel %vm3544, %v4750, 0
      %v4831 = vsel %vm3544, %v4751, 0
      %v4834 = vsel %vm3544, %v4752, 0
      %v4837 = vsel %vm3544, %v4753, 0
      %v4840 = vsel %vm3544, %v4754, 0
      %v4843 = vsel %vm3544, %v4755, 0
      %v4846 = vsel %vm3544, %v4756, 0
      %v4849 = vsel %vm3544, %v4757, 0
      %v4852 = vsel %vm3544, %v4758, 0
      %v4855 = vsel %vm3544, %v4759, 0
      %v4858 = vsel %vm3544, %v4760, 0
      %4860 = vmatprep.subr.mxu0 0.0
      %4861 = vmatpush1.msra.mxu0 %v4762
      %4862 = vmatprep.subr.mxu0 0.0
      %4863 = vmatpush1.msra.mxu0 %v4763
      %4864 = vmatprep.subr.mxu0 0.0
      %4865 = vmatpush1.msra.mxu0 0.0
      %4866 = vmatprep.subr.mxu0 0.0
      %4867 = vmatpush1.msra.mxu0 0.0
      %4868 = vmatprep.subr.mxu0 0.0
      %4869 = vmatpush1.msra.mxu0 0.0
      %4870 = vmatprep.subr.mxu0 0.0
      %4871 = vmatpush1.msra.mxu0 0.0
      %4872 = vmatprep.subr.mxu0 0.0
      %4873 = vmatpush1.msra.mxu0 0.0
      %4874 = vmatprep.subr.mxu0 0.0
      %4875 = vmatpush1.msra.mxu0 0.0
      %4876 = vmatprep.subr.mxu0 0.0
      %4877 = vmatpush1.msra.mxu0 0.0
      %4878 = vmatprep.subr.mxu0 0.0
      %4879 = vmatpush1.msra.mxu0 0.0
      %4880 = vmatprep.subr.mxu0 0.0
      %4881 = vmatpush1.msra.mxu0 0.0
      %4882 = vmatprep.subr.mxu0 0.0
      %4883 = vmatpush1.msra.mxu0 0.0
      %4884 = vmatprep.subr.mxu0 0.0
      %4885 = vmatpush1.msra.mxu0 0.0
      %4886 = vmatprep.subr.mxu0 0.0
      %4887 = vmatpush1.msra.mxu0 0.0
      %4888 = vmatprep.subr.mxu0 0.0
      %4889 = vmatpush1.msra.mxu0 0.0
      %4890 = vmatprep.subr.mxu0 0.0
      %4891 = vmatpush1.msra.mxu0 0.0
      %4892 = vmatprep.subr.mxu0 0.0
      %4893 = vmatpush1.msra.mxu0 0.0
      %4894 = vmatprep.subr.mxu0 0.0
      %4895 = vmatpush1.msra.mxu0 0.0
      %4896 = vmatprep.subr.mxu0 0.0
      %4897 = vmatpush1.msra.mxu0 0.0
      %4898 = vmatprep.subr.mxu0 0.0
      %4899 = vmatpush1.msra.mxu0 0.0
      %4900 = vmatprep.subr.mxu0 0.0
      %4901 = vmatpush1.msra.mxu0 0.0
      %4902 = vmatprep.subr.mxu0 0.0
      %4903 = vmatpush1.msra.mxu0 0.0
      %4904 = vmatprep.subr.mxu0 0.0
      %4905 = vmatpush1.msra.mxu0 0.0
      %4906 = vmatprep.subr.mxu0 0.0
      %4907 = vmatpush1.msra.mxu0 0.0
      %4908 = vmatprep.subr.mxu0 0.0
      %4909 = vmatpush1.msra.mxu0 0.0
      %4910 = vmatprep.subr.mxu0 0.0
      %4911 = vmatpush1.msra.mxu0 0.0
      %4912 = vmatprep.subr.mxu0 0.0
      %4913 = vmatpush1.msra.mxu0 0.0
      %4914 = vmatprep.subr.mxu0 0.0
      %4915 = vmatpush1.msra.mxu0 0.0
      %4916 = vmatprep.subr.mxu0 0.0
      %4917 = vmatpush1.msra.mxu0 0.0
      %4918 = vmatprep.subr.mxu0 0.0
      %4919 = vmatpush1.msra.mxu0 0.0
      %4920 = vmatprep.subr.mxu0 0.0
      %4921 = vmatpush1.msra.mxu0 0.0
      %4922 = vmatprep.subr.mxu0 0.0
      %4923 = vmatpush1.msra.mxu0 0.0
      %4924 = vmatprep.mubr.f32.mxu0 0.0
      %4925 = vmatmul.mubr.f32.gmra.mrb[0].mxu0 %v4765
      %v4926 = vpop.f32.mrb[0].mxu0
      %v4927 = vadd.f32 0.0, %v4926
      %v4928 = vpop.f32.mrb[0].mxu0
      %4929 = vmatprep.mubr.f32.mxu0 0.0
      %4930 = vmatmul.mubr.f32.gmra.mrb[0].mxu0 %v4768
      %v4931 = vpop.f32.mrb[0].mxu0
      %v4932 = vadd.f32 0.0, %v4931
      %v4933 = vpop.f32.mrb[0].mxu0
      %4934 = vmatprep.mubr.f32.mxu0 0.0
      %4935 = vmatmul.mubr.f32.gmra.mrb[0].mxu0 %v4771
      %v4936 = vpop.f32.mrb[0].mxu0
      %v4937 = vadd.f32 0.0, %v4936
      %v4938 = vpop.f32.mrb[0].mxu0
      %4939 = vmatprep.mubr.f32.mxu0 0.0
      %4940 = vmatmul.mubr.f32.gmra.mrb[0].mxu0 %v4774
      %v4941 = vpop.f32.mrb[0].mxu0
      %v4942 = vadd.f32 0.0, %v4941
      %v4943 = vpop.f32.mrb[0].mxu0
      %4944 = vmatprep.mubr.f32.mxu0 0.0
      %4945 = vmatmul.mubr.f32.gmra.mrb[0].mxu0 %v4777
      %v4946 = vpop.f32.mrb[0].mxu0
      %v4947 = vadd.f32 0.0, %v4946
      %v4948 = vpop.f32.mrb[0].mxu0
      %4949 = vmatprep.mubr.f32.mxu0 0.0
      %4950 = vmatmul.mubr.f32.gmra.mrb[0].mxu0 %v4780
      %v4951 = vpop.f32.mrb[0].mxu0
      %v4952 = vadd.f32 0.0, %v4951
      %v4953 = vpop.f32.mrb[0].mxu0
      %4954 = vmatprep.mubr.f32.mxu0 0.0
      %4955 = vmatmul.mubr.f32.gmra.mrb[0].mxu0 %v4783
      %v4956 = vpop.f32.mrb[0].mxu0
      %v4957 = vadd.f32 0.0, %v4956
      %v4958 = vpop.f32.mrb[0].mxu0
      %4959 = vmatprep.mubr.f32.mxu0 0.0
      %4960 = vmatmul.mubr.f32.gmra.mrb[0].mxu0 %v4786
      %v4961 = vpop.f32.mrb[0].mxu0
      %v4962 = vadd.f32 0.0, %v4961
      %v4963 = vpop.f32.mrb[0].mxu0
      %4964 = vmatprep.mubr.f32.mxu0 0.0
      %4965 = vmatmul.mubr.f32.gmra.mrb[0].mxu0 %v4789
      %v4966 = vpop.f32.mrb[0].mxu0
      %v4967 = vadd.f32 0.0, %v4966
      %v4968 = vpop.f32.mrb[0].mxu0
      %4969 = vmatprep.mubr.f32.mxu0 0.0
      %4970 = vmatmul.mubr.f32.gmra.mrb[0].mxu0 %v4792
      %v4971 = vpop.f32.mrb[0].mxu0
      %v4972 = vadd.f32 0.0, %v4971
      %v4973 = vpop.f32.mrb[0].mxu0
      %4974 = vmatprep.mubr.f32.mxu0 0.0
      %4975 = vmatmul.mubr.f32.gmra.mrb[0].mxu0 %v4795
      %v4976 = vpop.f32.mrb[0].mxu0
      %v4977 = vadd.f32 0.0, %v4976
      %v4978 = vpop.f32.mrb[0].mxu0
      %4979 = vmatprep.mubr.f32.mxu0 0.0
      %4980 = vmatmul.mubr.f32.gmra.mrb[0].mxu0 %v4798
      %v4981 = vpop.f32.mrb[0].mxu0
      %v4982 = vadd.f32 0.0, %v4981
      %v4983 = vpop.f32.mrb[0].mxu0
      %4984 = vmatprep.mubr.f32.mxu0 0.0
      %4985 = vmatmul.mubr.f32.gmra.mrb[0].mxu0 %v4801
      %v4986 = vpop.f32.mrb[0].mxu0
      %v4987 = vadd.f32 0.0, %v4986
      %v4988 = vpop.f32.mrb[0].mxu0
      %4989 = vmatprep.mubr.f32.mxu0 0.0
      %4990 = vmatmul.mubr.f32.gmra.mrb[0].mxu0 %v4804
      %v4991 = vpop.f32.mrb[0].mxu0
      %v4992 = vadd.f32 0.0, %v4991
      %v4993 = vpop.f32.mrb[0].mxu0
      %4994 = vmatprep.mubr.f32.mxu0 0.0
      %4995 = vmatmul.mubr.f32.gmra.mrb[0].mxu0 %v4807
      %v4996 = vpop.f32.mrb[0].mxu0
      %v4997 = vadd.f32 0.0, %v4996
      %v4998 = vpop.f32.mrb[0].mxu0
      %4999 = vmatprep.mubr.f32.mxu0 0.0
      %5000 = vmatmul.mubr.f32.gmra.mrb[0].mxu0 %v4810
      %v5001 = vpop.f32.mrb[0].mxu0
      %v5002 = vadd.f32 0.0, %v5001
      %v5003 = vpop.f32.mrb[0].mxu0
      %5004 = vmatprep.mubr.f32.mxu0 0.0
      %5005 = vmatmul.mubr.f32.gmra.mrb[0].mxu0 %v4813
      %v5006 = vpop.f32.mrb[0].mxu0
      %v5007 = vadd.f32 0.0, %v5006
      %v5008 = vpop.f32.mrb[0].mxu0
      %5009 = vmatprep.mubr.f32.mxu0 0.0
      %5010 = vmatmul.mubr.f32.gmra.mrb[0].mxu0 %v4816
      %v5011 = vpop.f32.mrb[0].mxu0
      %v5012 = vadd.f32 0.0, %v5011
      %v5013 = vpop.f32.mrb[0].mxu0
      %5014 = vmatprep.mubr.f32.mxu0 0.0
      %5015 = vmatmul.mubr.f32.gmra.mrb[0].mxu0 %v4819
      %v5016 = vpop.f32.mrb[0].mxu0
      %v5017 = vadd.f32 0.0, %v5016
      %v5018 = vpop.f32.mrb[0].mxu0
      %5019 = vmatprep.mubr.f32.mxu0 0.0
      %5020 = vmatmul.mubr.f32.gmra.mrb[0].mxu0 %v4822
      %v5021 = vpop.f32.mrb[0].mxu0
      %v5022 = vadd.f32 0.0, %v5021
      %v5023 = vpop.f32.mrb[0].mxu0
      %5024 = vmatprep.mubr.f32.mxu0 0.0
      %5025 = vmatmul.mubr.f32.gmra.mrb[0].mxu0 %v4825
      %v5026 = vpop.f32.mrb[0].mxu0
      %v5027 = vadd.f32 0.0, %v5026
      %v5028 = vpop.f32.mrb[0].mxu0
      %5029 = vmatprep.mubr.f32.mxu0 0.0
      %5030 = vmatmul.mubr.f32.gmra.mrb[0].mxu0 %v4828
      %v5031 = vpop.f32.mrb[0].mxu0
      %v5032 = vadd.f32 0.0, %v5031
      %v5033 = vpop.f32.mrb[0].mxu0
      %5034 = vmatprep.mubr.f32.mxu0 0.0
      %5035 = vmatmul.mubr.f32.gmra.mrb[0].mxu0 %v4831
      %v5036 = vpop.f32.mrb[0].mxu0
      %v5037 = vadd.f32 0.0, %v5036
      %v5038 = vpop.f32.mrb[0].mxu0
      %5039 = vmatprep.mubr.f32.mxu0 0.0
      %5040 = vmatmul.mubr.f32.gmra.mrb[0].mxu0 %v4834
      %v5041 = vpop.f32.mrb[0].mxu0
      %v5042 = vadd.f32 0.0, %v5041
      %v5043 = vpop.f32.mrb[0].mxu0
      %5044 = vmatprep.mubr.f32.mxu0 0.0
      %5045 = vmatmul.mubr.f32.gmra.mrb[0].mxu0 %v4837
      %v5046 = vpop.f32.mrb[0].mxu0
      %v5047 = vadd.f32 0.0, %v5046
      %v5048 = vpop.f32.mrb[0].mxu0
      %5049 = vmatprep.mubr.f32.mxu0 0.0
      %5050 = vmatmul.mubr.f32.gmra.mrb[0].mxu0 %v4840
      %v5051 = vpop.f32.mrb[0].mxu0
      %v5052 = vadd.f32 0.0, %v5051
      %v5053 = vpop.f32.mrb[0].mxu0
      %5054 = vmatprep.mubr.f32.mxu0 0.0
      %5055 = vmatmul.mubr.f32.gmra.mrb[0].mxu0 %v4843
      %v5056 = vpop.f32.mrb[0].mxu0
      %v5057 = vadd.f32 0.0, %v5056
      %v5058 = vpop.f32.mrb[0].mxu0
      %5059 = vmatprep.mubr.f32.mxu0 0.0
      %5060 = vmatmul.mubr.f32.gmra.mrb[0].mxu0 %v4846
      %v5061 = vpop.f32.mrb[0].mxu0
      %v5062 = vadd.f32 0.0, %v5061
      %v5063 = vpop.f32.mrb[0].mxu0
      %5064 = vmatprep.mubr.f32.mxu0 0.0
      %5065 = vmatmul.mubr.f32.gmra.mrb[0].mxu0 %v4849
      %v5066 = vpop.f32.mrb[0].mxu0
      %v5067 = vadd.f32 0.0, %v5066
      %v5068 = vpop.f32.mrb[0].mxu0
      %5069 = vmatprep.mubr.f32.mxu0 0.0
      %5070 = vmatmul.mubr.f32.gmra.mrb[0].mxu0 %v4852
      %v5071 = vpop.f32.mrb[0].mxu0
      %v5072 = vadd.f32 0.0, %v5071
      %v5073 = vpop.f32.mrb[0].mxu0
      %5074 = vmatprep.mubr.f32.mxu0 0.0
      %5075 = vmatmul.mubr.f32.gmra.mrb[0].mxu0 %v4855
      %v5076 = vpop.f32.mrb[0].mxu0
      %v5077 = vadd.f32 0.0, %v5076
      %v5078 = vpop.f32.mrb[0].mxu0
      %5079 = vmatprep.mubr.f32.mxu0 0.0
      %5080 = vmatmul.mubr.f32.gmra.mrb[0].mxu0 %v4858
      %v5081 = vpop.f32.mrb[0].mxu0
      %v5082 = vadd.f32 0.0, %v5081
      %v5083 = vpop.f32.mrb[0].mxu0
      %5084 = vdwg.mxu0
      %v5085 = vadd.f32 %v4697, %v4927
      %v5086 = vadd.f32 %v4698, %v4932
      %v5087 = vadd.f32 %v4699, %v4937
      %v5088 = vadd.f32 %v4700, %v4942
      %v5089 = vadd.f32 %v4701, %v4947
      %v5090 = vadd.f32 %v4702, %v4952
      %v5091 = vadd.f32 %v4703, %v4957
      %v5092 = vadd.f32 %v4704, %v4962
      %v5093 = vadd.f32 %v4705, %v4967
      %v5094 = vadd.f32 %v4706, %v4972
      %v5095 = vadd.f32 %v4707, %v4977
      %v5096 = vadd.f32 %v4708, %v4982
      %v5097 = vadd.f32 %v4709, %v4987
      %v5098 = vadd.f32 %v4710, %v4992
      %v5099 = vadd.f32 %v4711, %v4997
      %v5100 = vadd.f32 %v4712, %v5002
      %v5101 = vadd.f32 %v4713, %v5007
      %v5102 = vadd.f32 %v4714, %v5012
      %v5103 = vadd.f32 %v4715, %v5017
      %v5104 = vadd.f32 %v4716, %v5022
      %v5105 = vadd.f32 %v4717, %v5027
      %v5106 = vadd.f32 %v4718, %v5032
      %v5107 = vadd.f32 %v4719, %v5037
      %v5108 = vadd.f32 %v4720, %v5042
      %v5109 = vadd.f32 %v4721, %v5047
      %v5110 = vadd.f32 %v4722, %v5052
      %v5111 = vadd.f32 %v4723, %v5057
      %v5112 = vadd.f32 %v4724, %v5062
      %v5113 = vadd.f32 %v4725, %v5067
      %v5114 = vadd.f32 %v4726, %v5072
      %v5115 = vadd.f32 %v4727, %v5077
      %v5116 = vadd.f32 %v4728, %v5082
      %v5117 = vld [vmem:[%s6] sm:$0x1]
      %v5119 = vlaneseq
      %v5120 = vshrl.u32 %v5119, 7
      %v5121 = vsub.s32 0, %v5120
      %v5122 = vrot.slane %v5117, %v5121
      %v5124 = vadd.f32 %v5085, %v5122
      %v5125 = vadd.f32 %v5086, %v5122
      %v5126 = vadd.f32 %v5087, %v5122
      %v5127 = vadd.f32 %v5088, %v5122
      %v5128 = vadd.f32 %v5089, %v5122
      %v5129 = vadd.f32 %v5090, %v5122
      %v5130 = vadd.f32 %v5091, %v5122
      %v5131 = vadd.f32 %v5092, %v5122
      %v5132 = vadd.f32 %v5093, %v5122
      %v5133 = vadd.f32 %v5094, %v5122
      %v5134 = vadd.f32 %v5095, %v5122
      %v5135 = vadd.f32 %v5096, %v5122
      %v5136 = vadd.f32 %v5097, %v5122
      %v5137 = vadd.f32 %v5098, %v5122
      %v5138 = vadd.f32 %v5099, %v5122
      %v5139 = vadd.f32 %v5100, %v5122
      %v5140 = vadd.f32 %v5101, %v5122
      %v5141 = vadd.f32 %v5102, %v5122
      %v5142 = vadd.f32 %v5103, %v5122
      %v5143 = vadd.f32 %v5104, %v5122
      %v5144 = vadd.f32 %v5105, %v5122
      %v5145 = vadd.f32 %v5106, %v5122
      %v5146 = vadd.f32 %v5107, %v5122
      %v5147 = vadd.f32 %v5108, %v5122
      %v5148 = vadd.f32 %v5109, %v5122
      %v5149 = vadd.f32 %v5110, %v5122
      %v5150 = vadd.f32 %v5111, %v5122
      %v5151 = vadd.f32 %v5112, %v5122
      %v5152 = vadd.f32 %v5113, %v5122
      %v5153 = vadd.f32 %v5114, %v5122
      %v5154 = vadd.f32 %v5115, %v5122
      %v5155 = vadd.f32 %v5116, %v5122
      %v5156 = vmax.f32 %v5124, 0.0
      %v5157 = vmax.f32 %v5125, 0.0
      %v5158 = vmax.f32 %v5126, 0.0
      %v5159 = vmax.f32 %v5127, 0.0
      %v5160 = vmax.f32 %v5128, 0.0
      %v5161 = vmax.f32 %v5129, 0.0
      %v5162 = vmax.f32 %v5130, 0.0
      %v5163 = vmax.f32 %v5131, 0.0
      %v5164 = vmax.f32 %v5132, 0.0
      %v5165 = vmax.f32 %v5133, 0.0
      %v5166 = vmax.f32 %v5134, 0.0
      %v5167 = vmax.f32 %v5135, 0.0
      %v5168 = vmax.f32 %v5136, 0.0
      %v5169 = vmax.f32 %v5137, 0.0
      %v5170 = vmax.f32 %v5138, 0.0
      %v5171 = vmax.f32 %v5139, 0.0
      %v5172 = vmax.f32 %v5140, 0.0
      %v5173 = vmax.f32 %v5141, 0.0
      %v5174 = vmax.f32 %v5142, 0.0
      %v5175 = vmax.f32 %v5143, 0.0
      %v5176 = vmax.f32 %v5144, 0.0
      %v5177 = vmax.f32 %v5145, 0.0
      %v5178 = vmax.f32 %v5146, 0.0
      %v5179 = vmax.f32 %v5147, 0.0
      %v5180 = vmax.f32 %v5148, 0.0
      %v5181 = vmax.f32 %v5149, 0.0
      %v5182 = vmax.f32 %v5150, 0.0
      %v5183 = vmax.f32 %v5151, 0.0
      %v5184 = vmax.f32 %v5152, 0.0
      %v5185 = vmax.f32 %v5153, 0.0
      %v5186 = vmax.f32 %v5154, 0.0
      %v5187 = vmax.f32 %v5155, 0.0
      %5188 = vst.msk [vmem:[%s318] sm:$0xff] %vm1892, %v5156
      %5189 = vst.msk [vmem:[%s318 + $0x8] sm:$0xff] %vm1892, %v5157
      %5190 = vst.msk [vmem:[%s318 + $0x10] sm:$0xff] %vm1892, %v5158
      %5191 = vst.msk [vmem:[%s318 + $0x18] sm:$0xff] %vm1892, %v5159
      %5192 = vst.msk [vmem:[%s318 + $0x20] sm:$0xff] %vm1892, %v5160
      %5193 = vst.msk [vmem:[%s318 + $0x28] sm:$0xff] %vm1892, %v5161
      %5194 = vst.msk [vmem:[%s318 + $0x30] sm:$0xff] %vm1892, %v5162
      %5195 = vst.msk [vmem:[%s318 + $0x38] sm:$0xff] %vm1892, %v5163
      %5196 = vst.msk [vmem:[%s318 + $0x40] sm:$0xff] %vm1892, %v5164
      %5197 = vst.msk [vmem:[%s318 + $0x48] sm:$0xff] %vm1892, %v5165
      %5198 = vst.msk [vmem:[%s318 + $0x50] sm:$0xff] %vm1892, %v5166
      %5199 = vst.msk [vmem:[%s318 + $0x58] sm:$0xff] %vm1892, %v5167
      %5200 = vst.msk [vmem:[%s318 + $0x60] sm:$0xff] %vm1892, %v5168
      %5201 = vst.msk [vmem:[%s318 + $0x68] sm:$0xff] %vm1892, %v5169
      %5202 = vst.msk [vmem:[%s318 + $0x70] sm:$0xff] %vm1892, %v5170
      %5203 = vst.msk [vmem:[%s318 + $0x78] sm:$0xff] %vm1892, %v5171
      %5204 = vst.msk [vmem:[%s318 + $0x80] sm:$0xff] %vm1892, %v5172
      %5205 = vst.msk [vmem:[%s318 + $0x88] sm:$0xff] %vm1892, %v5173
      %5206 = vst.msk [vmem:[%s318 + $0x90] sm:$0xff] %vm1892, %v5174
      %5207 = vst.msk [vmem:[%s318 + $0x98] sm:$0xff] %vm1892, %v5175
      %5208 = vst.msk [vmem:[%s318 + $0xa0] sm:$0xff] %vm1892, %v5176
      %5209 = vst.msk [vmem:[%s318 + $0xa8] sm:$0xff] %vm1892, %v5177
      %5210 = vst.msk [vmem:[%s318 + $0xb0] sm:$0xff] %vm1892, %v5178
      %5211 = vst.msk [vmem:[%s318 + $0xb8] sm:$0xff] %vm1892, %v5179
      %5212 = vst.msk [vmem:[%s318 + $0xc0] sm:$0xff] %vm1892, %v5180
      %5213 = vst.msk [vmem:[%s318 + $0xc8] sm:$0xff] %vm1892, %v5181
      %5214 = vst.msk [vmem:[%s318 + $0xd0] sm:$0xff] %vm1892, %v5182
      %5215 = vst.msk [vmem:[%s318 + $0xd8] sm:$0xff] %vm1892, %v5183
      %5216 = vst.msk [vmem:[%s318 + $0xe0] sm:$0xff] %vm1892, %v5184
      %5217 = vst.msk [vmem:[%s318 + $0xe8] sm:$0xff] %vm1892, %v5185
      %5218 = vst.msk [vmem:[%s318 + $0xf0] sm:$0xff] %vm1892, %v5186
      %5219 = vst.msk [vmem:[%s318 + $0xf8] sm:$0xff] %vm1892, %v5187
      %v5220 = vld [vmem:[#allocation2] sm:$0xff]
      %v5221 = vld [vmem:[#allocation2 + $0x8] sm:$0xff]
      %v5222 = vld [vmem:[#allocation2 + $0x18] sm:$0xff]
      %v5223 = vld [vmem:[#allocation2 + $0x20] sm:$0xff]
      %v5224 = vld [vmem:[#allocation2 + $0x30] sm:$0xff]
      %v5225 = vld [vmem:[#allocation2 + $0x38] sm:$0xff]
      %v5226 = vld [vmem:[#allocation2 + $0x48] sm:$0xff]
      %v5227 = vld [vmem:[#allocation2 + $0x50] sm:$0xff]
      %v5228 = vld [vmem:[#allocation2 + $0x60] sm:$0xff]
      %v5229 = vld [vmem:[#allocation2 + $0x68] sm:$0xff]
      %v5230 = vld [vmem:[#allocation2 + $0x78] sm:$0xff]
      %v5231 = vld [vmem:[#allocation2 + $0x80] sm:$0xff]
      %v5232 = vld [vmem:[#allocation2 + $0x90] sm:$0xff]
      %v5233 = vld [vmem:[#allocation2 + $0x98] sm:$0xff]
      %v5234 = vld [vmem:[#allocation2 + $0xa8] sm:$0xff]
      %v5235 = vld [vmem:[#allocation2 + $0xb0] sm:$0xff]
      %v5236 = vld [vmem:[#allocation2 + $0xc0] sm:$0xff]
      %v5237 = vld [vmem:[#allocation2 + $0xc8] sm:$0xff]
      %v5238 = vld [vmem:[#allocation2 + $0xd8] sm:$0xff]
      %v5239 = vld [vmem:[#allocation2 + $0xe0] sm:$0xff]
      %v5240 = vld [vmem:[#allocation2 + $0xf0] sm:$0xff]
      %v5241 = vld [vmem:[#allocation2 + $0xf8] sm:$0xff]
      %v5242 = vld [vmem:[#allocation2 + $0x108] sm:$0xff]
      %v5243 = vld [vmem:[#allocation2 + $0x110] sm:$0xff]
      %v5244 = vld [vmem:[#allocation2 + $0x120] sm:$0xff]
      %v5245 = vld [vmem:[#allocation2 + $0x128] sm:$0xff]
      %v5246 = vld [vmem:[#allocation2 + $0x138] sm:$0xff]
      %v5247 = vld [vmem:[#allocation2 + $0x140] sm:$0xff]
      %v5248 = vld [vmem:[#allocation2 + $0x150] sm:$0xff]
      %v5249 = vld [vmem:[#allocation2 + $0x158] sm:$0xff]
      %v5250 = vld [vmem:[#allocation2 + $0x168] sm:$0xff]
      %v5251 = vld [vmem:[#allocation2 + $0x170] sm:$0xff]
      %v5252 = vld [vmem:[#allocation2 + $0x1] sm:$0xff]
      %v5253 = vld [vmem:[#allocation2 + $0x9] sm:$0xff]
      %v5254 = vld [vmem:[#allocation2 + $0x19] sm:$0xff]
      %v5255 = vld [vmem:[#allocation2 + $0x21] sm:$0xff]
      %v5256 = vld [vmem:[#allocation2 + $0x31] sm:$0xff]
      %v5257 = vld [vmem:[#allocation2 + $0x39] sm:$0xff]
      %v5258 = vld [vmem:[#allocation2 + $0x49] sm:$0xff]
      %v5259 = vld [vmem:[#allocation2 + $0x51] sm:$0xff]
      %v5260 = vld [vmem:[#allocation2 + $0x61] sm:$0xff]
      %v5261 = vld [vmem:[#allocation2 + $0x69] sm:$0xff]
      %v5262 = vld [vmem:[#allocation2 + $0x79] sm:$0xff]
      %v5263 = vld [vmem:[#allocation2 + $0x81] sm:$0xff]
      %v5264 = vld [vmem:[#allocation2 + $0x91] sm:$0xff]
      %v5265 = vld [vmem:[#allocation2 + $0x99] sm:$0xff]
      %v5266 = vld [vmem:[#allocation2 + $0xa9] sm:$0xff]
      %v5267 = vld [vmem:[#allocation2 + $0xb1] sm:$0xff]
      %v5268 = vld [vmem:[#allocation2 + $0xc1] sm:$0xff]
      %v5269 = vld [vmem:[#allocation2 + $0xc9] sm:$0xff]
      %v5270 = vld [vmem:[#allocation2 + $0xd9] sm:$0xff]
      %v5271 = vld [vmem:[#allocation2 + $0xe1] sm:$0xff]
      %v5272 = vld [vmem:[#allocation2 + $0xf1] sm:$0xff]
      %v5273 = vld [vmem:[#allocation2 + $0xf9] sm:$0xff]
      %v5274 = vld [vmem:[#allocation2 + $0x109] sm:$0xff]
      %v5275 = vld [vmem:[#allocation2 + $0x111] sm:$0xff]
      %v5276 = vld [vmem:[#allocation2 + $0x121] sm:$0xff]
      %v5277 = vld [vmem:[#allocation2 + $0x129] sm:$0xff]
      %v5278 = vld [vmem:[#allocation2 + $0x139] sm:$0xff]
      %v5279 = vld [vmem:[#allocation2 + $0x141] sm:$0xff]
      %v5280 = vld [vmem:[#allocation2 + $0x151] sm:$0xff]
      %v5281 = vld [vmem:[#allocation2 + $0x159] sm:$0xff]
      %v5282 = vld [vmem:[#allocation2 + $0x169] sm:$0xff]
      %v5283 = vld [vmem:[#allocation2 + $0x171] sm:$0xff]
      %v5284 = vmax.f32 %v5220, %v5252
      %v5285 = vmax.f32 %v5221, %v5253
      %v5286 = vmax.f32 %v5222, %v5254
      %v5287 = vmax.f32 %v5223, %v5255
      %v5288 = vmax.f32 %v5224, %v5256
      %v5289 = vmax.f32 %v5225, %v5257
      %v5290 = vmax.f32 %v5226, %v5258
      %v5291 = vmax.f32 %v5227, %v5259
      %v5292 = vmax.f32 %v5228, %v5260
      %v5293 = vmax.f32 %v5229, %v5261
      %v5294 = vmax.f32 %v5230, %v5262
      %v5295 = vmax.f32 %v5231, %v5263
      %v5296 = vmax.f32 %v5232, %v5264
      %v5297 = vmax.f32 %v5233, %v5265
      %v5298 = vmax.f32 %v5234, %v5266
      %v5299 = vmax.f32 %v5235, %v5267
      %v5300 = vmax.f32 %v5236, %v5268
      %v5301 = vmax.f32 %v5237, %v5269
      %v5302 = vmax.f32 %v5238, %v5270
      %v5303 = vmax.f32 %v5239, %v5271
      %v5304 = vmax.f32 %v5240, %v5272
      %v5305 = vmax.f32 %v5241, %v5273
      %v5306 = vmax.f32 %v5242, %v5274
      %v5307 = vmax.f32 %v5243, %v5275
      %v5308 = vmax.f32 %v5244, %v5276
      %v5309 = vmax.f32 %v5245, %v5277
      %v5310 = vmax.f32 %v5246, %v5278
      %v5311 = vmax.f32 %v5247, %v5279
      %v5312 = vmax.f32 %v5248, %v5280
      %v5313 = vmax.f32 %v5249, %v5281
      %v5314 = vmax.f32 %v5250, %v5282
      %v5315 = vmax.f32 %v5251, %v5283
      %v5316 = vld [vmem:[%s2692] sm:$0xff]
      %v5317 = vld [vmem:[%s2692 + $0x8] sm:$0xff]
      %v5318 = vld [vmem:[%s2692 + $0x18] sm:$0xff]
      %v5319 = vld [vmem:[%s2692 + $0x20] sm:$0xff]
      %v5320 = vld [vmem:[%s2692 + $0x30] sm:$0xff]
      %v5321 = vld [vmem:[%s2692 + $0x38] sm:$0xff]
      %v5322 = vld [vmem:[%s2692 + $0x48] sm:$0xff]
      %v5323 = vld [vmem:[%s2692 + $0x50] sm:$0xff]
      %v5324 = vld [vmem:[%s2692 + $0x60] sm:$0xff]
      %v5325 = vld [vmem:[%s2692 + $0x68] sm:$0xff]
      %v5326 = vld [vmem:[%s2692 + $0x78] sm:$0xff]
      %v5327 = vld [vmem:[%s2692 + $0x80] sm:$0xff]
      %v5328 = vld [vmem:[%s2692 + $0x90] sm:$0xff]
      %v5329 = vld [vmem:[%s2692 + $0x98] sm:$0xff]
      %v5330 = vld [vmem:[%s2692 + $0xa8] sm:$0xff]
      %v5331 = vld [vmem:[%s2692 + $0xb0] sm:$0xff]
      %v5332 = vld [vmem:[%s2692 + $0xc0] sm:$0xff]
      %v5333 = vld [vmem:[%s2692 + $0xc8] sm:$0xff]
      %v5334 = vld [vmem:[%s2692 + $0xd8] sm:$0xff]
      %v5335 = vld [vmem:[%s2692 + $0xe0] sm:$0xff]
      %v5336 = vld [vmem:[%s2692 + $0xf0] sm:$0xff]
      %v5337 = vld [vmem:[%s2692 + $0xf8] sm:$0xff]
      %v5338 = vld [vmem:[%s2692 + $0x108] sm:$0xff]
      %v5339 = vld [vmem:[%s2692 + $0x110] sm:$0xff]
      %v5340 = vld [vmem:[%s2692 + $0x120] sm:$0xff]
      %v5341 = vld [vmem:[%s2692 + $0x128] sm:$0xff]
      %v5342 = vld [vmem:[%s2692 + $0x138] sm:$0xff]
      %v5343 = vld [vmem:[%s2692 + $0x140] sm:$0xff]
      %v5344 = vld [vmem:[%s2692 + $0x150] sm:$0xff]
      %v5345 = vld [vmem:[%s2692 + $0x158] sm:$0xff]
      %v5346 = vld [vmem:[%s2692 + $0x168] sm:$0xff]
      %v5347 = vld [vmem:[%s2692 + $0x170] sm:$0xff]
      %v5348 = vmax.f32 %v5284, %v5316
      %v5349 = vmax.f32 %v5285, %v5317
      %v5350 = vmax.f32 %v5286, %v5318
      %v5351 = vmax.f32 %v5287, %v5319
      %v5352 = vmax.f32 %v5288, %v5320
      %v5353 = vmax.f32 %v5289, %v5321
      %v5354 = vmax.f32 %v5290, %v5322
      %v5355 = vmax.f32 %v5291, %v5323
      %v5356 = vmax.f32 %v5292, %v5324
      %v5357 = vmax.f32 %v5293, %v5325
      %v5358 = vmax.f32 %v5294, %v5326
      %v5359 = vmax.f32 %v5295, %v5327
      %v5360 = vmax.f32 %v5296, %v5328
      %v5361 = vmax.f32 %v5297, %v5329
      %v5362 = vmax.f32 %v5298, %v5330
      %v5363 = vmax.f32 %v5299, %v5331
      %v5364 = vmax.f32 %v5300, %v5332
      %v5365 = vmax.f32 %v5301, %v5333
      %v5366 = vmax.f32 %v5302, %v5334
      %v5367 = vmax.f32 %v5303, %v5335
      %v5368 = vmax.f32 %v5304, %v5336
      %v5369 = vmax.f32 %v5305, %v5337
      %v5370 = vmax.f32 %v5306, %v5338
      %v5371 = vmax.f32 %v5307, %v5339
      %v5372 = vmax.f32 %v5308, %v5340
      %v5373 = vmax.f32 %v5309, %v5341
      %v5374 = vmax.f32 %v5310, %v5342
      %v5375 = vmax.f32 %v5311, %v5343
      %v5376 = vmax.f32 %v5312, %v5344
      %v5377 = vmax.f32 %v5313, %v5345
      %v5378 = vmax.f32 %v5314, %v5346
      %v5379 = vmax.f32 %v5315, %v5347
      %v5380 = vld [vmem:[%s2692 + $0x1] sm:$0xff]
      %v5381 = vld [vmem:[%s2692 + $0x9] sm:$0xff]
      %v5382 = vld [vmem:[%s2692 + $0x19] sm:$0xff]
      %v5383 = vld [vmem:[%s2692 + $0x21] sm:$0xff]
      %v5384 = vld [vmem:[%s2692 + $0x31] sm:$0xff]
      %v5385 = vld [vmem:[%s2692 + $0x39] sm:$0xff]
      %v5386 = vld [vmem:[%s2692 + $0x49] sm:$0xff]
      %v5387 = vld [vmem:[%s2692 + $0x51] sm:$0xff]
      %v5388 = vld [vmem:[%s2692 + $0x61] sm:$0xff]
      %v5389 = vld [vmem:[%s2692 + $0x69] sm:$0xff]
      %v5390 = vld [vmem:[%s2692 + $0x79] sm:$0xff]
      %v5391 = vld [vmem:[%s2692 + $0x81] sm:$0xff]
      %v5392 = vld [vmem:[%s2692 + $0x91] sm:$0xff]
      %v5393 = vld [vmem:[%s2692 + $0x99] sm:$0xff]
      %v5394 = vld [vmem:[%s2692 + $0xa9] sm:$0xff]
      %v5395 = vld [vmem:[%s2692 + $0xb1] sm:$0xff]
      %v5396 = vld [vmem:[%s2692 + $0xc1] sm:$0xff]
      %v5397 = vld [vmem:[%s2692 + $0xc9] sm:$0xff]
      %v5398 = vld [vmem:[%s2692 + $0xd9] sm:$0xff]
      %v5399 = vld [vmem:[%s2692 + $0xe1] sm:$0xff]
      %v5400 = vld [vmem:[%s2692 + $0xf1] sm:$0xff]
      %v5401 = vld [vmem:[%s2692 + $0xf9] sm:$0xff]
      %v5402 = vld [vmem:[%s2692 + $0x109] sm:$0xff]
      %v5403 = vld [vmem:[%s2692 + $0x111] sm:$0xff]
      %v5404 = vld [vmem:[%s2692 + $0x121] sm:$0xff]
      %v5405 = vld [vmem:[%s2692 + $0x129] sm:$0xff]
      %v5406 = vld [vmem:[%s2692 + $0x139] sm:$0xff]
      %v5407 = vld [vmem:[%s2692 + $0x141] sm:$0xff]
      %v5408 = vld [vmem:[%s2692 + $0x151] sm:$0xff]
      %v5409 = vld [vmem:[%s2692 + $0x159] sm:$0xff]
      %v5410 = vld [vmem:[%s2692 + $0x169] sm:$0xff]
      %v5411 = vld [vmem:[%s2692 + $0x171] sm:$0xff]
      %v5412 = vmax.f32 %v5348, %v5380
      %v5413 = vmax.f32 %v5349, %v5381
      %v5414 = vmax.f32 %v5350, %v5382
      %v5415 = vmax.f32 %v5351, %v5383
      %v5416 = vmax.f32 %v5352, %v5384
      %v5417 = vmax.f32 %v5353, %v5385
      %v5418 = vmax.f32 %v5354, %v5386
      %v5419 = vmax.f32 %v5355, %v5387
      %v5420 = vmax.f32 %v5356, %v5388
      %v5421 = vmax.f32 %v5357, %v5389
      %v5422 = vmax.f32 %v5358, %v5390
      %v5423 = vmax.f32 %v5359, %v5391
      %v5424 = vmax.f32 %v5360, %v5392
      %v5425 = vmax.f32 %v5361, %v5393
      %v5426 = vmax.f32 %v5362, %v5394
      %v5427 = vmax.f32 %v5363, %v5395
      %v5428 = vmax.f32 %v5364, %v5396
      %v5429 = vmax.f32 %v5365, %v5397
      %v5430 = vmax.f32 %v5366, %v5398
      %v5431 = vmax.f32 %v5367, %v5399
      %v5432 = vmax.f32 %v5368, %v5400
      %v5433 = vmax.f32 %v5369, %v5401
      %v5434 = vmax.f32 %v5370, %v5402
      %v5435 = vmax.f32 %v5371, %v5403
      %v5436 = vmax.f32 %v5372, %v5404
      %v5437 = vmax.f32 %v5373, %v5405
      %v5438 = vmax.f32 %v5374, %v5406
      %v5439 = vmax.f32 %v5375, %v5407
      %v5440 = vmax.f32 %v5376, %v5408
      %v5441 = vmax.f32 %v5377, %v5409
      %v5442 = vmax.f32 %v5378, %v5410
      %v5443 = vmax.f32 %v5379, %v5411
      %5444 = vst.msk [vmem:[%s313] sm:$0xff] %vm1892, %v5412
      %5445 = vst.msk [vmem:[%s313 + $0x8] sm:$0xff] %vm1892, %v5413
      %5446 = vst.msk [vmem:[%s313 + $0x10] sm:$0xff] %vm1892, %v5414
      %5447 = vst.msk [vmem:[%s313 + $0x18] sm:$0xff] %vm1892, %v5415
      %5448 = vst.msk [vmem:[%s313 + $0x20] sm:$0xff] %vm1892, %v5416
      %5449 = vst.msk [vmem:[%s313 + $0x28] sm:$0xff] %vm1892, %v5417
      %5450 = vst.msk [vmem:[%s313 + $0x30] sm:$0xff] %vm1892, %v5418
      %5451 = vst.msk [vmem:[%s313 + $0x38] sm:$0xff] %vm1892, %v5419
      %5452 = vst.msk [vmem:[%s313 + $0x40] sm:$0xff] %vm1892, %v5420
      %5453 = vst.msk [vmem:[%s313 + $0x48] sm:$0xff] %vm1892, %v5421
      %5454 = vst.msk [vmem:[%s313 + $0x50] sm:$0xff] %vm1892, %v5422
      %5455 = vst.msk [vmem:[%s313 + $0x58] sm:$0xff] %vm1892, %v5423
      %5456 = vst.msk [vmem:[%s313 + $0x60] sm:$0xff] %vm1892, %v5424
      %5457 = vst.msk [vmem:[%s313 + $0x68] sm:$0xff] %vm1892, %v5425
      %5458 = vst.msk [vmem:[%s313 + $0x70] sm:$0xff] %vm1892, %v5426
      %5459 = vst.msk [vmem:[%s313 + $0x78] sm:$0xff] %vm1892, %v5427
      %5460 = vst.msk [vmem:[%s313 + $0x80] sm:$0xff] %vm1892, %v5428
      %5461 = vst.msk [vmem:[%s313 + $0x88] sm:$0xff] %vm1892, %v5429
      %5462 = vst.msk [vmem:[%s313 + $0x90] sm:$0xff] %vm1892, %v5430
      %5463 = vst.msk [vmem:[%s313 + $0x98] sm:$0xff] %vm1892, %v5431
      %5464 = vst.msk [vmem:[%s313 + $0xa0] sm:$0xff] %vm1892, %v5432
      %5465 = vst.msk [vmem:[%s313 + $0xa8] sm:$0xff] %vm1892, %v5433
      %5466 = vst.msk [vmem:[%s313 + $0xb0] sm:$0xff] %vm1892, %v5434
      %5467 = vst.msk [vmem:[%s313 + $0xb8] sm:$0xff] %vm1892, %v5435
      %5468 = vst.msk [vmem:[%s313 + $0xc0] sm:$0xff] %vm1892, %v5436
      %5469 = vst.msk [vmem:[%s313 + $0xc8] sm:$0xff] %vm1892, %v5437
      %5470 = vst.msk [vmem:[%s313 + $0xd0] sm:$0xff] %vm1892, %v5438
      %5471 = vst.msk [vmem:[%s313 + $0xd8] sm:$0xff] %vm1892, %v5439
      %5472 = vst.msk [vmem:[%s313 + $0xe0] sm:$0xff] %vm1892, %v5440
      %5473 = vst.msk [vmem:[%s313 + $0xe8] sm:$0xff] %vm1892, %v5441
      %5474 = vst.msk [vmem:[%s313 + $0xf0] sm:$0xff] %vm1892, %v5442
      %5475 = vst.msk [vmem:[%s313 + $0xf8] sm:$0xff] %vm1892, %v5443
      %p5476 = scmp.lt.s32.totalorder %s20, 1
      %s5477 = scalar_select %p5476, %s20, 1
      %s5478 = smul.addr %s5477, 32
      %s5479 = smul.addr %s5478, 8
      %s5480 = scalar_lea.vmem %s7, %s5479
      %p5481 = scmp.lt.s32.totalorder %s20, 1
      %s5482 = scalar_select %p5481, %s20, 1
      %s5483 = smul.addr %s5482, 32
      %s5484 = smul.addr %s5483, 8
      %s5485 = scalar_lea.vmem %s8, %s5484
      // Predicated region
      $region49: #{_lambda_.2} parent=47 // pred_check
        %p5486 = pneg %p190
      $region50: #{_lambda_.2} parent=47 // pred_check_branch
        %5488 = sbr.rel (%p5486) target = $region52
      $region51: #{_lambda_.2} parent=47 // pred_region
        _
      $region52: #{_lambda_.2} parent=47 // pred_fallthru
        _
      // Predicated region
      $region53: #{_lambda_.2} parent=47 // pred_check
        %p5489 = pneg %p216
      $region54: #{_lambda_.2} parent=47 // pred_check_branch
        %5491 = sbr.rel (%p5489) target = $region56
      $region55: #{_lambda_.2} parent=47 // pred_region
        _
      $region56: #{_lambda_.2} parent=47 // pred_fallthru
        _
    $region48: #{_lambda_.2} parent=5 // pred_fallthru
      _
    %p5492 = scmp.le.s32.totalorder 2, %s15
    // Predicated region
    $region57: #{_lambda_.2} parent=5 // pred_check
      %p5493 = pneg %p5492
    $region58: #{_lambda_.2} parent=5 // pred_check_branch
      %5495 = sbr.rel (%p5493) target = $region60
    $region59: #{_lambda_.2} parent=5 // pred_region
      %s5496 = ssub.s32 %s15, 2
      // Predicated region
      $region61: #{_lambda_.2} parent=59 // pred_check
        %p5497 = pneg %p196
      $region62: #{_lambda_.2} parent=59 // pred_check_branch
        %5499 = sbr.rel (%p5497) target = $region64
      $region63: #{_lambda_.2} parent=59 // pred_region
        %p5500 = scmp.lt.s32.totalorder %s21, 1
        %s5501 = scalar_select %p5500, %s21, 1
        %s5502 = smul.addr %s5501, 32
        %s5503 = smul.addr %s5502, 8
        %s5504 = scalar_lea.vmem %s7, %s5503
      $region64: #{_lambda_.2} parent=59 // pred_fallthru
        _
      // Predicated region
      $region65: #{_lambda_.2} parent=59 // pred_check
        %p5505 = pneg %p222
      $region66: #{_lambda_.2} parent=59 // pred_check_branch
        %5507 = sbr.rel (%p5505) target = $region68
      $region67: #{_lambda_.2} parent=59 // pred_region
        %p5508 = scmp.lt.s32.totalorder %s21, 1
        %s5509 = scalar_select %p5508, %s21, 1
        %s5510 = smul.addr %s5509, 32
        %s5511 = smul.addr %s5510, 8
        %s5512 = scalar_lea.vmem %s8, %s5511
      $region68: #{_lambda_.2} parent=59 // pred_fallthru
        _
    $region60: #{_lambda_.2} parent=5 // pred_fallthru
      _
  $region6: #{_lambda_.2} parent=0 // loop_footer
    %s19 = sadd.s32 1, %s15
  $region7: #{_lambda_.2} parent=0 // loop_footer_branch
    %14 = sbr.rel target = $region3
  $region8: #{_lambda_.2} parent=0 // loop_exit
    _

</llo_original>
